<compile_context>
chip_gen: v7x
topology: tpu7x:2x2x1
jax: 0.10.0
libtpu: 0.0.40
codegen_flags: <defaults>
</compile_context>

<pallas_src>
import functools
import math

import jax
import jax.numpy as jnp
from jax.experimental import pallas as pl
from jax.experimental.pallas import tpu as pltpu

_LN_EPS = 1e-5


def _gelu_tanh(x):
    # tanh-form GELU: one EUP transcendental instead of the erf polynomial's
    # ~10 VALU ops per element.  |err| vs exact-erf GELU < ~1e-3, well inside
    # the bf16-matmul tolerance used in the self-test.
    c = math.sqrt(2.0 / math.pi)
    return 0.5 * x * (1.0 + jnp.tanh(c * (x + 0.044715 * x * x * x)))


def _layer_norm(x, w, b):
    mu = jnp.mean(x, axis=-1, keepdims=True)
    var = jnp.mean(jnp.square(x - mu), axis=-1, keepdims=True)
    return (x - mu) * jax.lax.rsqrt(var + _LN_EPS) * w + b


def encoder_block_kernel(x_ref, ln_w_ref, ln_b_ref, wqkv_ref, bqkv_ref,
                         wo_ref, bo_ref, w1_ref, b1_ref, w2_ref, b2_ref,
                         o_ref, *, num_heads, batch, ff_chunk):
    rows, e = x_ref.shape                 # rows = patch_tile * batch (patch-major)
    tp = rows // batch
    d = e // num_heads
    scale = 1.0 / math.sqrt(d)
    mm = wqkv_ref.dtype                   # bf16 matmul operands, f32 accumulation

    x = x_ref[...].astype(jnp.float32)    # LN / softmax stats always in f32
    ln_w = ln_w_ref[...]
    ln_b = ln_b_ref[...]

    # ---- LayerNorm 1 ----
    h = _layer_norm(x, ln_w, ln_b)
    hb = h.astype(mm)

    # ---- fused, lane-dense Q/K/V projection: [rows, E] x [E, 3E] ----
    qkv = jnp.dot(hb, wqkv_ref[...],
                  preferred_element_type=jnp.float32) + bqkv_ref[...]

    # ---- per-(patch, head) attention over the *batch* axis ----
    # (torch nn.MultiheadAttention, batch_first=False, fed [B, P, E].)
    # Head outputs are folded directly into the output-projection accumulator
    # (x1 += oh @ Wo[h*d:(h+1)*d, :]): no VMEM scratch, no masked partial-lane
    # stores.  Residual-1 and the out-proj bias are folded into the init.
    x1 = x + bo_ref[...]
    for hd in range(num_heads):
        qh = qkv[:, hd * d:(hd + 1) * d].reshape(tp, batch, d).astype(mm)
        kh = qkv[:, e + hd * d:e + (hd + 1) * d].reshape(tp, batch, d).astype(mm)
        vh = qkv[:, 2 * e + hd * d:2 * e + (hd + 1) * d].reshape(tp, batch, d).astype(mm)
        s = jnp.einsum('pid,pjd->pij', qh, kh,
                       preferred_element_type=jnp.float32) * scale
        s = s - jnp.max(s, axis=-1, keepdims=True)
        pw = jnp.exp(s)
        inv = pl.reciprocal(jnp.sum(pw, axis=-1, keepdims=True), approx=True)
        pw = pw * inv                                      # softmax over keys
        oh = jnp.einsum('pij,pjd->pid', pw.astype(mm), vh,
                        preferred_element_type=jnp.float32)
        x1 = x1 + jnp.dot(oh.reshape(rows, d).astype(mm),
                          wo_ref[hd * d:(hd + 1) * d, :],
                          preferred_element_type=jnp.float32)
    # dropout(p=0.1) in eval mode == identity; x1 = attention output + residual1

    # ---- LayerNorm 2 (shared params) + feed-forward, hidden dim chunked ----
    h2 = _layer_norm(x1, ln_w, ln_b).astype(mm)
    ff_hidden = w1_ref.shape[1]
    acc = x1 + b2_ref[...]                 # residual-2 + second-linear bias
    for c in range(ff_hidden // ff_chunk):
        cs = slice(c * ff_chunk, (c + 1) * ff_chunk)
        z = jnp.dot(h2, w1_ref[:, cs],
                    preferred_element_type=jnp.float32) + b1_ref[:, cs]
        z = _gelu_tanh(z)                                  # f32 elementwise
        acc = acc + jnp.dot(z.astype(mm), w2_ref[cs, :],
                            preferred_element_type=jnp.float32)

    o_ref[...] = acc.astype(o_ref.dtype)


def prepare_params(params, num_heads, matmul_dtype=jnp.bfloat16):
    """One-time weight preprocessing, hoisted out of the per-call path."""
    E = params['ln_w'].shape[0]
    assert E % num_heads == 0
    f32 = jnp.float32
    return {
        'ln_w': params['ln_w'].reshape(1, E).astype(f32),
        'ln_b': params['ln_b'].reshape(1, E).astype(f32),
        'wqkv': params['in_w'].T.astype(matmul_dtype),      # [E, 3E] fused QKV
        'bqkv': params['in_b'].reshape(1, 3 * E).astype(f32),
        'wo': params['out_w'].T.astype(matmul_dtype),       # [E, E]
        'bo': params['out_b'].reshape(1, E).astype(f32),
        'w1': params['ff1_w'].T.astype(matmul_dtype),       # [E, 4E]
        'b1': params['ff1_b'].reshape(1, -1).astype(f32),
        'w2': params['ff2_w'].T.astype(matmul_dtype),       # [4E, E]
        'b2': params['ff2_b'].reshape(1, E).astype(f32),
    }


def _vmem_capacity_bytes():
    try:
        return int(pltpu.get_tpu_info().vmem_capacity_bytes)
    except Exception:
        return 64 * 1024 * 1024            # conservative: v7x per-TC VMEM


def _choose_patch_tile(num_patches, batch, target_rows):
    """Largest patch tile giving sublane-aligned rows, <= target_rows rows per
    step and >= 2 (preferably an even number of) grid steps (v7x megacore)."""
    divisors = [d for d in range(1, num_patches + 1) if num_patches % d == 0]
    valid = [d for d in divisors if (d * batch) % 8 == 0 or d == num_patches]
    fitting = [d for d in valid if d * batch <= target_rows] or [min(valid)]
    multi = [d for d in fitting if num_patches // d >= 2]
    if not multi:
        return max(fitting)
    even = [d for d in multi if (num_patches // d) % 2 == 0]
    return max(even) if even else max(multi)


def _choose_ff_chunk(hidden, cap=1024):
    """Largest 128-multiple chunk of the FFN hidden dim <= cap that divides it."""
    if hidden <= cap:
        return hidden
    start = cap - (cap % 128)
    for c in range(start, 0, -128):
        if hidden % c == 0:
            return c
    return hidden


def _const_spec(shape, single_buffer):
    n = len(shape)
    imap = lambda *args, n=n: (0,) * n
    if single_buffer:
        # Constant-index blocks: no double buffering needed.
        return pl.BlockSpec(shape, imap, pipeline_mode=pl.Buffered(1))
    return pl.BlockSpec(shape, imap)


def transformer_encoder_block(x, prepared, num_heads, patch_tile=None,
                              ff_chunk=None, single_buffer_weights=True):
    """x: [B, P, E] -> [B, P, E]; eval-mode forward of the PyTorch module."""
    B, P, E = x.shape
    assert E % num_heads == 0

    capacity = _vmem_capacity_bytes()
    target_rows = 1024 if capacity >= 96 * 1024 * 1024 else 512
    tp = _choose_patch_tile(P, B, target_rows) if patch_tile is None else patch_tile
    assert P % tp == 0
    rows = tp * B

    ff_hidden = prepared['w1'].shape[1]
    fc = _choose_ff_chunk(ff_hidden) if ff_chunk is None else ff_chunk
    assert ff_hidden % fc == 0

    # torch attends over the batch axis -> patch-major layout so attention is
    # leading-dim batched and all matmuls see a flat [rows, E] slab.
    # TODO(synk): this transpose costs one extra HBM pass each way; removing it
    # needs an in-kernel (B,tp,E)->(tp*B,E) sublane relayout (not done here).
    x_flat = jnp.transpose(x, (1, 0, 2)).reshape(P * B, E)

    p = prepared
    weight_ops = (p['ln_w'], p['ln_b'], p['wqkv'], p['bqkv'],
                  p['wo'], p['bo'], p['w1'], p['b1'], p['w2'], p['b2'])
    operands = (x_flat,) + weight_ops

    # Generation-aware VMEM budget: weights (doubled if double-buffered),
    # double-buffered in/out tiles, f32 intermediates (qkv, LN/residual slabs,
    # one FFN chunk), 40% headroom, capped at 85% of this chip's VMEM.
    weight_bytes = sum(int(w.size) * w.dtype.itemsize for w in weight_ops)
    wb = weight_bytes * (1 if single_buffer_weights else 2)
    io_bytes = 2 * 2 * rows * E * x.dtype.itemsize
    act = rows * E * 4
    interm = 7 * act + rows * 3 * E * (4 + 2) + rows * fc * (2 * 4 + 2)
    vmem_limit = int(min(max(1.4 * (wb + io_bytes + interm), 32 * 1024 * 1024),
                         0.85 * capacity))

    in_specs = [pl.BlockSpec((rows, E), lambda i: (i, 0))]
    in_specs += [_const_spec(w.shape, single_buffer_weights) for w in weight_ops]
    out_spec = pl.BlockSpec((rows, E), lambda i: (i, 0))

    n_rows = P * B
    flops = 24 * n_rows * E * E + 4 * n_rows * B * E
    transcendentals = n_rows * B * num_heads + n_rows * 4 * E
    bytes_accessed = 2 * n_rows * E * x.dtype.itemsize + weight_bytes

    kernel = functools.partial(encoder_block_kernel, num_heads=num_heads,
                               batch=B, ff_chunk=fc)

    out_flat = pl.pallas_call(
        kernel,
        out_shape=jax.ShapeDtypeStruct((P * B, E), x.dtype),
        grid_spec=pltpu.PrefetchScalarGridSpec(
            num_scalar_prefetch=0,
            grid=(P // tp,),
            in_specs=in_specs,
            out_specs=out_spec),
        compiler_params=pltpu.CompilerParams(
            dimension_semantics=("parallel",),
            vmem_limit_bytes=vmem_limit),
        cost_estimate=pl.CostEstimate(
            flops=int(flops),
            transcendentals=int(transcendentals),
            bytes_accessed=int(bytes_accessed)),
    )(*operands)

    return out_flat.reshape(P, B, E).transpose(1, 0, 2)


def torch_ref(x, p, H):
    """Plain-JAX reference reproducing the PyTorch forward (eval mode, f32)."""
    B, P, E = x.shape
    D = E // H

    def ln(t):
        mu = t.mean(-1, keepdims=True)
        var = ((t - mu) ** 2).mean(-1, keepdims=True)
        return (t - mu) / jnp.sqrt(var + _LN_EPS) * p['ln_w'] + p['ln_b']

    h = ln(x)
    q = h @ p['in_w'][:E].T + p['in_b'][:E]
    k = h @ p['in_w'][E:2 * E].T + p['in_b'][E:2 * E]
    v = h @ p['in_w'][2 * E:].T + p['in_b'][2 * E:]

    def split(t):  # [B, P, E] -> [P, H, B, D]  (torch batch_first=False view)
        return t.reshape(B, P, H, D).transpose(1, 2, 0, 3)

    qh, kh, vh = split(q), split(k), split(v)
    s = jnp.einsum('phid,phjd->phij', qh, kh) / math.sqrt(D)
    a = jax.nn.softmax(s, axis=-1)
    o = jnp.einsum('phij,phjd->phid', a, vh)
    o = o.transpose(2, 0, 1, 3).reshape(B, P, E)
    attn = o @ p['out_w'].T + p['out_b']
    x1 = attn + x
    h2 = ln(x1)
    z = h2 @ p['ff1_w'].T + p['ff1_b']
    z = 0.5 * z * (1.0 + jax.scipy.special.erf(z / math.sqrt(2.0)))
    z = z @ p['ff2_w'].T + p['ff2_b']
    return z + x1


if __name__ == "__main__":
    B, P, E, H = 2, 16, 32, 4           # small [batch, patches, embed], 2 grid steps
    key = jax.random.PRNGKey(0)
    ks = jax.random.split(key, 10)
    x = jax.random.normal(ks[0], (B, P, E), jnp.float32)

    params = {
        'ln_w': jnp.ones((E,), jnp.float32),
        'ln_b': jnp.zeros((E,), jnp.float32),
        'in_w': 0.05 * jax.random.normal(ks[1], (3 * E, E), jnp.float32),
        'in_b': 0.05 * jax.random.normal(ks[2], (3 * E,), jnp.float32),
        'out_w': 0.05 * jax.random.normal(ks[3], (E, E), jnp.float32),
        'out_b': 0.05 * jax.random.normal(ks[4], (E,), jnp.float32),
        'ff1_w': 0.05 * jax.random.normal(ks[5], (4 * E, E), jnp.float32),
        'ff1_b': 0.05 * jax.random.normal(ks[6], (4 * E,), jnp.float32),
        'ff2_w': 0.05 * jax.random.normal(ks[7], (E, 4 * E), jnp.float32),
        'ff2_b': 0.05 * jax.random.normal(ks[8], (E,), jnp.float32),
    }

    prepared = prepare_params(params, num_heads=H)   # one-time weight prep (bf16)

    fwd = jax.jit(transformer_encoder_block,
                  static_argnames=("num_heads", "patch_tile", "ff_chunk",
                                   "single_buffer_weights"))

    def run(single_buffer):
        out = fwd(x, prepared, num_heads=H, patch_tile=None, ff_chunk=None,
                  single_buffer_weights=single_buffer)
        return jax.block_until_ready(out)

    try:
        out = run(True)                  # weights single-buffered (pl.Buffered(1))
    except Exception:
        # Fallback if this jax build rejects pipeline_mode=pl.Buffered(1):
        # default double-buffered weight blocks (still within the vmem limit).
        out = run(False)

    with jax.default_matmul_precision("float32"):
        ref = jax.block_until_ready(torch_ref(x, params, H))

    assert out.shape == (B, P, E)
    max_err = float(jnp.max(jnp.abs(out - ref)))
    # bf16 matmul operands with f32 accumulation + tanh-GELU -> relaxed tolerance.
    assert jnp.allclose(out, ref, atol=2e-2, rtol=2e-2), f"max_err={max_err}"
    print("KERNEL_OK")
</pallas_src>

<mosaic_0001>
module attributes {stable_mosaic.version = 11 : i64} {
  func.func @encoder_block_kernel(%arg0: i32, %arg1: memref<16x32xf32, #tpu.memory_space<vmem>>, %arg2: memref<1x32xf32, #tpu.memory_space<vmem>>, %arg3: memref<1x32xf32, #tpu.memory_space<vmem>>, %arg4: memref<32x96xbf16, #tpu.memory_space<vmem>>, %arg5: memref<1x96xf32, #tpu.memory_space<vmem>>, %arg6: memref<32x32xbf16, #tpu.memory_space<vmem>>, %arg7: memref<1x32xf32, #tpu.memory_space<vmem>>, %arg8: memref<32x128xbf16, #tpu.memory_space<vmem>>, %arg9: memref<1x128xf32, #tpu.memory_space<vmem>>, %arg10: memref<128x32xbf16, #tpu.memory_space<vmem>>, %arg11: memref<1x32xf32, #tpu.memory_space<vmem>>, %arg12: memref<16x32xf32, #tpu.memory_space<vmem>>) attributes {dimension_semantics = [#tpu.dimension_semantics<parallel>], iteration_bounds = array<i64: 2>, scalar_prefetch = 0 : i64, scratch_operands = 0 : i64, tpu.core_type = #tpu.core_type<tc>, window_params = [{transform_indices = @transform_0, window_bounds = array<i64: 16, 32>}, {pipeline_mode = #tpu.pipeline_mode<synchronous>, transform_indices = @transform_1, window_bounds = array<i64: 1, 32>}, {pipeline_mode = #tpu.pipeline_mode<synchronous>, transform_indices = @transform_2, window_bounds = array<i64: 1, 32>}, {pipeline_mode = #tpu.pipeline_mode<synchronous>, transform_indices = @transform_3, window_bounds = array<i64: 32, 96>}, {pipeline_mode = #tpu.pipeline_mode<synchronous>, transform_indices = @transform_4, window_bounds = array<i64: 1, 96>}, {pipeline_mode = #tpu.pipeline_mode<synchronous>, transform_indices = @transform_5, window_bounds = array<i64: 32, 32>}, {pipeline_mode = #tpu.pipeline_mode<synchronous>, transform_indices = @transform_6, window_bounds = array<i64: 1, 32>}, {pipeline_mode = #tpu.pipeline_mode<synchronous>, transform_indices = @transform_7, window_bounds = array<i64: 32, 128>}, {pipeline_mode = #tpu.pipeline_mode<synchronous>, transform_indices = @transform_8, window_bounds = array<i64: 1, 128>}, {pipeline_mode = #tpu.pipeline_mode<synchronous>, transform_indices = @transform_9, window_bounds = array<i64: 128, 32>}, {pipeline_mode = #tpu.pipeline_mode<synchronous>, transform_indices = @transform_10, window_bounds = array<i64: 1, 32>}, {transform_indices = @transform_11, window_bounds = array<i64: 16, 32>}]} {
    %c0 = arith.constant 0 : index
    %c0_0 = arith.constant 0 : index
    %0 = vector.load %arg1[%c0, %c0_0] : memref<16x32xf32, #tpu.memory_space<vmem>>, vector<16x32xf32>
    %c0_1 = arith.constant 0 : index
    %c0_2 = arith.constant 0 : index
    %1 = vector.load %arg2[%c0_1, %c0_2] : memref<1x32xf32, #tpu.memory_space<vmem>>, vector<1x32xf32>
    %c0_3 = arith.constant 0 : index
    %c0_4 = arith.constant 0 : index
    %2 = vector.load %arg3[%c0_3, %c0_4] : memref<1x32xf32, #tpu.memory_space<vmem>>, vector<1x32xf32>
    %cst = arith.constant dense<0.000000e+00> : vector<16xf32>
    %3 = vector.multi_reduction <add>, %0, %cst [1] : vector<16x32xf32> to vector<16xf32>
    %4 = vector.shape_cast %3 : vector<16xf32> to vector<16x1xf32>
    %cst_5 = arith.constant 3.200000e+01 : f32
    %5 = vector.broadcast %cst_5 : f32 to vector<16x1xf32>
    %6 = arith.divf %4, %5 : vector<16x1xf32>
    %7 = vector.broadcast %6 : vector<16x1xf32> to vector<16x32xf32>
    %8 = arith.subf %0, %7 : vector<16x32xf32>
    %9 = arith.mulf %8, %8 : vector<16x32xf32>
    %cst_6 = arith.constant dense<0.000000e+00> : vector<16xf32>
    %10 = vector.multi_reduction <add>, %9, %cst_6 [1] : vector<16x32xf32> to vector<16xf32>
    %11 = vector.shape_cast %10 : vector<16xf32> to vector<16x1xf32>
    %cst_7 = arith.constant 3.200000e+01 : f32
    %12 = vector.broadcast %cst_7 : f32 to vector<16x1xf32>
    %13 = arith.divf %11, %12 : vector<16x1xf32>
    %14 = vector.broadcast %6 : vector<16x1xf32> to vector<16x32xf32>
    %15 = arith.subf %0, %14 : vector<16x32xf32>
    %cst_8 = arith.constant 9.99999974E-6 : f32
    %16 = vector.broadcast %cst_8 : f32 to vector<16x1xf32>
    %17 = arith.addf %13, %16 : vector<16x1xf32>
    %18 = math.rsqrt %17 : vector<16x1xf32>
    %19 = vector.broadcast %18 : vector<16x1xf32> to vector<16x32xf32>
    %20 = arith.mulf %15, %19 : vector<16x32xf32>
    %21 = vector.broadcast %1 : vector<1x32xf32> to vector<16x32xf32>
    %22 = arith.mulf %20, %21 : vector<16x32xf32>
    %23 = vector.broadcast %2 : vector<1x32xf32> to vector<16x32xf32>
    %24 = arith.addf %22, %23 : vector<16x32xf32>
    %25 = arith.truncf %24 : vector<16x32xf32> to vector<16x32xbf16>
    %c0_9 = arith.constant 0 : index
    %c0_10 = arith.constant 0 : index
    %26 = vector.load %arg4[%c0_9, %c0_10] : memref<32x96xbf16, #tpu.memory_space<vmem>>, vector<32x96xbf16>
    %cst_11 = arith.constant dense<0.000000e+00> : vector<16x96xf32>
    %27 = tpu.matmul %25, %26, %cst_11 {dimension_numbers = #tpu.dot_dimension_numbers<[1], [0], [0], [1], [0, 0, 1, 1], [], []>} : vector<16x32xbf16>, vector<32x96xbf16>, vector<16x96xf32> -> vector<16x96xf32>
    %c0_12 = arith.constant 0 : index
    %c0_13 = arith.constant 0 : index
    %28 = vector.load %arg5[%c0_12, %c0_13] : memref<1x96xf32, #tpu.memory_space<vmem>>, vector<1x96xf32>
    %29 = vector.broadcast %28 : vector<1x96xf32> to vector<16x96xf32>
    %30 = arith.addf %27, %29 : vector<16x96xf32>
    %c0_14 = arith.constant 0 : index
    %c0_15 = arith.constant 0 : index
    %31 = vector.load %arg7[%c0_14, %c0_15] : memref<1x32xf32, #tpu.memory_space<vmem>>, vector<1x32xf32>
    %32 = vector.broadcast %31 : vector<1x32xf32> to vector<16x32xf32>
    %33 = arith.addf %0, %32 : vector<16x32xf32>
    %34 = vector.extract_strided_slice %30 {offsets = [0, 0], sizes = [16, 8], strides = [1, 1]} : vector<16x96xf32> to vector<16x8xf32>
    %35 = vector.shape_cast %34 : vector<16x8xf32> to vector<8x2x8xf32>
    %36 = arith.truncf %35 : vector<8x2x8xf32> to vector<8x2x8xbf16>
    %37 = vector.extract_strided_slice %30 {offsets = [0, 32], sizes = [16, 8], strides = [1, 1]} : vector<16x96xf32> to vector<16x8xf32>
    %38 = vector.shape_cast %37 : vector<16x8xf32> to vector<8x2x8xf32>
    %39 = arith.truncf %38 : vector<8x2x8xf32> to vector<8x2x8xbf16>
    %40 = vector.extract_strided_slice %30 {offsets = [0, 64], sizes = [16, 8], strides = [1, 1]} : vector<16x96xf32> to vector<16x8xf32>
    %41 = vector.shape_cast %40 : vector<16x8xf32> to vector<8x2x8xf32>
    %42 = arith.truncf %41 : vector<8x2x8xf32> to vector<8x2x8xbf16>
    "tpu.trace_start"() <{level = 10 : i32, message = "pid,pjd->pij"}> : () -> ()
    %cst_16 = arith.constant dense<0.000000e+00> : vector<8x2x2xf32>
    %43 = tpu.matmul %36, %39, %cst_16 {dimension_numbers = #tpu.dot_dimension_numbers<[2], [2], [1], [1], [0, 0, 0, 1, 1, 1], [0], [0]>} : vector<8x2x8xbf16>, vector<8x2x8xbf16>, vector<8x2x2xf32> -> vector<8x2x2xf32>
    "tpu.trace_stop"() : () -> ()
    %cst_17 = arith.constant 0.353553385 : f32
    %44 = vector.broadcast %cst_17 : f32 to vector<8x2x2xf32>
    %45 = arith.mulf %43, %44 : vector<8x2x2xf32>
    %cst_18 = arith.constant dense<0xFF800000> : vector<8x2xf32>
    %46 = vector.multi_reduction <maximumf>, %45, %cst_18 [2] : vector<8x2x2xf32> to vector<8x2xf32>
    %47 = vector.shape_cast %46 : vector<8x2xf32> to vector<8x2x1xf32>
    %48 = vector.broadcast %47 : vector<8x2x1xf32> to vector<8x2x2xf32>
    %49 = arith.subf %45, %48 : vector<8x2x2xf32>
    %50 = math.exp %49 : vector<8x2x2xf32>
    %cst_19 = arith.constant dense<0.000000e+00> : vector<8x2xf32>
    %51 = vector.multi_reduction <add>, %50, %cst_19 [2] : vector<8x2x2xf32> to vector<8x2xf32>
    %52 = vector.shape_cast %51 : vector<8x2xf32> to vector<8x2x1xf32>
    %53 = tpu.reciprocal %52 {approx = true} : vector<8x2x1xf32> -> vector<8x2x1xf32>
    %54 = vector.broadcast %53 : vector<8x2x1xf32> to vector<8x2x2xf32>
    %55 = arith.mulf %50, %54 : vector<8x2x2xf32>
    %56 = arith.truncf %55 : vector<8x2x2xf32> to vector<8x2x2xbf16>
    "tpu.trace_start"() <{level = 10 : i32, message = "pij,pjd->pid"}> : () -> ()
    %cst_20 = arith.constant dense<0.000000e+00> : vector<8x2x8xf32>
    %57 = tpu.matmul %56, %42, %cst_20 {dimension_numbers = #tpu.dot_dimension_numbers<[2], [1], [1], [2], [0, 0, 0, 1, 1, 2], [0], [0]>} : vector<8x2x2xbf16>, vector<8x2x8xbf16>, vector<8x2x8xf32> -> vector<8x2x8xf32>
    "tpu.trace_stop"() : () -> ()
    %58 = vector.shape_cast %57 : vector<8x2x8xf32> to vector<16x8xf32>
    %59 = arith.truncf %58 : vector<16x8xf32> to vector<16x8xbf16>
    %c0_21 = arith.constant 0 : index
    %c0_22 = arith.constant 0 : index
    %60 = vector.load %arg6[%c0_21, %c0_22] : memref<32x32xbf16, #tpu.memory_space<vmem>>, vector<8x32xbf16>
    %cst_23 = arith.constant dense<0.000000e+00> : vector<16x32xf32>
    %61 = tpu.matmul %59, %60, %cst_23 {dimension_numbers = #tpu.dot_dimension_numbers<[1], [0], [0], [1], [0, 0, 1, 1], [], []>} : vector<16x8xbf16>, vector<8x32xbf16>, vector<16x32xf32> -> vector<16x32xf32>
    %62 = arith.addf %33, %61 : vector<16x32xf32>
    %63 = vector.extract_strided_slice %30 {offsets = [0, 8], sizes = [16, 8], strides = [1, 1]} : vector<16x96xf32> to vector<16x8xf32>
    %64 = vector.shape_cast %63 : vector<16x8xf32> to vector<8x2x8xf32>
    %65 = arith.truncf %64 : vector<8x2x8xf32> to vector<8x2x8xbf16>
    %66 = vector.extract_strided_slice %30 {offsets = [0, 40], sizes = [16, 8], strides = [1, 1]} : vector<16x96xf32> to vector<16x8xf32>
    %67 = vector.shape_cast %66 : vector<16x8xf32> to vector<8x2x8xf32>
    %68 = arith.truncf %67 : vector<8x2x8xf32> to vector<8x2x8xbf16>
    %69 = vector.extract_strided_slice %30 {offsets = [0, 72], sizes = [16, 8], strides = [1, 1]} : vector<16x96xf32> to vector<16x8xf32>
    %70 = vector.shape_cast %69 : vector<16x8xf32> to vector<8x2x8xf32>
    %71 = arith.truncf %70 : vector<8x2x8xf32> to vector<8x2x8xbf16>
    "tpu.trace_start"() <{level = 10 : i32, message = "pid,pjd->pij"}> : () -> ()
    %cst_24 = arith.constant dense<0.000000e+00> : vector<8x2x2xf32>
    %72 = tpu.matmul %65, %68, %cst_24 {dimension_numbers = #tpu.dot_dimension_numbers<[2], [2], [1], [1], [0, 0, 0, 1, 1, 1], [0], [0]>} : vector<8x2x8xbf16>, vector<8x2x8xbf16>, vector<8x2x2xf32> -> vector<8x2x2xf32>
    "tpu.trace_stop"() : () -> ()
    %cst_25 = arith.constant 0.353553385 : f32
    %73 = vector.broadcast %cst_25 : f32 to vector<8x2x2xf32>
    %74 = arith.mulf %72, %73 : vector<8x2x2xf32>
    %cst_26 = arith.constant dense<0xFF800000> : vector<8x2xf32>
    %75 = vector.multi_reduction <maximumf>, %74, %cst_26 [2] : vector<8x2x2xf32> to vector<8x2xf32>
    %76 = vector.shape_cast %75 : vector<8x2xf32> to vector<8x2x1xf32>
    %77 = vector.broadcast %76 : vector<8x2x1xf32> to vector<8x2x2xf32>
    %78 = arith.subf %74, %77 : vector<8x2x2xf32>
    %79 = math.exp %78 : vector<8x2x2xf32>
    %cst_27 = arith.constant dense<0.000000e+00> : vector<8x2xf32>
    %80 = vector.multi_reduction <add>, %79, %cst_27 [2] : vector<8x2x2xf32> to vector<8x2xf32>
    %81 = vector.shape_cast %80 : vector<8x2xf32> to vector<8x2x1xf32>
    %82 = tpu.reciprocal %81 {approx = true} : vector<8x2x1xf32> -> vector<8x2x1xf32>
    %83 = vector.broadcast %82 : vector<8x2x1xf32> to vector<8x2x2xf32>
    %84 = arith.mulf %79, %83 : vector<8x2x2xf32>
    %85 = arith.truncf %84 : vector<8x2x2xf32> to vector<8x2x2xbf16>
    "tpu.trace_start"() <{level = 10 : i32, message = "pij,pjd->pid"}> : () -> ()
    %cst_28 = arith.constant dense<0.000000e+00> : vector<8x2x8xf32>
    %86 = tpu.matmul %85, %71, %cst_28 {dimension_numbers = #tpu.dot_dimension_numbers<[2], [1], [1], [2], [0, 0, 0, 1, 1, 2], [0], [0]>} : vector<8x2x2xbf16>, vector<8x2x8xbf16>, vector<8x2x8xf32> -> vector<8x2x8xf32>
    "tpu.trace_stop"() : () -> ()
    %87 = vector.shape_cast %86 : vector<8x2x8xf32> to vector<16x8xf32>
    %88 = arith.truncf %87 : vector<16x8xf32> to vector<16x8xbf16>
    %c8 = arith.constant 8 : index
    %c0_29 = arith.constant 0 : index
    %89 = vector.load %arg6[%c8, %c0_29] : memref<32x32xbf16, #tpu.memory_space<vmem>>, vector<8x32xbf16>
    %cst_30 = arith.constant dense<0.000000e+00> : vector<16x32xf32>
    %90 = tpu.matmul %88, %89, %cst_30 {dimension_numbers = #tpu.dot_dimension_numbers<[1], [0], [0], [1], [0, 0, 1, 1], [], []>} : vector<16x8xbf16>, vector<8x32xbf16>, vector<16x32xf32> -> vector<16x32xf32>
    %91 = arith.addf %62, %90 : vector<16x32xf32>
    %92 = vector.extract_strided_slice %30 {offsets = [0, 16], sizes = [16, 8], strides = [1, 1]} : vector<16x96xf32> to vector<16x8xf32>
    %93 = vector.shape_cast %92 : vector<16x8xf32> to vector<8x2x8xf32>
    %94 = arith.truncf %93 : vector<8x2x8xf32> to vector<8x2x8xbf16>
    %95 = vector.extract_strided_slice %30 {offsets = [0, 48], sizes = [16, 8], strides = [1, 1]} : vector<16x96xf32> to vector<16x8xf32>
    %96 = vector.shape_cast %95 : vector<16x8xf32> to vector<8x2x8xf32>
    %97 = arith.truncf %96 : vector<8x2x8xf32> to vector<8x2x8xbf16>
    %98 = vector.extract_strided_slice %30 {offsets = [0, 80], sizes = [16, 8], strides = [1, 1]} : vector<16x96xf32> to vector<16x8xf32>
    %99 = vector.shape_cast %98 : vector<16x8xf32> to vector<8x2x8xf32>
    %100 = arith.truncf %99 : vector<8x2x8xf32> to vector<8x2x8xbf16>
    "tpu.trace_start"() <{level = 10 : i32, message = "pid,pjd->pij"}> : () -> ()
    %cst_31 = arith.constant dense<0.000000e+00> : vector<8x2x2xf32>
    %101 = tpu.matmul %94, %97, %cst_31 {dimension_numbers = #tpu.dot_dimension_numbers<[2], [2], [1], [1], [0, 0, 0, 1, 1, 1], [0], [0]>} : vector<8x2x8xbf16>, vector<8x2x8xbf16>, vector<8x2x2xf32> -> vector<8x2x2xf32>
    "tpu.trace_stop"() : () -> ()
    %cst_32 = arith.constant 0.353553385 : f32
    %102 = vector.broadcast %cst_32 : f32 to vector<8x2x2xf32>
    %103 = arith.mulf %101, %102 : vector<8x2x2xf32>
    %cst_33 = arith.constant dense<0xFF800000> : vector<8x2xf32>
    %104 = vector.multi_reduction <maximumf>, %103, %cst_33 [2] : vector<8x2x2xf32> to vector<8x2xf32>
    %105 = vector.shape_cast %104 : vector<8x2xf32> to vector<8x2x1xf32>
    %106 = vector.broadcast %105 : vector<8x2x1xf32> to vector<8x2x2xf32>
    %107 = arith.subf %103, %106 : vector<8x2x2xf32>
    %108 = math.exp %107 : vector<8x2x2xf32>
    %cst_34 = arith.constant dense<0.000000e+00> : vector<8x2xf32>
    %109 = vector.multi_reduction <add>, %108, %cst_34 [2] : vector<8x2x2xf32> to vector<8x2xf32>
    %110 = vector.shape_cast %109 : vector<8x2xf32> to vector<8x2x1xf32>
    %111 = tpu.reciprocal %110 {approx = true} : vector<8x2x1xf32> -> vector<8x2x1xf32>
    %112 = vector.broadcast %111 : vector<8x2x1xf32> to vector<8x2x2xf32>
    %113 = arith.mulf %108, %112 : vector<8x2x2xf32>
    %114 = arith.truncf %113 : vector<8x2x2xf32> to vector<8x2x2xbf16>
    "tpu.trace_start"() <{level = 10 : i32, message = "pij,pjd->pid"}> : () -> ()
    %cst_35 = arith.constant dense<0.000000e+00> : vector<8x2x8xf32>
    %115 = tpu.matmul %114, %100, %cst_35 {dimension_numbers = #tpu.dot_dimension_numbers<[2], [1], [1], [2], [0, 0, 0, 1, 1, 2], [0], [0]>} : vector<8x2x2xbf16>, vector<8x2x8xbf16>, vector<8x2x8xf32> -> vector<8x2x8xf32>
    "tpu.trace_stop"() : () -> ()
    %116 = vector.shape_cast %115 : vector<8x2x8xf32> to vector<16x8xf32>
    %117 = arith.truncf %116 : vector<16x8xf32> to vector<16x8xbf16>
    %c16 = arith.constant 16 : index
    %c0_36 = arith.constant 0 : index
    %118 = vector.load %arg6[%c16, %c0_36] : memref<32x32xbf16, #tpu.memory_space<vmem>>, vector<8x32xbf16>
    %cst_37 = arith.constant dense<0.000000e+00> : vector<16x32xf32>
    %119 = tpu.matmul %117, %118, %cst_37 {dimension_numbers = #tpu.dot_dimension_numbers<[1], [0], [0], [1], [0, 0, 1, 1], [], []>} : vector<16x8xbf16>, vector<8x32xbf16>, vector<16x32xf32> -> vector<16x32xf32>
    %120 = arith.addf %91, %119 : vector<16x32xf32>
    %121 = vector.extract_strided_slice %30 {offsets = [0, 24], sizes = [16, 8], strides = [1, 1]} : vector<16x96xf32> to vector<16x8xf32>
    %122 = vector.shape_cast %121 : vector<16x8xf32> to vector<8x2x8xf32>
    %123 = arith.truncf %122 : vector<8x2x8xf32> to vector<8x2x8xbf16>
    %124 = vector.extract_strided_slice %30 {offsets = [0, 56], sizes = [16, 8], strides = [1, 1]} : vector<16x96xf32> to vector<16x8xf32>
    %125 = vector.shape_cast %124 : vector<16x8xf32> to vector<8x2x8xf32>
    %126 = arith.truncf %125 : vector<8x2x8xf32> to vector<8x2x8xbf16>
    %127 = vector.extract_strided_slice %30 {offsets = [0, 88], sizes = [16, 8], strides = [1, 1]} : vector<16x96xf32> to vector<16x8xf32>
    %128 = vector.shape_cast %127 : vector<16x8xf32> to vector<8x2x8xf32>
    %129 = arith.truncf %128 : vector<8x2x8xf32> to vector<8x2x8xbf16>
    "tpu.trace_start"() <{level = 10 : i32, message = "pid,pjd->pij"}> : () -> ()
    %cst_38 = arith.constant dense<0.000000e+00> : vector<8x2x2xf32>
    %130 = tpu.matmul %123, %126, %cst_38 {dimension_numbers = #tpu.dot_dimension_numbers<[2], [2], [1], [1], [0, 0, 0, 1, 1, 1], [0], [0]>} : vector<8x2x8xbf16>, vector<8x2x8xbf16>, vector<8x2x2xf32> -> vector<8x2x2xf32>
    "tpu.trace_stop"() : () -> ()
    %cst_39 = arith.constant 0.353553385 : f32
    %131 = vector.broadcast %cst_39 : f32 to vector<8x2x2xf32>
    %132 = arith.mulf %130, %131 : vector<8x2x2xf32>
    %cst_40 = arith.constant dense<0xFF800000> : vector<8x2xf32>
    %133 = vector.multi_reduction <maximumf>, %132, %cst_40 [2] : vector<8x2x2xf32> to vector<8x2xf32>
    %134 = vector.shape_cast %133 : vector<8x2xf32> to vector<8x2x1xf32>
    %135 = vector.broadcast %134 : vector<8x2x1xf32> to vector<8x2x2xf32>
    %136 = arith.subf %132, %135 : vector<8x2x2xf32>
    %137 = math.exp %136 : vector<8x2x2xf32>
    %cst_41 = arith.constant dense<0.000000e+00> : vector<8x2xf32>
    %138 = vector.multi_reduction <add>, %137, %cst_41 [2] : vector<8x2x2xf32> to vector<8x2xf32>
    %139 = vector.shape_cast %138 : vector<8x2xf32> to vector<8x2x1xf32>
    %140 = tpu.reciprocal %139 {approx = true} : vector<8x2x1xf32> -> vector<8x2x1xf32>
    %141 = vector.broadcast %140 : vector<8x2x1xf32> to vector<8x2x2xf32>
    %142 = arith.mulf %137, %141 : vector<8x2x2xf32>
    %143 = arith.truncf %142 : vector<8x2x2xf32> to vector<8x2x2xbf16>
    "tpu.trace_start"() <{level = 10 : i32, message = "pij,pjd->pid"}> : () -> ()
    %cst_42 = arith.constant dense<0.000000e+00> : vector<8x2x8xf32>
    %144 = tpu.matmul %143, %129, %cst_42 {dimension_numbers = #tpu.dot_dimension_numbers<[2], [1], [1], [2], [0, 0, 0, 1, 1, 2], [0], [0]>} : vector<8x2x2xbf16>, vector<8x2x8xbf16>, vector<8x2x8xf32> -> vector<8x2x8xf32>
    "tpu.trace_stop"() : () -> ()
    %145 = vector.shape_cast %144 : vector<8x2x8xf32> to vector<16x8xf32>
    %146 = arith.truncf %145 : vector<16x8xf32> to vector<16x8xbf16>
    %c24 = arith.constant 24 : index
    %c0_43 = arith.constant 0 : index
    %147 = vector.load %arg6[%c24, %c0_43] : memref<32x32xbf16, #tpu.memory_space<vmem>>, vector<8x32xbf16>
    %cst_44 = arith.constant dense<0.000000e+00> : vector<16x32xf32>
    %148 = tpu.matmul %146, %147, %cst_44 {dimension_numbers = #tpu.dot_dimension_numbers<[1], [0], [0], [1], [0, 0, 1, 1], [], []>} : vector<16x8xbf16>, vector<8x32xbf16>, vector<16x32xf32> -> vector<16x32xf32>
    %149 = arith.addf %120, %148 : vector<16x32xf32>
    %cst_45 = arith.constant dense<0.000000e+00> : vector<16xf32>
    %150 = vector.multi_reduction <add>, %149, %cst_45 [1] : vector<16x32xf32> to vector<16xf32>
    %151 = vector.shape_cast %150 : vector<16xf32> to vector<16x1xf32>
    %cst_46 = arith.constant 3.200000e+01 : f32
    %152 = vector.broadcast %cst_46 : f32 to vector<16x1xf32>
    %153 = arith.divf %151, %152 : vector<16x1xf32>
    %154 = vector.broadcast %153 : vector<16x1xf32> to vector<16x32xf32>
    %155 = arith.subf %149, %154 : vector<16x32xf32>
    %156 = arith.mulf %155, %155 : vector<16x32xf32>
    %cst_47 = arith.constant dense<0.000000e+00> : vector<16xf32>
    %157 = vector.multi_reduction <add>, %156, %cst_47 [1] : vector<16x32xf32> to vector<16xf32>
    %158 = vector.shape_cast %157 : vector<16xf32> to vector<16x1xf32>
    %cst_48 = arith.constant 3.200000e+01 : f32
    %159 = vector.broadcast %cst_48 : f32 to vector<16x1xf32>
    %160 = arith.divf %158, %159 : vector<16x1xf32>
    %161 = vector.broadcast %153 : vector<16x1xf32> to vector<16x32xf32>
    %162 = arith.subf %149, %161 : vector<16x32xf32>
    %cst_49 = arith.constant 9.99999974E-6 : f32
    %163 = vector.broadcast %cst_49 : f32 to vector<16x1xf32>
    %164 = arith.addf %160, %163 : vector<16x1xf32>
    %165 = math.rsqrt %164 : vector<16x1xf32>
    %166 = vector.broadcast %165 : vector<16x1xf32> to vector<16x32xf32>
    %167 = arith.mulf %162, %166 : vector<16x32xf32>
    %168 = vector.broadcast %1 : vector<1x32xf32> to vector<16x32xf32>
    %169 = arith.mulf %167, %168 : vector<16x32xf32>
    %170 = vector.broadcast %2 : vector<1x32xf32> to vector<16x32xf32>
    %171 = arith.addf %169, %170 : vector<16x32xf32>
    %172 = arith.truncf %171 : vector<16x32xf32> to vector<16x32xbf16>
    %c0_50 = arith.constant 0 : index
    %c0_51 = arith.constant 0 : index
    %173 = vector.load %arg11[%c0_50, %c0_51] : memref<1x32xf32, #tpu.memory_space<vmem>>, vector<1x32xf32>
    %174 = vector.broadcast %173 : vector<1x32xf32> to vector<16x32xf32>
    %175 = arith.addf %149, %174 : vector<16x32xf32>
    %c0_52 = arith.constant 0 : index
    %c0_53 = arith.constant 0 : index
    %176 = vector.load %arg8[%c0_52, %c0_53] : memref<32x128xbf16, #tpu.memory_space<vmem>>, vector<32x128xbf16>
    %cst_54 = arith.constant dense<0.000000e+00> : vector<16x128xf32>
    %177 = tpu.matmul %172, %176, %cst_54 {dimension_numbers = #tpu.dot_dimension_numbers<[1], [0], [0], [1], [0, 0, 1, 1], [], []>} : vector<16x32xbf16>, vector<32x128xbf16>, vector<16x128xf32> -> vector<16x128xf32>
    %c0_55 = arith.constant 0 : index
    %c0_56 = arith.constant 0 : index
    %178 = vector.load %arg9[%c0_55, %c0_56] : memref<1x128xf32, #tpu.memory_space<vmem>>, vector<1x128xf32>
    %179 = vector.broadcast %178 : vector<1x128xf32> to vector<16x128xf32>
    %180 = arith.addf %177, %179 : vector<16x128xf32>
    %cst_57 = arith.constant 5.000000e-01 : f32
    %181 = vector.broadcast %cst_57 : f32 to vector<16x128xf32>
    %182 = arith.mulf %181, %180 : vector<16x128xf32>
    %cst_58 = arith.constant 4.471500e-02 : f32
    %183 = vector.broadcast %cst_58 : f32 to vector<16x128xf32>
    %184 = arith.mulf %183, %180 : vector<16x128xf32>
    %185 = arith.mulf %184, %180 : vector<16x128xf32>
    %186 = arith.mulf %185, %180 : vector<16x128xf32>
    %187 = arith.addf %180, %186 : vector<16x128xf32>
    %cst_59 = arith.constant 0.797884583 : f32
    %188 = vector.broadcast %cst_59 : f32 to vector<16x128xf32>
    %189 = arith.mulf %188, %187 : vector<16x128xf32>
    %190 = math.tanh %189 : vector<16x128xf32>
    %cst_60 = arith.constant 1.000000e+00 : f32
    %191 = vector.broadcast %cst_60 : f32 to vector<16x128xf32>
    %192 = arith.addf %191, %190 : vector<16x128xf32>
    %193 = arith.mulf %182, %192 : vector<16x128xf32>
    %194 = arith.truncf %193 : vector<16x128xf32> to vector<16x128xbf16>
    %c0_61 = arith.constant 0 : index
    %c0_62 = arith.constant 0 : index
    %195 = vector.load %arg10[%c0_61, %c0_62] : memref<128x32xbf16, #tpu.memory_space<vmem>>, vector<128x32xbf16>
    %cst_63 = arith.constant dense<0.000000e+00> : vector<16x32xf32>
    %196 = tpu.matmul %194, %195, %cst_63 {dimension_numbers = #tpu.dot_dimension_numbers<[1], [0], [0], [1], [0, 0, 1, 1], [], []>} : vector<16x128xbf16>, vector<128x32xbf16>, vector<16x32xf32> -> vector<16x32xf32>
    %197 = arith.addf %175, %196 : vector<16x32xf32>
    %c0_64 = arith.constant 0 : index
    %c0_65 = arith.constant 0 : index
    %198 = vector.load %arg12[%c0_64, %c0_65] : memref<16x32xf32, #tpu.memory_space<vmem>>, vector<16x32xf32>
    tpu.vector_store %arg12[%c0_64, %c0_65], %197 {strides = array<i32>} : memref<16x32xf32, #tpu.memory_space<vmem>>, vector<16x32xf32>,
    return
  }
  func.func @transform_0(%arg0: i32) -> (i32, i32) {
    %c0_i32 = arith.constant 0 : i32
    %c0_i32_0 = arith.constant 0 : i32
    return %arg0, %c0_i32 : i32, i32
  }
  func.func @transform_1(%arg0: i32) -> (i32, i32) {
    %c0_i32 = arith.constant 0 : i32
    %c0_i32_0 = arith.constant 0 : i32
    %c0_i32_1 = arith.constant 0 : i32
    return %c0_i32, %c0_i32_0 : i32, i32
  }
  func.func @transform_2(%arg0: i32) -> (i32, i32) {
    %c0_i32 = arith.constant 0 : i32
    %c0_i32_0 = arith.constant 0 : i32
    %c0_i32_1 = arith.constant 0 : i32
    return %c0_i32, %c0_i32_0 : i32, i32
  }
  func.func @transform_3(%arg0: i32) -> (i32, i32) {
    %c0_i32 = arith.constant 0 : i32
    %c0_i32_0 = arith.constant 0 : i32
    %c0_i32_1 = arith.constant 0 : i32
    return %c0_i32, %c0_i32_0 : i32, i32
  }
  func.func @transform_4(%arg0: i32) -> (i32, i32) {
    %c0_i32 = arith.constant 0 : i32
    %c0_i32_0 = arith.constant 0 : i32
    %c0_i32_1 = arith.constant 0 : i32
    return %c0_i32, %c0_i32_0 : i32, i32
  }
  func.func @transform_5(%arg0: i32) -> (i32, i32) {
    %c0_i32 = arith.constant 0 : i32
    %c0_i32_0 = arith.constant 0 : i32
    %c0_i32_1 = arith.constant 0 : i32
    return %c0_i32, %c0_i32_0 : i32, i32
  }
  func.func @transform_6(%arg0: i32) -> (i32, i32) {
    %c0_i32 = arith.constant 0 : i32
    %c0_i32_0 = arith.constant 0 : i32
    %c0_i32_1 = arith.constant 0 : i32
    return %c0_i32, %c0_i32_0 : i32, i32
  }
  func.func @transform_7(%arg0: i32) -> (i32, i32) {
    %c0_i32 = arith.constant 0 : i32
    %c0_i32_0 = arith.constant 0 : i32
    %c0_i32_1 = arith.constant 0 : i32
    return %c0_i32, %c0_i32_0 : i32, i32
  }
  func.func @transform_8(%arg0: i32) -> (i32, i32) {
    %c0_i32 = arith.constant 0 : i32
    %c0_i32_0 = arith.constant 0 : i32
    %c0_i32_1 = arith.constant 0 : i32
    return %c0_i32, %c0_i32_0 : i32, i32
  }
  func.func @transform_9(%arg0: i32) -> (i32, i32) {
    %c0_i32 = arith.constant 0 : i32
    %c0_i32_0 = arith.constant 0 : i32
    %c0_i32_1 = arith.constant 0 : i32
    return %c0_i32, %c0_i32_0 : i32, i32
  }
  func.func @transform_10(%arg0: i32) -> (i32, i32) {
    %c0_i32 = arith.constant 0 : i32
    %c0_i32_0 = arith.constant 0 : i32
    %c0_i32_1 = arith.constant 0 : i32
    return %c0_i32, %c0_i32_0 : i32, i32
  }
  func.func @transform_11(%arg0: i32) -> (i32, i32) {
    %c0_i32 = arith.constant 0 : i32
    %c0_i32_0 = arith.constant 0 : i32
    return %arg0, %c0_i32 : i32, i32
  }
}

module attributes {stable_mosaic.version = 11 : i64} {
  func.func @encoder_block_kernel(%arg0: i32, %arg1: memref<16x32xf32, #tpu.memory_space<vmem>>, %arg2: memref<1x32xf32, #tpu.memory_space<vmem>>, %arg3: memref<1x32xf32, #tpu.memory_space<vmem>>, %arg4: memref<32x96xbf16, #tpu.memory_space<vmem>>, %arg5: memref<1x96xf32, #tpu.memory_space<vmem>>, %arg6: memref<32x32xbf16, #tpu.memory_space<vmem>>, %arg7: memref<1x32xf32, #tpu.memory_space<vmem>>, %arg8: memref<32x128xbf16, #tpu.memory_space<vmem>>, %arg9: memref<1x128xf32, #tpu.memory_space<vmem>>, %arg10: memref<128x32xbf16, #tpu.memory_space<vmem>>, %arg11: memref<1x32xf32, #tpu.memory_space<vmem>>, %arg12: memref<16x32xf32, #tpu.memory_space<vmem>>) attributes {dimension_semantics = [#tpu.dimension_semantics<parallel>], iteration_bounds = array<i64: 2>, scalar_prefetch = 0 : i64, scratch_operands = 0 : i64, tpu.core_type = #tpu.core_type<tc>, window_params = [{transform_indices = @transform_0, window_bounds = array<i64: 16, 32>}, {pipeline_mode = #tpu.pipeline_mode<synchronous>, transform_indices = @transform_1, window_bounds = array<i64: 1, 32>}, {pipeline_mode = #tpu.pipeline_mode<synchronous>, transform_indices = @transform_2, window_bounds = array<i64: 1, 32>}, {pipeline_mode = #tpu.pipeline_mode<synchronous>, transform_indices = @transform_3, window_bounds = array<i64: 32, 96>}, {pipeline_mode = #tpu.pipeline_mode<synchronous>, transform_indices = @transform_4, window_bounds = array<i64: 1, 96>}, {pipeline_mode = #tpu.pipeline_mode<synchronous>, transform_indices = @transform_5, window_bounds = array<i64: 32, 32>}, {pipeline_mode = #tpu.pipeline_mode<synchronous>, transform_indices = @transform_6, window_bounds = array<i64: 1, 32>}, {pipeline_mode = #tpu.pipeline_mode<synchronous>, transform_indices = @transform_7, window_bounds = array<i64: 32, 128>}, {pipeline_mode = #tpu.pipeline_mode<synchronous>, transform_indices = @transform_8, window_bounds = array<i64: 1, 128>}, {pipeline_mode = #tpu.pipeline_mode<synchronous>, transform_indices = @transform_9, window_bounds = array<i64: 128, 32>}, {pipeline_mode = #tpu.pipeline_mode<synchronous>, transform_indices = @transform_10, window_bounds = array<i64: 1, 32>}, {transform_indices = @transform_11, window_bounds = array<i64: 16, 32>}]} {
    %c0 = arith.constant 0 : index
    %c0_0 = arith.constant 0 : index
    %0 = vector.load %arg1[%c0, %c0_0] : memref<16x32xf32, #tpu.memory_space<vmem>>, vector<16x32xf32>
    %c0_1 = arith.constant 0 : index
    %c0_2 = arith.constant 0 : index
    %1 = vector.load %arg2[%c0_1, %c0_2] : memref<1x32xf32, #tpu.memory_space<vmem>>, vector<1x32xf32>
    %c0_3 = arith.constant 0 : index
    %c0_4 = arith.constant 0 : index
    %2 = vector.load %arg3[%c0_3, %c0_4] : memref<1x32xf32, #tpu.memory_space<vmem>>, vector<1x32xf32>
    %cst = arith.constant dense<0.000000e+00> : vector<16xf32>
    %3 = vector.multi_reduction <add>, %0, %cst [1] : vector<16x32xf32> to vector<16xf32>
    %4 = vector.shape_cast %3 : vector<16xf32> to vector<16x1xf32>
    %cst_5 = arith.constant 3.200000e+01 : f32
    %5 = vector.broadcast %cst_5 : f32 to vector<16x1xf32>
    %6 = arith.divf %4, %5 : vector<16x1xf32>
    %7 = vector.broadcast %6 : vector<16x1xf32> to vector<16x32xf32>
    %8 = arith.subf %0, %7 : vector<16x32xf32>
    %9 = arith.mulf %8, %8 : vector<16x32xf32>
    %cst_6 = arith.constant dense<0.000000e+00> : vector<16xf32>
    %10 = vector.multi_reduction <add>, %9, %cst_6 [1] : vector<16x32xf32> to vector<16xf32>
    %11 = vector.shape_cast %10 : vector<16xf32> to vector<16x1xf32>
    %cst_7 = arith.constant 3.200000e+01 : f32
    %12 = vector.broadcast %cst_7 : f32 to vector<16x1xf32>
    %13 = arith.divf %11, %12 : vector<16x1xf32>
    %14 = vector.broadcast %6 : vector<16x1xf32> to vector<16x32xf32>
    %15 = arith.subf %0, %14 : vector<16x32xf32>
    %cst_8 = arith.constant 9.99999974E-6 : f32
    %16 = vector.broadcast %cst_8 : f32 to vector<16x1xf32>
    %17 = arith.addf %13, %16 : vector<16x1xf32>
    %18 = math.rsqrt %17 : vector<16x1xf32>
    %19 = vector.broadcast %18 : vector<16x1xf32> to vector<16x32xf32>
    %20 = arith.mulf %15, %19 : vector<16x32xf32>
    %21 = vector.broadcast %1 : vector<1x32xf32> to vector<16x32xf32>
    %22 = arith.mulf %20, %21 : vector<16x32xf32>
    %23 = vector.broadcast %2 : vector<1x32xf32> to vector<16x32xf32>
    %24 = arith.addf %22, %23 : vector<16x32xf32>
    %25 = arith.truncf %24 : vector<16x32xf32> to vector<16x32xbf16>
    %c0_9 = arith.constant 0 : index
    %c0_10 = arith.constant 0 : index
    %26 = vector.load %arg4[%c0_9, %c0_10] : memref<32x96xbf16, #tpu.memory_space<vmem>>, vector<32x96xbf16>
    %cst_11 = arith.constant dense<0.000000e+00> : vector<16x96xf32>
    %27 = tpu.matmul %25, %26, %cst_11 {dimension_numbers = #tpu.dot_dimension_numbers<[1], [0], [0], [1], [0, 0, 1, 1], [], []>} : vector<16x32xbf16>, vector<32x96xbf16>, vector<16x96xf32> -> vector<16x96xf32>
    %c0_12 = arith.constant 0 : index
    %c0_13 = arith.constant 0 : index
    %28 = vector.load %arg5[%c0_12, %c0_13] : memref<1x96xf32, #tpu.memory_space<vmem>>, vector<1x96xf32>
    %29 = vector.broadcast %28 : vector<1x96xf32> to vector<16x96xf32>
    %30 = arith.addf %27, %29 : vector<16x96xf32>
    %c0_14 = arith.constant 0 : index
    %c0_15 = arith.constant 0 : index
    %31 = vector.load %arg7[%c0_14, %c0_15] : memref<1x32xf32, #tpu.memory_space<vmem>>, vector<1x32xf32>
    %32 = vector.broadcast %31 : vector<1x32xf32> to vector<16x32xf32>
    %33 = arith.addf %0, %32 : vector<16x32xf32>
    %34 = vector.extract_strided_slice %30 {offsets = [0, 0], sizes = [16, 8], strides = [1, 1]} : vector<16x96xf32> to vector<16x8xf32>
    %35 = vector.shape_cast %34 : vector<16x8xf32> to vector<8x2x8xf32>
    %36 = arith.truncf %35 : vector<8x2x8xf32> to vector<8x2x8xbf16>
    %37 = vector.extract_strided_slice %30 {offsets = [0, 32], sizes = [16, 8], strides = [1, 1]} : vector<16x96xf32> to vector<16x8xf32>
    %38 = vector.shape_cast %37 : vector<16x8xf32> to vector<8x2x8xf32>
    %39 = arith.truncf %38 : vector<8x2x8xf32> to vector<8x2x8xbf16>
    %40 = vector.extract_strided_slice %30 {offsets = [0, 64], sizes = [16, 8], strides = [1, 1]} : vector<16x96xf32> to vector<16x8xf32>
    %41 = vector.shape_cast %40 : vector<16x8xf32> to vector<8x2x8xf32>
    %42 = arith.truncf %41 : vector<8x2x8xf32> to vector<8x2x8xbf16>
    "tpu.trace_start"() <{level = 10 : i32, message = "pid,pjd->pij"}> : () -> ()
    %cst_16 = arith.constant dense<0.000000e+00> : vector<8x2x2xf32>
    %43 = tpu.matmul %36, %39, %cst_16 {dimension_numbers = #tpu.dot_dimension_numbers<[2], [2], [1], [1], [0, 0, 0, 1, 1, 1], [0], [0]>} : vector<8x2x8xbf16>, vector<8x2x8xbf16>, vector<8x2x2xf32> -> vector<8x2x2xf32>
    "tpu.trace_stop"() : () -> ()
    %cst_17 = arith.constant 0.353553385 : f32
    %44 = vector.broadcast %cst_17 : f32 to vector<8x2x2xf32>
    %45 = arith.mulf %43, %44 : vector<8x2x2xf32>
    %cst_18 = arith.constant dense<0xFF800000> : vector<8x2xf32>
    %46 = vector.multi_reduction <maximumf>, %45, %cst_18 [2] : vector<8x2x2xf32> to vector<8x2xf32>
    %47 = vector.shape_cast %46 : vector<8x2xf32> to vector<8x2x1xf32>
    %48 = vector.broadcast %47 : vector<8x2x1xf32> to vector<8x2x2xf32>
    %49 = arith.subf %45, %48 : vector<8x2x2xf32>
    %50 = math.exp %49 : vector<8x2x2xf32>
    %cst_19 = arith.constant dense<0.000000e+00> : vector<8x2xf32>
    %51 = vector.multi_reduction <add>, %50, %cst_19 [2] : vector<8x2x2xf32> to vector<8x2xf32>
    %52 = vector.shape_cast %51 : vector<8x2xf32> to vector<8x2x1xf32>
    %53 = tpu.reciprocal %52 {approx = true} : vector<8x2x1xf32> -> vector<8x2x1xf32>
    %54 = vector.broadcast %53 : vector<8x2x1xf32> to vector<8x2x2xf32>
    %55 = arith.mulf %50, %54 : vector<8x2x2xf32>
    %56 = arith.truncf %55 : vector<8x2x2xf32> to vector<8x2x2xbf16>
    "tpu.trace_start"() <{level = 10 : i32, message = "pij,pjd->pid"}> : () -> ()
    %cst_20 = arith.constant dense<0.000000e+00> : vector<8x2x8xf32>
    %57 = tpu.matmul %56, %42, %cst_20 {dimension_numbers = #tpu.dot_dimension_numbers<[2], [1], [1], [2], [0, 0, 0, 1, 1, 2], [0], [0]>} : vector<8x2x2xbf16>, vector<8x2x8xbf16>, vector<8x2x8xf32> -> vector<8x2x8xf32>
    "tpu.trace_stop"() : () -> ()
    %58 = vector.shape_cast %57 : vector<8x2x8xf32> to vector<16x8xf32>
    %59 = arith.truncf %58 : vector<16x8xf32> to vector<16x8xbf16>
    %c0_21 = arith.constant 0 : index
    %c0_22 = arith.constant 0 : index
    %60 = vector.load %arg6[%c0_21, %c0_22] : memref<32x32xbf16, #tpu.memory_space<vmem>>, vector<8x32xbf16>
    %cst_23 = arith.constant dense<0.000000e+00> : vector<16x32xf32>
    %61 = tpu.matmul %59, %60, %cst_23 {dimension_numbers = #tpu.dot_dimension_numbers<[1], [0], [0], [1], [0, 0, 1, 1], [], []>} : vector<16x8xbf16>, vector<8x32xbf16>, vector<16x32xf32> -> vector<16x32xf32>
    %62 = arith.addf %33, %61 : vector<16x32xf32>
    %63 = vector.extract_strided_slice %30 {offsets = [0, 8], sizes = [16, 8], strides = [1, 1]} : vector<16x96xf32> to vector<16x8xf32>
    %64 = vector.shape_cast %63 : vector<16x8xf32> to vector<8x2x8xf32>
    %65 = arith.truncf %64 : vector<8x2x8xf32> to vector<8x2x8xbf16>
    %66 = vector.extract_strided_slice %30 {offsets = [0, 40], sizes = [16, 8], strides = [1, 1]} : vector<16x96xf32> to vector<16x8xf32>
    %67 = vector.shape_cast %66 : vector<16x8xf32> to vector<8x2x8xf32>
    %68 = arith.truncf %67 : vector<8x2x8xf32> to vector<8x2x8xbf16>
    %69 = vector.extract_strided_slice %30 {offsets = [0, 72], sizes = [16, 8], strides = [1, 1]} : vector<16x96xf32> to vector<16x8xf32>
    %70 = vector.shape_cast %69 : vector<16x8xf32> to vector<8x2x8xf32>
    %71 = arith.truncf %70 : vector<8x2x8xf32> to vector<8x2x8xbf16>
    "tpu.trace_start"() <{level = 10 : i32, message = "pid,pjd->pij"}> : () -> ()
    %cst_24 = arith.constant dense<0.000000e+00> : vector<8x2x2xf32>
    %72 = tpu.matmul %65, %68, %cst_24 {dimension_numbers = #tpu.dot_dimension_numbers<[2], [2], [1], [1], [0, 0, 0, 1, 1, 1], [0], [0]>} : vector<8x2x8xbf16>, vector<8x2x8xbf16>, vector<8x2x2xf32> -> vector<8x2x2xf32>
    "tpu.trace_stop"() : () -> ()
    %cst_25 = arith.constant 0.353553385 : f32
    %73 = vector.broadcast %cst_25 : f32 to vector<8x2x2xf32>
    %74 = arith.mulf %72, %73 : vector<8x2x2xf32>
    %cst_26 = arith.constant dense<0xFF800000> : vector<8x2xf32>
    %75 = vector.multi_reduction <maximumf>, %74, %cst_26 [2] : vector<8x2x2xf32> to vector<8x2xf32>
    %76 = vector.shape_cast %75 : vector<8x2xf32> to vector<8x2x1xf32>
    %77 = vector.broadcast %76 : vector<8x2x1xf32> to vector<8x2x2xf32>
    %78 = arith.subf %74, %77 : vector<8x2x2xf32>
    %79 = math.exp %78 : vector<8x2x2xf32>
    %cst_27 = arith.constant dense<0.000000e+00> : vector<8x2xf32>
    %80 = vector.multi_reduction <add>, %79, %cst_27 [2] : vector<8x2x2xf32> to vector<8x2xf32>
    %81 = vector.shape_cast %80 : vector<8x2xf32> to vector<8x2x1xf32>
    %82 = tpu.reciprocal %81 {approx = true} : vector<8x2x1xf32> -> vector<8x2x1xf32>
    %83 = vector.broadcast %82 : vector<8x2x1xf32> to vector<8x2x2xf32>
    %84 = arith.mulf %79, %83 : vector<8x2x2xf32>
    %85 = arith.truncf %84 : vector<8x2x2xf32> to vector<8x2x2xbf16>
    "tpu.trace_start"() <{level = 10 : i32, message = "pij,pjd->pid"}> : () -> ()
    %cst_28 = arith.constant dense<0.000000e+00> : vector<8x2x8xf32>
    %86 = tpu.matmul %85, %71, %cst_28 {dimension_numbers = #tpu.dot_dimension_numbers<[2], [1], [1], [2], [0, 0, 0, 1, 1, 2], [0], [0]>} : vector<8x2x2xbf16>, vector<8x2x8xbf16>, vector<8x2x8xf32> -> vector<8x2x8xf32>
    "tpu.trace_stop"() : () -> ()
    %87 = vector.shape_cast %86 : vector<8x2x8xf32> to vector<16x8xf32>
    %88 = arith.truncf %87 : vector<16x8xf32> to vector<16x8xbf16>
    %c8 = arith.constant 8 : index
    %c0_29 = arith.constant 0 : index
    %89 = vector.load %arg6[%c8, %c0_29] : memref<32x32xbf16, #tpu.memory_space<vmem>>, vector<8x32xbf16>
    %cst_30 = arith.constant dense<0.000000e+00> : vector<16x32xf32>
    %90 = tpu.matmul %88, %89, %cst_30 {dimension_numbers = #tpu.dot_dimension_numbers<[1], [0], [0], [1], [0, 0, 1, 1], [], []>} : vector<16x8xbf16>, vector<8x32xbf16>, vector<16x32xf32> -> vector<16x32xf32>
    %91 = arith.addf %62, %90 : vector<16x32xf32>
    %92 = vector.extract_strided_slice %30 {offsets = [0, 16], sizes = [16, 8], strides = [1, 1]} : vector<16x96xf32> to vector<16x8xf32>
    %93 = vector.shape_cast %92 : vector<16x8xf32> to vector<8x2x8xf32>
    %94 = arith.truncf %93 : vector<8x2x8xf32> to vector<8x2x8xbf16>
    %95 = vector.extract_strided_slice %30 {offsets = [0, 48], sizes = [16, 8], strides = [1, 1]} : vector<16x96xf32> to vector<16x8xf32>
    %96 = vector.shape_cast %95 : vector<16x8xf32> to vector<8x2x8xf32>
    %97 = arith.truncf %96 : vector<8x2x8xf32> to vector<8x2x8xbf16>
    %98 = vector.extract_strided_slice %30 {offsets = [0, 80], sizes = [16, 8], strides = [1, 1]} : vector<16x96xf32> to vector<16x8xf32>
    %99 = vector.shape_cast %98 : vector<16x8xf32> to vector<8x2x8xf32>
    %100 = arith.truncf %99 : vector<8x2x8xf32> to vector<8x2x8xbf16>
    "tpu.trace_start"() <{level = 10 : i32, message = "pid,pjd->pij"}> : () -> ()
    %cst_31 = arith.constant dense<0.000000e+00> : vector<8x2x2xf32>
    %101 = tpu.matmul %94, %97, %cst_31 {dimension_numbers = #tpu.dot_dimension_numbers<[2], [2], [1], [1], [0, 0, 0, 1, 1, 1], [0], [0]>} : vector<8x2x8xbf16>, vector<8x2x8xbf16>, vector<8x2x2xf32> -> vector<8x2x2xf32>
    "tpu.trace_stop"() : () -> ()
    %cst_32 = arith.constant 0.353553385 : f32
    %102 = vector.broadcast %cst_32 : f32 to vector<8x2x2xf32>
    %103 = arith.mulf %101, %102 : vector<8x2x2xf32>
    %cst_33 = arith.constant dense<0xFF800000> : vector<8x2xf32>
    %104 = vector.multi_reduction <maximumf>, %103, %cst_33 [2] : vector<8x2x2xf32> to vector<8x2xf32>
    %105 = vector.shape_cast %104 : vector<8x2xf32> to vector<8x2x1xf32>
    %106 = vector.broadcast %105 : vector<8x2x1xf32> to vector<8x2x2xf32>
    %107 = arith.subf %103, %106 : vector<8x2x2xf32>
    %108 = math.exp %107 : vector<8x2x2xf32>
    %cst_34 = arith.constant dense<0.000000e+00> : vector<8x2xf32>
    %109 = vector.multi_reduction <add>, %108, %cst_34 [2] : vector<8x2x2xf32> to vector<8x2xf32>
    %110 = vector.shape_cast %109 : vector<8x2xf32> to vector<8x2x1xf32>
    %111 = tpu.reciprocal %110 {approx = true} : vector<8x2x1xf32> -> vector<8x2x1xf32>
    %112 = vector.broadcast %111 : vector<8x2x1xf32> to vector<8x2x2xf32>
    %113 = arith.mulf %108, %112 : vector<8x2x2xf32>
    %114 = arith.truncf %113 : vector<8x2x2xf32> to vector<8x2x2xbf16>
    "tpu.trace_start"() <{level = 10 : i32, message = "pij,pjd->pid"}> : () -> ()
    %cst_35 = arith.constant dense<0.000000e+00> : vector<8x2x8xf32>
    %115 = tpu.matmul %114, %100, %cst_35 {dimension_numbers = #tpu.dot_dimension_numbers<[2], [1], [1], [2], [0, 0, 0, 1, 1, 2], [0], [0]>} : vector<8x2x2xbf16>, vector<8x2x8xbf16>, vector<8x2x8xf32> -> vector<8x2x8xf32>
    "tpu.trace_stop"() : () -> ()
    %116 = vector.shape_cast %115 : vector<8x2x8xf32> to vector<16x8xf32>
    %117 = arith.truncf %116 : vector<16x8xf32> to vector<16x8xbf16>
    %c16 = arith.constant 16 : index
    %c0_36 = arith.constant 0 : index
    %118 = vector.load %arg6[%c16, %c0_36] : memref<32x32xbf16, #tpu.memory_space<vmem>>, vector<8x32xbf16>
    %cst_37 = arith.constant dense<0.000000e+00> : vector<16x32xf32>
    %119 = tpu.matmul %117, %118, %cst_37 {dimension_numbers = #tpu.dot_dimension_numbers<[1], [0], [0], [1], [0, 0, 1, 1], [], []>} : vector<16x8xbf16>, vector<8x32xbf16>, vector<16x32xf32> -> vector<16x32xf32>
    %120 = arith.addf %91, %119 : vector<16x32xf32>
    %121 = vector.extract_strided_slice %30 {offsets = [0, 24], sizes = [16, 8], strides = [1, 1]} : vector<16x96xf32> to vector<16x8xf32>
    %122 = vector.shape_cast %121 : vector<16x8xf32> to vector<8x2x8xf32>
    %123 = arith.truncf %122 : vector<8x2x8xf32> to vector<8x2x8xbf16>
    %124 = vector.extract_strided_slice %30 {offsets = [0, 56], sizes = [16, 8], strides = [1, 1]} : vector<16x96xf32> to vector<16x8xf32>
    %125 = vector.shape_cast %124 : vector<16x8xf32> to vector<8x2x8xf32>
    %126 = arith.truncf %125 : vector<8x2x8xf32> to vector<8x2x8xbf16>
    %127 = vector.extract_strided_slice %30 {offsets = [0, 88], sizes = [16, 8], strides = [1, 1]} : vector<16x96xf32> to vector<16x8xf32>
    %128 = vector.shape_cast %127 : vector<16x8xf32> to vector<8x2x8xf32>
    %129 = arith.truncf %128 : vector<8x2x8xf32> to vector<8x2x8xbf16>
    "tpu.trace_start"() <{level = 10 : i32, message = "pid,pjd->pij"}> : () -> ()
    %cst_38 = arith.constant dense<0.000000e+00> : vector<8x2x2xf32>
    %130 = tpu.matmul %123, %126, %cst_38 {dimension_numbers = #tpu.dot_dimension_numbers<[2], [2], [1], [1], [0, 0, 0, 1, 1, 1], [0], [0]>} : vector<8x2x8xbf16>, vector<8x2x8xbf16>, vector<8x2x2xf32> -> vector<8x2x2xf32>
    "tpu.trace_stop"() : () -> ()
    %cst_39 = arith.constant 0.353553385 : f32
    %131 = vector.broadcast %cst_39 : f32 to vector<8x2x2xf32>
    %132 = arith.mulf %130, %131 : vector<8x2x2xf32>
    %cst_40 = arith.constant dense<0xFF800000> : vector<8x2xf32>
    %133 = vector.multi_reduction <maximumf>, %132, %cst_40 [2] : vector<8x2x2xf32> to vector<8x2xf32>
    %134 = vector.shape_cast %133 : vector<8x2xf32> to vector<8x2x1xf32>
    %135 = vector.broadcast %134 : vector<8x2x1xf32> to vector<8x2x2xf32>
    %136 = arith.subf %132, %135 : vector<8x2x2xf32>
    %137 = math.exp %136 : vector<8x2x2xf32>
    %cst_41 = arith.constant dense<0.000000e+00> : vector<8x2xf32>
    %138 = vector.multi_reduction <add>, %137, %cst_41 [2] : vector<8x2x2xf32> to vector<8x2xf32>
    %139 = vector.shape_cast %138 : vector<8x2xf32> to vector<8x2x1xf32>
    %140 = tpu.reciprocal %139 {approx = true} : vector<8x2x1xf32> -> vector<8x2x1xf32>
    %141 = vector.broadcast %140 : vector<8x2x1xf32> to vector<8x2x2xf32>
    %142 = arith.mulf %137, %141 : vector<8x2x2xf32>
    %143 = arith.truncf %142 : vector<8x2x2xf32> to vector<8x2x2xbf16>
    "tpu.trace_start"() <{level = 10 : i32, message = "pij,pjd->pid"}> : () -> ()
    %cst_42 = arith.constant dense<0.000000e+00> : vector<8x2x8xf32>
    %144 = tpu.matmul %143, %129, %cst_42 {dimension_numbers = #tpu.dot_dimension_numbers<[2], [1], [1], [2], [0, 0, 0, 1, 1, 2], [0], [0]>} : vector<8x2x2xbf16>, vector<8x2x8xbf16>, vector<8x2x8xf32> -> vector<8x2x8xf32>
    "tpu.trace_stop"() : () -> ()
    %145 = vector.shape_cast %144 : vector<8x2x8xf32> to vector<16x8xf32>
    %146 = arith.truncf %145 : vector<16x8xf32> to vector<16x8xbf16>
    %c24 = arith.constant 24 : index
    %c0_43 = arith.constant 0 : index
    %147 = vector.load %arg6[%c24, %c0_43] : memref<32x32xbf16, #tpu.memory_space<vmem>>, vector<8x32xbf16>
    %cst_44 = arith.constant dense<0.000000e+00> : vector<16x32xf32>
    %148 = tpu.matmul %146, %147, %cst_44 {dimension_numbers = #tpu.dot_dimension_numbers<[1], [0], [0], [1], [0, 0, 1, 1], [], []>} : vector<16x8xbf16>, vector<8x32xbf16>, vector<16x32xf32> -> vector<16x32xf32>
    %149 = arith.addf %120, %148 : vector<16x32xf32>
    %cst_45 = arith.constant dense<0.000000e+00> : vector<16xf32>
    %150 = vector.multi_reduction <add>, %149, %cst_45 [1] : vector<16x32xf32> to vector<16xf32>
    %151 = vector.shape_cast %150 : vector<16xf32> to vector<16x1xf32>
    %cst_46 = arith.constant 3.200000e+01 : f32
    %152 = vector.broadcast %cst_46 : f32 to vector<16x1xf32>
    %153 = arith.divf %151, %152 : vector<16x1xf32>
    %154 = vector.broadcast %153 : vector<16x1xf32> to vector<16x32xf32>
    %155 = arith.subf %149, %154 : vector<16x32xf32>
    %156 = arith.mulf %155, %155 : vector<16x32xf32>
    %cst_47 = arith.constant dense<0.000000e+00> : vector<16xf32>
    %157 = vector.multi_reduction <add>, %156, %cst_47 [1] : vector<16x32xf32> to vector<16xf32>
    %158 = vector.shape_cast %157 : vector<16xf32> to vector<16x1xf32>
    %cst_48 = arith.constant 3.200000e+01 : f32
    %159 = vector.broadcast %cst_48 : f32 to vector<16x1xf32>
    %160 = arith.divf %158, %159 : vector<16x1xf32>
    %161 = vector.broadcast %153 : vector<16x1xf32> to vector<16x32xf32>
    %162 = arith.subf %149, %161 : vector<16x32xf32>
    %cst_49 = arith.constant 9.99999974E-6 : f32
    %163 = vector.broadcast %cst_49 : f32 to vector<16x1xf32>
    %164 = arith.addf %160, %163 : vector<16x1xf32>
    %165 = math.rsqrt %164 : vector<16x1xf32>
    %166 = vector.broadcast %165 : vector<16x1xf32> to vector<16x32xf32>
    %167 = arith.mulf %162, %166 : vector<16x32xf32>
    %168 = vector.broadcast %1 : vector<1x32xf32> to vector<16x32xf32>
    %169 = arith.mulf %167, %168 : vector<16x32xf32>
    %170 = vector.broadcast %2 : vector<1x32xf32> to vector<16x32xf32>
    %171 = arith.addf %169, %170 : vector<16x32xf32>
    %172 = arith.truncf %171 : vector<16x32xf32> to vector<16x32xbf16>
    %c0_50 = arith.constant 0 : index
    %c0_51 = arith.constant 0 : index
    %173 = vector.load %arg11[%c0_50, %c0_51] : memref<1x32xf32, #tpu.memory_space<vmem>>, vector<1x32xf32>
    %174 = vector.broadcast %173 : vector<1x32xf32> to vector<16x32xf32>
    %175 = arith.addf %149, %174 : vector<16x32xf32>
    %c0_52 = arith.constant 0 : index
    %c0_53 = arith.constant 0 : index
    %176 = vector.load %arg8[%c0_52, %c0_53] : memref<32x128xbf16, #tpu.memory_space<vmem>>, vector<32x128xbf16>
    %cst_54 = arith.constant dense<0.000000e+00> : vector<16x128xf32>
    %177 = tpu.matmul %172, %176, %cst_54 {dimension_numbers = #tpu.dot_dimension_numbers<[1], [0], [0], [1], [0, 0, 1, 1], [], []>} : vector<16x32xbf16>, vector<32x128xbf16>, vector<16x128xf32> -> vector<16x128xf32>
    %c0_55 = arith.constant 0 : index
    %c0_56 = arith.constant 0 : index
    %178 = vector.load %arg9[%c0_55, %c0_56] : memref<1x128xf32, #tpu.memory_space<vmem>>, vector<1x128xf32>
    %179 = vector.broadcast %178 : vector<1x128xf32> to vector<16x128xf32>
    %180 = arith.addf %177, %179 : vector<16x128xf32>
    %cst_57 = arith.constant 5.000000e-01 : f32
    %181 = vector.broadcast %cst_57 : f32 to vector<16x128xf32>
    %182 = arith.mulf %181, %180 : vector<16x128xf32>
    %cst_58 = arith.constant 4.471500e-02 : f32
    %183 = vector.broadcast %cst_58 : f32 to vector<16x128xf32>
    %184 = arith.mulf %183, %180 : vector<16x128xf32>
    %185 = arith.mulf %184, %180 : vector<16x128xf32>
    %186 = arith.mulf %185, %180 : vector<16x128xf32>
    %187 = arith.addf %180, %186 : vector<16x128xf32>
    %cst_59 = arith.constant 0.797884583 : f32
    %188 = vector.broadcast %cst_59 : f32 to vector<16x128xf32>
    %189 = arith.mulf %188, %187 : vector<16x128xf32>
    %190 = math.tanh %189 : vector<16x128xf32>
    %cst_60 = arith.constant 1.000000e+00 : f32
    %191 = vector.broadcast %cst_60 : f32 to vector<16x128xf32>
    %192 = arith.addf %191, %190 : vector<16x128xf32>
    %193 = arith.mulf %182, %192 : vector<16x128xf32>
    %194 = arith.truncf %193 : vector<16x128xf32> to vector<16x128xbf16>
    %c0_61 = arith.constant 0 : index
    %c0_62 = arith.constant 0 : index
    %195 = vector.load %arg10[%c0_61, %c0_62] : memref<128x32xbf16, #tpu.memory_space<vmem>>, vector<128x32xbf16>
    %cst_63 = arith.constant dense<0.000000e+00> : vector<16x32xf32>
    %196 = tpu.matmul %194, %195, %cst_63 {dimension_numbers = #tpu.dot_dimension_numbers<[1], [0], [0], [1], [0, 0, 1, 1], [], []>} : vector<16x128xbf16>, vector<128x32xbf16>, vector<16x32xf32> -> vector<16x32xf32>
    %197 = arith.addf %175, %196 : vector<16x32xf32>
    %c0_64 = arith.constant 0 : index
    %c0_65 = arith.constant 0 : index
    %198 = vector.load %arg12[%c0_64, %c0_65] : memref<16x32xf32, #tpu.memory_space<vmem>>, vector<16x32xf32>
    tpu.vector_store %arg12[%c0_64, %c0_65], %197 {strides = array<i32>} : memref<16x32xf32, #tpu.memory_space<vmem>>, vector<16x32xf32>,
    return
  }
  func.func @transform_0(%arg0: i32) -> (i32, i32) {
    %c0_i32 = arith.constant 0 : i32
    %c0_i32_0 = arith.constant 0 : i32
    return %arg0, %c0_i32 : i32, i32
  }
  func.func @transform_1(%arg0: i32) -> (i32, i32) {
    %c0_i32 = arith.constant 0 : i32
    %c0_i32_0 = arith.constant 0 : i32
    %c0_i32_1 = arith.constant 0 : i32
    return %c0_i32, %c0_i32_0 : i32, i32
  }
  func.func @transform_2(%arg0: i32) -> (i32, i32) {
    %c0_i32 = arith.constant 0 : i32
    %c0_i32_0 = arith.constant 0 : i32
    %c0_i32_1 = arith.constant 0 : i32
    return %c0_i32, %c0_i32_0 : i32, i32
  }
  func.func @transform_3(%arg0: i32) -> (i32, i32) {
    %c0_i32 = arith.constant 0 : i32
    %c0_i32_0 = arith.constant 0 : i32
    %c0_i32_1 = arith.constant 0 : i32
    return %c0_i32, %c0_i32_0 : i32, i32
  }
  func.func @transform_4(%arg0: i32) -> (i32, i32) {
    %c0_i32 = arith.constant 0 : i32
    %c0_i32_0 = arith.constant 0 : i32
    %c0_i32_1 = arith.constant 0 : i32
    return %c0_i32, %c0_i32_0 : i32, i32
  }
  func.func @transform_5(%arg0: i32) -> (i32, i32) {
    %c0_i32 = arith.constant 0 : i32
    %c0_i32_0 = arith.constant 0 : i32
    %c0_i32_1 = arith.constant 0 : i32
    return %c0_i32, %c0_i32_0 : i32, i32
  }
  func.func @transform_6(%arg0: i32) -> (i32, i32) {
    %c0_i32 = arith.constant 0 : i32
    %c0_i32_0 = arith.constant 0 : i32
    %c0_i32_1 = arith.constant 0 : i32
    return %c0_i32, %c0_i32_0 : i32, i32
  }
  func.func @transform_7(%arg0: i32) -> (i32, i32) {
    %c0_i32 = arith.constant 0 : i32
    %c0_i32_0 = arith.constant 0 : i32
    %c0_i32_1 = arith.constant 0 : i32
    return %c0_i32, %c0_i32_0 : i32, i32
  }
  func.func @transform_8(%arg0: i32) -> (i32, i32) {
    %c0_i32 = arith.constant 0 : i32
    %c0_i32_0 = arith.constant 0 : i32
    %c0_i32_1 = arith.constant 0 : i32
    return %c0_i32, %c0_i32_0 : i32, i32
  }
  func.func @transform_9(%arg0: i32) -> (i32, i32) {
    %c0_i32 = arith.constant 0 : i32
    %c0_i32_0 = arith.constant 0 : i32
    %c0_i32_1 = arith.constant 0 : i32
    return %c0_i32, %c0_i32_0 : i32, i32
  }
  func.func @transform_10(%arg0: i32) -> (i32, i32) {
    %c0_i32 = arith.constant 0 : i32
    %c0_i32_0 = arith.constant 0 : i32
    %c0_i32_1 = arith.constant 0 : i32
    return %c0_i32, %c0_i32_0 : i32, i32
  }
  func.func @transform_11(%arg0: i32) -> (i32, i32) {
    %c0_i32 = arith.constant 0 : i32
    %c0_i32_0 = arith.constant 0 : i32
    return %arg0, %c0_i32 : i32, i32
  }
}

</mosaic_0001>

<llo_original>
// kernel: transformer_encoder_block.1
$region0: #{transformer_encoder_block.1}
  #allocation0 [shape = 'u32[]', space=smem, size = 0x4, offset = 0x4, fixed_abs, tag = 'smem constant byte address 0x4 - core index']
  #allocation1 [shape = 'u32[144,128]{1,0:T(1,128)}', space=vmem, size = 0x12000, scoped, tag = 'internal scratch']
  %s0 = inlined_call_operand.vmem [shape: f32[32,32], index: 0, kind: input, shape index: {}]
  %s1 = inlined_call_operand.vmem [shape: f32[1,32], index: 1, kind: input, shape index: {}]
  %s2 = inlined_call_operand.vmem [shape: f32[1,32], index: 2, kind: input, shape index: {}]
  %s3 = inlined_call_operand.vmem [shape: bf16[32,96], index: 3, kind: input, shape index: {}]
  %s4 = inlined_call_operand.vmem [shape: f32[1,96], index: 4, kind: input, shape index: {}]
  %s5 = inlined_call_operand.vmem [shape: bf16[32,32], index: 5, kind: input, shape index: {}]
  %s6 = inlined_call_operand.vmem [shape: f32[1,32], index: 6, kind: input, shape index: {}]
  %s7 = inlined_call_operand.vmem [shape: bf16[32,128], index: 7, kind: input, shape index: {}]
  %s8 = inlined_call_operand.vmem [shape: f32[1,128], index: 8, kind: input, shape index: {}]
  %s9 = inlined_call_operand.vmem [shape: bf16[128,32], index: 9, kind: input, shape index: {}]
  %s10 = inlined_call_operand.vmem [shape: f32[1,32], index: 10, kind: input, shape index: {}]
  %s11 = inlined_call_operand.vmem [shape: f32[32,32], index: 11, kind: output, shape index: {}]
  %s12 = sld [smem:[#allocation0]]
  $region77: #{transformer_encoder_block.1} parent=0
    _
  %s14 = ssub.s32 1, %s12
  %s15 = scalar_select 0, %s14, %s12
  loop: start=0, step=1, limit=4
  $region2: #{transformer_encoder_block.1} parent=0 // loop_pre_header
    _
  $region3: #{transformer_encoder_block.1} parent=0 // loop_header
    %s17 = sphi 0, %s21
    %p18 = scmp.ge.s32.totalorder %s17, 4
    %s27 = sphi 0, %s29
    %s30 = sphi 0, %s27
    %s31 = sphi 0, %s30
    %s47 = sphi 0, %s31
    %s51 = sphi 0, %s51
    %s53 = sphi 0, %s51
    %s54 = sphi 0, %s53
    %s68 = sphi 0, %s54
    %s72 = sphi 0, %s72
    %s74 = sphi 0, %s72
    %s75 = sphi 0, %s74
    %s89 = sphi 0, %s75
    %s93 = sphi 0, %s93
    %s95 = sphi 0, %s93
    %s96 = sphi 0, %s95
    %s110 = sphi 0, %s96
    %s114 = sphi 0, %s114
    %s116 = sphi 0, %s114
    %s117 = sphi 0, %s116
    %s131 = sphi 0, %s117
    %s135 = sphi 0, %s135
    %s137 = sphi 0, %s135
    %s138 = sphi 0, %s137
    %s152 = sphi 0, %s138
    %s156 = sphi 0, %s156
    %s158 = sphi 0, %s156
    %s159 = sphi 0, %s158
    %s173 = sphi 0, %s159
    %s177 = sphi 0, %s177
    %s179 = sphi 0, %s177
    %s180 = sphi 0, %s179
    %s194 = sphi 0, %s180
    %s198 = sphi 0, %s198
    %s200 = sphi 0, %s198
    %s201 = sphi 0, %s200
    %s215 = sphi 0, %s201
    %s219 = sphi 0, %s219
    %s221 = sphi 0, %s219
    %s222 = sphi 0, %s221
    %s236 = sphi 0, %s222
    %s240 = sphi 0, %s240
    %s242 = sphi 0, %s240
    %s243 = sphi 0, %s242
    %s257 = sphi 0, %s243
    %s263 = sphi 0, %s265
    %s266 = sphi 0, %s263
    %s267 = sphi 0, %s266
    %s283 = sphi 0, %s267
  $region4: #{transformer_encoder_block.1} parent=0 // loop_header_branch
    %20 = sbr.rel (%p18) target = $region8
  $region5: #{transformer_encoder_block.1} parent=0 // loop_body
    %s22 = ssub.s32 %s17, 1
    %s23 = ssub.s32 %s17, 2
    %s24 = sadd.s32 %s17, 1
    %s25 = ssub.s32 %s17, %s24
    %p26 = scmp.eq.s32.totalorder %s25, 0
    %s28 = sadd.s32 %s27, 1
    %s29 = scalar_select %p26, %s27, %s28
    %p32 = pneg %p26
    %p33 = scmp.eq.s32.totalorder %s17, 1
    %p34 = por %p32, %p33
    %p35 = scmp.ne.s32.totalorder %s27, %s30
    %p36 = scmp.eq.s32.totalorder %s17, 0
    %p37 = por %p35, %p36
    %p38 = scmp.ne.s32.totalorder %s27, %s30
    %p39 = scmp.eq.s32.totalorder %s22, 1
    %p40 = por %p38, %p39
    %p41 = scmp.ne.s32.totalorder %s30, %s31
    %p42 = scmp.eq.s32.totalorder %s22, 0
    %p43 = por %p41, %p42
    %p44 = scmp.ne.s32.totalorder %s30, %s31
    %p45 = scmp.eq.s32.totalorder %s23, 1
    %p46 = por %p44, %p45
    %p48 = scmp.ne.s32.totalorder %s31, %s47
    %p49 = scmp.eq.s32.totalorder %s23, 0
    %p50 = por %p48, %p49
    %s52 = sadd.s32 %s51, 1
    %p55 = scmp.eq.s32.totalorder %s17, 1
    %p56 = scmp.ne.s32.totalorder %s51, %s53
    %p57 = scmp.eq.s32.totalorder %s17, 0
    %p58 = por %p56, %p57
    %p59 = scmp.ne.s32.totalorder %s51, %s53
    %p60 = scmp.eq.s32.totalorder %s22, 1
    %p61 = por %p59, %p60
    %p62 = scmp.ne.s32.totalorder %s53, %s54
    %p63 = scmp.eq.s32.totalorder %s22, 0
    %p64 = por %p62, %p63
    %p65 = scmp.ne.s32.totalorder %s53, %s54
    %p66 = scmp.eq.s32.totalorder %s23, 1
    %p67 = por %p65, %p66
    %p69 = scmp.ne.s32.totalorder %s54, %s68
    %p70 = scmp.eq.s32.totalorder %s23, 0
    %p71 = por %p69, %p70
    %s73 = sadd.s32 %s72, 1
    %p76 = scmp.eq.s32.totalorder %s17, 1
    %p77 = scmp.ne.s32.totalorder %s72, %s74
    %p78 = scmp.eq.s32.totalorder %s17, 0
    %p79 = por %p77, %p78
    %p80 = scmp.ne.s32.totalorder %s72, %s74
    %p81 = scmp.eq.s32.totalorder %s22, 1
    %p82 = por %p80, %p81
    %p83 = scmp.ne.s32.totalorder %s74, %s75
    %p84 = scmp.eq.s32.totalorder %s22, 0
    %p85 = por %p83, %p84
    %p86 = scmp.ne.s32.totalorder %s74, %s75
    %p87 = scmp.eq.s32.totalorder %s23, 1
    %p88 = por %p86, %p87
    %p90 = scmp.ne.s32.totalorder %s75, %s89
    %p91 = scmp.eq.s32.totalorder %s23, 0
    %p92 = por %p90, %p91
    %s94 = sadd.s32 %s93, 1
    %p97 = scmp.eq.s32.totalorder %s17, 1
    %p98 = scmp.ne.s32.totalorder %s93, %s95
    %p99 = scmp.eq.s32.totalorder %s17, 0
    %p100 = por %p98, %p99
    %p101 = scmp.ne.s32.totalorder %s93, %s95
    %p102 = scmp.eq.s32.totalorder %s22, 1
    %p103 = por %p101, %p102
    %p104 = scmp.ne.s32.totalorder %s95, %s96
    %p105 = scmp.eq.s32.totalorder %s22, 0
    %p106 = por %p104, %p105
    %p107 = scmp.ne.s32.totalorder %s95, %s96
    %p108 = scmp.eq.s32.totalorder %s23, 1
    %p109 = por %p107, %p108
    %p111 = scmp.ne.s32.totalorder %s96, %s110
    %p112 = scmp.eq.s32.totalorder %s23, 0
    %p113 = por %p111, %p112
    %s115 = sadd.s32 %s114, 1
    %p118 = scmp.eq.s32.totalorder %s17, 1
    %p119 = scmp.ne.s32.totalorder %s114, %s116
    %p120 = scmp.eq.s32.totalorder %s17, 0
    %p121 = por %p119, %p120
    %p122 = scmp.ne.s32.totalorder %s114, %s116
    %p123 = scmp.eq.s32.totalorder %s22, 1
    %p124 = por %p122, %p123
    %p125 = scmp.ne.s32.totalorder %s116, %s117
    %p126 = scmp.eq.s32.totalorder %s22, 0
    %p127 = por %p125, %p126
    %p128 = scmp.ne.s32.totalorder %s116, %s117
    %p129 = scmp.eq.s32.totalorder %s23, 1
    %p130 = por %p128, %p129
    %p132 = scmp.ne.s32.totalorder %s117, %s131
    %p133 = scmp.eq.s32.totalorder %s23, 0
    %p134 = por %p132, %p133
    %s136 = sadd.s32 %s135, 1
    %p139 = scmp.eq.s32.totalorder %s17, 1
    %p140 = scmp.ne.s32.totalorder %s135, %s137
    %p141 = scmp.eq.s32.totalorder %s17, 0
    %p142 = por %p140, %p141
    %p143 = scmp.ne.s32.totalorder %s135, %s137
    %p144 = scmp.eq.s32.totalorder %s22, 1
    %p145 = por %p143, %p144
    %p146 = scmp.ne.s32.totalorder %s137, %s138
    %p147 = scmp.eq.s32.totalorder %s22, 0
    %p148 = por %p146, %p147
    %p149 = scmp.ne.s32.totalorder %s137, %s138
    %p150 = scmp.eq.s32.totalorder %s23, 1
    %p151 = por %p149, %p150
    %p153 = scmp.ne.s32.totalorder %s138, %s152
    %p154 = scmp.eq.s32.totalorder %s23, 0
    %p155 = por %p153, %p154
    %s157 = sadd.s32 %s156, 1
    %p160 = scmp.eq.s32.totalorder %s17, 1
    %p161 = scmp.ne.s32.totalorder %s156, %s158
    %p162 = scmp.eq.s32.totalorder %s17, 0
    %p163 = por %p161, %p162
    %p164 = scmp.ne.s32.totalorder %s156, %s158
    %p165 = scmp.eq.s32.totalorder %s22, 1
    %p166 = por %p164, %p165
    %p167 = scmp.ne.s32.totalorder %s158, %s159
    %p168 = scmp.eq.s32.totalorder %s22, 0
    %p169 = por %p167, %p168
    %p170 = scmp.ne.s32.totalorder %s158, %s159
    %p171 = scmp.eq.s32.totalorder %s23, 1
    %p172 = por %p170, %p171
    %p174 = scmp.ne.s32.totalorder %s159, %s173
    %p175 = scmp.eq.s32.totalorder %s23, 0
    %p176 = por %p174, %p175
    %s178 = sadd.s32 %s177, 1
    %p181 = scmp.eq.s32.totalorder %s17, 1
    %p182 = scmp.ne.s32.totalorder %s177, %s179
    %p183 = scmp.eq.s32.totalorder %s17, 0
    %p184 = por %p182, %p183
    %p185 = scmp.ne.s32.totalorder %s177, %s179
    %p186 = scmp.eq.s32.totalorder %s22, 1
    %p187 = por %p185, %p186
    %p188 = scmp.ne.s32.totalorder %s179, %s180
    %p189 = scmp.eq.s32.totalorder %s22, 0
    %p190 = por %p188, %p189
    %p191 = scmp.ne.s32.totalorder %s179, %s180
    %p192 = scmp.eq.s32.totalorder %s23, 1
    %p193 = por %p191, %p192
    %p195 = scmp.ne.s32.totalorder %s180, %s194
    %p196 = scmp.eq.s32.totalorder %s23, 0
    %p197 = por %p195, %p196
    %s199 = sadd.s32 %s198, 1
    %p202 = scmp.eq.s32.totalorder %s17, 1
    %p203 = scmp.ne.s32.totalorder %s198, %s200
    %p204 = scmp.eq.s32.totalorder %s17, 0
    %p205 = por %p203, %p204
    %p206 = scmp.ne.s32.totalorder %s198, %s200
    %p207 = scmp.eq.s32.totalorder %s22, 1
    %p208 = por %p206, %p207
    %p209 = scmp.ne.s32.totalorder %s200, %s201
    %p210 = scmp.eq.s32.totalorder %s22, 0
    %p211 = por %p209, %p210
    %p212 = scmp.ne.s32.totalorder %s200, %s201
    %p213 = scmp.eq.s32.totalorder %s23, 1
    %p214 = por %p212, %p213
    %p216 = scmp.ne.s32.totalorder %s201, %s215
    %p217 = scmp.eq.s32.totalorder %s23, 0
    %p218 = por %p216, %p217
    %s220 = sadd.s32 %s219, 1
    %p223 = scmp.eq.s32.totalorder %s17, 1
    %p224 = scmp.ne.s32.totalorder %s219, %s221
    %p225 = scmp.eq.s32.totalorder %s17, 0
    %p226 = por %p224, %p225
    %p227 = scmp.ne.s32.totalorder %s219, %s221
    %p228 = scmp.eq.s32.totalorder %s22, 1
    %p229 = por %p227, %p228
    %p230 = scmp.ne.s32.totalorder %s221, %s222
    %p231 = scmp.eq.s32.totalorder %s22, 0
    %p232 = por %p230, %p231
    %p233 = scmp.ne.s32.totalorder %s221, %s222
    %p234 = scmp.eq.s32.totalorder %s23, 1
    %p235 = por %p233, %p234
    %p237 = scmp.ne.s32.totalorder %s222, %s236
    %p238 = scmp.eq.s32.totalorder %s23, 0
    %p239 = por %p237, %p238
    %s241 = sadd.s32 %s240, 1
    %p244 = scmp.eq.s32.totalorder %s17, 1
    %p245 = scmp.ne.s32.totalorder %s240, %s242
    %p246 = scmp.eq.s32.totalorder %s17, 0
    %p247 = por %p245, %p246
    %p248 = scmp.ne.s32.totalorder %s240, %s242
    %p249 = scmp.eq.s32.totalorder %s22, 1
    %p250 = por %p248, %p249
    %p251 = scmp.ne.s32.totalorder %s242, %s243
    %p252 = scmp.eq.s32.totalorder %s22, 0
    %p253 = por %p251, %p252
    %p254 = scmp.ne.s32.totalorder %s242, %s243
    %p255 = scmp.eq.s32.totalorder %s23, 1
    %p256 = por %p254, %p255
    %p258 = scmp.ne.s32.totalorder %s243, %s257
    %p259 = scmp.eq.s32.totalorder %s23, 0
    %p260 = por %p258, %p259
    %s261 = ssub.s32 %s17, %s24
    %p262 = scmp.eq.s32.totalorder %s261, 0
    %s264 = sadd.s32 %s263, 1
    %s265 = scalar_select %p262, %s263, %s264
    %p268 = pneg %p262
    %p269 = scmp.eq.s32.totalorder %s17, 1
    %p270 = por %p268, %p269
    %p271 = scmp.ne.s32.totalorder %s263, %s266
    %p272 = scmp.eq.s32.totalorder %s17, 0
    %p273 = por %p271, %p272
    %p274 = scmp.ne.s32.totalorder %s263, %s266
    %p275 = scmp.eq.s32.totalorder %s22, 1
    %p276 = por %p274, %p275
    %p277 = scmp.ne.s32.totalorder %s266, %s267
    %p278 = scmp.eq.s32.totalorder %s22, 0
    %p279 = por %p277, %p278
    %p280 = scmp.ne.s32.totalorder %s266, %s267
    %p281 = scmp.eq.s32.totalorder %s23, 1
    %p282 = por %p280, %p281
    %p284 = scmp.ne.s32.totalorder %s267, %s283
    %p285 = scmp.eq.s32.totalorder %s23, 0
    %p286 = por %p284, %p285
    %p287 = scmp.le.s32.totalorder 1, %s17
    %p288 = scmp.lt.s32.totalorder %s17, 3
    %p289 = pnand %p287, %p288
    %p290 = pneg %p289
    // Predicated region
    $region9: #{transformer_encoder_block.1} parent=5 // pred_check
      _
    $region10: #{transformer_encoder_block.1} parent=5 // pred_check_branch
      %292 = sbr.rel (%p289) target = $region12
    $region11: #{transformer_encoder_block.1} parent=5 // pred_region
      %s293 = ssub.s32 %s17, 1
      // Predicated region
      $region13: #{transformer_encoder_block.1} parent=11 // pred_check
        %p294 = pneg %p64
      $region14: #{transformer_encoder_block.1} parent=11 // pred_check_branch
        %296 = sbr.rel (%p294) target = $region16
      $region15: #{transformer_encoder_block.1} parent=11 // pred_region
        _
      $region16: #{transformer_encoder_block.1} parent=11 // pred_fallthru
        _
      // Predicated region
      $region17: #{transformer_encoder_block.1} parent=11 // pred_check
        %p297 = pneg %p85
      $region18: #{transformer_encoder_block.1} parent=11 // pred_check_branch
        %299 = sbr.rel (%p297) target = $region20
      $region19: #{transformer_encoder_block.1} parent=11 // pred_region
        _
      $region20: #{transformer_encoder_block.1} parent=11 // pred_fallthru
        _
      // Predicated region
      $region21: #{transformer_encoder_block.1} parent=11 // pred_check
        %p300 = pneg %p106
      $region22: #{transformer_encoder_block.1} parent=11 // pred_check_branch
        %302 = sbr.rel (%p300) target = $region24
      $region23: #{transformer_encoder_block.1} parent=11 // pred_region
        _
      $region24: #{transformer_encoder_block.1} parent=11 // pred_fallthru
        _
      // Predicated region
      $region25: #{transformer_encoder_block.1} parent=11 // pred_check
        %p303 = pneg %p127
      $region26: #{transformer_encoder_block.1} parent=11 // pred_check_branch
        %305 = sbr.rel (%p303) target = $region28
      $region27: #{transformer_encoder_block.1} parent=11 // pred_region
        _
      $region28: #{transformer_encoder_block.1} parent=11 // pred_fallthru
        _
      // Predicated region
      $region29: #{transformer_encoder_block.1} parent=11 // pred_check
        %p306 = pneg %p148
      $region30: #{transformer_encoder_block.1} parent=11 // pred_check_branch
        %308 = sbr.rel (%p306) target = $region32
      $region31: #{transformer_encoder_block.1} parent=11 // pred_region
        _
      $region32: #{transformer_encoder_block.1} parent=11 // pred_fallthru
        _
      // Predicated region
      $region33: #{transformer_encoder_block.1} parent=11 // pred_check
        %p309 = pneg %p169
      $region34: #{transformer_encoder_block.1} parent=11 // pred_check_branch
        %311 = sbr.rel (%p309) target = $region36
      $region35: #{transformer_encoder_block.1} parent=11 // pred_region
        _
      $region36: #{transformer_encoder_block.1} parent=11 // pred_fallthru
        _
      // Predicated region
      $region37: #{transformer_encoder_block.1} parent=11 // pred_check
        %p312 = pneg %p190
      $region38: #{transformer_encoder_block.1} parent=11 // pred_check_branch
        %314 = sbr.rel (%p312) target = $region40
      $region39: #{transformer_encoder_block.1} parent=11 // pred_region
        _
      $region40: #{transformer_encoder_block.1} parent=11 // pred_fallthru
        _
      // Predicated region
      $region41: #{transformer_encoder_block.1} parent=11 // pred_check
        %p315 = pneg %p211
      $region42: #{transformer_encoder_block.1} parent=11 // pred_check_branch
        %317 = sbr.rel (%p315) target = $region44
      $region43: #{transformer_encoder_block.1} parent=11 // pred_region
        _
      $region44: #{transformer_encoder_block.1} parent=11 // pred_fallthru
        _
      // Predicated region
      $region45: #{transformer_encoder_block.1} parent=11 // pred_check
        %p318 = pneg %p232
      $region46: #{transformer_encoder_block.1} parent=11 // pred_check_branch
        %320 = sbr.rel (%p318) target = $region48
      $region47: #{transformer_encoder_block.1} parent=11 // pred_region
        _
      $region48: #{transformer_encoder_block.1} parent=11 // pred_fallthru
        _
      // Predicated region
      $region49: #{transformer_encoder_block.1} parent=11 // pred_check
        %p321 = pneg %p253
      $region50: #{transformer_encoder_block.1} parent=11 // pred_check_branch
        %323 = sbr.rel (%p321) target = $region52
      $region51: #{transformer_encoder_block.1} parent=11 // pred_region
        _
      $region52: #{transformer_encoder_block.1} parent=11 // pred_fallthru
        _
    $region12: #{transformer_encoder_block.1} parent=5 // pred_fallthru
      _
    %p324 = scmp.lt.s32.totalorder %s17, 2
    // Predicated region
    $region53: #{transformer_encoder_block.1} parent=5 // pred_check
      %p325 = pneg %p324
    $region54: #{transformer_encoder_block.1} parent=5 // pred_check_branch
      %327 = sbr.rel (%p325) target = $region56
    $region55: #{transformer_encoder_block.1} parent=5 // pred_region
      // Predicated region
      $region57: #{transformer_encoder_block.1} parent=55 // pred_check
        %p328 = pneg %p37
      $region58: #{transformer_encoder_block.1} parent=55 // pred_check_branch
        %330 = sbr.rel (%p328) target = $region60
      $region59: #{transformer_encoder_block.1} parent=55 // pred_region
        %s331 = smul.u32 2, %s17
        %p332 = scmp.lt.s32.totalorder %s331, 3
        %s333 = scalar_select %p332, %s331, 3
        %s334 = smul.addr %s333, 8
        %s335 = scalar_lea.vmem %s0, %s334
        %s336 = smul.u32 2, %s17
      $region60: #{transformer_encoder_block.1} parent=55 // pred_fallthru
        _
    $region56: #{transformer_encoder_block.1} parent=5 // pred_fallthru
      _
    %p337 = scmp.le.s32.totalorder 1, %s17
    %p338 = scmp.lt.s32.totalorder %s17, 3
    %p339 = pnand %p337, %p338
    %p340 = pneg %p339
    // Predicated region
    $region61: #{transformer_encoder_block.1} parent=5 // pred_check
      _
    $region62: #{transformer_encoder_block.1} parent=5 // pred_check_branch
      %342 = sbr.rel (%p339) target = $region64
    $region63: #{transformer_encoder_block.1} parent=5 // pred_region
      %s343 = ssub.s32 %s17, 1
      %s344 = smul.u32 2, %s22
      %p345 = scmp.lt.s32.totalorder %s344, 3
      %s346 = scalar_select %p345, %s344, 3
      %s347 = smul.addr %s346, 8
      %s348 = scalar_lea.vmem %s0, %s347
      %p349 = pneg %p43
      %p350 = pneg %p40
      %p351 = pneg %p64
      %p352 = pneg %p61
      %p353 = pneg %p85
      %p354 = pneg %p82
      %p355 = pneg %p106
      %p356 = pneg %p103
      %p357 = pneg %p127
      %p358 = pneg %p124
      %p359 = pneg %p148
      %p360 = pneg %p145
      %p361 = pneg %p169
      %p362 = pneg %p166
      %p363 = pneg %p190
      %p364 = pneg %p187
      %p365 = pneg %p211
      %p366 = pneg %p208
      %p367 = pneg %p232
      %p368 = pneg %p229
      %p369 = pneg %p253
      %p370 = pneg %p250
      %p371 = pneg %p279
      %p372 = pneg %p276
      %s373 = smul.u32 2, %s22
      %p374 = scmp.lt.s32.totalorder %s373, 3
      %s375 = scalar_select %p374, %s373, 3
      %s376 = smul.addr %s375, 8
      %s377 = scalar_lea.vmem %s11, %s376
      %s378 = smul.u32 2, %s22
      %p379 = scmp.lt.s32.totalorder %s378, 3
      %s380 = scalar_select %p379, %s378, 3
      %s381 = smul.addr %s380, 8
      %s382 = scalar_lea.vmem %s0, %s381
      %s383 = smul.u32 2, %s22
      %s384 = smul.u32 2, %s22
      %p385 = scmp.lt.s32.totalorder %s384, 3
      %s386 = scalar_select %p385, %s384, 3
      %s387 = smul.addr %s386, 8
      %s388 = scalar_lea.vmem %s11, %s387
      %s389 = smul.u32 2, %s22
      %v391 = vld [vmem:[%s382] sm:$0xff]
      %v392 = vld [vmem:[%s382 + $0x8] sm:$0xff]
      %v393 = vld [vmem:[%s1] sm:$0x1]
      %v394 = vld [vmem:[%s2] sm:$0x1]
      %vm395 = vcmask 261120
      %v396 = vsel %vm395, %v391, 0.0
      %397 = vadd.xlane.f32.xlu0 %v396
      %v398 = vpop.xlane.xlu0 %397
      %v399 = vsel %vm395, %v392, 0.0
      %400 = vadd.xlane.f32.xlu0 %v399
      %v401 = vpop.xlane.xlu0 %400
      %v402 = vrcp.pop 32.0
      %v403 = vmul.f32 %v398, %v402
      %v404 = vmul.f32 %v401, %v402
      %v405 = vsub.f32 %v391, %v403
      %v406 = vsub.f32 %v392, %v404
      %v407 = vmul.f32 %v405, %v405
      %v408 = vmul.f32 %v406, %v406
      %v409 = vsel %vm395, %v407, 0.0
      %410 = vadd.xlane.f32.xlu0 %v409
      %v411 = vpop.xlane.xlu0 %410
      %v412 = vsel %vm395, %v408, 0.0
      %413 = vadd.xlane.f32.xlu0 %v412
      %v414 = vpop.xlane.xlu0 %413
      %v415 = vmul.f32 %v411, %v402
      %v416 = vmul.f32 %v414, %v402
      %v417 = vadd.f32 %v415, 1e-05
      %v418 = vadd.f32 %v416, 1e-05
      %v419 = vrsqrt.pop %v417
      %v420 = vrsqrt.pop %v418
      %v421 = vmul.f32 %v405, %v419
      %v422 = vmul.f32 %v406, %v420
      %v424 = vlaneseq
      %v425 = vshrl.u32 %v424, 7
      %v426 = vsub.s32 0, %v425
      %v427 = vrot.slane %v393, %v426
      %v429 = vmul.f32 %v421, %v427
      %v430 = vmul.f32 %v422, %v427
      %v432 = vlaneseq
      %v433 = vshrl.u32 %v432, 7
      %v434 = vsub.s32 0, %v433
      %v435 = vrot.slane %v394, %v434
      %v437 = vadd.f32 %v429, %v435
      %v438 = vadd.f32 %v430, %v435
      %v439 = vpack.c.bf16 %v438, %v437
      %v440 = vld [vmem:[%s3] sm:$0xf]
      %v441 = vld [vmem:[%s3 + $0x4] sm:$0xf]
      %v442 = vld [vmem:[%s3 + $0x8] sm:$0xf]
      %v443 = vld [vmem:[%s3 + $0xc] sm:$0xf]
      %v444 = vld [vmem:[%s4] sm:$0x1]
      %v446 = vlaneseq
      %v447 = vshrl.u32 %v446, 7
      %v448 = vsub.s32 0, %v447
      %v449 = vrot.slane %v444, %v448
      %v455 = vunpack.c.l.b16 %v440
      %v456 = vunpack.c.l.b16 %v441
      %v457 = vunpack.c.l.b16 %v442
      %v458 = vunpack.c.l.b16 %v443
      %v459 = vpack.c.b16 %v456, %v455
      %v460 = vpack.c.b16 %v458, %v457
      %v464 = vsel %vm395, %v439, 0
      %466 = vmatprep.subr.bf16.mxu0 0
      %467 = vmatpush1.bf16.msra.mxu0 %v459
      %468 = vmatprep.subr.bf16.mxu0 0
      %469 = vmatpush1.bf16.msra.mxu0 %v460
      %470 = vmatprep.subr.bf16.mxu0 0
      %471 = vmatpush1.bf16.msra.mxu0 0
      %472 = vmatprep.subr.bf16.mxu0 0
      %473 = vmatpush1.bf16.msra.mxu0 0
      %474 = vmatprep.subr.bf16.mxu0 0
      %475 = vmatpush1.bf16.msra.mxu0 0
      %476 = vmatprep.subr.bf16.mxu0 0
      %477 = vmatpush1.bf16.msra.mxu0 0
      %478 = vmatprep.subr.bf16.mxu0 0
      %479 = vmatpush1.bf16.msra.mxu0 0
      %480 = vmatprep.subr.bf16.mxu0 0
      %481 = vmatpush1.bf16.msra.mxu0 0
      %482 = vmatprep.subr.bf16.mxu0 0
      %483 = vmatpush1.bf16.msra.mxu0 0
      %484 = vmatprep.subr.bf16.mxu0 0
      %485 = vmatpush1.bf16.msra.mxu0 0
      %486 = vmatprep.subr.bf16.mxu0 0
      %487 = vmatpush1.bf16.msra.mxu0 0
      %488 = vmatprep.subr.bf16.mxu0 0
      %489 = vmatpush1.bf16.msra.mxu0 0
      %490 = vmatprep.subr.bf16.mxu0 0
      %491 = vmatpush1.bf16.msra.mxu0 0
      %492 = vmatprep.subr.bf16.mxu0 0
      %493 = vmatpush1.bf16.msra.mxu0 0
      %494 = vmatprep.subr.bf16.mxu0 0
      %495 = vmatpush1.bf16.msra.mxu0 0
      %496 = vmatprep.subr.bf16.mxu0 0
      %497 = vmatpush1.bf16.msra.mxu0 0
      %498 = vmatprep.mubr.bf16.mxu0 0
      %499 = vmatmul.mubr.bf16.gmra.mrb[0].mxu0 %v464
      %v500 = vpop.f32.mrb[0].mxu0
      %v501 = vadd.f32 %v449, %v500
      %v502 = vpop.f32.mrb[0].mxu0
      %v503 = vpop.f32.mrb[0].mxu0
      %v504 = vadd.f32 %v449, %v503
      %v505 = vpop.f32.mrb[0].mxu0
      %506 = vdwg.mxu0
      %v507 = vld [vmem:[%s6] sm:$0x1]
      %v509 = vlaneseq
      %v510 = vshrl.u32 %v509, 7
      %v511 = vsub.s32 0, %v510
      %v512 = vrot.slane %v507, %v511
      %v514 = vadd.f32 %v391, %v512
      %v515 = vadd.f32 %v392, %v512
      %v518 = vcombine.high %v501, %v501
      %v520 = vunpack.c.l.s4 1983009808
      %v521 = vunpack.c.0.s8 %v520
      %v522 = vlaneseq
      %v523 = vshrl.u32 %v522, 7
      %v524 = vsub.s32 %v521, %v523
      %v525 = vrot.slane %v501, %v524
      %v527 = vunpack.c.l.s4 1983009808
      %v528 = vunpack.c.0.s8 %v527
      %v529 = vlaneseq
      %v530 = vshrl.u32 %v529, 7
      %v531 = vsub.s32 %v528, %v530
      %v532 = vrot.slane %v518, %v531
      %v533 = vcombine.high %v525, %v525
      %v534 = vcombine.high %v532, %v532
      %v535 = vcombine.high %v504, %v504
      %v537 = vunpack.c.l.s4 1983009808
      %v538 = vunpack.c.0.s8 %v537
      %v539 = vlaneseq
      %v540 = vshrl.u32 %v539, 7
      %v541 = vsub.s32 %v538, %v540
      %v542 = vrot.slane %v504, %v541
      %v544 = vunpack.c.l.s4 1983009808
      %v545 = vunpack.c.0.s8 %v544
      %v546 = vlaneseq
      %v547 = vshrl.u32 %v546, 7
      %v548 = vsub.s32 %v545, %v547
      %v549 = vrot.slane %v535, %v548
      %v550 = vcombine.high %v542, %v542
      %v551 = vcombine.high %v549, %v549
      %v560 = vpack.c.bf16 %v525, %v525
      %v561 = vpack.c.bf16 %v533, %v533
      %v562 = vpack.c.bf16 %v532, %v532
      %v563 = vpack.c.bf16 %v534, %v534
      %v564 = vpack.c.bf16 %v542, %v542
      %v565 = vpack.c.bf16 %v550, %v550
      %v566 = vpack.c.bf16 %v549, %v549
      %v567 = vpack.c.bf16 %v551, %v551
      %569 = vrot.lane.b32.xlu0 %v560, 96
      %v570 = vpop.permute.xlu0 %569
      %vm571 = vcmask 64512
      %v573 = vsel %vm571, %v560, 0
      %v576 = vsel %vm571, %v570, 0
      %578 = vmatprep.subr.bf16.mxu0 0
      %579 = vmatpush1.bf16.xpose.msra.mxu0 %v576
      %580 = vmatprep.subr.bf16.mxu0 0
      %581 = vmatpush1.bf16.xpose.msra.mxu0 0
      %582 = vmatprep.subr.bf16.mxu0 0
      %583 = vmatpush1.bf16.xpose.msra.mxu0 0
      %584 = vmatprep.subr.bf16.mxu0 0
      %585 = vmatpush1.bf16.xpose.msra.mxu0 0
      %586 = vmatprep.subr.bf16.mxu0 0
      %587 = vmatpush1.bf16.xpose.msra.mxu0 0
      %588 = vmatprep.subr.bf16.mxu0 0
      %589 = vmatpush1.bf16.xpose.msra.mxu0 0
      %590 = vmatprep.subr.bf16.mxu0 0
      %591 = vmatpush1.bf16.xpose.msra.mxu0 0
      %592 = vmatprep.subr.bf16.mxu0 0
      %593 = vmatpush1.bf16.xpose.msra.mxu0 0
      %594 = vmatprep.subr.bf16.mxu0 0
      %595 = vmatpush1.bf16.xpose.msra.mxu0 0
      %596 = vmatprep.subr.bf16.mxu0 0
      %597 = vmatpush1.bf16.xpose.msra.mxu0 0
      %598 = vmatprep.subr.bf16.mxu0 0
      %599 = vmatpush1.bf16.xpose.msra.mxu0 0
      %600 = vmatprep.subr.bf16.mxu0 0
      %601 = vmatpush1.bf16.xpose.msra.mxu0 0
      %602 = vmatprep.subr.bf16.mxu0 0
      %603 = vmatpush1.bf16.xpose.msra.mxu0 0
      %604 = vmatprep.subr.bf16.mxu0 0
      %605 = vmatpush1.bf16.xpose.msra.mxu0 0
      %606 = vmatprep.subr.bf16.mxu0 0
      %607 = vmatpush1.bf16.xpose.msra.mxu0 0
      %608 = vmatprep.subr.bf16.mxu0 0
      %609 = vmatpush1.bf16.xpose.msra.mxu0 0
      %610 = vmatprep.mubr.bf16.mxu0 0
      %611 = vmatmul.mubr.bf16.gmra.mrb[0].mxu0 %v573
      %v612 = vpop.f32.mrb[0].mxu0
      %v613 = vadd.f32 0.0, %v612
      %v614 = vpop.f32.mrb[0].mxu0
      %v615 = vpop.f32.mrb[0].mxu0
      %v616 = vpop.f32.mrb[0].mxu0
      %617 = vdwg.mxu0
      %619 = vrot.lane.b32.xlu0 %v561, 96
      %v620 = vpop.permute.xlu0 %619
      %v622 = vsel %vm571, %v561, 0
      %v625 = vsel %vm571, %v620, 0
      %627 = vmatprep.subr.bf16.mxu0 0
      %628 = vmatpush1.bf16.xpose.msra.mxu0 %v625
      %629 = vmatprep.subr.bf16.mxu0 0
      %630 = vmatpush1.bf16.xpose.msra.mxu0 0
      %631 = vmatprep.subr.bf16.mxu0 0
      %632 = vmatpush1.bf16.xpose.msra.mxu0 0
      %633 = vmatprep.subr.bf16.mxu0 0
      %634 = vmatpush1.bf16.xpose.msra.mxu0 0
      %635 = vmatprep.subr.bf16.mxu0 0
      %636 = vmatpush1.bf16.xpose.msra.mxu0 0
      %637 = vmatprep.subr.bf16.mxu0 0
      %638 = vmatpush1.bf16.xpose.msra.mxu0 0
      %639 = vmatprep.subr.bf16.mxu0 0
      %640 = vmatpush1.bf16.xpose.msra.mxu0 0
      %641 = vmatprep.subr.bf16.mxu0 0
      %642 = vmatpush1.bf16.xpose.msra.mxu0 0
      %643 = vmatprep.subr.bf16.mxu0 0
      %644 = vmatpush1.bf16.xpose.msra.mxu0 0
      %645 = vmatprep.subr.bf16.mxu0 0
      %646 = vmatpush1.bf16.xpose.msra.mxu0 0
      %647 = vmatprep.subr.bf16.mxu0 0
      %648 = vmatpush1.bf16.xpose.msra.mxu0 0
      %649 = vmatprep.subr.bf16.mxu0 0
      %650 = vmatpush1.bf16.xpose.msra.mxu0 0
      %651 = vmatprep.subr.bf16.mxu0 0
      %652 = vmatpush1.bf16.xpose.msra.mxu0 0
      %653 = vmatprep.subr.bf16.mxu0 0
      %654 = vmatpush1.bf16.xpose.msra.mxu0 0
      %655 = vmatprep.subr.bf16.mxu0 0
      %656 = vmatpush1.bf16.xpose.msra.mxu0 0
      %657 = vmatprep.subr.bf16.mxu0 0
      %658 = vmatpush1.bf16.xpose.msra.mxu0 0
      %659 = vmatprep.mubr.bf16.mxu0 0
      %660 = vmatmul.mubr.bf16.gmra.mrb[0].mxu0 %v622
      %v661 = vpop.f32.mrb[0].mxu0
      %v662 = vadd.f32 0.0, %v661
      %v663 = vpop.f32.mrb[0].mxu0
      %v664 = vpop.f32.mrb[0].mxu0
      %v665 = vpop.f32.mrb[0].mxu0
      %666 = vdwg.mxu0
      %668 = vrot.lane.b32.xlu0 %v562, 96
      %v669 = vpop.permute.xlu0 %668
      %v671 = vsel %vm571, %v562, 0
      %v674 = vsel %vm571, %v669, 0
      %676 = vmatprep.subr.bf16.mxu0 0
      %677 = vmatpush1.bf16.xpose.msra.mxu0 %v674
      %678 = vmatprep.subr.bf16.mxu0 0
      %679 = vmatpush1.bf16.xpose.msra.mxu0 0
      %680 = vmatprep.subr.bf16.mxu0 0
      %681 = vmatpush1.bf16.xpose.msra.mxu0 0
      %682 = vmatprep.subr.bf16.mxu0 0
      %683 = vmatpush1.bf16.xpose.msra.mxu0 0
      %684 = vmatprep.subr.bf16.mxu0 0
      %685 = vmatpush1.bf16.xpose.msra.mxu0 0
      %686 = vmatprep.subr.bf16.mxu0 0
      %687 = vmatpush1.bf16.xpose.msra.mxu0 0
      %688 = vmatprep.subr.bf16.mxu0 0
      %689 = vmatpush1.bf16.xpose.msra.mxu0 0
      %690 = vmatprep.subr.bf16.mxu0 0
      %691 = vmatpush1.bf16.xpose.msra.mxu0 0
      %692 = vmatprep.subr.bf16.mxu0 0
      %693 = vmatpush1.bf16.xpose.msra.mxu0 0
      %694 = vmatprep.subr.bf16.mxu0 0
      %695 = vmatpush1.bf16.xpose.msra.mxu0 0
      %696 = vmatprep.subr.bf16.mxu0 0
      %697 = vmatpush1.bf16.xpose.msra.mxu0 0
      %698 = vmatprep.subr.bf16.mxu0 0
      %699 = vmatpush1.bf16.xpose.msra.mxu0 0
      %700 = vmatprep.subr.bf16.mxu0 0
      %701 = vmatpush1.bf16.xpose.msra.mxu0 0
      %702 = vmatprep.subr.bf16.mxu0 0
      %703 = vmatpush1.bf16.xpose.msra.mxu0 0
      %704 = vmatprep.subr.bf16.mxu0 0
      %705 = vmatpush1.bf16.xpose.msra.mxu0 0
      %706 = vmatprep.subr.bf16.mxu0 0
      %707 = vmatpush1.bf16.xpose.msra.mxu0 0
      %708 = vmatprep.mubr.bf16.mxu0 0
      %709 = vmatmul.mubr.bf16.gmra.mrb[0].mxu0 %v671
      %v710 = vpop.f32.mrb[0].mxu0
      %v711 = vadd.f32 0.0, %v710
      %v712 = vpop.f32.mrb[0].mxu0
      %v713 = vpop.f32.mrb[0].mxu0
      %v714 = vpop.f32.mrb[0].mxu0
      %715 = vdwg.mxu0
      %717 = vrot.lane.b32.xlu0 %v563, 96
      %v718 = vpop.permute.xlu0 %717
      %v720 = vsel %vm571, %v563, 0
      %v723 = vsel %vm571, %v718, 0
      %725 = vmatprep.subr.bf16.mxu0 0
      %726 = vmatpush1.bf16.xpose.msra.mxu0 %v723
      %727 = vmatprep.subr.bf16.mxu0 0
      %728 = vmatpush1.bf16.xpose.msra.mxu0 0
      %729 = vmatprep.subr.bf16.mxu0 0
      %730 = vmatpush1.bf16.xpose.msra.mxu0 0
      %731 = vmatprep.subr.bf16.mxu0 0
      %732 = vmatpush1.bf16.xpose.msra.mxu0 0
      %733 = vmatprep.subr.bf16.mxu0 0
      %734 = vmatpush1.bf16.xpose.msra.mxu0 0
      %735 = vmatprep.subr.bf16.mxu0 0
      %736 = vmatpush1.bf16.xpose.msra.mxu0 0
      %737 = vmatprep.subr.bf16.mxu0 0
      %738 = vmatpush1.bf16.xpose.msra.mxu0 0
      %739 = vmatprep.subr.bf16.mxu0 0
      %740 = vmatpush1.bf16.xpose.msra.mxu0 0
      %741 = vmatprep.subr.bf16.mxu0 0
      %742 = vmatpush1.bf16.xpose.msra.mxu0 0
      %743 = vmatprep.subr.bf16.mxu0 0
      %744 = vmatpush1.bf16.xpose.msra.mxu0 0
      %745 = vmatprep.subr.bf16.mxu0 0
      %746 = vmatpush1.bf16.xpose.msra.mxu0 0
      %747 = vmatprep.subr.bf16.mxu0 0
      %748 = vmatpush1.bf16.xpose.msra.mxu0 0
      %749 = vmatprep.subr.bf16.mxu0 0
      %750 = vmatpush1.bf16.xpose.msra.mxu0 0
      %751 = vmatprep.subr.bf16.mxu0 0
      %752 = vmatpush1.bf16.xpose.msra.mxu0 0
      %753 = vmatprep.subr.bf16.mxu0 0
      %754 = vmatpush1.bf16.xpose.msra.mxu0 0
      %755 = vmatprep.subr.bf16.mxu0 0
      %756 = vmatpush1.bf16.xpose.msra.mxu0 0
      %757 = vmatprep.mubr.bf16.mxu0 0
      %758 = vmatmul.mubr.bf16.gmra.mrb[0].mxu0 %v720
      %v759 = vpop.f32.mrb[0].mxu0
      %v760 = vadd.f32 0.0, %v759
      %v761 = vpop.f32.mrb[0].mxu0
      %v762 = vpop.f32.mrb[0].mxu0
      %v763 = vpop.f32.mrb[0].mxu0
      %764 = vdwg.mxu0
      %766 = vrot.lane.b32.xlu0 %v564, 96
      %v767 = vpop.permute.xlu0 %766
      %v769 = vsel %vm571, %v564, 0
      %v772 = vsel %vm571, %v767, 0
      %774 = vmatprep.subr.bf16.mxu0 0
      %775 = vmatpush1.bf16.xpose.msra.mxu0 %v772
      %776 = vmatprep.subr.bf16.mxu0 0
      %777 = vmatpush1.bf16.xpose.msra.mxu0 0
      %778 = vmatprep.subr.bf16.mxu0 0
      %779 = vmatpush1.bf16.xpose.msra.mxu0 0
      %780 = vmatprep.subr.bf16.mxu0 0
      %781 = vmatpush1.bf16.xpose.msra.mxu0 0
      %782 = vmatprep.subr.bf16.mxu0 0
      %783 = vmatpush1.bf16.xpose.msra.mxu0 0
      %784 = vmatprep.subr.bf16.mxu0 0
      %785 = vmatpush1.bf16.xpose.msra.mxu0 0
      %786 = vmatprep.subr.bf16.mxu0 0
      %787 = vmatpush1.bf16.xpose.msra.mxu0 0
      %788 = vmatprep.subr.bf16.mxu0 0
      %789 = vmatpush1.bf16.xpose.msra.mxu0 0
      %790 = vmatprep.subr.bf16.mxu0 0
      %791 = vmatpush1.bf16.xpose.msra.mxu0 0
      %792 = vmatprep.subr.bf16.mxu0 0
      %793 = vmatpush1.bf16.xpose.msra.mxu0 0
      %794 = vmatprep.subr.bf16.mxu0 0
      %795 = vmatpush1.bf16.xpose.msra.mxu0 0
      %796 = vmatprep.subr.bf16.mxu0 0
      %797 = vmatpush1.bf16.xpose.msra.mxu0 0
      %798 = vmatprep.subr.bf16.mxu0 0
      %799 = vmatpush1.bf16.xpose.msra.mxu0 0
      %800 = vmatprep.subr.bf16.mxu0 0
      %801 = vmatpush1.bf16.xpose.msra.mxu0 0
      %802 = vmatprep.subr.bf16.mxu0 0
      %803 = vmatpush1.bf16.xpose.msra.mxu0 0
      %804 = vmatprep.subr.bf16.mxu0 0
      %805 = vmatpush1.bf16.xpose.msra.mxu0 0
      %806 = vmatprep.mubr.bf16.mxu0 0
      %807 = vmatmul.mubr.bf16.gmra.mrb[0].mxu0 %v769
      %v808 = vpop.f32.mrb[0].mxu0
      %v809 = vadd.f32 0.0, %v808
      %v810 = vpop.f32.mrb[0].mxu0
      %v811 = vpop.f32.mrb[0].mxu0
      %v812 = vpop.f32.mrb[0].mxu0
      %813 = vdwg.mxu0
      %815 = vrot.lane.b32.xlu0 %v565, 96
      %v816 = vpop.permute.xlu0 %815
      %v818 = vsel %vm571, %v565, 0
      %v821 = vsel %vm571, %v816, 0
      %823 = vmatprep.subr.bf16.mxu0 0
      %824 = vmatpush1.bf16.xpose.msra.mxu0 %v821
      %825 = vmatprep.subr.bf16.mxu0 0
      %826 = vmatpush1.bf16.xpose.msra.mxu0 0
      %827 = vmatprep.subr.bf16.mxu0 0
      %828 = vmatpush1.bf16.xpose.msra.mxu0 0
      %829 = vmatprep.subr.bf16.mxu0 0
      %830 = vmatpush1.bf16.xpose.msra.mxu0 0
      %831 = vmatprep.subr.bf16.mxu0 0
      %832 = vmatpush1.bf16.xpose.msra.mxu0 0
      %833 = vmatprep.subr.bf16.mxu0 0
      %834 = vmatpush1.bf16.xpose.msra.mxu0 0
      %835 = vmatprep.subr.bf16.mxu0 0
      %836 = vmatpush1.bf16.xpose.msra.mxu0 0
      %837 = vmatprep.subr.bf16.mxu0 0
      %838 = vmatpush1.bf16.xpose.msra.mxu0 0
      %839 = vmatprep.subr.bf16.mxu0 0
      %840 = vmatpush1.bf16.xpose.msra.mxu0 0
      %841 = vmatprep.subr.bf16.mxu0 0
      %842 = vmatpush1.bf16.xpose.msra.mxu0 0
      %843 = vmatprep.subr.bf16.mxu0 0
      %844 = vmatpush1.bf16.xpose.msra.mxu0 0
      %845 = vmatprep.subr.bf16.mxu0 0
      %846 = vmatpush1.bf16.xpose.msra.mxu0 0
      %847 = vmatprep.subr.bf16.mxu0 0
      %848 = vmatpush1.bf16.xpose.msra.mxu0 0
      %849 = vmatprep.subr.bf16.mxu0 0
      %850 = vmatpush1.bf16.xpose.msra.mxu0 0
      %851 = vmatprep.subr.bf16.mxu0 0
      %852 = vmatpush1.bf16.xpose.msra.mxu0 0
      %853 = vmatprep.subr.bf16.mxu0 0
      %854 = vmatpush1.bf16.xpose.msra.mxu0 0
      %855 = vmatprep.mubr.bf16.mxu0 0
      %856 = vmatmul.mubr.bf16.gmra.mrb[0].mxu0 %v818
      %v857 = vpop.f32.mrb[0].mxu0
      %v858 = vadd.f32 0.0, %v857
      %v859 = vpop.f32.mrb[0].mxu0
      %v860 = vpop.f32.mrb[0].mxu0
      %v861 = vpop.f32.mrb[0].mxu0
      %862 = vdwg.mxu0
      %864 = vrot.lane.b32.xlu0 %v566, 96
      %v865 = vpop.permute.xlu0 %864
      %v867 = vsel %vm571, %v566, 0
      %v870 = vsel %vm571, %v865, 0
      %872 = vmatprep.subr.bf16.mxu0 0
      %873 = vmatpush1.bf16.xpose.msra.mxu0 %v870
      %874 = vmatprep.subr.bf16.mxu0 0
      %875 = vmatpush1.bf16.xpose.msra.mxu0 0
      %876 = vmatprep.subr.bf16.mxu0 0
      %877 = vmatpush1.bf16.xpose.msra.mxu0 0
      %878 = vmatprep.subr.bf16.mxu0 0
      %879 = vmatpush1.bf16.xpose.msra.mxu0 0
      %880 = vmatprep.subr.bf16.mxu0 0
      %881 = vmatpush1.bf16.xpose.msra.mxu0 0
      %882 = vmatprep.subr.bf16.mxu0 0
      %883 = vmatpush1.bf16.xpose.msra.mxu0 0
      %884 = vmatprep.subr.bf16.mxu0 0
      %885 = vmatpush1.bf16.xpose.msra.mxu0 0
      %886 = vmatprep.subr.bf16.mxu0 0
      %887 = vmatpush1.bf16.xpose.msra.mxu0 0
      %888 = vmatprep.subr.bf16.mxu0 0
      %889 = vmatpush1.bf16.xpose.msra.mxu0 0
      %890 = vmatprep.subr.bf16.mxu0 0
      %891 = vmatpush1.bf16.xpose.msra.mxu0 0
      %892 = vmatprep.subr.bf16.mxu0 0
      %893 = vmatpush1.bf16.xpose.msra.mxu0 0
      %894 = vmatprep.subr.bf16.mxu0 0
      %895 = vmatpush1.bf16.xpose.msra.mxu0 0
      %896 = vmatprep.subr.bf16.mxu0 0
      %897 = vmatpush1.bf16.xpose.msra.mxu0 0
      %898 = vmatprep.subr.bf16.mxu0 0
      %899 = vmatpush1.bf16.xpose.msra.mxu0 0
      %900 = vmatprep.subr.bf16.mxu0 0
      %901 = vmatpush1.bf16.xpose.msra.mxu0 0
      %902 = vmatprep.subr.bf16.mxu0 0
      %903 = vmatpush1.bf16.xpose.msra.mxu0 0
      %904 = vmatprep.mubr.bf16.mxu0 0
      %905 = vmatmul.mubr.bf16.gmra.mrb[0].mxu0 %v867
      %v906 = vpop.f32.mrb[0].mxu0
      %v907 = vadd.f32 0.0, %v906
      %v908 = vpop.f32.mrb[0].mxu0
      %v909 = vpop.f32.mrb[0].mxu0
      %v910 = vpop.f32.mrb[0].mxu0
      %911 = vdwg.mxu0
      %913 = vrot.lane.b32.xlu0 %v567, 96
      %v914 = vpop.permute.xlu0 %913
      %v916 = vsel %vm571, %v567, 0
      %v919 = vsel %vm571, %v914, 0
      %921 = vmatprep.subr.bf16.mxu0 0
      %922 = vmatpush1.bf16.xpose.msra.mxu0 %v919
      %923 = vmatprep.subr.bf16.mxu0 0
      %924 = vmatpush1.bf16.xpose.msra.mxu0 0
      %925 = vmatprep.subr.bf16.mxu0 0
      %926 = vmatpush1.bf16.xpose.msra.mxu0 0
      %927 = vmatprep.subr.bf16.mxu0 0
      %928 = vmatpush1.bf16.xpose.msra.mxu0 0
      %929 = vmatprep.subr.bf16.mxu0 0
      %930 = vmatpush1.bf16.xpose.msra.mxu0 0
      %931 = vmatprep.subr.bf16.mxu0 0
      %932 = vmatpush1.bf16.xpose.msra.mxu0 0
      %933 = vmatprep.subr.bf16.mxu0 0
      %934 = vmatpush1.bf16.xpose.msra.mxu0 0
      %935 = vmatprep.subr.bf16.mxu0 0
      %936 = vmatpush1.bf16.xpose.msra.mxu0 0
      %937 = vmatprep.subr.bf16.mxu0 0
      %938 = vmatpush1.bf16.xpose.msra.mxu0 0
      %939 = vmatprep.subr.bf16.mxu0 0
      %940 = vmatpush1.bf16.xpose.msra.mxu0 0
      %941 = vmatprep.subr.bf16.mxu0 0
      %942 = vmatpush1.bf16.xpose.msra.mxu0 0
      %943 = vmatprep.subr.bf16.mxu0 0
      %944 = vmatpush1.bf16.xpose.msra.mxu0 0
      %945 = vmatprep.subr.bf16.mxu0 0
      %946 = vmatpush1.bf16.xpose.msra.mxu0 0
      %947 = vmatprep.subr.bf16.mxu0 0
      %948 = vmatpush1.bf16.xpose.msra.mxu0 0
      %949 = vmatprep.subr.bf16.mxu0 0
      %950 = vmatpush1.bf16.xpose.msra.mxu0 0
      %951 = vmatprep.subr.bf16.mxu0 0
      %952 = vmatpush1.bf16.xpose.msra.mxu0 0
      %953 = vmatprep.mubr.bf16.mxu0 0
      %954 = vmatmul.mubr.bf16.gmra.mrb[0].mxu0 %v916
      %v955 = vpop.f32.mrb[0].mxu0
      %v956 = vadd.f32 0.0, %v955
      %v957 = vpop.f32.mrb[0].mxu0
      %v958 = vpop.f32.mrb[0].mxu0
      %v959 = vpop.f32.mrb[0].mxu0
      %960 = vdwg.mxu0
      %v961 = vmul.f32 %v613, 0.35355338
      %v962 = vmul.f32 %v662, 0.35355338
      %v963 = vmul.f32 %v711, 0.35355338
      %v964 = vmul.f32 %v760, 0.35355338
      %v965 = vmul.f32 %v809, 0.35355338
      %v966 = vmul.f32 %v858, 0.35355338
      %v967 = vmul.f32 %v907, 0.35355338
      %v968 = vmul.f32 %v956, 0.35355338
      %vm969 = vcmask 9216
      %v970 = vsel %vm969, %v961, -inf
      %971 = vmax.xlane.f32.xlu0 %v970
      %v972 = vpop.xlane.xlu0 %971
      %v973 = vsel %vm969, %v962, -inf
      %974 = vmax.xlane.f32.xlu0 %v973
      %v975 = vpop.xlane.xlu0 %974
      %v976 = vsel %vm969, %v963, -inf
      %977 = vmax.xlane.f32.xlu0 %v976
      %v978 = vpop.xlane.xlu0 %977
      %v979 = vsel %vm969, %v964, -inf
      %980 = vmax.xlane.f32.xlu0 %v979
      %v981 = vpop.xlane.xlu0 %980
      %v982 = vsel %vm969, %v965, -inf
      %983 = vmax.xlane.f32.xlu0 %v982
      %v984 = vpop.xlane.xlu0 %983
      %v985 = vsel %vm969, %v966, -inf
      %986 = vmax.xlane.f32.xlu0 %v985
      %v987 = vpop.xlane.xlu0 %986
      %v988 = vsel %vm969, %v967, -inf
      %989 = vmax.xlane.f32.xlu0 %v988
      %v990 = vpop.xlane.xlu0 %989
      %v991 = vsel %vm969, %v968, -inf
      %992 = vmax.xlane.f32.xlu0 %v991
      %v993 = vpop.xlane.xlu0 %992
      %v994 = vsub.f32 %v961, %v972
      %v995 = vsub.f32 %v962, %v975
      %v996 = vsub.f32 %v963, %v978
      %v997 = vsub.f32 %v964, %v981
      %v998 = vsub.f32 %v965, %v984
      %v999 = vsub.f32 %v966, %v987
      %v1000 = vsub.f32 %v967, %v990
      %v1001 = vsub.f32 %v968, %v993
      %v1002 = vmul.f32 %v994, 1.442695
      %v1003 = vpow.pop %v1002
      %v1004 = vmul.f32 %v995, 1.442695
      %v1005 = vpow.pop %v1004
      %v1006 = vmul.f32 %v996, 1.442695
      %v1007 = vpow.pop %v1006
      %v1008 = vmul.f32 %v997, 1.442695
      %v1009 = vpow.pop %v1008
      %v1010 = vmul.f32 %v998, 1.442695
      %v1011 = vpow.pop %v1010
      %v1012 = vmul.f32 %v999, 1.442695
      %v1013 = vpow.pop %v1012
      %v1014 = vmul.f32 %v1000, 1.442695
      %v1015 = vpow.pop %v1014
      %v1016 = vmul.f32 %v1001, 1.442695
      %v1017 = vpow.pop %v1016
      %v1018 = vsel %vm969, %v1003, 0.0
      %1019 = vadd.xlane.f32.xlu0 %v1018
      %v1020 = vpop.xlane.xlu0 %1019
      %v1021 = vsel %vm969, %v1005, 0.0
      %1022 = vadd.xlane.f32.xlu0 %v1021
      %v1023 = vpop.xlane.xlu0 %1022
      %v1024 = vsel %vm969, %v1007, 0.0
      %1025 = vadd.xlane.f32.xlu0 %v1024
      %v1026 = vpop.xlane.xlu0 %1025
      %v1027 = vsel %vm969, %v1009, 0.0
      %1028 = vadd.xlane.f32.xlu0 %v1027
      %v1029 = vpop.xlane.xlu0 %1028
      %v1030 = vsel %vm969, %v1011, 0.0
      %1031 = vadd.xlane.f32.xlu0 %v1030
      %v1032 = vpop.xlane.xlu0 %1031
      %v1033 = vsel %vm969, %v1013, 0.0
      %1034 = vadd.xlane.f32.xlu0 %v1033
      %v1035 = vpop.xlane.xlu0 %1034
      %v1036 = vsel %vm969, %v1015, 0.0
      %1037 = vadd.xlane.f32.xlu0 %v1036
      %v1038 = vpop.xlane.xlu0 %1037
      %v1039 = vsel %vm969, %v1017, 0.0
      %1040 = vadd.xlane.f32.xlu0 %v1039
      %v1041 = vpop.xlane.xlu0 %1040
      %v1042 = vrcp.pop %v1020
      %v1043 = vrcp.pop %v1023
      %v1044 = vrcp.pop %v1026
      %v1045 = vrcp.pop %v1029
      %v1046 = vrcp.pop %v1032
      %v1047 = vrcp.pop %v1035
      %v1048 = vrcp.pop %v1038
      %v1049 = vrcp.pop %v1041
      %v1050 = vmul.f32 %v1003, %v1042
      %v1051 = vmul.f32 %v1005, %v1043
      %v1052 = vmul.f32 %v1007, %v1044
      %v1053 = vmul.f32 %v1009, %v1045
      %v1054 = vmul.f32 %v1011, %v1046
      %v1055 = vmul.f32 %v1013, %v1047
      %v1056 = vmul.f32 %v1015, %v1048
      %v1057 = vmul.f32 %v1017, %v1049
      %v1058 = vpack.c.bf16 %v1050, %v1050
      %v1059 = vpack.c.bf16 %v1051, %v1051
      %v1060 = vpack.c.bf16 %v1052, %v1052
      %v1061 = vpack.c.bf16 %v1053, %v1053
      %v1062 = vpack.c.bf16 %v1054, %v1054
      %v1063 = vpack.c.bf16 %v1055, %v1055
      %v1064 = vpack.c.bf16 %v1056, %v1056
      %v1065 = vpack.c.bf16 %v1057, %v1057
      %1066 = vrot.lane.b32.xlu0 %v560, 64
      %v1067 = vpop.permute.xlu0 %1066
      %vm1068 = vcmask 15360
      %v1070 = vsel %vm1068, %v1058, 0
      %vm1072 = vcmask 1040384
      %v1074 = vsel %vm1072, %v1067, 0
      %1076 = vmatprep.subr.bf16.mxu0 0
      %1077 = vmatpush1.bf16.msra.mxu0 %v1074
      %1078 = vmatprep.subr.bf16.mxu0 0
      %1079 = vmatpush1.bf16.msra.mxu0 0
      %1080 = vmatprep.subr.bf16.mxu0 0
      %1081 = vmatpush1.bf16.msra.mxu0 0
      %1082 = vmatprep.subr.bf16.mxu0 0
      %1083 = vmatpush1.bf16.msra.mxu0 0
      %1084 = vmatprep.subr.bf16.mxu0 0
      %1085 = vmatpush1.bf16.msra.mxu0 0
      %1086 = vmatprep.subr.bf16.mxu0 0
      %1087 = vmatpush1.bf16.msra.mxu0 0
      %1088 = vmatprep.subr.bf16.mxu0 0
      %1089 = vmatpush1.bf16.msra.mxu0 0
      %1090 = vmatprep.subr.bf16.mxu0 0
      %1091 = vmatpush1.bf16.msra.mxu0 0
      %1092 = vmatprep.subr.bf16.mxu0 0
      %1093 = vmatpush1.bf16.msra.mxu0 0
      %1094 = vmatprep.subr.bf16.mxu0 0
      %1095 = vmatpush1.bf16.msra.mxu0 0
      %1096 = vmatprep.subr.bf16.mxu0 0
      %1097 = vmatpush1.bf16.msra.mxu0 0
      %1098 = vmatprep.subr.bf16.mxu0 0
      %1099 = vmatpush1.bf16.msra.mxu0 0
      %1100 = vmatprep.subr.bf16.mxu0 0
      %1101 = vmatpush1.bf16.msra.mxu0 0
      %1102 = vmatprep.subr.bf16.mxu0 0
      %1103 = vmatpush1.bf16.msra.mxu0 0
      %1104 = vmatprep.subr.bf16.mxu0 0
      %1105 = vmatpush1.bf16.msra.mxu0 0
      %1106 = vmatprep.subr.bf16.mxu0 0
      %1107 = vmatpush1.bf16.msra.mxu0 0
      %1108 = vmatprep.mubr.bf16.mxu0 0
      %1109 = vmatmul.mubr.bf16.gmra.mrb[0].mxu0 %v1070
      %v1110 = vpop.f32.mrb[0].mxu0
      %v1111 = vadd.f32 0.0, %v1110
      %v1112 = vpop.f32.mrb[0].mxu0
      %v1113 = vpop.f32.mrb[0].mxu0
      %v1114 = vpop.f32.mrb[0].mxu0
      %1115 = vdwg.mxu0
      %1116 = vrot.lane.b32.xlu0 %v561, 64
      %v1117 = vpop.permute.xlu0 %1116
      %v1119 = vsel %vm1068, %v1059, 0
      %v1122 = vsel %vm1072, %v1117, 0
      %1124 = vmatprep.subr.bf16.mxu0 0
      %1125 = vmatpush1.bf16.msra.mxu0 %v1122
      %1126 = vmatprep.subr.bf16.mxu0 0
      %1127 = vmatpush1.bf16.msra.mxu0 0
      %1128 = vmatprep.subr.bf16.mxu0 0
      %1129 = vmatpush1.bf16.msra.mxu0 0
      %1130 = vmatprep.subr.bf16.mxu0 0
      %1131 = vmatpush1.bf16.msra.mxu0 0
      %1132 = vmatprep.subr.bf16.mxu0 0
      %1133 = vmatpush1.bf16.msra.mxu0 0
      %1134 = vmatprep.subr.bf16.mxu0 0
      %1135 = vmatpush1.bf16.msra.mxu0 0
      %1136 = vmatprep.subr.bf16.mxu0 0
      %1137 = vmatpush1.bf16.msra.mxu0 0
      %1138 = vmatprep.subr.bf16.mxu0 0
      %1139 = vmatpush1.bf16.msra.mxu0 0
      %1140 = vmatprep.subr.bf16.mxu0 0
      %1141 = vmatpush1.bf16.msra.mxu0 0
      %1142 = vmatprep.subr.bf16.mxu0 0
      %1143 = vmatpush1.bf16.msra.mxu0 0
      %1144 = vmatprep.subr.bf16.mxu0 0
      %1145 = vmatpush1.bf16.msra.mxu0 0
      %1146 = vmatprep.subr.bf16.mxu0 0
      %1147 = vmatpush1.bf16.msra.mxu0 0
      %1148 = vmatprep.subr.bf16.mxu0 0
      %1149 = vmatpush1.bf16.msra.mxu0 0
      %1150 = vmatprep.subr.bf16.mxu0 0
      %1151 = vmatpush1.bf16.msra.mxu0 0
      %1152 = vmatprep.subr.bf16.mxu0 0
      %1153 = vmatpush1.bf16.msra.mxu0 0
      %1154 = vmatprep.subr.bf16.mxu0 0
      %1155 = vmatpush1.bf16.msra.mxu0 0
      %1156 = vmatprep.mubr.bf16.mxu0 0
      %1157 = vmatmul.mubr.bf16.gmra.mrb[0].mxu0 %v1119
      %v1158 = vpop.f32.mrb[0].mxu0
      %v1159 = vadd.f32 0.0, %v1158
      %v1160 = vpop.f32.mrb[0].mxu0
      %v1161 = vpop.f32.mrb[0].mxu0
      %v1162 = vpop.f32.mrb[0].mxu0
      %1163 = vdwg.mxu0
      %1164 = vrot.lane.b32.xlu0 %v562, 64
      %v1165 = vpop.permute.xlu0 %1164
      %v1167 = vsel %vm1068, %v1060, 0
      %v1170 = vsel %vm1072, %v1165, 0
      %1172 = vmatprep.subr.bf16.mxu0 0
      %1173 = vmatpush1.bf16.msra.mxu0 %v1170
      %1174 = vmatprep.subr.bf16.mxu0 0
      %1175 = vmatpush1.bf16.msra.mxu0 0
      %1176 = vmatprep.subr.bf16.mxu0 0
      %1177 = vmatpush1.bf16.msra.mxu0 0
      %1178 = vmatprep.subr.bf16.mxu0 0
      %1179 = vmatpush1.bf16.msra.mxu0 0
      %1180 = vmatprep.subr.bf16.mxu0 0
      %1181 = vmatpush1.bf16.msra.mxu0 0
      %1182 = vmatprep.subr.bf16.mxu0 0
      %1183 = vmatpush1.bf16.msra.mxu0 0
      %1184 = vmatprep.subr.bf16.mxu0 0
      %1185 = vmatpush1.bf16.msra.mxu0 0
      %1186 = vmatprep.subr.bf16.mxu0 0
      %1187 = vmatpush1.bf16.msra.mxu0 0
      %1188 = vmatprep.subr.bf16.mxu0 0
      %1189 = vmatpush1.bf16.msra.mxu0 0
      %1190 = vmatprep.subr.bf16.mxu0 0
      %1191 = vmatpush1.bf16.msra.mxu0 0
      %1192 = vmatprep.subr.bf16.mxu0 0
      %1193 = vmatpush1.bf16.msra.mxu0 0
      %1194 = vmatprep.subr.bf16.mxu0 0
      %1195 = vmatpush1.bf16.msra.mxu0 0
      %1196 = vmatprep.subr.bf16.mxu0 0
      %1197 = vmatpush1.bf16.msra.mxu0 0
      %1198 = vmatprep.subr.bf16.mxu0 0
      %1199 = vmatpush1.bf16.msra.mxu0 0
      %1200 = vmatprep.subr.bf16.mxu0 0
      %1201 = vmatpush1.bf16.msra.mxu0 0
      %1202 = vmatprep.subr.bf16.mxu0 0
      %1203 = vmatpush1.bf16.msra.mxu0 0
      %1204 = vmatprep.mubr.bf16.mxu0 0
      %1205 = vmatmul.mubr.bf16.gmra.mrb[0].mxu0 %v1167
      %v1206 = vpop.f32.mrb[0].mxu0
      %v1207 = vadd.f32 0.0, %v1206
      %v1208 = vpop.f32.mrb[0].mxu0
      %v1209 = vpop.f32.mrb[0].mxu0
      %v1210 = vpop.f32.mrb[0].mxu0
      %1211 = vdwg.mxu0
      %1212 = vrot.lane.b32.xlu0 %v563, 64
      %v1213 = vpop.permute.xlu0 %1212
      %v1215 = vsel %vm1068, %v1061, 0
      %v1218 = vsel %vm1072, %v1213, 0
      %1220 = vmatprep.subr.bf16.mxu0 0
      %1221 = vmatpush1.bf16.msra.mxu0 %v1218
      %1222 = vmatprep.subr.bf16.mxu0 0
      %1223 = vmatpush1.bf16.msra.mxu0 0
      %1224 = vmatprep.subr.bf16.mxu0 0
      %1225 = vmatpush1.bf16.msra.mxu0 0
      %1226 = vmatprep.subr.bf16.mxu0 0
      %1227 = vmatpush1.bf16.msra.mxu0 0
      %1228 = vmatprep.subr.bf16.mxu0 0
      %1229 = vmatpush1.bf16.msra.mxu0 0
      %1230 = vmatprep.subr.bf16.mxu0 0
      %1231 = vmatpush1.bf16.msra.mxu0 0
      %1232 = vmatprep.subr.bf16.mxu0 0
      %1233 = vmatpush1.bf16.msra.mxu0 0
      %1234 = vmatprep.subr.bf16.mxu0 0
      %1235 = vmatpush1.bf16.msra.mxu0 0
      %1236 = vmatprep.subr.bf16.mxu0 0
      %1237 = vmatpush1.bf16.msra.mxu0 0
      %1238 = vmatprep.subr.bf16.mxu0 0
      %1239 = vmatpush1.bf16.msra.mxu0 0
      %1240 = vmatprep.subr.bf16.mxu0 0
      %1241 = vmatpush1.bf16.msra.mxu0 0
      %1242 = vmatprep.subr.bf16.mxu0 0
      %1243 = vmatpush1.bf16.msra.mxu0 0
      %1244 = vmatprep.subr.bf16.mxu0 0
      %1245 = vmatpush1.bf16.msra.mxu0 0
      %1246 = vmatprep.subr.bf16.mxu0 0
      %1247 = vmatpush1.bf16.msra.mxu0 0
      %1248 = vmatprep.subr.bf16.mxu0 0
      %1249 = vmatpush1.bf16.msra.mxu0 0
      %1250 = vmatprep.subr.bf16.mxu0 0
      %1251 = vmatpush1.bf16.msra.mxu0 0
      %1252 = vmatprep.mubr.bf16.mxu0 0
      %1253 = vmatmul.mubr.bf16.gmra.mrb[0].mxu0 %v1215
      %v1254 = vpop.f32.mrb[0].mxu0
      %v1255 = vadd.f32 0.0, %v1254
      %v1256 = vpop.f32.mrb[0].mxu0
      %v1257 = vpop.f32.mrb[0].mxu0
      %v1258 = vpop.f32.mrb[0].mxu0
      %1259 = vdwg.mxu0
      %1260 = vrot.lane.b32.xlu0 %v564, 64
      %v1261 = vpop.permute.xlu0 %1260
      %v1263 = vsel %vm1068, %v1062, 0
      %v1266 = vsel %vm1072, %v1261, 0
      %1268 = vmatprep.subr.bf16.mxu0 0
      %1269 = vmatpush1.bf16.msra.mxu0 %v1266
      %1270 = vmatprep.subr.bf16.mxu0 0
      %1271 = vmatpush1.bf16.msra.mxu0 0
      %1272 = vmatprep.subr.bf16.mxu0 0
      %1273 = vmatpush1.bf16.msra.mxu0 0
      %1274 = vmatprep.subr.bf16.mxu0 0
      %1275 = vmatpush1.bf16.msra.mxu0 0
      %1276 = vmatprep.subr.bf16.mxu0 0
      %1277 = vmatpush1.bf16.msra.mxu0 0
      %1278 = vmatprep.subr.bf16.mxu0 0
      %1279 = vmatpush1.bf16.msra.mxu0 0
      %1280 = vmatprep.subr.bf16.mxu0 0
      %1281 = vmatpush1.bf16.msra.mxu0 0
      %1282 = vmatprep.subr.bf16.mxu0 0
      %1283 = vmatpush1.bf16.msra.mxu0 0
      %1284 = vmatprep.subr.bf16.mxu0 0
      %1285 = vmatpush1.bf16.msra.mxu0 0
      %1286 = vmatprep.subr.bf16.mxu0 0
      %1287 = vmatpush1.bf16.msra.mxu0 0
      %1288 = vmatprep.subr.bf16.mxu0 0
      %1289 = vmatpush1.bf16.msra.mxu0 0
      %1290 = vmatprep.subr.bf16.mxu0 0
      %1291 = vmatpush1.bf16.msra.mxu0 0
      %1292 = vmatprep.subr.bf16.mxu0 0
      %1293 = vmatpush1.bf16.msra.mxu0 0
      %1294 = vmatprep.subr.bf16.mxu0 0
      %1295 = vmatpush1.bf16.msra.mxu0 0
      %1296 = vmatprep.subr.bf16.mxu0 0
      %1297 = vmatpush1.bf16.msra.mxu0 0
      %1298 = vmatprep.subr.bf16.mxu0 0
      %1299 = vmatpush1.bf16.msra.mxu0 0
      %1300 = vmatprep.mubr.bf16.mxu0 0
      %1301 = vmatmul.mubr.bf16.gmra.mrb[0].mxu0 %v1263
      %v1302 = vpop.f32.mrb[0].mxu0
      %v1303 = vadd.f32 0.0, %v1302
      %v1304 = vpop.f32.mrb[0].mxu0
      %v1305 = vpop.f32.mrb[0].mxu0
      %v1306 = vpop.f32.mrb[0].mxu0
      %1307 = vdwg.mxu0
      %1308 = vrot.lane.b32.xlu0 %v565, 64
      %v1309 = vpop.permute.xlu0 %1308
      %v1311 = vsel %vm1068, %v1063, 0
      %v1314 = vsel %vm1072, %v1309, 0
      %1316 = vmatprep.subr.bf16.mxu0 0
      %1317 = vmatpush1.bf16.msra.mxu0 %v1314
      %1318 = vmatprep.subr.bf16.mxu0 0
      %1319 = vmatpush1.bf16.msra.mxu0 0
      %1320 = vmatprep.subr.bf16.mxu0 0
      %1321 = vmatpush1.bf16.msra.mxu0 0
      %1322 = vmatprep.subr.bf16.mxu0 0
      %1323 = vmatpush1.bf16.msra.mxu0 0
      %1324 = vmatprep.subr.bf16.mxu0 0
      %1325 = vmatpush1.bf16.msra.mxu0 0
      %1326 = vmatprep.subr.bf16.mxu0 0
      %1327 = vmatpush1.bf16.msra.mxu0 0
      %1328 = vmatprep.subr.bf16.mxu0 0
      %1329 = vmatpush1.bf16.msra.mxu0 0
      %1330 = vmatprep.subr.bf16.mxu0 0
      %1331 = vmatpush1.bf16.msra.mxu0 0
      %1332 = vmatprep.subr.bf16.mxu0 0
      %1333 = vmatpush1.bf16.msra.mxu0 0
      %1334 = vmatprep.subr.bf16.mxu0 0
      %1335 = vmatpush1.bf16.msra.mxu0 0
      %1336 = vmatprep.subr.bf16.mxu0 0
      %1337 = vmatpush1.bf16.msra.mxu0 0
      %1338 = vmatprep.subr.bf16.mxu0 0
      %1339 = vmatpush1.bf16.msra.mxu0 0
      %1340 = vmatprep.subr.bf16.mxu0 0
      %1341 = vmatpush1.bf16.msra.mxu0 0
      %1342 = vmatprep.subr.bf16.mxu0 0
      %1343 = vmatpush1.bf16.msra.mxu0 0
      %1344 = vmatprep.subr.bf16.mxu0 0
      %1345 = vmatpush1.bf16.msra.mxu0 0
      %1346 = vmatprep.subr.bf16.mxu0 0
      %1347 = vmatpush1.bf16.msra.mxu0 0
      %1348 = vmatprep.mubr.bf16.mxu0 0
      %1349 = vmatmul.mubr.bf16.gmra.mrb[0].mxu0 %v1311
      %v1350 = vpop.f32.mrb[0].mxu0
      %v1351 = vadd.f32 0.0, %v1350
      %v1352 = vpop.f32.mrb[0].mxu0
      %v1353 = vpop.f32.mrb[0].mxu0
      %v1354 = vpop.f32.mrb[0].mxu0
      %1355 = vdwg.mxu0
      %1356 = vrot.lane.b32.xlu0 %v566, 64
      %v1357 = vpop.permute.xlu0 %1356
      %v1359 = vsel %vm1068, %v1064, 0
      %v1362 = vsel %vm1072, %v1357, 0
      %1364 = vmatprep.subr.bf16.mxu0 0
      %1365 = vmatpush1.bf16.msra.mxu0 %v1362
      %1366 = vmatprep.subr.bf16.mxu0 0
      %1367 = vmatpush1.bf16.msra.mxu0 0
      %1368 = vmatprep.subr.bf16.mxu0 0
      %1369 = vmatpush1.bf16.msra.mxu0 0
      %1370 = vmatprep.subr.bf16.mxu0 0
      %1371 = vmatpush1.bf16.msra.mxu0 0
      %1372 = vmatprep.subr.bf16.mxu0 0
      %1373 = vmatpush1.bf16.msra.mxu0 0
      %1374 = vmatprep.subr.bf16.mxu0 0
      %1375 = vmatpush1.bf16.msra.mxu0 0
      %1376 = vmatprep.subr.bf16.mxu0 0
      %1377 = vmatpush1.bf16.msra.mxu0 0
      %1378 = vmatprep.subr.bf16.mxu0 0
      %1379 = vmatpush1.bf16.msra.mxu0 0
      %1380 = vmatprep.subr.bf16.mxu0 0
      %1381 = vmatpush1.bf16.msra.mxu0 0
      %1382 = vmatprep.subr.bf16.mxu0 0
      %1383 = vmatpush1.bf16.msra.mxu0 0
      %1384 = vmatprep.subr.bf16.mxu0 0
      %1385 = vmatpush1.bf16.msra.mxu0 0
      %1386 = vmatprep.subr.bf16.mxu0 0
      %1387 = vmatpush1.bf16.msra.mxu0 0
      %1388 = vmatprep.subr.bf16.mxu0 0
      %1389 = vmatpush1.bf16.msra.mxu0 0
      %1390 = vmatprep.subr.bf16.mxu0 0
      %1391 = vmatpush1.bf16.msra.mxu0 0
      %1392 = vmatprep.subr.bf16.mxu0 0
      %1393 = vmatpush1.bf16.msra.mxu0 0
      %1394 = vmatprep.subr.bf16.mxu0 0
      %1395 = vmatpush1.bf16.msra.mxu0 0
      %1396 = vmatprep.mubr.bf16.mxu0 0
      %1397 = vmatmul.mubr.bf16.gmra.mrb[0].mxu0 %v1359
      %v1398 = vpop.f32.mrb[0].mxu0
      %v1399 = vadd.f32 0.0, %v1398
      %v1400 = vpop.f32.mrb[0].mxu0
      %v1401 = vpop.f32.mrb[0].mxu0
      %v1402 = vpop.f32.mrb[0].mxu0
      %1403 = vdwg.mxu0
      %1404 = vrot.lane.b32.xlu0 %v567, 64
      %v1405 = vpop.permute.xlu0 %1404
      %v1407 = vsel %vm1068, %v1065, 0
      %v1410 = vsel %vm1072, %v1405, 0
      %1412 = vmatprep.subr.bf16.mxu0 0
      %1413 = vmatpush1.bf16.msra.mxu0 %v1410
      %1414 = vmatprep.subr.bf16.mxu0 0
      %1415 = vmatpush1.bf16.msra.mxu0 0
      %1416 = vmatprep.subr.bf16.mxu0 0
      %1417 = vmatpush1.bf16.msra.mxu0 0
      %1418 = vmatprep.subr.bf16.mxu0 0
      %1419 = vmatpush1.bf16.msra.mxu0 0
      %1420 = vmatprep.subr.bf16.mxu0 0
      %1421 = vmatpush1.bf16.msra.mxu0 0
      %1422 = vmatprep.subr.bf16.mxu0 0
      %1423 = vmatpush1.bf16.msra.mxu0 0
      %1424 = vmatprep.subr.bf16.mxu0 0
      %1425 = vmatpush1.bf16.msra.mxu0 0
      %1426 = vmatprep.subr.bf16.mxu0 0
      %1427 = vmatpush1.bf16.msra.mxu0 0
      %1428 = vmatprep.subr.bf16.mxu0 0
      %1429 = vmatpush1.bf16.msra.mxu0 0
      %1430 = vmatprep.subr.bf16.mxu0 0
      %1431 = vmatpush1.bf16.msra.mxu0 0
      %1432 = vmatprep.subr.bf16.mxu0 0
      %1433 = vmatpush1.bf16.msra.mxu0 0
      %1434 = vmatprep.subr.bf16.mxu0 0
      %1435 = vmatpush1.bf16.msra.mxu0 0
      %1436 = vmatprep.subr.bf16.mxu0 0
      %1437 = vmatpush1.bf16.msra.mxu0 0
      %1438 = vmatprep.subr.bf16.mxu0 0
      %1439 = vmatpush1.bf16.msra.mxu0 0
      %1440 = vmatprep.subr.bf16.mxu0 0
      %1441 = vmatpush1.bf16.msra.mxu0 0
      %1442 = vmatprep.subr.bf16.mxu0 0
      %1443 = vmatpush1.bf16.msra.mxu0 0
      %1444 = vmatprep.mubr.bf16.mxu0 0
      %1445 = vmatmul.mubr.bf16.gmra.mrb[0].mxu0 %v1407
      %v1446 = vpop.f32.mrb[0].mxu0
      %v1447 = vadd.f32 0.0, %v1446
      %v1448 = vpop.f32.mrb[0].mxu0
      %v1449 = vpop.f32.mrb[0].mxu0
      %v1450 = vpop.f32.mrb[0].mxu0
      %1451 = vdwg.mxu0
      %v1460 = vcombine.low %v1111, %v1159
      %v1461 = vcombine.low %v1207, %v1255
      %v1463 = vunpack.c.l.s4 1983009808
      %v1464 = vunpack.c.0.s8 %v1463
      %v1465 = vlaneseq
      %v1466 = vshrl.u32 %v1465, 7
      %v1467 = vsub.s32 %v1464, %v1466
      %v1468 = vrot.slane %v1460, %v1467
      %v1470 = vunpack.c.l.s4 1983009808
      %v1471 = vunpack.c.0.s8 %v1470
      %v1472 = vlaneseq
      %v1473 = vshrl.u32 %v1472, 7
      %v1474 = vsub.s32 %v1471, %v1473
      %v1475 = vrot.slane %v1461, %v1474
      %v1476 = vcombine.low %v1468, %v1475
      %v1477 = vcombine.low %v1303, %v1351
      %v1478 = vcombine.low %v1399, %v1447
      %v1480 = vunpack.c.l.s4 1983009808
      %v1481 = vunpack.c.0.s8 %v1480
      %v1482 = vlaneseq
      %v1483 = vshrl.u32 %v1482, 7
      %v1484 = vsub.s32 %v1481, %v1483
      %v1485 = vrot.slane %v1477, %v1484
      %v1487 = vunpack.c.l.s4 1983009808
      %v1488 = vunpack.c.0.s8 %v1487
      %v1489 = vlaneseq
      %v1490 = vshrl.u32 %v1489, 7
      %v1491 = vsub.s32 %v1488, %v1490
      %v1492 = vrot.slane %v1478, %v1491
      %v1493 = vcombine.low %v1485, %v1492
      %v1496 = vpack.c.bf16 %v1493, %v1476
      %v1497 = vld [vmem:[%s5] sm:$0xf]
      %v1499 = vsel %vm571, %v1496, 0
      %vm1501 = vcmask 1043456
      %v1503 = vsel %vm1501, %v1497, 0
      %1505 = vmatprep.subr.bf16.mxu0 0
      %1506 = vmatpush1.bf16.msra.mxu0 %v1503
      %1507 = vmatprep.subr.bf16.mxu0 0
      %1508 = vmatpush1.bf16.msra.mxu0 0
      %1509 = vmatprep.subr.bf16.mxu0 0
      %1510 = vmatpush1.bf16.msra.mxu0 0
      %1511 = vmatprep.subr.bf16.mxu0 0
      %1512 = vmatpush1.bf16.msra.mxu0 0
      %1513 = vmatprep.subr.bf16.mxu0 0
      %1514 = vmatpush1.bf16.msra.mxu0 0
      %1515 = vmatprep.subr.bf16.mxu0 0
      %1516 = vmatpush1.bf16.msra.mxu0 0
      %1517 = vmatprep.subr.bf16.mxu0 0
      %1518 = vmatpush1.bf16.msra.mxu0 0
      %1519 = vmatprep.subr.bf16.mxu0 0
      %1520 = vmatpush1.bf16.msra.mxu0 0
      %1521 = vmatprep.subr.bf16.mxu0 0
      %1522 = vmatpush1.bf16.msra.mxu0 0
      %1523 = vmatprep.subr.bf16.mxu0 0
      %1524 = vmatpush1.bf16.msra.mxu0 0
      %1525 = vmatprep.subr.bf16.mxu0 0
      %1526 = vmatpush1.bf16.msra.mxu0 0
      %1527 = vmatprep.subr.bf16.mxu0 0
      %1528 = vmatpush1.bf16.msra.mxu0 0
      %1529 = vmatprep.subr.bf16.mxu0 0
      %1530 = vmatpush1.bf16.msra.mxu0 0
      %1531 = vmatprep.subr.bf16.mxu0 0
      %1532 = vmatpush1.bf16.msra.mxu0 0
      %1533 = vmatprep.subr.bf16.mxu0 0
      %1534 = vmatpush1.bf16.msra.mxu0 0
      %1535 = vmatprep.subr.bf16.mxu0 0
      %1536 = vmatpush1.bf16.msra.mxu0 0
      %1537 = vmatprep.mubr.bf16.mxu0 0
      %1538 = vmatmul.mubr.bf16.gmra.mrb[0].mxu0 %v1499
      %v1539 = vpop.f32.mrb[0].mxu0
      %v1540 = vadd.f32 0.0, %v1539
      %v1541 = vpop.f32.mrb[0].mxu0
      %v1542 = vpop.f32.mrb[0].mxu0
      %v1543 = vadd.f32 0.0, %v1542
      %v1544 = vpop.f32.mrb[0].mxu0
      %1545 = vdwg.mxu0
      %v1546 = vadd.f32 %v514, %v1540
      %v1547 = vadd.f32 %v515, %v1543
      %1548 = vrot.lane.b32.xlu0 %v560, 120
      %v1549 = vpop.permute.xlu0 %1548
      %1550 = vrot.lane.b32.xlu0 %v560, 88
      %v1551 = vpop.permute.xlu0 %1550
      %v1553 = vsel %vm571, %v1549, 0
      %v1556 = vsel %vm571, %v1551, 0
      %1558 = vmatprep.subr.bf16.mxu0 0
      %1559 = vmatpush1.bf16.xpose.msra.mxu0 %v1556
      %1560 = vmatprep.subr.bf16.mxu0 0
      %1561 = vmatpush1.bf16.xpose.msra.mxu0 0
      %1562 = vmatprep.subr.bf16.mxu0 0
      %1563 = vmatpush1.bf16.xpose.msra.mxu0 0
      %1564 = vmatprep.subr.bf16.mxu0 0
      %1565 = vmatpush1.bf16.xpose.msra.mxu0 0
      %1566 = vmatprep.subr.bf16.mxu0 0
      %1567 = vmatpush1.bf16.xpose.msra.mxu0 0
      %1568 = vmatprep.subr.bf16.mxu0 0
      %1569 = vmatpush1.bf16.xpose.msra.mxu0 0
      %1570 = vmatprep.subr.bf16.mxu0 0
      %1571 = vmatpush1.bf16.xpose.msra.mxu0 0
      %1572 = vmatprep.subr.bf16.mxu0 0
      %1573 = vmatpush1.bf16.xpose.msra.mxu0 0
      %1574 = vmatprep.subr.bf16.mxu0 0
      %1575 = vmatpush1.bf16.xpose.msra.mxu0 0
      %1576 = vmatprep.subr.bf16.mxu0 0
      %1577 = vmatpush1.bf16.xpose.msra.mxu0 0
      %1578 = vmatprep.subr.bf16.mxu0 0
      %1579 = vmatpush1.bf16.xpose.msra.mxu0 0
      %1580 = vmatprep.subr.bf16.mxu0 0
      %1581 = vmatpush1.bf16.xpose.msra.mxu0 0
      %1582 = vmatprep.subr.bf16.mxu0 0
      %1583 = vmatpush1.bf16.xpose.msra.mxu0 0
      %1584 = vmatprep.subr.bf16.mxu0 0
      %1585 = vmatpush1.bf16.xpose.msra.mxu0 0
      %1586 = vmatprep.subr.bf16.mxu0 0
      %1587 = vmatpush1.bf16.xpose.msra.mxu0 0
      %1588 = vmatprep.subr.bf16.mxu0 0
      %1589 = vmatpush1.bf16.xpose.msra.mxu0 0
      %1590 = vmatprep.mubr.bf16.mxu0 0
      %1591 = vmatmul.mubr.bf16.gmra.mrb[0].mxu0 %v1553
      %v1592 = vpop.f32.mrb[0].mxu0
      %v1593 = vadd.f32 0.0, %v1592
      %v1594 = vpop.f32.mrb[0].mxu0
      %v1595 = vpop.f32.mrb[0].mxu0
      %v1596 = vpop.f32.mrb[0].mxu0
      %1597 = vdwg.mxu0
      %1598 = vrot.lane.b32.xlu0 %v561, 120
      %v1599 = vpop.permute.xlu0 %1598
      %1600 = vrot.lane.b32.xlu0 %v561, 88
      %v1601 = vpop.permute.xlu0 %1600
      %v1603 = vsel %vm571, %v1599, 0
      %v1606 = vsel %vm571, %v1601, 0
      %1608 = vmatprep.subr.bf16.mxu0 0
      %1609 = vmatpush1.bf16.xpose.msra.mxu0 %v1606
      %1610 = vmatprep.subr.bf16.mxu0 0
      %1611 = vmatpush1.bf16.xpose.msra.mxu0 0
      %1612 = vmatprep.subr.bf16.mxu0 0
      %1613 = vmatpush1.bf16.xpose.msra.mxu0 0
      %1614 = vmatprep.subr.bf16.mxu0 0
      %1615 = vmatpush1.bf16.xpose.msra.mxu0 0
      %1616 = vmatprep.subr.bf16.mxu0 0
      %1617 = vmatpush1.bf16.xpose.msra.mxu0 0
      %1618 = vmatprep.subr.bf16.mxu0 0
      %1619 = vmatpush1.bf16.xpose.msra.mxu0 0
      %1620 = vmatprep.subr.bf16.mxu0 0
      %1621 = vmatpush1.bf16.xpose.msra.mxu0 0
      %1622 = vmatprep.subr.bf16.mxu0 0
      %1623 = vmatpush1.bf16.xpose.msra.mxu0 0
      %1624 = vmatprep.subr.bf16.mxu0 0
      %1625 = vmatpush1.bf16.xpose.msra.mxu0 0
      %1626 = vmatprep.subr.bf16.mxu0 0
      %1627 = vmatpush1.bf16.xpose.msra.mxu0 0
      %1628 = vmatprep.subr.bf16.mxu0 0
      %1629 = vmatpush1.bf16.xpose.msra.mxu0 0
      %1630 = vmatprep.subr.bf16.mxu0 0
      %1631 = vmatpush1.bf16.xpose.msra.mxu0 0
      %1632 = vmatprep.subr.bf16.mxu0 0
      %1633 = vmatpush1.bf16.xpose.msra.mxu0 0
      %1634 = vmatprep.subr.bf16.mxu0 0
      %1635 = vmatpush1.bf16.xpose.msra.mxu0 0
      %1636 = vmatprep.subr.bf16.mxu0 0
      %1637 = vmatpush1.bf16.xpose.msra.mxu0 0
      %1638 = vmatprep.subr.bf16.mxu0 0
      %1639 = vmatpush1.bf16.xpose.msra.mxu0 0
      %1640 = vmatprep.mubr.bf16.mxu0 0
      %1641 = vmatmul.mubr.bf16.gmra.mrb[0].mxu0 %v1603
      %v1642 = vpop.f32.mrb[0].mxu0
      %v1643 = vadd.f32 0.0, %v1642
      %v1644 = vpop.f32.mrb[0].mxu0
      %v1645 = vpop.f32.mrb[0].mxu0
      %v1646 = vpop.f32.mrb[0].mxu0
      %1647 = vdwg.mxu0
      %1648 = vrot.lane.b32.xlu0 %v562, 120
      %v1649 = vpop.permute.xlu0 %1648
      %1650 = vrot.lane.b32.xlu0 %v562, 88
      %v1651 = vpop.permute.xlu0 %1650
      %v1653 = vsel %vm571, %v1649, 0
      %v1656 = vsel %vm571, %v1651, 0
      %1658 = vmatprep.subr.bf16.mxu0 0
      %1659 = vmatpush1.bf16.xpose.msra.mxu0 %v1656
      %1660 = vmatprep.subr.bf16.mxu0 0
      %1661 = vmatpush1.bf16.xpose.msra.mxu0 0
      %1662 = vmatprep.subr.bf16.mxu0 0
      %1663 = vmatpush1.bf16.xpose.msra.mxu0 0
      %1664 = vmatprep.subr.bf16.mxu0 0
      %1665 = vmatpush1.bf16.xpose.msra.mxu0 0
      %1666 = vmatprep.subr.bf16.mxu0 0
      %1667 = vmatpush1.bf16.xpose.msra.mxu0 0
      %1668 = vmatprep.subr.bf16.mxu0 0
      %1669 = vmatpush1.bf16.xpose.msra.mxu0 0
      %1670 = vmatprep.subr.bf16.mxu0 0
      %1671 = vmatpush1.bf16.xpose.msra.mxu0 0
      %1672 = vmatprep.subr.bf16.mxu0 0
      %1673 = vmatpush1.bf16.xpose.msra.mxu0 0
      %1674 = vmatprep.subr.bf16.mxu0 0
      %1675 = vmatpush1.bf16.xpose.msra.mxu0 0
      %1676 = vmatprep.subr.bf16.mxu0 0
      %1677 = vmatpush1.bf16.xpose.msra.mxu0 0
      %1678 = vmatprep.subr.bf16.mxu0 0
      %1679 = vmatpush1.bf16.xpose.msra.mxu0 0
      %1680 = vmatprep.subr.bf16.mxu0 0
      %1681 = vmatpush1.bf16.xpose.msra.mxu0 0
      %1682 = vmatprep.subr.bf16.mxu0 0
      %1683 = vmatpush1.bf16.xpose.msra.mxu0 0
      %1684 = vmatprep.subr.bf16.mxu0 0
      %1685 = vmatpush1.bf16.xpose.msra.mxu0 0
      %1686 = vmatprep.subr.bf16.mxu0 0
      %1687 = vmatpush1.bf16.xpose.msra.mxu0 0
      %1688 = vmatprep.subr.bf16.mxu0 0
      %1689 = vmatpush1.bf16.xpose.msra.mxu0 0
      %1690 = vmatprep.mubr.bf16.mxu0 0
      %1691 = vmatmul.mubr.bf16.gmra.mrb[0].mxu0 %v1653
      %v1692 = vpop.f32.mrb[0].mxu0
      %v1693 = vadd.f32 0.0, %v1692
      %v1694 = vpop.f32.mrb[0].mxu0
      %v1695 = vpop.f32.mrb[0].mxu0
      %v1696 = vpop.f32.mrb[0].mxu0
      %1697 = vdwg.mxu0
      %1698 = vrot.lane.b32.xlu0 %v563, 120
      %v1699 = vpop.permute.xlu0 %1698
      %1700 = vrot.lane.b32.xlu0 %v563, 88
      %v1701 = vpop.permute.xlu0 %1700
      %v1703 = vsel %vm571, %v1699, 0
      %v1706 = vsel %vm571, %v1701, 0
      %1708 = vmatprep.subr.bf16.mxu0 0
      %1709 = vmatpush1.bf16.xpose.msra.mxu0 %v1706
      %1710 = vmatprep.subr.bf16.mxu0 0
      %1711 = vmatpush1.bf16.xpose.msra.mxu0 0
      %1712 = vmatprep.subr.bf16.mxu0 0
      %1713 = vmatpush1.bf16.xpose.msra.mxu0 0
      %1714 = vmatprep.subr.bf16.mxu0 0
      %1715 = vmatpush1.bf16.xpose.msra.mxu0 0
      %1716 = vmatprep.subr.bf16.mxu0 0
      %1717 = vmatpush1.bf16.xpose.msra.mxu0 0
      %1718 = vmatprep.subr.bf16.mxu0 0
      %1719 = vmatpush1.bf16.xpose.msra.mxu0 0
      %1720 = vmatprep.subr.bf16.mxu0 0
      %1721 = vmatpush1.bf16.xpose.msra.mxu0 0
      %1722 = vmatprep.subr.bf16.mxu0 0
      %1723 = vmatpush1.bf16.xpose.msra.mxu0 0
      %1724 = vmatprep.subr.bf16.mxu0 0
      %1725 = vmatpush1.bf16.xpose.msra.mxu0 0
      %1726 = vmatprep.subr.bf16.mxu0 0
      %1727 = vmatpush1.bf16.xpose.msra.mxu0 0
      %1728 = vmatprep.subr.bf16.mxu0 0
      %1729 = vmatpush1.bf16.xpose.msra.mxu0 0
      %1730 = vmatprep.subr.bf16.mxu0 0
      %1731 = vmatpush1.bf16.xpose.msra.mxu0 0
      %1732 = vmatprep.subr.bf16.mxu0 0
      %1733 = vmatpush1.bf16.xpose.msra.mxu0 0
      %1734 = vmatprep.subr.bf16.mxu0 0
      %1735 = vmatpush1.bf16.xpose.msra.mxu0 0
      %1736 = vmatprep.subr.bf16.mxu0 0
      %1737 = vmatpush1.bf16.xpose.msra.mxu0 0
      %1738 = vmatprep.subr.bf16.mxu0 0
      %1739 = vmatpush1.bf16.xpose.msra.mxu0 0
      %1740 = vmatprep.mubr.bf16.mxu0 0
      %1741 = vmatmul.mubr.bf16.gmra.mrb[0].mxu0 %v1703
      %v1742 = vpop.f32.mrb[0].mxu0
      %v1743 = vadd.f32 0.0, %v1742
      %v1744 = vpop.f32.mrb[0].mxu0
      %v1745 = vpop.f32.mrb[0].mxu0
      %v1746 = vpop.f32.mrb[0].mxu0
      %1747 = vdwg.mxu0
      %1748 = vrot.lane.b32.xlu0 %v564, 120
      %v1749 = vpop.permute.xlu0 %1748
      %1750 = vrot.lane.b32.xlu0 %v564, 88
      %v1751 = vpop.permute.xlu0 %1750
      %v1753 = vsel %vm571, %v1749, 0
      %v1756 = vsel %vm571, %v1751, 0
      %1758 = vmatprep.subr.bf16.mxu0 0
      %1759 = vmatpush1.bf16.xpose.msra.mxu0 %v1756
      %1760 = vmatprep.subr.bf16.mxu0 0
      %1761 = vmatpush1.bf16.xpose.msra.mxu0 0
      %1762 = vmatprep.subr.bf16.mxu0 0
      %1763 = vmatpush1.bf16.xpose.msra.mxu0 0
      %1764 = vmatprep.subr.bf16.mxu0 0
      %1765 = vmatpush1.bf16.xpose.msra.mxu0 0
      %1766 = vmatprep.subr.bf16.mxu0 0
      %1767 = vmatpush1.bf16.xpose.msra.mxu0 0
      %1768 = vmatprep.subr.bf16.mxu0 0
      %1769 = vmatpush1.bf16.xpose.msra.mxu0 0
      %1770 = vmatprep.subr.bf16.mxu0 0
      %1771 = vmatpush1.bf16.xpose.msra.mxu0 0
      %1772 = vmatprep.subr.bf16.mxu0 0
      %1773 = vmatpush1.bf16.xpose.msra.mxu0 0
      %1774 = vmatprep.subr.bf16.mxu0 0
      %1775 = vmatpush1.bf16.xpose.msra.mxu0 0
      %1776 = vmatprep.subr.bf16.mxu0 0
      %1777 = vmatpush1.bf16.xpose.msra.mxu0 0
      %1778 = vmatprep.subr.bf16.mxu0 0
      %1779 = vmatpush1.bf16.xpose.msra.mxu0 0
      %1780 = vmatprep.subr.bf16.mxu0 0
      %1781 = vmatpush1.bf16.xpose.msra.mxu0 0
      %1782 = vmatprep.subr.bf16.mxu0 0
      %1783 = vmatpush1.bf16.xpose.msra.mxu0 0
      %1784 = vmatprep.subr.bf16.mxu0 0
      %1785 = vmatpush1.bf16.xpose.msra.mxu0 0
      %1786 = vmatprep.subr.bf16.mxu0 0
      %1787 = vmatpush1.bf16.xpose.msra.mxu0 0
      %1788 = vmatprep.subr.bf16.mxu0 0
      %1789 = vmatpush1.bf16.xpose.msra.mxu0 0
      %1790 = vmatprep.mubr.bf16.mxu0 0
      %1791 = vmatmul.mubr.bf16.gmra.mrb[0].mxu0 %v1753
      %v1792 = vpop.f32.mrb[0].mxu0
      %v1793 = vadd.f32 0.0, %v1792
      %v1794 = vpop.f32.mrb[0].mxu0
      %v1795 = vpop.f32.mrb[0].mxu0
      %v1796 = vpop.f32.mrb[0].mxu0
      %1797 = vdwg.mxu0
      %1798 = vrot.lane.b32.xlu0 %v565, 120
      %v1799 = vpop.permute.xlu0 %1798
      %1800 = vrot.lane.b32.xlu0 %v565, 88
      %v1801 = vpop.permute.xlu0 %1800
      %v1803 = vsel %vm571, %v1799, 0
      %v1806 = vsel %vm571, %v1801, 0
      %1808 = vmatprep.subr.bf16.mxu0 0
      %1809 = vmatpush1.bf16.xpose.msra.mxu0 %v1806
      %1810 = vmatprep.subr.bf16.mxu0 0
      %1811 = vmatpush1.bf16.xpose.msra.mxu0 0
      %1812 = vmatprep.subr.bf16.mxu0 0
      %1813 = vmatpush1.bf16.xpose.msra.mxu0 0
      %1814 = vmatprep.subr.bf16.mxu0 0
      %1815 = vmatpush1.bf16.xpose.msra.mxu0 0
      %1816 = vmatprep.subr.bf16.mxu0 0
      %1817 = vmatpush1.bf16.xpose.msra.mxu0 0
      %1818 = vmatprep.subr.bf16.mxu0 0
      %1819 = vmatpush1.bf16.xpose.msra.mxu0 0
      %1820 = vmatprep.subr.bf16.mxu0 0
      %1821 = vmatpush1.bf16.xpose.msra.mxu0 0
      %1822 = vmatprep.subr.bf16.mxu0 0
      %1823 = vmatpush1.bf16.xpose.msra.mxu0 0
      %1824 = vmatprep.subr.bf16.mxu0 0
      %1825 = vmatpush1.bf16.xpose.msra.mxu0 0
      %1826 = vmatprep.subr.bf16.mxu0 0
      %1827 = vmatpush1.bf16.xpose.msra.mxu0 0
      %1828 = vmatprep.subr.bf16.mxu0 0
      %1829 = vmatpush1.bf16.xpose.msra.mxu0 0
      %1830 = vmatprep.subr.bf16.mxu0 0
      %1831 = vmatpush1.bf16.xpose.msra.mxu0 0
      %1832 = vmatprep.subr.bf16.mxu0 0
      %1833 = vmatpush1.bf16.xpose.msra.mxu0 0
      %1834 = vmatprep.subr.bf16.mxu0 0
      %1835 = vmatpush1.bf16.xpose.msra.mxu0 0
      %1836 = vmatprep.subr.bf16.mxu0 0
      %1837 = vmatpush1.bf16.xpose.msra.mxu0 0
      %1838 = vmatprep.subr.bf16.mxu0 0
      %1839 = vmatpush1.bf16.xpose.msra.mxu0 0
      %1840 = vmatprep.mubr.bf16.mxu0 0
      %1841 = vmatmul.mubr.bf16.gmra.mrb[0].mxu0 %v1803
      %v1842 = vpop.f32.mrb[0].mxu0
      %v1843 = vadd.f32 0.0, %v1842
      %v1844 = vpop.f32.mrb[0].mxu0
      %v1845 = vpop.f32.mrb[0].mxu0
      %v1846 = vpop.f32.mrb[0].mxu0
      %1847 = vdwg.mxu0
      %1848 = vrot.lane.b32.xlu0 %v566, 120
      %v1849 = vpop.permute.xlu0 %1848
      %1850 = vrot.lane.b32.xlu0 %v566, 88
      %v1851 = vpop.permute.xlu0 %1850
      %v1853 = vsel %vm571, %v1849, 0
      %v1856 = vsel %vm571, %v1851, 0
      %1858 = vmatprep.subr.bf16.mxu0 0
      %1859 = vmatpush1.bf16.xpose.msra.mxu0 %v1856
      %1860 = vmatprep.subr.bf16.mxu0 0
      %1861 = vmatpush1.bf16.xpose.msra.mxu0 0
      %1862 = vmatprep.subr.bf16.mxu0 0
      %1863 = vmatpush1.bf16.xpose.msra.mxu0 0
      %1864 = vmatprep.subr.bf16.mxu0 0
      %1865 = vmatpush1.bf16.xpose.msra.mxu0 0
      %1866 = vmatprep.subr.bf16.mxu0 0
      %1867 = vmatpush1.bf16.xpose.msra.mxu0 0
      %1868 = vmatprep.subr.bf16.mxu0 0
      %1869 = vmatpush1.bf16.xpose.msra.mxu0 0
      %1870 = vmatprep.subr.bf16.mxu0 0
      %1871 = vmatpush1.bf16.xpose.msra.mxu0 0
      %1872 = vmatprep.subr.bf16.mxu0 0
      %1873 = vmatpush1.bf16.xpose.msra.mxu0 0
      %1874 = vmatprep.subr.bf16.mxu0 0
      %1875 = vmatpush1.bf16.xpose.msra.mxu0 0
      %1876 = vmatprep.subr.bf16.mxu0 0
      %1877 = vmatpush1.bf16.xpose.msra.mxu0 0
      %1878 = vmatprep.subr.bf16.mxu0 0
      %1879 = vmatpush1.bf16.xpose.msra.mxu0 0
      %1880 = vmatprep.subr.bf16.mxu0 0
      %1881 = vmatpush1.bf16.xpose.msra.mxu0 0
      %1882 = vmatprep.subr.bf16.mxu0 0
      %1883 = vmatpush1.bf16.xpose.msra.mxu0 0
      %1884 = vmatprep.subr.bf16.mxu0 0
      %1885 = vmatpush1.bf16.xpose.msra.mxu0 0
      %1886 = vmatprep.subr.bf16.mxu0 0
      %1887 = vmatpush1.bf16.xpose.msra.mxu0 0
      %1888 = vmatprep.subr.bf16.mxu0 0
      %1889 = vmatpush1.bf16.xpose.msra.mxu0 0
      %1890 = vmatprep.mubr.bf16.mxu0 0
      %1891 = vmatmul.mubr.bf16.gmra.mrb[0].mxu0 %v1853
      %v1892 = vpop.f32.mrb[0].mxu0
      %v1893 = vadd.f32 0.0, %v1892
      %v1894 = vpop.f32.mrb[0].mxu0
      %v1895 = vpop.f32.mrb[0].mxu0
      %v1896 = vpop.f32.mrb[0].mxu0
      %1897 = vdwg.mxu0
      %1898 = vrot.lane.b32.xlu0 %v567, 120
      %v1899 = vpop.permute.xlu0 %1898
      %1900 = vrot.lane.b32.xlu0 %v567, 88
      %v1901 = vpop.permute.xlu0 %1900
      %v1903 = vsel %vm571, %v1899, 0
      %v1906 = vsel %vm571, %v1901, 0
      %1908 = vmatprep.subr.bf16.mxu0 0
      %1909 = vmatpush1.bf16.xpose.msra.mxu0 %v1906
      %1910 = vmatprep.subr.bf16.mxu0 0
      %1911 = vmatpush1.bf16.xpose.msra.mxu0 0
      %1912 = vmatprep.subr.bf16.mxu0 0
      %1913 = vmatpush1.bf16.xpose.msra.mxu0 0
      %1914 = vmatprep.subr.bf16.mxu0 0
      %1915 = vmatpush1.bf16.xpose.msra.mxu0 0
      %1916 = vmatprep.subr.bf16.mxu0 0
      %1917 = vmatpush1.bf16.xpose.msra.mxu0 0
      %1918 = vmatprep.subr.bf16.mxu0 0
      %1919 = vmatpush1.bf16.xpose.msra.mxu0 0
      %1920 = vmatprep.subr.bf16.mxu0 0
      %1921 = vmatpush1.bf16.xpose.msra.mxu0 0
      %1922 = vmatprep.subr.bf16.mxu0 0
      %1923 = vmatpush1.bf16.xpose.msra.mxu0 0
      %1924 = vmatprep.subr.bf16.mxu0 0
      %1925 = vmatpush1.bf16.xpose.msra.mxu0 0
      %1926 = vmatprep.subr.bf16.mxu0 0
      %1927 = vmatpush1.bf16.xpose.msra.mxu0 0
      %1928 = vmatprep.subr.bf16.mxu0 0
      %1929 = vmatpush1.bf16.xpose.msra.mxu0 0
      %1930 = vmatprep.subr.bf16.mxu0 0
      %1931 = vmatpush1.bf16.xpose.msra.mxu0 0
      %1932 = vmatprep.subr.bf16.mxu0 0
      %1933 = vmatpush1.bf16.xpose.msra.mxu0 0
      %1934 = vmatprep.subr.bf16.mxu0 0
      %1935 = vmatpush1.bf16.xpose.msra.mxu0 0
      %1936 = vmatprep.subr.bf16.mxu0 0
      %1937 = vmatpush1.bf16.xpose.msra.mxu0 0
      %1938 = vmatprep.subr.bf16.mxu0 0
      %1939 = vmatpush1.bf16.xpose.msra.mxu0 0
      %1940 = vmatprep.mubr.bf16.mxu0 0
      %1941 = vmatmul.mubr.bf16.gmra.mrb[0].mxu0 %v1903
      %v1942 = vpop.f32.mrb[0].mxu0
      %v1943 = vadd.f32 0.0, %v1942
      %v1944 = vpop.f32.mrb[0].mxu0
      %v1945 = vpop.f32.mrb[0].mxu0
      %v1946 = vpop.f32.mrb[0].mxu0
      %1947 = vdwg.mxu0
      %v1948 = vmul.f32 %v1593, 0.35355338
      %v1949 = vmul.f32 %v1643, 0.35355338
      %v1950 = vmul.f32 %v1693, 0.35355338
      %v1951 = vmul.f32 %v1743, 0.35355338
      %v1952 = vmul.f32 %v1793, 0.35355338
      %v1953 = vmul.f32 %v1843, 0.35355338
      %v1954 = vmul.f32 %v1893, 0.35355338
      %v1955 = vmul.f32 %v1943, 0.35355338
      %v1956 = vsel %vm969, %v1948, -inf
      %1957 = vmax.xlane.f32.xlu0 %v1956
      %v1958 = vpop.xlane.xlu0 %1957
      %v1959 = vsel %vm969, %v1949, -inf
      %1960 = vmax.xlane.f32.xlu0 %v1959
      %v1961 = vpop.xlane.xlu0 %1960
      %v1962 = vsel %vm969, %v1950, -inf
      %1963 = vmax.xlane.f32.xlu0 %v1962
      %v1964 = vpop.xlane.xlu0 %1963
      %v1965 = vsel %vm969, %v1951, -inf
      %1966 = vmax.xlane.f32.xlu0 %v1965
      %v1967 = vpop.xlane.xlu0 %1966
      %v1968 = vsel %vm969, %v1952, -inf
      %1969 = vmax.xlane.f32.xlu0 %v1968
      %v1970 = vpop.xlane.xlu0 %1969
      %v1971 = vsel %vm969, %v1953, -inf
      %1972 = vmax.xlane.f32.xlu0 %v1971
      %v1973 = vpop.xlane.xlu0 %1972
      %v1974 = vsel %vm969, %v1954, -inf
      %1975 = vmax.xlane.f32.xlu0 %v1974
      %v1976 = vpop.xlane.xlu0 %1975
      %v1977 = vsel %vm969, %v1955, -inf
      %1978 = vmax.xlane.f32.xlu0 %v1977
      %v1979 = vpop.xlane.xlu0 %1978
      %v1980 = vsub.f32 %v1948, %v1958
      %v1981 = vsub.f32 %v1949, %v1961
      %v1982 = vsub.f32 %v1950, %v1964
      %v1983 = vsub.f32 %v1951, %v1967
      %v1984 = vsub.f32 %v1952, %v1970
      %v1985 = vsub.f32 %v1953, %v1973
      %v1986 = vsub.f32 %v1954, %v1976
      %v1987 = vsub.f32 %v1955, %v1979
      %v1988 = vmul.f32 %v1980, 1.442695
      %v1989 = vpow.pop %v1988
      %v1990 = vmul.f32 %v1981, 1.442695
      %v1991 = vpow.pop %v1990
      %v1992 = vmul.f32 %v1982, 1.442695
      %v1993 = vpow.pop %v1992
      %v1994 = vmul.f32 %v1983, 1.442695
      %v1995 = vpow.pop %v1994
      %v1996 = vmul.f32 %v1984, 1.442695
      %v1997 = vpow.pop %v1996
      %v1998 = vmul.f32 %v1985, 1.442695
      %v1999 = vpow.pop %v1998
      %v2000 = vmul.f32 %v1986, 1.442695
      %v2001 = vpow.pop %v2000
      %v2002 = vmul.f32 %v1987, 1.442695
      %v2003 = vpow.pop %v2002
      %v2004 = vsel %vm969, %v1989, 0.0
      %2005 = vadd.xlane.f32.xlu0 %v2004
      %v2006 = vpop.xlane.xlu0 %2005
      %v2007 = vsel %vm969, %v1991, 0.0
      %2008 = vadd.xlane.f32.xlu0 %v2007
      %v2009 = vpop.xlane.xlu0 %2008
      %v2010 = vsel %vm969, %v1993, 0.0
      %2011 = vadd.xlane.f32.xlu0 %v2010
      %v2012 = vpop.xlane.xlu0 %2011
      %v2013 = vsel %vm969, %v1995, 0.0
      %2014 = vadd.xlane.f32.xlu0 %v2013
      %v2015 = vpop.xlane.xlu0 %2014
      %v2016 = vsel %vm969, %v1997, 0.0
      %2017 = vadd.xlane.f32.xlu0 %v2016
      %v2018 = vpop.xlane.xlu0 %2017
      %v2019 = vsel %vm969, %v1999, 0.0
      %2020 = vadd.xlane.f32.xlu0 %v2019
      %v2021 = vpop.xlane.xlu0 %2020
      %v2022 = vsel %vm969, %v2001, 0.0
      %2023 = vadd.xlane.f32.xlu0 %v2022
      %v2024 = vpop.xlane.xlu0 %2023
      %v2025 = vsel %vm969, %v2003, 0.0
      %2026 = vadd.xlane.f32.xlu0 %v2025
      %v2027 = vpop.xlane.xlu0 %2026
      %v2028 = vrcp.pop %v2006
      %v2029 = vrcp.pop %v2009
      %v2030 = vrcp.pop %v2012
      %v2031 = vrcp.pop %v2015
      %v2032 = vrcp.pop %v2018
      %v2033 = vrcp.pop %v2021
      %v2034 = vrcp.pop %v2024
      %v2035 = vrcp.pop %v2027
      %v2036 = vmul.f32 %v1989, %v2028
      %v2037 = vmul.f32 %v1991, %v2029
      %v2038 = vmul.f32 %v1993, %v2030
      %v2039 = vmul.f32 %v1995, %v2031
      %v2040 = vmul.f32 %v1997, %v2032
      %v2041 = vmul.f32 %v1999, %v2033
      %v2042 = vmul.f32 %v2001, %v2034
      %v2043 = vmul.f32 %v2003, %v2035
      %v2044 = vpack.c.bf16 %v2036, %v2036
      %v2045 = vpack.c.bf16 %v2037, %v2037
      %v2046 = vpack.c.bf16 %v2038, %v2038
      %v2047 = vpack.c.bf16 %v2039, %v2039
      %v2048 = vpack.c.bf16 %v2040, %v2040
      %v2049 = vpack.c.bf16 %v2041, %v2041
      %v2050 = vpack.c.bf16 %v2042, %v2042
      %v2051 = vpack.c.bf16 %v2043, %v2043
      %2052 = vrot.lane.b32.xlu0 %v560, 56
      %v2053 = vpop.permute.xlu0 %2052
      %v2055 = vsel %vm1068, %v2044, 0
      %v2058 = vsel %vm1072, %v2053, 0
      %2060 = vmatprep.subr.bf16.mxu0 0
      %2061 = vmatpush1.bf16.msra.mxu0 %v2058
      %2062 = vmatprep.subr.bf16.mxu0 0
      %2063 = vmatpush1.bf16.msra.mxu0 0
      %2064 = vmatprep.subr.bf16.mxu0 0
      %2065 = vmatpush1.bf16.msra.mxu0 0
      %2066 = vmatprep.subr.bf16.mxu0 0
      %2067 = vmatpush1.bf16.msra.mxu0 0
      %2068 = vmatprep.subr.bf16.mxu0 0
      %2069 = vmatpush1.bf16.msra.mxu0 0
      %2070 = vmatprep.subr.bf16.mxu0 0
      %2071 = vmatpush1.bf16.msra.mxu0 0
      %2072 = vmatprep.subr.bf16.mxu0 0
      %2073 = vmatpush1.bf16.msra.mxu0 0
      %2074 = vmatprep.subr.bf16.mxu0 0
      %2075 = vmatpush1.bf16.msra.mxu0 0
      %2076 = vmatprep.subr.bf16.mxu0 0
      %2077 = vmatpush1.bf16.msra.mxu0 0
      %2078 = vmatprep.subr.bf16.mxu0 0
      %2079 = vmatpush1.bf16.msra.mxu0 0
      %2080 = vmatprep.subr.bf16.mxu0 0
      %2081 = vmatpush1.bf16.msra.mxu0 0
      %2082 = vmatprep.subr.bf16.mxu0 0
      %2083 = vmatpush1.bf16.msra.mxu0 0
      %2084 = vmatprep.subr.bf16.mxu0 0
      %2085 = vmatpush1.bf16.msra.mxu0 0
      %2086 = vmatprep.subr.bf16.mxu0 0
      %2087 = vmatpush1.bf16.msra.mxu0 0
      %2088 = vmatprep.subr.bf16.mxu0 0
      %2089 = vmatpush1.bf16.msra.mxu0 0
      %2090 = vmatprep.subr.bf16.mxu0 0
      %2091 = vmatpush1.bf16.msra.mxu0 0
      %2092 = vmatprep.mubr.bf16.mxu0 0
      %2093 = vmatmul.mubr.bf16.gmra.mrb[0].mxu0 %v2055
      %v2094 = vpop.f32.mrb[0].mxu0
      %v2095 = vadd.f32 0.0, %v2094
      %v2096 = vpop.f32.mrb[0].mxu0
      %v2097 = vpop.f32.mrb[0].mxu0
      %v2098 = vpop.f32.mrb[0].mxu0
      %2099 = vdwg.mxu0
      %2100 = vrot.lane.b32.xlu0 %v561, 56
      %v2101 = vpop.permute.xlu0 %2100
      %v2103 = vsel %vm1068, %v2045, 0
      %v2106 = vsel %vm1072, %v2101, 0
      %2108 = vmatprep.subr.bf16.mxu0 0
      %2109 = vmatpush1.bf16.msra.mxu0 %v2106
      %2110 = vmatprep.subr.bf16.mxu0 0
      %2111 = vmatpush1.bf16.msra.mxu0 0
      %2112 = vmatprep.subr.bf16.mxu0 0
      %2113 = vmatpush1.bf16.msra.mxu0 0
      %2114 = vmatprep.subr.bf16.mxu0 0
      %2115 = vmatpush1.bf16.msra.mxu0 0
      %2116 = vmatprep.subr.bf16.mxu0 0
      %2117 = vmatpush1.bf16.msra.mxu0 0
      %2118 = vmatprep.subr.bf16.mxu0 0
      %2119 = vmatpush1.bf16.msra.mxu0 0
      %2120 = vmatprep.subr.bf16.mxu0 0
      %2121 = vmatpush1.bf16.msra.mxu0 0
      %2122 = vmatprep.subr.bf16.mxu0 0
      %2123 = vmatpush1.bf16.msra.mxu0 0
      %2124 = vmatprep.subr.bf16.mxu0 0
      %2125 = vmatpush1.bf16.msra.mxu0 0
      %2126 = vmatprep.subr.bf16.mxu0 0
      %2127 = vmatpush1.bf16.msra.mxu0 0
      %2128 = vmatprep.subr.bf16.mxu0 0
      %2129 = vmatpush1.bf16.msra.mxu0 0
      %2130 = vmatprep.subr.bf16.mxu0 0
      %2131 = vmatpush1.bf16.msra.mxu0 0
      %2132 = vmatprep.subr.bf16.mxu0 0
      %2133 = vmatpush1.bf16.msra.mxu0 0
      %2134 = vmatprep.subr.bf16.mxu0 0
      %2135 = vmatpush1.bf16.msra.mxu0 0
      %2136 = vmatprep.subr.bf16.mxu0 0
      %2137 = vmatpush1.bf16.msra.mxu0 0
      %2138 = vmatprep.subr.bf16.mxu0 0
      %2139 = vmatpush1.bf16.msra.mxu0 0
      %2140 = vmatprep.mubr.bf16.mxu0 0
      %2141 = vmatmul.mubr.bf16.gmra.mrb[0].mxu0 %v2103
      %v2142 = vpop.f32.mrb[0].mxu0
      %v2143 = vadd.f32 0.0, %v2142
      %v2144 = vpop.f32.mrb[0].mxu0
      %v2145 = vpop.f32.mrb[0].mxu0
      %v2146 = vpop.f32.mrb[0].mxu0
      %2147 = vdwg.mxu0
      %2148 = vrot.lane.b32.xlu0 %v562, 56
      %v2149 = vpop.permute.xlu0 %2148
      %v2151 = vsel %vm1068, %v2046, 0
      %v2154 = vsel %vm1072, %v2149, 0
      %2156 = vmatprep.subr.bf16.mxu0 0
      %2157 = vmatpush1.bf16.msra.mxu0 %v2154
      %2158 = vmatprep.subr.bf16.mxu0 0
      %2159 = vmatpush1.bf16.msra.mxu0 0
      %2160 = vmatprep.subr.bf16.mxu0 0
      %2161 = vmatpush1.bf16.msra.mxu0 0
      %2162 = vmatprep.subr.bf16.mxu0 0
      %2163 = vmatpush1.bf16.msra.mxu0 0
      %2164 = vmatprep.subr.bf16.mxu0 0
      %2165 = vmatpush1.bf16.msra.mxu0 0
      %2166 = vmatprep.subr.bf16.mxu0 0
      %2167 = vmatpush1.bf16.msra.mxu0 0
      %2168 = vmatprep.subr.bf16.mxu0 0
      %2169 = vmatpush1.bf16.msra.mxu0 0
      %2170 = vmatprep.subr.bf16.mxu0 0
      %2171 = vmatpush1.bf16.msra.mxu0 0
      %2172 = vmatprep.subr.bf16.mxu0 0
      %2173 = vmatpush1.bf16.msra.mxu0 0
      %2174 = vmatprep.subr.bf16.mxu0 0
      %2175 = vmatpush1.bf16.msra.mxu0 0
      %2176 = vmatprep.subr.bf16.mxu0 0
      %2177 = vmatpush1.bf16.msra.mxu0 0
      %2178 = vmatprep.subr.bf16.mxu0 0
      %2179 = vmatpush1.bf16.msra.mxu0 0
      %2180 = vmatprep.subr.bf16.mxu0 0
      %2181 = vmatpush1.bf16.msra.mxu0 0
      %2182 = vmatprep.subr.bf16.mxu0 0
      %2183 = vmatpush1.bf16.msra.mxu0 0
      %2184 = vmatprep.subr.bf16.mxu0 0
      %2185 = vmatpush1.bf16.msra.mxu0 0
      %2186 = vmatprep.subr.bf16.mxu0 0
      %2187 = vmatpush1.bf16.msra.mxu0 0
      %2188 = vmatprep.mubr.bf16.mxu0 0
      %2189 = vmatmul.mubr.bf16.gmra.mrb[0].mxu0 %v2151
      %v2190 = vpop.f32.mrb[0].mxu0
      %v2191 = vadd.f32 0.0, %v2190
      %v2192 = vpop.f32.mrb[0].mxu0
      %v2193 = vpop.f32.mrb[0].mxu0
      %v2194 = vpop.f32.mrb[0].mxu0
      %2195 = vdwg.mxu0
      %2196 = vrot.lane.b32.xlu0 %v563, 56
      %v2197 = vpop.permute.xlu0 %2196
      %v2199 = vsel %vm1068, %v2047, 0
      %v2202 = vsel %vm1072, %v2197, 0
      %2204 = vmatprep.subr.bf16.mxu0 0
      %2205 = vmatpush1.bf16.msra.mxu0 %v2202
      %2206 = vmatprep.subr.bf16.mxu0 0
      %2207 = vmatpush1.bf16.msra.mxu0 0
      %2208 = vmatprep.subr.bf16.mxu0 0
      %2209 = vmatpush1.bf16.msra.mxu0 0
      %2210 = vmatprep.subr.bf16.mxu0 0
      %2211 = vmatpush1.bf16.msra.mxu0 0
      %2212 = vmatprep.subr.bf16.mxu0 0
      %2213 = vmatpush1.bf16.msra.mxu0 0
      %2214 = vmatprep.subr.bf16.mxu0 0
      %2215 = vmatpush1.bf16.msra.mxu0 0
      %2216 = vmatprep.subr.bf16.mxu0 0
      %2217 = vmatpush1.bf16.msra.mxu0 0
      %2218 = vmatprep.subr.bf16.mxu0 0
      %2219 = vmatpush1.bf16.msra.mxu0 0
      %2220 = vmatprep.subr.bf16.mxu0 0
      %2221 = vmatpush1.bf16.msra.mxu0 0
      %2222 = vmatprep.subr.bf16.mxu0 0
      %2223 = vmatpush1.bf16.msra.mxu0 0
      %2224 = vmatprep.subr.bf16.mxu0 0
      %2225 = vmatpush1.bf16.msra.mxu0 0
      %2226 = vmatprep.subr.bf16.mxu0 0
      %2227 = vmatpush1.bf16.msra.mxu0 0
      %2228 = vmatprep.subr.bf16.mxu0 0
      %2229 = vmatpush1.bf16.msra.mxu0 0
      %2230 = vmatprep.subr.bf16.mxu0 0
      %2231 = vmatpush1.bf16.msra.mxu0 0
      %2232 = vmatprep.subr.bf16.mxu0 0
      %2233 = vmatpush1.bf16.msra.mxu0 0
      %2234 = vmatprep.subr.bf16.mxu0 0
      %2235 = vmatpush1.bf16.msra.mxu0 0
      %2236 = vmatprep.mubr.bf16.mxu0 0
      %2237 = vmatmul.mubr.bf16.gmra.mrb[0].mxu0 %v2199
      %v2238 = vpop.f32.mrb[0].mxu0
      %v2239 = vadd.f32 0.0, %v2238
      %v2240 = vpop.f32.mrb[0].mxu0
      %v2241 = vpop.f32.mrb[0].mxu0
      %v2242 = vpop.f32.mrb[0].mxu0
      %2243 = vdwg.mxu0
      %2244 = vrot.lane.b32.xlu0 %v564, 56
      %v2245 = vpop.permute.xlu0 %2244
      %v2247 = vsel %vm1068, %v2048, 0
      %v2250 = vsel %vm1072, %v2245, 0
      %2252 = vmatprep.subr.bf16.mxu0 0
      %2253 = vmatpush1.bf16.msra.mxu0 %v2250
      %2254 = vmatprep.subr.bf16.mxu0 0
      %2255 = vmatpush1.bf16.msra.mxu0 0
      %2256 = vmatprep.subr.bf16.mxu0 0
      %2257 = vmatpush1.bf16.msra.mxu0 0
      %2258 = vmatprep.subr.bf16.mxu0 0
      %2259 = vmatpush1.bf16.msra.mxu0 0
      %2260 = vmatprep.subr.bf16.mxu0 0
      %2261 = vmatpush1.bf16.msra.mxu0 0
      %2262 = vmatprep.subr.bf16.mxu0 0
      %2263 = vmatpush1.bf16.msra.mxu0 0
      %2264 = vmatprep.subr.bf16.mxu0 0
      %2265 = vmatpush1.bf16.msra.mxu0 0
      %2266 = vmatprep.subr.bf16.mxu0 0
      %2267 = vmatpush1.bf16.msra.mxu0 0
      %2268 = vmatprep.subr.bf16.mxu0 0
      %2269 = vmatpush1.bf16.msra.mxu0 0
      %2270 = vmatprep.subr.bf16.mxu0 0
      %2271 = vmatpush1.bf16.msra.mxu0 0
      %2272 = vmatprep.subr.bf16.mxu0 0
      %2273 = vmatpush1.bf16.msra.mxu0 0
      %2274 = vmatprep.subr.bf16.mxu0 0
      %2275 = vmatpush1.bf16.msra.mxu0 0
      %2276 = vmatprep.subr.bf16.mxu0 0
      %2277 = vmatpush1.bf16.msra.mxu0 0
      %2278 = vmatprep.subr.bf16.mxu0 0
      %2279 = vmatpush1.bf16.msra.mxu0 0
      %2280 = vmatprep.subr.bf16.mxu0 0
      %2281 = vmatpush1.bf16.msra.mxu0 0
      %2282 = vmatprep.subr.bf16.mxu0 0
      %2283 = vmatpush1.bf16.msra.mxu0 0
      %2284 = vmatprep.mubr.bf16.mxu0 0
      %2285 = vmatmul.mubr.bf16.gmra.mrb[0].mxu0 %v2247
      %v2286 = vpop.f32.mrb[0].mxu0
      %v2287 = vadd.f32 0.0, %v2286
      %v2288 = vpop.f32.mrb[0].mxu0
      %v2289 = vpop.f32.mrb[0].mxu0
      %v2290 = vpop.f32.mrb[0].mxu0
      %2291 = vdwg.mxu0
      %2292 = vrot.lane.b32.xlu0 %v565, 56
      %v2293 = vpop.permute.xlu0 %2292
      %v2295 = vsel %vm1068, %v2049, 0
      %v2298 = vsel %vm1072, %v2293, 0
      %2300 = vmatprep.subr.bf16.mxu0 0
      %2301 = vmatpush1.bf16.msra.mxu0 %v2298
      %2302 = vmatprep.subr.bf16.mxu0 0
      %2303 = vmatpush1.bf16.msra.mxu0 0
      %2304 = vmatprep.subr.bf16.mxu0 0
      %2305 = vmatpush1.bf16.msra.mxu0 0
      %2306 = vmatprep.subr.bf16.mxu0 0
      %2307 = vmatpush1.bf16.msra.mxu0 0
      %2308 = vmatprep.subr.bf16.mxu0 0
      %2309 = vmatpush1.bf16.msra.mxu0 0
      %2310 = vmatprep.subr.bf16.mxu0 0
      %2311 = vmatpush1.bf16.msra.mxu0 0
      %2312 = vmatprep.subr.bf16.mxu0 0
      %2313 = vmatpush1.bf16.msra.mxu0 0
      %2314 = vmatprep.subr.bf16.mxu0 0
      %2315 = vmatpush1.bf16.msra.mxu0 0
      %2316 = vmatprep.subr.bf16.mxu0 0
      %2317 = vmatpush1.bf16.msra.mxu0 0
      %2318 = vmatprep.subr.bf16.mxu0 0
      %2319 = vmatpush1.bf16.msra.mxu0 0
      %2320 = vmatprep.subr.bf16.mxu0 0
      %2321 = vmatpush1.bf16.msra.mxu0 0
      %2322 = vmatprep.subr.bf16.mxu0 0
      %2323 = vmatpush1.bf16.msra.mxu0 0
      %2324 = vmatprep.subr.bf16.mxu0 0
      %2325 = vmatpush1.bf16.msra.mxu0 0
      %2326 = vmatprep.subr.bf16.mxu0 0
      %2327 = vmatpush1.bf16.msra.mxu0 0
      %2328 = vmatprep.subr.bf16.mxu0 0
      %2329 = vmatpush1.bf16.msra.mxu0 0
      %2330 = vmatprep.subr.bf16.mxu0 0
      %2331 = vmatpush1.bf16.msra.mxu0 0
      %2332 = vmatprep.mubr.bf16.mxu0 0
      %2333 = vmatmul.mubr.bf16.gmra.mrb[0].mxu0 %v2295
      %v2334 = vpop.f32.mrb[0].mxu0
      %v2335 = vadd.f32 0.0, %v2334
      %v2336 = vpop.f32.mrb[0].mxu0
      %v2337 = vpop.f32.mrb[0].mxu0
      %v2338 = vpop.f32.mrb[0].mxu0
      %2339 = vdwg.mxu0
      %2340 = vrot.lane.b32.xlu0 %v566, 56
      %v2341 = vpop.permute.xlu0 %2340
      %v2343 = vsel %vm1068, %v2050, 0
      %v2346 = vsel %vm1072, %v2341, 0
      %2348 = vmatprep.subr.bf16.mxu0 0
      %2349 = vmatpush1.bf16.msra.mxu0 %v2346
      %2350 = vmatprep.subr.bf16.mxu0 0
      %2351 = vmatpush1.bf16.msra.mxu0 0
      %2352 = vmatprep.subr.bf16.mxu0 0
      %2353 = vmatpush1.bf16.msra.mxu0 0
      %2354 = vmatprep.subr.bf16.mxu0 0
      %2355 = vmatpush1.bf16.msra.mxu0 0
      %2356 = vmatprep.subr.bf16.mxu0 0
      %2357 = vmatpush1.bf16.msra.mxu0 0
      %2358 = vmatprep.subr.bf16.mxu0 0
      %2359 = vmatpush1.bf16.msra.mxu0 0
      %2360 = vmatprep.subr.bf16.mxu0 0
      %2361 = vmatpush1.bf16.msra.mxu0 0
      %2362 = vmatprep.subr.bf16.mxu0 0
      %2363 = vmatpush1.bf16.msra.mxu0 0
      %2364 = vmatprep.subr.bf16.mxu0 0
      %2365 = vmatpush1.bf16.msra.mxu0 0
      %2366 = vmatprep.subr.bf16.mxu0 0
      %2367 = vmatpush1.bf16.msra.mxu0 0
      %2368 = vmatprep.subr.bf16.mxu0 0
      %2369 = vmatpush1.bf16.msra.mxu0 0
      %2370 = vmatprep.subr.bf16.mxu0 0
      %2371 = vmatpush1.bf16.msra.mxu0 0
      %2372 = vmatprep.subr.bf16.mxu0 0
      %2373 = vmatpush1.bf16.msra.mxu0 0
      %2374 = vmatprep.subr.bf16.mxu0 0
      %2375 = vmatpush1.bf16.msra.mxu0 0
      %2376 = vmatprep.subr.bf16.mxu0 0
      %2377 = vmatpush1.bf16.msra.mxu0 0
      %2378 = vmatprep.subr.bf16.mxu0 0
      %2379 = vmatpush1.bf16.msra.mxu0 0
      %2380 = vmatprep.mubr.bf16.mxu0 0
      %2381 = vmatmul.mubr.bf16.gmra.mrb[0].mxu0 %v2343
      %v2382 = vpop.f32.mrb[0].mxu0
      %v2383 = vadd.f32 0.0, %v2382
      %v2384 = vpop.f32.mrb[0].mxu0
      %v2385 = vpop.f32.mrb[0].mxu0
      %v2386 = vpop.f32.mrb[0].mxu0
      %2387 = vdwg.mxu0
      %2388 = vrot.lane.b32.xlu0 %v567, 56
      %v2389 = vpop.permute.xlu0 %2388
      %v2391 = vsel %vm1068, %v2051, 0
      %v2394 = vsel %vm1072, %v2389, 0
      %2396 = vmatprep.subr.bf16.mxu0 0
      %2397 = vmatpush1.bf16.msra.mxu0 %v2394
      %2398 = vmatprep.subr.bf16.mxu0 0
      %2399 = vmatpush1.bf16.msra.mxu0 0
      %2400 = vmatprep.subr.bf16.mxu0 0
      %2401 = vmatpush1.bf16.msra.mxu0 0
      %2402 = vmatprep.subr.bf16.mxu0 0
      %2403 = vmatpush1.bf16.msra.mxu0 0
      %2404 = vmatprep.subr.bf16.mxu0 0
      %2405 = vmatpush1.bf16.msra.mxu0 0
      %2406 = vmatprep.subr.bf16.mxu0 0
      %2407 = vmatpush1.bf16.msra.mxu0 0
      %2408 = vmatprep.subr.bf16.mxu0 0
      %2409 = vmatpush1.bf16.msra.mxu0 0
      %2410 = vmatprep.subr.bf16.mxu0 0
      %2411 = vmatpush1.bf16.msra.mxu0 0
      %2412 = vmatprep.subr.bf16.mxu0 0
      %2413 = vmatpush1.bf16.msra.mxu0 0
      %2414 = vmatprep.subr.bf16.mxu0 0
      %2415 = vmatpush1.bf16.msra.mxu0 0
      %2416 = vmatprep.subr.bf16.mxu0 0
      %2417 = vmatpush1.bf16.msra.mxu0 0
      %2418 = vmatprep.subr.bf16.mxu0 0
      %2419 = vmatpush1.bf16.msra.mxu0 0
      %2420 = vmatprep.subr.bf16.mxu0 0
      %2421 = vmatpush1.bf16.msra.mxu0 0
      %2422 = vmatprep.subr.bf16.mxu0 0
      %2423 = vmatpush1.bf16.msra.mxu0 0
      %2424 = vmatprep.subr.bf16.mxu0 0
      %2425 = vmatpush1.bf16.msra.mxu0 0
      %2426 = vmatprep.subr.bf16.mxu0 0
      %2427 = vmatpush1.bf16.msra.mxu0 0
      %2428 = vmatprep.mubr.bf16.mxu0 0
      %2429 = vmatmul.mubr.bf16.gmra.mrb[0].mxu0 %v2391
      %v2430 = vpop.f32.mrb[0].mxu0
      %v2431 = vadd.f32 0.0, %v2430
      %v2432 = vpop.f32.mrb[0].mxu0
      %v2433 = vpop.f32.mrb[0].mxu0
      %v2434 = vpop.f32.mrb[0].mxu0
      %2435 = vdwg.mxu0
      %v2444 = vcombine.low %v2095, %v2143
      %v2445 = vcombine.low %v2191, %v2239
      %v2447 = vunpack.c.l.s4 1983009808
      %v2448 = vunpack.c.0.s8 %v2447
      %v2449 = vlaneseq
      %v2450 = vshrl.u32 %v2449, 7
      %v2451 = vsub.s32 %v2448, %v2450
      %v2452 = vrot.slane %v2444, %v2451
      %v2454 = vunpack.c.l.s4 1983009808
      %v2455 = vunpack.c.0.s8 %v2454
      %v2456 = vlaneseq
      %v2457 = vshrl.u32 %v2456, 7
      %v2458 = vsub.s32 %v2455, %v2457
      %v2459 = vrot.slane %v2445, %v2458
      %v2460 = vcombine.low %v2452, %v2459
      %v2461 = vcombine.low %v2287, %v2335
      %v2462 = vcombine.low %v2383, %v2431
      %v2464 = vunpack.c.l.s4 1983009808
      %v2465 = vunpack.c.0.s8 %v2464
      %v2466 = vlaneseq
      %v2467 = vshrl.u32 %v2466, 7
      %v2468 = vsub.s32 %v2465, %v2467
      %v2469 = vrot.slane %v2461, %v2468
      %v2471 = vunpack.c.l.s4 1983009808
      %v2472 = vunpack.c.0.s8 %v2471
      %v2473 = vlaneseq
      %v2474 = vshrl.u32 %v2473, 7
      %v2475 = vsub.s32 %v2472, %v2474
      %v2476 = vrot.slane %v2462, %v2475
      %v2477 = vcombine.low %v2469, %v2476
      %v2480 = vpack.c.bf16 %v2477, %v2460
      %v2481 = vld [vmem:[%s5 + $0x4] sm:$0xf]
      %v2483 = vsel %vm571, %v2480, 0
      %v2486 = vsel %vm1501, %v2481, 0
      %2488 = vmatprep.subr.bf16.mxu0 0
      %2489 = vmatpush1.bf16.msra.mxu0 %v2486
      %2490 = vmatprep.subr.bf16.mxu0 0
      %2491 = vmatpush1.bf16.msra.mxu0 0
      %2492 = vmatprep.subr.bf16.mxu0 0
      %2493 = vmatpush1.bf16.msra.mxu0 0
      %2494 = vmatprep.subr.bf16.mxu0 0
      %2495 = vmatpush1.bf16.msra.mxu0 0
      %2496 = vmatprep.subr.bf16.mxu0 0
      %2497 = vmatpush1.bf16.msra.mxu0 0
      %2498 = vmatprep.subr.bf16.mxu0 0
      %2499 = vmatpush1.bf16.msra.mxu0 0
      %2500 = vmatprep.subr.bf16.mxu0 0
      %2501 = vmatpush1.bf16.msra.mxu0 0
      %2502 = vmatprep.subr.bf16.mxu0 0
      %2503 = vmatpush1.bf16.msra.mxu0 0
      %2504 = vmatprep.subr.bf16.mxu0 0
      %2505 = vmatpush1.bf16.msra.mxu0 0
      %2506 = vmatprep.subr.bf16.mxu0 0
      %2507 = vmatpush1.bf16.msra.mxu0 0
      %2508 = vmatprep.subr.bf16.mxu0 0
      %2509 = vmatpush1.bf16.msra.mxu0 0
      %2510 = vmatprep.subr.bf16.mxu0 0
      %2511 = vmatpush1.bf16.msra.mxu0 0
      %2512 = vmatprep.subr.bf16.mxu0 0
      %2513 = vmatpush1.bf16.msra.mxu0 0
      %2514 = vmatprep.subr.bf16.mxu0 0
      %2515 = vmatpush1.bf16.msra.mxu0 0
      %2516 = vmatprep.subr.bf16.mxu0 0
      %2517 = vmatpush1.bf16.msra.mxu0 0
      %2518 = vmatprep.subr.bf16.mxu0 0
      %2519 = vmatpush1.bf16.msra.mxu0 0
      %2520 = vmatprep.mubr.bf16.mxu0 0
      %2521 = vmatmul.mubr.bf16.gmra.mrb[0].mxu0 %v2483
      %v2522 = vpop.f32.mrb[0].mxu0
      %v2523 = vadd.f32 0.0, %v2522
      %v2524 = vpop.f32.mrb[0].mxu0
      %v2525 = vpop.f32.mrb[0].mxu0
      %v2526 = vadd.f32 0.0, %v2525
      %v2527 = vpop.f32.mrb[0].mxu0
      %2528 = vdwg.mxu0
      %v2529 = vadd.f32 %v1546, %v2523
      %v2530 = vadd.f32 %v1547, %v2526
      %2531 = vrot.lane.b32.xlu0 %v560, 112
      %v2532 = vpop.permute.xlu0 %2531
      %2533 = vrot.lane.b32.xlu0 %v560, 80
      %v2534 = vpop.permute.xlu0 %2533
      %v2536 = vsel %vm571, %v2532, 0
      %v2539 = vsel %vm571, %v2534, 0
      %2541 = vmatprep.subr.bf16.mxu0 0
      %2542 = vmatpush1.bf16.xpose.msra.mxu0 %v2539
      %2543 = vmatprep.subr.bf16.mxu0 0
      %2544 = vmatpush1.bf16.xpose.msra.mxu0 0
      %2545 = vmatprep.subr.bf16.mxu0 0
      %2546 = vmatpush1.bf16.xpose.msra.mxu0 0
      %2547 = vmatprep.subr.bf16.mxu0 0
      %2548 = vmatpush1.bf16.xpose.msra.mxu0 0
      %2549 = vmatprep.subr.bf16.mxu0 0
      %2550 = vmatpush1.bf16.xpose.msra.mxu0 0
      %2551 = vmatprep.subr.bf16.mxu0 0
      %2552 = vmatpush1.bf16.xpose.msra.mxu0 0
      %2553 = vmatprep.subr.bf16.mxu0 0
      %2554 = vmatpush1.bf16.xpose.msra.mxu0 0
      %2555 = vmatprep.subr.bf16.mxu0 0
      %2556 = vmatpush1.bf16.xpose.msra.mxu0 0
      %2557 = vmatprep.subr.bf16.mxu0 0
      %2558 = vmatpush1.bf16.xpose.msra.mxu0 0
      %2559 = vmatprep.subr.bf16.mxu0 0
      %2560 = vmatpush1.bf16.xpose.msra.mxu0 0
      %2561 = vmatprep.subr.bf16.mxu0 0
      %2562 = vmatpush1.bf16.xpose.msra.mxu0 0
      %2563 = vmatprep.subr.bf16.mxu0 0
      %2564 = vmatpush1.bf16.xpose.msra.mxu0 0
      %2565 = vmatprep.subr.bf16.mxu0 0
      %2566 = vmatpush1.bf16.xpose.msra.mxu0 0
      %2567 = vmatprep.subr.bf16.mxu0 0
      %2568 = vmatpush1.bf16.xpose.msra.mxu0 0
      %2569 = vmatprep.subr.bf16.mxu0 0
      %2570 = vmatpush1.bf16.xpose.msra.mxu0 0
      %2571 = vmatprep.subr.bf16.mxu0 0
      %2572 = vmatpush1.bf16.xpose.msra.mxu0 0
      %2573 = vmatprep.mubr.bf16.mxu0 0
      %2574 = vmatmul.mubr.bf16.gmra.mrb[0].mxu0 %v2536
      %v2575 = vpop.f32.mrb[0].mxu0
      %v2576 = vadd.f32 0.0, %v2575
      %v2577 = vpop.f32.mrb[0].mxu0
      %v2578 = vpop.f32.mrb[0].mxu0
      %v2579 = vpop.f32.mrb[0].mxu0
      %2580 = vdwg.mxu0
      %2581 = vrot.lane.b32.xlu0 %v561, 112
      %v2582 = vpop.permute.xlu0 %2581
      %2583 = vrot.lane.b32.xlu0 %v561, 80
      %v2584 = vpop.permute.xlu0 %2583
      %v2586 = vsel %vm571, %v2582, 0
      %v2589 = vsel %vm571, %v2584, 0
      %2591 = vmatprep.subr.bf16.mxu0 0
      %2592 = vmatpush1.bf16.xpose.msra.mxu0 %v2589
      %2593 = vmatprep.subr.bf16.mxu0 0
      %2594 = vmatpush1.bf16.xpose.msra.mxu0 0
      %2595 = vmatprep.subr.bf16.mxu0 0
      %2596 = vmatpush1.bf16.xpose.msra.mxu0 0
      %2597 = vmatprep.subr.bf16.mxu0 0
      %2598 = vmatpush1.bf16.xpose.msra.mxu0 0
      %2599 = vmatprep.subr.bf16.mxu0 0
      %2600 = vmatpush1.bf16.xpose.msra.mxu0 0
      %2601 = vmatprep.subr.bf16.mxu0 0
      %2602 = vmatpush1.bf16.xpose.msra.mxu0 0
      %2603 = vmatprep.subr.bf16.mxu0 0
      %2604 = vmatpush1.bf16.xpose.msra.mxu0 0
      %2605 = vmatprep.subr.bf16.mxu0 0
      %2606 = vmatpush1.bf16.xpose.msra.mxu0 0
      %2607 = vmatprep.subr.bf16.mxu0 0
      %2608 = vmatpush1.bf16.xpose.msra.mxu0 0
      %2609 = vmatprep.subr.bf16.mxu0 0
      %2610 = vmatpush1.bf16.xpose.msra.mxu0 0
      %2611 = vmatprep.subr.bf16.mxu0 0
      %2612 = vmatpush1.bf16.xpose.msra.mxu0 0
      %2613 = vmatprep.subr.bf16.mxu0 0
      %2614 = vmatpush1.bf16.xpose.msra.mxu0 0
      %2615 = vmatprep.subr.bf16.mxu0 0
      %2616 = vmatpush1.bf16.xpose.msra.mxu0 0
      %2617 = vmatprep.subr.bf16.mxu0 0
      %2618 = vmatpush1.bf16.xpose.msra.mxu0 0
      %2619 = vmatprep.subr.bf16.mxu0 0
      %2620 = vmatpush1.bf16.xpose.msra.mxu0 0
      %2621 = vmatprep.subr.bf16.mxu0 0
      %2622 = vmatpush1.bf16.xpose.msra.mxu0 0
      %2623 = vmatprep.mubr.bf16.mxu0 0
      %2624 = vmatmul.mubr.bf16.gmra.mrb[0].mxu0 %v2586
      %v2625 = vpop.f32.mrb[0].mxu0
      %v2626 = vadd.f32 0.0, %v2625
      %v2627 = vpop.f32.mrb[0].mxu0
      %v2628 = vpop.f32.mrb[0].mxu0
      %v2629 = vpop.f32.mrb[0].mxu0
      %2630 = vdwg.mxu0
      %2631 = vrot.lane.b32.xlu0 %v562, 112
      %v2632 = vpop.permute.xlu0 %2631
      %2633 = vrot.lane.b32.xlu0 %v562, 80
      %v2634 = vpop.permute.xlu0 %2633
      %v2636 = vsel %vm571, %v2632, 0
      %v2639 = vsel %vm571, %v2634, 0
      %2641 = vmatprep.subr.bf16.mxu0 0
      %2642 = vmatpush1.bf16.xpose.msra.mxu0 %v2639
      %2643 = vmatprep.subr.bf16.mxu0 0
      %2644 = vmatpush1.bf16.xpose.msra.mxu0 0
      %2645 = vmatprep.subr.bf16.mxu0 0
      %2646 = vmatpush1.bf16.xpose.msra.mxu0 0
      %2647 = vmatprep.subr.bf16.mxu0 0
      %2648 = vmatpush1.bf16.xpose.msra.mxu0 0
      %2649 = vmatprep.subr.bf16.mxu0 0
      %2650 = vmatpush1.bf16.xpose.msra.mxu0 0
      %2651 = vmatprep.subr.bf16.mxu0 0
      %2652 = vmatpush1.bf16.xpose.msra.mxu0 0
      %2653 = vmatprep.subr.bf16.mxu0 0
      %2654 = vmatpush1.bf16.xpose.msra.mxu0 0
      %2655 = vmatprep.subr.bf16.mxu0 0
      %2656 = vmatpush1.bf16.xpose.msra.mxu0 0
      %2657 = vmatprep.subr.bf16.mxu0 0
      %2658 = vmatpush1.bf16.xpose.msra.mxu0 0
      %2659 = vmatprep.subr.bf16.mxu0 0
      %2660 = vmatpush1.bf16.xpose.msra.mxu0 0
      %2661 = vmatprep.subr.bf16.mxu0 0
      %2662 = vmatpush1.bf16.xpose.msra.mxu0 0
      %2663 = vmatprep.subr.bf16.mxu0 0
      %2664 = vmatpush1.bf16.xpose.msra.mxu0 0
      %2665 = vmatprep.subr.bf16.mxu0 0
      %2666 = vmatpush1.bf16.xpose.msra.mxu0 0
      %2667 = vmatprep.subr.bf16.mxu0 0
      %2668 = vmatpush1.bf16.xpose.msra.mxu0 0
      %2669 = vmatprep.subr.bf16.mxu0 0
      %2670 = vmatpush1.bf16.xpose.msra.mxu0 0
      %2671 = vmatprep.subr.bf16.mxu0 0
      %2672 = vmatpush1.bf16.xpose.msra.mxu0 0
      %2673 = vmatprep.mubr.bf16.mxu0 0
      %2674 = vmatmul.mubr.bf16.gmra.mrb[0].mxu0 %v2636
      %v2675 = vpop.f32.mrb[0].mxu0
      %v2676 = vadd.f32 0.0, %v2675
      %v2677 = vpop.f32.mrb[0].mxu0
      %v2678 = vpop.f32.mrb[0].mxu0
      %v2679 = vpop.f32.mrb[0].mxu0
      %2680 = vdwg.mxu0
      %2681 = vrot.lane.b32.xlu0 %v563, 112
      %v2682 = vpop.permute.xlu0 %2681
      %2683 = vrot.lane.b32.xlu0 %v563, 80
      %v2684 = vpop.permute.xlu0 %2683
      %v2686 = vsel %vm571, %v2682, 0
      %v2689 = vsel %vm571, %v2684, 0
      %2691 = vmatprep.subr.bf16.mxu0 0
      %2692 = vmatpush1.bf16.xpose.msra.mxu0 %v2689
      %2693 = vmatprep.subr.bf16.mxu0 0
      %2694 = vmatpush1.bf16.xpose.msra.mxu0 0
      %2695 = vmatprep.subr.bf16.mxu0 0
      %2696 = vmatpush1.bf16.xpose.msra.mxu0 0
      %2697 = vmatprep.subr.bf16.mxu0 0
      %2698 = vmatpush1.bf16.xpose.msra.mxu0 0
      %2699 = vmatprep.subr.bf16.mxu0 0
      %2700 = vmatpush1.bf16.xpose.msra.mxu0 0
      %2701 = vmatprep.subr.bf16.mxu0 0
      %2702 = vmatpush1.bf16.xpose.msra.mxu0 0
      %2703 = vmatprep.subr.bf16.mxu0 0
      %2704 = vmatpush1.bf16.xpose.msra.mxu0 0
      %2705 = vmatprep.subr.bf16.mxu0 0
      %2706 = vmatpush1.bf16.xpose.msra.mxu0 0
      %2707 = vmatprep.subr.bf16.mxu0 0
      %2708 = vmatpush1.bf16.xpose.msra.mxu0 0
      %2709 = vmatprep.subr.bf16.mxu0 0
      %2710 = vmatpush1.bf16.xpose.msra.mxu0 0
      %2711 = vmatprep.subr.bf16.mxu0 0
      %2712 = vmatpush1.bf16.xpose.msra.mxu0 0
      %2713 = vmatprep.subr.bf16.mxu0 0
      %2714 = vmatpush1.bf16.xpose.msra.mxu0 0
      %2715 = vmatprep.subr.bf16.mxu0 0
      %2716 = vmatpush1.bf16.xpose.msra.mxu0 0
      %2717 = vmatprep.subr.bf16.mxu0 0
      %2718 = vmatpush1.bf16.xpose.msra.mxu0 0
      %2719 = vmatprep.subr.bf16.mxu0 0
      %2720 = vmatpush1.bf16.xpose.msra.mxu0 0
      %2721 = vmatprep.subr.bf16.mxu0 0
      %2722 = vmatpush1.bf16.xpose.msra.mxu0 0
      %2723 = vmatprep.mubr.bf16.mxu0 0
      %2724 = vmatmul.mubr.bf16.gmra.mrb[0].mxu0 %v2686
      %v2725 = vpop.f32.mrb[0].mxu0
      %v2726 = vadd.f32 0.0, %v2725
      %v2727 = vpop.f32.mrb[0].mxu0
      %v2728 = vpop.f32.mrb[0].mxu0
      %v2729 = vpop.f32.mrb[0].mxu0
      %2730 = vdwg.mxu0
      %2731 = vrot.lane.b32.xlu0 %v564, 112
      %v2732 = vpop.permute.xlu0 %2731
      %2733 = vrot.lane.b32.xlu0 %v564, 80
      %v2734 = vpop.permute.xlu0 %2733
      %v2736 = vsel %vm571, %v2732, 0
      %v2739 = vsel %vm571, %v2734, 0
      %2741 = vmatprep.subr.bf16.mxu0 0
      %2742 = vmatpush1.bf16.xpose.msra.mxu0 %v2739
      %2743 = vmatprep.subr.bf16.mxu0 0
      %2744 = vmatpush1.bf16.xpose.msra.mxu0 0
      %2745 = vmatprep.subr.bf16.mxu0 0
      %2746 = vmatpush1.bf16.xpose.msra.mxu0 0
      %2747 = vmatprep.subr.bf16.mxu0 0
      %2748 = vmatpush1.bf16.xpose.msra.mxu0 0
      %2749 = vmatprep.subr.bf16.mxu0 0
      %2750 = vmatpush1.bf16.xpose.msra.mxu0 0
      %2751 = vmatprep.subr.bf16.mxu0 0
      %2752 = vmatpush1.bf16.xpose.msra.mxu0 0
      %2753 = vmatprep.subr.bf16.mxu0 0
      %2754 = vmatpush1.bf16.xpose.msra.mxu0 0
      %2755 = vmatprep.subr.bf16.mxu0 0
      %2756 = vmatpush1.bf16.xpose.msra.mxu0 0
      %2757 = vmatprep.subr.bf16.mxu0 0
      %2758 = vmatpush1.bf16.xpose.msra.mxu0 0
      %2759 = vmatprep.subr.bf16.mxu0 0
      %2760 = vmatpush1.bf16.xpose.msra.mxu0 0
      %2761 = vmatprep.subr.bf16.mxu0 0
      %2762 = vmatpush1.bf16.xpose.msra.mxu0 0
      %2763 = vmatprep.subr.bf16.mxu0 0
      %2764 = vmatpush1.bf16.xpose.msra.mxu0 0
      %2765 = vmatprep.subr.bf16.mxu0 0
      %2766 = vmatpush1.bf16.xpose.msra.mxu0 0
      %2767 = vmatprep.subr.bf16.mxu0 0
      %2768 = vmatpush1.bf16.xpose.msra.mxu0 0
      %2769 = vmatprep.subr.bf16.mxu0 0
      %2770 = vmatpush1.bf16.xpose.msra.mxu0 0
      %2771 = vmatprep.subr.bf16.mxu0 0
      %2772 = vmatpush1.bf16.xpose.msra.mxu0 0
      %2773 = vmatprep.mubr.bf16.mxu0 0
      %2774 = vmatmul.mubr.bf16.gmra.mrb[0].mxu0 %v2736
      %v2775 = vpop.f32.mrb[0].mxu0
      %v2776 = vadd.f32 0.0, %v2775
      %v2777 = vpop.f32.mrb[0].mxu0
      %v2778 = vpop.f32.mrb[0].mxu0
      %v2779 = vpop.f32.mrb[0].mxu0
      %2780 = vdwg.mxu0
      %2781 = vrot.lane.b32.xlu0 %v565, 112
      %v2782 = vpop.permute.xlu0 %2781
      %2783 = vrot.lane.b32.xlu0 %v565, 80
      %v2784 = vpop.permute.xlu0 %2783
      %v2786 = vsel %vm571, %v2782, 0
      %v2789 = vsel %vm571, %v2784, 0
      %2791 = vmatprep.subr.bf16.mxu0 0
      %2792 = vmatpush1.bf16.xpose.msra.mxu0 %v2789
      %2793 = vmatprep.subr.bf16.mxu0 0
      %2794 = vmatpush1.bf16.xpose.msra.mxu0 0
      %2795 = vmatprep.subr.bf16.mxu0 0
      %2796 = vmatpush1.bf16.xpose.msra.mxu0 0
      %2797 = vmatprep.subr.bf16.mxu0 0
      %2798 = vmatpush1.bf16.xpose.msra.mxu0 0
      %2799 = vmatprep.subr.bf16.mxu0 0
      %2800 = vmatpush1.bf16.xpose.msra.mxu0 0
      %2801 = vmatprep.subr.bf16.mxu0 0
      %2802 = vmatpush1.bf16.xpose.msra.mxu0 0
      %2803 = vmatprep.subr.bf16.mxu0 0
      %2804 = vmatpush1.bf16.xpose.msra.mxu0 0
      %2805 = vmatprep.subr.bf16.mxu0 0
      %2806 = vmatpush1.bf16.xpose.msra.mxu0 0
      %2807 = vmatprep.subr.bf16.mxu0 0
      %2808 = vmatpush1.bf16.xpose.msra.mxu0 0
      %2809 = vmatprep.subr.bf16.mxu0 0
      %2810 = vmatpush1.bf16.xpose.msra.mxu0 0
      %2811 = vmatprep.subr.bf16.mxu0 0
      %2812 = vmatpush1.bf16.xpose.msra.mxu0 0
      %2813 = vmatprep.subr.bf16.mxu0 0
      %2814 = vmatpush1.bf16.xpose.msra.mxu0 0
      %2815 = vmatprep.subr.bf16.mxu0 0
      %2816 = vmatpush1.bf16.xpose.msra.mxu0 0
      %2817 = vmatprep.subr.bf16.mxu0 0
      %2818 = vmatpush1.bf16.xpose.msra.mxu0 0
      %2819 = vmatprep.subr.bf16.mxu0 0
      %2820 = vmatpush1.bf16.xpose.msra.mxu0 0
      %2821 = vmatprep.subr.bf16.mxu0 0
      %2822 = vmatpush1.bf16.xpose.msra.mxu0 0
      %2823 = vmatprep.mubr.bf16.mxu0 0
      %2824 = vmatmul.mubr.bf16.gmra.mrb[0].mxu0 %v2786
      %v2825 = vpop.f32.mrb[0].mxu0
      %v2826 = vadd.f32 0.0, %v2825
      %v2827 = vpop.f32.mrb[0].mxu0
      %v2828 = vpop.f32.mrb[0].mxu0
      %v2829 = vpop.f32.mrb[0].mxu0
      %2830 = vdwg.mxu0
      %2831 = vrot.lane.b32.xlu0 %v566, 112
      %v2832 = vpop.permute.xlu0 %2831
      %2833 = vrot.lane.b32.xlu0 %v566, 80
      %v2834 = vpop.permute.xlu0 %2833
      %v2836 = vsel %vm571, %v2832, 0
      %v2839 = vsel %vm571, %v2834, 0
      %2841 = vmatprep.subr.bf16.mxu0 0
      %2842 = vmatpush1.bf16.xpose.msra.mxu0 %v2839
      %2843 = vmatprep.subr.bf16.mxu0 0
      %2844 = vmatpush1.bf16.xpose.msra.mxu0 0
      %2845 = vmatprep.subr.bf16.mxu0 0
      %2846 = vmatpush1.bf16.xpose.msra.mxu0 0
      %2847 = vmatprep.subr.bf16.mxu0 0
      %2848 = vmatpush1.bf16.xpose.msra.mxu0 0
      %2849 = vmatprep.subr.bf16.mxu0 0
      %2850 = vmatpush1.bf16.xpose.msra.mxu0 0
      %2851 = vmatprep.subr.bf16.mxu0 0
      %2852 = vmatpush1.bf16.xpose.msra.mxu0 0
      %2853 = vmatprep.subr.bf16.mxu0 0
      %2854 = vmatpush1.bf16.xpose.msra.mxu0 0
      %2855 = vmatprep.subr.bf16.mxu0 0
      %2856 = vmatpush1.bf16.xpose.msra.mxu0 0
      %2857 = vmatprep.subr.bf16.mxu0 0
      %2858 = vmatpush1.bf16.xpose.msra.mxu0 0
      %2859 = vmatprep.subr.bf16.mxu0 0
      %2860 = vmatpush1.bf16.xpose.msra.mxu0 0
      %2861 = vmatprep.subr.bf16.mxu0 0
      %2862 = vmatpush1.bf16.xpose.msra.mxu0 0
      %2863 = vmatprep.subr.bf16.mxu0 0
      %2864 = vmatpush1.bf16.xpose.msra.mxu0 0
      %2865 = vmatprep.subr.bf16.mxu0 0
      %2866 = vmatpush1.bf16.xpose.msra.mxu0 0
      %2867 = vmatprep.subr.bf16.mxu0 0
      %2868 = vmatpush1.bf16.xpose.msra.mxu0 0
      %2869 = vmatprep.subr.bf16.mxu0 0
      %2870 = vmatpush1.bf16.xpose.msra.mxu0 0
      %2871 = vmatprep.subr.bf16.mxu0 0
      %2872 = vmatpush1.bf16.xpose.msra.mxu0 0
      %2873 = vmatprep.mubr.bf16.mxu0 0
      %2874 = vmatmul.mubr.bf16.gmra.mrb[0].mxu0 %v2836
      %v2875 = vpop.f32.mrb[0].mxu0
      %v2876 = vadd.f32 0.0, %v2875
      %v2877 = vpop.f32.mrb[0].mxu0
      %v2878 = vpop.f32.mrb[0].mxu0
      %v2879 = vpop.f32.mrb[0].mxu0
      %2880 = vdwg.mxu0
      %2881 = vrot.lane.b32.xlu0 %v567, 112
      %v2882 = vpop.permute.xlu0 %2881
      %2883 = vrot.lane.b32.xlu0 %v567, 80
      %v2884 = vpop.permute.xlu0 %2883
      %v2886 = vsel %vm571, %v2882, 0
      %v2889 = vsel %vm571, %v2884, 0
      %2891 = vmatprep.subr.bf16.mxu0 0
      %2892 = vmatpush1.bf16.xpose.msra.mxu0 %v2889
      %2893 = vmatprep.subr.bf16.mxu0 0
      %2894 = vmatpush1.bf16.xpose.msra.mxu0 0
      %2895 = vmatprep.subr.bf16.mxu0 0
      %2896 = vmatpush1.bf16.xpose.msra.mxu0 0
      %2897 = vmatprep.subr.bf16.mxu0 0
      %2898 = vmatpush1.bf16.xpose.msra.mxu0 0
      %2899 = vmatprep.subr.bf16.mxu0 0
      %2900 = vmatpush1.bf16.xpose.msra.mxu0 0
      %2901 = vmatprep.subr.bf16.mxu0 0
      %2902 = vmatpush1.bf16.xpose.msra.mxu0 0
      %2903 = vmatprep.subr.bf16.mxu0 0
      %2904 = vmatpush1.bf16.xpose.msra.mxu0 0
      %2905 = vmatprep.subr.bf16.mxu0 0
      %2906 = vmatpush1.bf16.xpose.msra.mxu0 0
      %2907 = vmatprep.subr.bf16.mxu0 0
      %2908 = vmatpush1.bf16.xpose.msra.mxu0 0
      %2909 = vmatprep.subr.bf16.mxu0 0
      %2910 = vmatpush1.bf16.xpose.msra.mxu0 0
      %2911 = vmatprep.subr.bf16.mxu0 0
      %2912 = vmatpush1.bf16.xpose.msra.mxu0 0
      %2913 = vmatprep.subr.bf16.mxu0 0
      %2914 = vmatpush1.bf16.xpose.msra.mxu0 0
      %2915 = vmatprep.subr.bf16.mxu0 0
      %2916 = vmatpush1.bf16.xpose.msra.mxu0 0
      %2917 = vmatprep.subr.bf16.mxu0 0
      %2918 = vmatpush1.bf16.xpose.msra.mxu0 0
      %2919 = vmatprep.subr.bf16.mxu0 0
      %2920 = vmatpush1.bf16.xpose.msra.mxu0 0
      %2921 = vmatprep.subr.bf16.mxu0 0
      %2922 = vmatpush1.bf16.xpose.msra.mxu0 0
      %2923 = vmatprep.mubr.bf16.mxu0 0
      %2924 = vmatmul.mubr.bf16.gmra.mrb[0].mxu0 %v2886
      %v2925 = vpop.f32.mrb[0].mxu0
      %v2926 = vadd.f32 0.0, %v2925
      %v2927 = vpop.f32.mrb[0].mxu0
      %v2928 = vpop.f32.mrb[0].mxu0
      %v2929 = vpop.f32.mrb[0].mxu0
      %2930 = vdwg.mxu0
      %v2931 = vmul.f32 %v2576, 0.35355338
      %v2932 = vmul.f32 %v2626, 0.35355338
      %v2933 = vmul.f32 %v2676, 0.35355338
      %v2934 = vmul.f32 %v2726, 0.35355338
      %v2935 = vmul.f32 %v2776, 0.35355338
      %v2936 = vmul.f32 %v2826, 0.35355338
      %v2937 = vmul.f32 %v2876, 0.35355338
      %v2938 = vmul.f32 %v2926, 0.35355338
      %v2939 = vsel %vm969, %v2931, -inf
      %2940 = vmax.xlane.f32.xlu0 %v2939
      %v2941 = vpop.xlane.xlu0 %2940
      %v2942 = vsel %vm969, %v2932, -inf
      %2943 = vmax.xlane.f32.xlu0 %v2942
      %v2944 = vpop.xlane.xlu0 %2943
      %v2945 = vsel %vm969, %v2933, -inf
      %2946 = vmax.xlane.f32.xlu0 %v2945
      %v2947 = vpop.xlane.xlu0 %2946
      %v2948 = vsel %vm969, %v2934, -inf
      %2949 = vmax.xlane.f32.xlu0 %v2948
      %v2950 = vpop.xlane.xlu0 %2949
      %v2951 = vsel %vm969, %v2935, -inf
      %2952 = vmax.xlane.f32.xlu0 %v2951
      %v2953 = vpop.xlane.xlu0 %2952
      %v2954 = vsel %vm969, %v2936, -inf
      %2955 = vmax.xlane.f32.xlu0 %v2954
      %v2956 = vpop.xlane.xlu0 %2955
      %v2957 = vsel %vm969, %v2937, -inf
      %2958 = vmax.xlane.f32.xlu0 %v2957
      %v2959 = vpop.xlane.xlu0 %2958
      %v2960 = vsel %vm969, %v2938, -inf
      %2961 = vmax.xlane.f32.xlu0 %v2960
      %v2962 = vpop.xlane.xlu0 %2961
      %v2963 = vsub.f32 %v2931, %v2941
      %v2964 = vsub.f32 %v2932, %v2944
      %v2965 = vsub.f32 %v2933, %v2947
      %v2966 = vsub.f32 %v2934, %v2950
      %v2967 = vsub.f32 %v2935, %v2953
      %v2968 = vsub.f32 %v2936, %v2956
      %v2969 = vsub.f32 %v2937, %v2959
      %v2970 = vsub.f32 %v2938, %v2962
      %v2971 = vmul.f32 %v2963, 1.442695
      %v2972 = vpow.pop %v2971
      %v2973 = vmul.f32 %v2964, 1.442695
      %v2974 = vpow.pop %v2973
      %v2975 = vmul.f32 %v2965, 1.442695
      %v2976 = vpow.pop %v2975
      %v2977 = vmul.f32 %v2966, 1.442695
      %v2978 = vpow.pop %v2977
      %v2979 = vmul.f32 %v2967, 1.442695
      %v2980 = vpow.pop %v2979
      %v2981 = vmul.f32 %v2968, 1.442695
      %v2982 = vpow.pop %v2981
      %v2983 = vmul.f32 %v2969, 1.442695
      %v2984 = vpow.pop %v2983
      %v2985 = vmul.f32 %v2970, 1.442695
      %v2986 = vpow.pop %v2985
      %v2987 = vsel %vm969, %v2972, 0.0
      %2988 = vadd.xlane.f32.xlu0 %v2987
      %v2989 = vpop.xlane.xlu0 %2988
      %v2990 = vsel %vm969, %v2974, 0.0
      %2991 = vadd.xlane.f32.xlu0 %v2990
      %v2992 = vpop.xlane.xlu0 %2991
      %v2993 = vsel %vm969, %v2976, 0.0
      %2994 = vadd.xlane.f32.xlu0 %v2993
      %v2995 = vpop.xlane.xlu0 %2994
      %v2996 = vsel %vm969, %v2978, 0.0
      %2997 = vadd.xlane.f32.xlu0 %v2996
      %v2998 = vpop.xlane.xlu0 %2997
      %v2999 = vsel %vm969, %v2980, 0.0
      %3000 = vadd.xlane.f32.xlu0 %v2999
      %v3001 = vpop.xlane.xlu0 %3000
      %v3002 = vsel %vm969, %v2982, 0.0
      %3003 = vadd.xlane.f32.xlu0 %v3002
      %v3004 = vpop.xlane.xlu0 %3003
      %v3005 = vsel %vm969, %v2984, 0.0
      %3006 = vadd.xlane.f32.xlu0 %v3005
      %v3007 = vpop.xlane.xlu0 %3006
      %v3008 = vsel %vm969, %v2986, 0.0
      %3009 = vadd.xlane.f32.xlu0 %v3008
      %v3010 = vpop.xlane.xlu0 %3009
      %v3011 = vrcp.pop %v2989
      %v3012 = vrcp.pop %v2992
      %v3013 = vrcp.pop %v2995
      %v3014 = vrcp.pop %v2998
      %v3015 = vrcp.pop %v3001
      %v3016 = vrcp.pop %v3004
      %v3017 = vrcp.pop %v3007
      %v3018 = vrcp.pop %v3010
      %v3019 = vmul.f32 %v2972, %v3011
      %v3020 = vmul.f32 %v2974, %v3012
      %v3021 = vmul.f32 %v2976, %v3013
      %v3022 = vmul.f32 %v2978, %v3014
      %v3023 = vmul.f32 %v2980, %v3015
      %v3024 = vmul.f32 %v2982, %v3016
      %v3025 = vmul.f32 %v2984, %v3017
      %v3026 = vmul.f32 %v2986, %v3018
      %v3027 = vpack.c.bf16 %v3019, %v3019
      %v3028 = vpack.c.bf16 %v3020, %v3020
      %v3029 = vpack.c.bf16 %v3021, %v3021
      %v3030 = vpack.c.bf16 %v3022, %v3022
      %v3031 = vpack.c.bf16 %v3023, %v3023
      %v3032 = vpack.c.bf16 %v3024, %v3024
      %v3033 = vpack.c.bf16 %v3025, %v3025
      %v3034 = vpack.c.bf16 %v3026, %v3026
      %3035 = vrot.lane.b32.xlu0 %v560, 48
      %v3036 = vpop.permute.xlu0 %3035
      %v3038 = vsel %vm1068, %v3027, 0
      %v3041 = vsel %vm1072, %v3036, 0
      %3043 = vmatprep.subr.bf16.mxu0 0
      %3044 = vmatpush1.bf16.msra.mxu0 %v3041
      %3045 = vmatprep.subr.bf16.mxu0 0
      %3046 = vmatpush1.bf16.msra.mxu0 0
      %3047 = vmatprep.subr.bf16.mxu0 0
      %3048 = vmatpush1.bf16.msra.mxu0 0
      %3049 = vmatprep.subr.bf16.mxu0 0
      %3050 = vmatpush1.bf16.msra.mxu0 0
      %3051 = vmatprep.subr.bf16.mxu0 0
      %3052 = vmatpush1.bf16.msra.mxu0 0
      %3053 = vmatprep.subr.bf16.mxu0 0
      %3054 = vmatpush1.bf16.msra.mxu0 0
      %3055 = vmatprep.subr.bf16.mxu0 0
      %3056 = vmatpush1.bf16.msra.mxu0 0
      %3057 = vmatprep.subr.bf16.mxu0 0
      %3058 = vmatpush1.bf16.msra.mxu0 0
      %3059 = vmatprep.subr.bf16.mxu0 0
      %3060 = vmatpush1.bf16.msra.mxu0 0
      %3061 = vmatprep.subr.bf16.mxu0 0
      %3062 = vmatpush1.bf16.msra.mxu0 0
      %3063 = vmatprep.subr.bf16.mxu0 0
      %3064 = vmatpush1.bf16.msra.mxu0 0
      %3065 = vmatprep.subr.bf16.mxu0 0
      %3066 = vmatpush1.bf16.msra.mxu0 0
      %3067 = vmatprep.subr.bf16.mxu0 0
      %3068 = vmatpush1.bf16.msra.mxu0 0
      %3069 = vmatprep.subr.bf16.mxu0 0
      %3070 = vmatpush1.bf16.msra.mxu0 0
      %3071 = vmatprep.subr.bf16.mxu0 0
      %3072 = vmatpush1.bf16.msra.mxu0 0
      %3073 = vmatprep.subr.bf16.mxu0 0
      %3074 = vmatpush1.bf16.msra.mxu0 0
      %3075 = vmatprep.mubr.bf16.mxu0 0
      %3076 = vmatmul.mubr.bf16.gmra.mrb[0].mxu0 %v3038
      %v3077 = vpop.f32.mrb[0].mxu0
      %v3078 = vadd.f32 0.0, %v3077
      %v3079 = vpop.f32.mrb[0].mxu0
      %v3080 = vpop.f32.mrb[0].mxu0
      %v3081 = vpop.f32.mrb[0].mxu0
      %3082 = vdwg.mxu0
      %3083 = vrot.lane.b32.xlu0 %v561, 48
      %v3084 = vpop.permute.xlu0 %3083
      %v3086 = vsel %vm1068, %v3028, 0
      %v3089 = vsel %vm1072, %v3084, 0
      %3091 = vmatprep.subr.bf16.mxu0 0
      %3092 = vmatpush1.bf16.msra.mxu0 %v3089
      %3093 = vmatprep.subr.bf16.mxu0 0
      %3094 = vmatpush1.bf16.msra.mxu0 0
      %3095 = vmatprep.subr.bf16.mxu0 0
      %3096 = vmatpush1.bf16.msra.mxu0 0
      %3097 = vmatprep.subr.bf16.mxu0 0
      %3098 = vmatpush1.bf16.msra.mxu0 0
      %3099 = vmatprep.subr.bf16.mxu0 0
      %3100 = vmatpush1.bf16.msra.mxu0 0
      %3101 = vmatprep.subr.bf16.mxu0 0
      %3102 = vmatpush1.bf16.msra.mxu0 0
      %3103 = vmatprep.subr.bf16.mxu0 0
      %3104 = vmatpush1.bf16.msra.mxu0 0
      %3105 = vmatprep.subr.bf16.mxu0 0
      %3106 = vmatpush1.bf16.msra.mxu0 0
      %3107 = vmatprep.subr.bf16.mxu0 0
      %3108 = vmatpush1.bf16.msra.mxu0 0
      %3109 = vmatprep.subr.bf16.mxu0 0
      %3110 = vmatpush1.bf16.msra.mxu0 0
      %3111 = vmatprep.subr.bf16.mxu0 0
      %3112 = vmatpush1.bf16.msra.mxu0 0
      %3113 = vmatprep.subr.bf16.mxu0 0
      %3114 = vmatpush1.bf16.msra.mxu0 0
      %3115 = vmatprep.subr.bf16.mxu0 0
      %3116 = vmatpush1.bf16.msra.mxu0 0
      %3117 = vmatprep.subr.bf16.mxu0 0
      %3118 = vmatpush1.bf16.msra.mxu0 0
      %3119 = vmatprep.subr.bf16.mxu0 0
      %3120 = vmatpush1.bf16.msra.mxu0 0
      %3121 = vmatprep.subr.bf16.mxu0 0
      %3122 = vmatpush1.bf16.msra.mxu0 0
      %3123 = vmatprep.mubr.bf16.mxu0 0
      %3124 = vmatmul.mubr.bf16.gmra.mrb[0].mxu0 %v3086
      %v3125 = vpop.f32.mrb[0].mxu0
      %v3126 = vadd.f32 0.0, %v3125
      %v3127 = vpop.f32.mrb[0].mxu0
      %v3128 = vpop.f32.mrb[0].mxu0
      %v3129 = vpop.f32.mrb[0].mxu0
      %3130 = vdwg.mxu0
      %3131 = vrot.lane.b32.xlu0 %v562, 48
      %v3132 = vpop.permute.xlu0 %3131
      %v3134 = vsel %vm1068, %v3029, 0
      %v3137 = vsel %vm1072, %v3132, 0
      %3139 = vmatprep.subr.bf16.mxu0 0
      %3140 = vmatpush1.bf16.msra.mxu0 %v3137
      %3141 = vmatprep.subr.bf16.mxu0 0
      %3142 = vmatpush1.bf16.msra.mxu0 0
      %3143 = vmatprep.subr.bf16.mxu0 0
      %3144 = vmatpush1.bf16.msra.mxu0 0
      %3145 = vmatprep.subr.bf16.mxu0 0
      %3146 = vmatpush1.bf16.msra.mxu0 0
      %3147 = vmatprep.subr.bf16.mxu0 0
      %3148 = vmatpush1.bf16.msra.mxu0 0
      %3149 = vmatprep.subr.bf16.mxu0 0
      %3150 = vmatpush1.bf16.msra.mxu0 0
      %3151 = vmatprep.subr.bf16.mxu0 0
      %3152 = vmatpush1.bf16.msra.mxu0 0
      %3153 = vmatprep.subr.bf16.mxu0 0
      %3154 = vmatpush1.bf16.msra.mxu0 0
      %3155 = vmatprep.subr.bf16.mxu0 0
      %3156 = vmatpush1.bf16.msra.mxu0 0
      %3157 = vmatprep.subr.bf16.mxu0 0
      %3158 = vmatpush1.bf16.msra.mxu0 0
      %3159 = vmatprep.subr.bf16.mxu0 0
      %3160 = vmatpush1.bf16.msra.mxu0 0
      %3161 = vmatprep.subr.bf16.mxu0 0
      %3162 = vmatpush1.bf16.msra.mxu0 0
      %3163 = vmatprep.subr.bf16.mxu0 0
      %3164 = vmatpush1.bf16.msra.mxu0 0
      %3165 = vmatprep.subr.bf16.mxu0 0
      %3166 = vmatpush1.bf16.msra.mxu0 0
      %3167 = vmatprep.subr.bf16.mxu0 0
      %3168 = vmatpush1.bf16.msra.mxu0 0
      %3169 = vmatprep.subr.bf16.mxu0 0
      %3170 = vmatpush1.bf16.msra.mxu0 0
      %3171 = vmatprep.mubr.bf16.mxu0 0
      %3172 = vmatmul.mubr.bf16.gmra.mrb[0].mxu0 %v3134
      %v3173 = vpop.f32.mrb[0].mxu0
      %v3174 = vadd.f32 0.0, %v3173
      %v3175 = vpop.f32.mrb[0].mxu0
      %v3176 = vpop.f32.mrb[0].mxu0
      %v3177 = vpop.f32.mrb[0].mxu0
      %3178 = vdwg.mxu0
      %3179 = vrot.lane.b32.xlu0 %v563, 48
      %v3180 = vpop.permute.xlu0 %3179
      %v3182 = vsel %vm1068, %v3030, 0
      %v3185 = vsel %vm1072, %v3180, 0
      %3187 = vmatprep.subr.bf16.mxu0 0
      %3188 = vmatpush1.bf16.msra.mxu0 %v3185
      %3189 = vmatprep.subr.bf16.mxu0 0
      %3190 = vmatpush1.bf16.msra.mxu0 0
      %3191 = vmatprep.subr.bf16.mxu0 0
      %3192 = vmatpush1.bf16.msra.mxu0 0
      %3193 = vmatprep.subr.bf16.mxu0 0
      %3194 = vmatpush1.bf16.msra.mxu0 0
      %3195 = vmatprep.subr.bf16.mxu0 0
      %3196 = vmatpush1.bf16.msra.mxu0 0
      %3197 = vmatprep.subr.bf16.mxu0 0
      %3198 = vmatpush1.bf16.msra.mxu0 0
      %3199 = vmatprep.subr.bf16.mxu0 0
      %3200 = vmatpush1.bf16.msra.mxu0 0
      %3201 = vmatprep.subr.bf16.mxu0 0
      %3202 = vmatpush1.bf16.msra.mxu0 0
      %3203 = vmatprep.subr.bf16.mxu0 0
      %3204 = vmatpush1.bf16.msra.mxu0 0
      %3205 = vmatprep.subr.bf16.mxu0 0
      %3206 = vmatpush1.bf16.msra.mxu0 0
      %3207 = vmatprep.subr.bf16.mxu0 0
      %3208 = vmatpush1.bf16.msra.mxu0 0
      %3209 = vmatprep.subr.bf16.mxu0 0
      %3210 = vmatpush1.bf16.msra.mxu0 0
      %3211 = vmatprep.subr.bf16.mxu0 0
      %3212 = vmatpush1.bf16.msra.mxu0 0
      %3213 = vmatprep.subr.bf16.mxu0 0
      %3214 = vmatpush1.bf16.msra.mxu0 0
      %3215 = vmatprep.subr.bf16.mxu0 0
      %3216 = vmatpush1.bf16.msra.mxu0 0
      %3217 = vmatprep.subr.bf16.mxu0 0
      %3218 = vmatpush1.bf16.msra.mxu0 0
      %3219 = vmatprep.mubr.bf16.mxu0 0
      %3220 = vmatmul.mubr.bf16.gmra.mrb[0].mxu0 %v3182
      %v3221 = vpop.f32.mrb[0].mxu0
      %v3222 = vadd.f32 0.0, %v3221
      %v3223 = vpop.f32.mrb[0].mxu0
      %v3224 = vpop.f32.mrb[0].mxu0
      %v3225 = vpop.f32.mrb[0].mxu0
      %3226 = vdwg.mxu0
      %3227 = vrot.lane.b32.xlu0 %v564, 48
      %v3228 = vpop.permute.xlu0 %3227
      %v3230 = vsel %vm1068, %v3031, 0
      %v3233 = vsel %vm1072, %v3228, 0
      %3235 = vmatprep.subr.bf16.mxu0 0
      %3236 = vmatpush1.bf16.msra.mxu0 %v3233
      %3237 = vmatprep.subr.bf16.mxu0 0
      %3238 = vmatpush1.bf16.msra.mxu0 0
      %3239 = vmatprep.subr.bf16.mxu0 0
      %3240 = vmatpush1.bf16.msra.mxu0 0
      %3241 = vmatprep.subr.bf16.mxu0 0
      %3242 = vmatpush1.bf16.msra.mxu0 0
      %3243 = vmatprep.subr.bf16.mxu0 0
      %3244 = vmatpush1.bf16.msra.mxu0 0
      %3245 = vmatprep.subr.bf16.mxu0 0
      %3246 = vmatpush1.bf16.msra.mxu0 0
      %3247 = vmatprep.subr.bf16.mxu0 0
      %3248 = vmatpush1.bf16.msra.mxu0 0
      %3249 = vmatprep.subr.bf16.mxu0 0
      %3250 = vmatpush1.bf16.msra.mxu0 0
      %3251 = vmatprep.subr.bf16.mxu0 0
      %3252 = vmatpush1.bf16.msra.mxu0 0
      %3253 = vmatprep.subr.bf16.mxu0 0
      %3254 = vmatpush1.bf16.msra.mxu0 0
      %3255 = vmatprep.subr.bf16.mxu0 0
      %3256 = vmatpush1.bf16.msra.mxu0 0
      %3257 = vmatprep.subr.bf16.mxu0 0
      %3258 = vmatpush1.bf16.msra.mxu0 0
      %3259 = vmatprep.subr.bf16.mxu0 0
      %3260 = vmatpush1.bf16.msra.mxu0 0
      %3261 = vmatprep.subr.bf16.mxu0 0
      %3262 = vmatpush1.bf16.msra.mxu0 0
      %3263 = vmatprep.subr.bf16.mxu0 0
      %3264 = vmatpush1.bf16.msra.mxu0 0
      %3265 = vmatprep.subr.bf16.mxu0 0
      %3266 = vmatpush1.bf16.msra.mxu0 0
      %3267 = vmatprep.mubr.bf16.mxu0 0
      %3268 = vmatmul.mubr.bf16.gmra.mrb[0].mxu0 %v3230
      %v3269 = vpop.f32.mrb[0].mxu0
      %v3270 = vadd.f32 0.0, %v3269
      %v3271 = vpop.f32.mrb[0].mxu0
      %v3272 = vpop.f32.mrb[0].mxu0
      %v3273 = vpop.f32.mrb[0].mxu0
      %3274 = vdwg.mxu0
      %3275 = vrot.lane.b32.xlu0 %v565, 48
      %v3276 = vpop.permute.xlu0 %3275
      %v3278 = vsel %vm1068, %v3032, 0
      %v3281 = vsel %vm1072, %v3276, 0
      %3283 = vmatprep.subr.bf16.mxu0 0
      %3284 = vmatpush1.bf16.msra.mxu0 %v3281
      %3285 = vmatprep.subr.bf16.mxu0 0
      %3286 = vmatpush1.bf16.msra.mxu0 0
      %3287 = vmatprep.subr.bf16.mxu0 0
      %3288 = vmatpush1.bf16.msra.mxu0 0
      %3289 = vmatprep.subr.bf16.mxu0 0
      %3290 = vmatpush1.bf16.msra.mxu0 0
      %3291 = vmatprep.subr.bf16.mxu0 0
      %3292 = vmatpush1.bf16.msra.mxu0 0
      %3293 = vmatprep.subr.bf16.mxu0 0
      %3294 = vmatpush1.bf16.msra.mxu0 0
      %3295 = vmatprep.subr.bf16.mxu0 0
      %3296 = vmatpush1.bf16.msra.mxu0 0
      %3297 = vmatprep.subr.bf16.mxu0 0
      %3298 = vmatpush1.bf16.msra.mxu0 0
      %3299 = vmatprep.subr.bf16.mxu0 0
      %3300 = vmatpush1.bf16.msra.mxu0 0
      %3301 = vmatprep.subr.bf16.mxu0 0
      %3302 = vmatpush1.bf16.msra.mxu0 0
      %3303 = vmatprep.subr.bf16.mxu0 0
      %3304 = vmatpush1.bf16.msra.mxu0 0
      %3305 = vmatprep.subr.bf16.mxu0 0
      %3306 = vmatpush1.bf16.msra.mxu0 0
      %3307 = vmatprep.subr.bf16.mxu0 0
      %3308 = vmatpush1.bf16.msra.mxu0 0
      %3309 = vmatprep.subr.bf16.mxu0 0
      %3310 = vmatpush1.bf16.msra.mxu0 0
      %3311 = vmatprep.subr.bf16.mxu0 0
      %3312 = vmatpush1.bf16.msra.mxu0 0
      %3313 = vmatprep.subr.bf16.mxu0 0
      %3314 = vmatpush1.bf16.msra.mxu0 0
      %3315 = vmatprep.mubr.bf16.mxu0 0
      %3316 = vmatmul.mubr.bf16.gmra.mrb[0].mxu0 %v3278
      %v3317 = vpop.f32.mrb[0].mxu0
      %v3318 = vadd.f32 0.0, %v3317
      %v3319 = vpop.f32.mrb[0].mxu0
      %v3320 = vpop.f32.mrb[0].mxu0
      %v3321 = vpop.f32.mrb[0].mxu0
      %3322 = vdwg.mxu0
      %3323 = vrot.lane.b32.xlu0 %v566, 48
      %v3324 = vpop.permute.xlu0 %3323
      %v3326 = vsel %vm1068, %v3033, 0
      %v3329 = vsel %vm1072, %v3324, 0
      %3331 = vmatprep.subr.bf16.mxu0 0
      %3332 = vmatpush1.bf16.msra.mxu0 %v3329
      %3333 = vmatprep.subr.bf16.mxu0 0
      %3334 = vmatpush1.bf16.msra.mxu0 0
      %3335 = vmatprep.subr.bf16.mxu0 0
      %3336 = vmatpush1.bf16.msra.mxu0 0
      %3337 = vmatprep.subr.bf16.mxu0 0
      %3338 = vmatpush1.bf16.msra.mxu0 0
      %3339 = vmatprep.subr.bf16.mxu0 0
      %3340 = vmatpush1.bf16.msra.mxu0 0
      %3341 = vmatprep.subr.bf16.mxu0 0
      %3342 = vmatpush1.bf16.msra.mxu0 0
      %3343 = vmatprep.subr.bf16.mxu0 0
      %3344 = vmatpush1.bf16.msra.mxu0 0
      %3345 = vmatprep.subr.bf16.mxu0 0
      %3346 = vmatpush1.bf16.msra.mxu0 0
      %3347 = vmatprep.subr.bf16.mxu0 0
      %3348 = vmatpush1.bf16.msra.mxu0 0
      %3349 = vmatprep.subr.bf16.mxu0 0
      %3350 = vmatpush1.bf16.msra.mxu0 0
      %3351 = vmatprep.subr.bf16.mxu0 0
      %3352 = vmatpush1.bf16.msra.mxu0 0
      %3353 = vmatprep.subr.bf16.mxu0 0
      %3354 = vmatpush1.bf16.msra.mxu0 0
      %3355 = vmatprep.subr.bf16.mxu0 0
      %3356 = vmatpush1.bf16.msra.mxu0 0
      %3357 = vmatprep.subr.bf16.mxu0 0
      %3358 = vmatpush1.bf16.msra.mxu0 0
      %3359 = vmatprep.subr.bf16.mxu0 0
      %3360 = vmatpush1.bf16.msra.mxu0 0
      %3361 = vmatprep.subr.bf16.mxu0 0
      %3362 = vmatpush1.bf16.msra.mxu0 0
      %3363 = vmatprep.mubr.bf16.mxu0 0
      %3364 = vmatmul.mubr.bf16.gmra.mrb[0].mxu0 %v3326
      %v3365 = vpop.f32.mrb[0].mxu0
      %v3366 = vadd.f32 0.0, %v3365
      %v3367 = vpop.f32.mrb[0].mxu0
      %v3368 = vpop.f32.mrb[0].mxu0
      %v3369 = vpop.f32.mrb[0].mxu0
      %3370 = vdwg.mxu0
      %3371 = vrot.lane.b32.xlu0 %v567, 48
      %v3372 = vpop.permute.xlu0 %3371
      %v3374 = vsel %vm1068, %v3034, 0
      %v3377 = vsel %vm1072, %v3372, 0
      %3379 = vmatprep.subr.bf16.mxu0 0
      %3380 = vmatpush1.bf16.msra.mxu0 %v3377
      %3381 = vmatprep.subr.bf16.mxu0 0
      %3382 = vmatpush1.bf16.msra.mxu0 0
      %3383 = vmatprep.subr.bf16.mxu0 0
      %3384 = vmatpush1.bf16.msra.mxu0 0
      %3385 = vmatprep.subr.bf16.mxu0 0
      %3386 = vmatpush1.bf16.msra.mxu0 0
      %3387 = vmatprep.subr.bf16.mxu0 0
      %3388 = vmatpush1.bf16.msra.mxu0 0
      %3389 = vmatprep.subr.bf16.mxu0 0
      %3390 = vmatpush1.bf16.msra.mxu0 0
      %3391 = vmatprep.subr.bf16.mxu0 0
      %3392 = vmatpush1.bf16.msra.mxu0 0
      %3393 = vmatprep.subr.bf16.mxu0 0
      %3394 = vmatpush1.bf16.msra.mxu0 0
      %3395 = vmatprep.subr.bf16.mxu0 0
      %3396 = vmatpush1.bf16.msra.mxu0 0
      %3397 = vmatprep.subr.bf16.mxu0 0
      %3398 = vmatpush1.bf16.msra.mxu0 0
      %3399 = vmatprep.subr.bf16.mxu0 0
      %3400 = vmatpush1.bf16.msra.mxu0 0
      %3401 = vmatprep.subr.bf16.mxu0 0
      %3402 = vmatpush1.bf16.msra.mxu0 0
      %3403 = vmatprep.subr.bf16.mxu0 0
      %3404 = vmatpush1.bf16.msra.mxu0 0
      %3405 = vmatprep.subr.bf16.mxu0 0
      %3406 = vmatpush1.bf16.msra.mxu0 0
      %3407 = vmatprep.subr.bf16.mxu0 0
      %3408 = vmatpush1.bf16.msra.mxu0 0
      %3409 = vmatprep.subr.bf16.mxu0 0
      %3410 = vmatpush1.bf16.msra.mxu0 0
      %3411 = vmatprep.mubr.bf16.mxu0 0
      %3412 = vmatmul.mubr.bf16.gmra.mrb[0].mxu0 %v3374
      %v3413 = vpop.f32.mrb[0].mxu0
      %v3414 = vadd.f32 0.0, %v3413
      %v3415 = vpop.f32.mrb[0].mxu0
      %v3416 = vpop.f32.mrb[0].mxu0
      %v3417 = vpop.f32.mrb[0].mxu0
      %3418 = vdwg.mxu0
      %v3427 = vcombine.low %v3078, %v3126
      %v3428 = vcombine.low %v3174, %v3222
      %v3430 = vunpack.c.l.s4 1983009808
      %v3431 = vunpack.c.0.s8 %v3430
      %v3432 = vlaneseq
      %v3433 = vshrl.u32 %v3432, 7
      %v3434 = vsub.s32 %v3431, %v3433
      %v3435 = vrot.slane %v3427, %v3434
      %v3437 = vunpack.c.l.s4 1983009808
      %v3438 = vunpack.c.0.s8 %v3437
      %v3439 = vlaneseq
      %v3440 = vshrl.u32 %v3439, 7
      %v3441 = vsub.s32 %v3438, %v3440
      %v3442 = vrot.slane %v3428, %v3441
      %v3443 = vcombine.low %v3435, %v3442
      %v3444 = vcombine.low %v3270, %v3318
      %v3445 = vcombine.low %v3366, %v3414
      %v3447 = vunpack.c.l.s4 1983009808
      %v3448 = vunpack.c.0.s8 %v3447
      %v3449 = vlaneseq
      %v3450 = vshrl.u32 %v3449, 7
      %v3451 = vsub.s32 %v3448, %v3450
      %v3452 = vrot.slane %v3444, %v3451
      %v3454 = vunpack.c.l.s4 1983009808
      %v3455 = vunpack.c.0.s8 %v3454
      %v3456 = vlaneseq
      %v3457 = vshrl.u32 %v3456, 7
      %v3458 = vsub.s32 %v3455, %v3457
      %v3459 = vrot.slane %v3445, %v3458
      %v3460 = vcombine.low %v3452, %v3459
      %v3463 = vpack.c.bf16 %v3460, %v3443
      %v3464 = vld [vmem:[%s5 + $0x8] sm:$0xf]
      %v3466 = vsel %vm571, %v3463, 0
      %v3469 = vsel %vm1501, %v3464, 0
      %3471 = vmatprep.subr.bf16.mxu0 0
      %3472 = vmatpush1.bf16.msra.mxu0 %v3469
      %3473 = vmatprep.subr.bf16.mxu0 0
      %3474 = vmatpush1.bf16.msra.mxu0 0
      %3475 = vmatprep.subr.bf16.mxu0 0
      %3476 = vmatpush1.bf16.msra.mxu0 0
      %3477 = vmatprep.subr.bf16.mxu0 0
      %3478 = vmatpush1.bf16.msra.mxu0 0
      %3479 = vmatprep.subr.bf16.mxu0 0
      %3480 = vmatpush1.bf16.msra.mxu0 0
      %3481 = vmatprep.subr.bf16.mxu0 0
      %3482 = vmatpush1.bf16.msra.mxu0 0
      %3483 = vmatprep.subr.bf16.mxu0 0
      %3484 = vmatpush1.bf16.msra.mxu0 0
      %3485 = vmatprep.subr.bf16.mxu0 0
      %3486 = vmatpush1.bf16.msra.mxu0 0
      %3487 = vmatprep.subr.bf16.mxu0 0
      %3488 = vmatpush1.bf16.msra.mxu0 0
      %3489 = vmatprep.subr.bf16.mxu0 0
      %3490 = vmatpush1.bf16.msra.mxu0 0
      %3491 = vmatprep.subr.bf16.mxu0 0
      %3492 = vmatpush1.bf16.msra.mxu0 0
      %3493 = vmatprep.subr.bf16.mxu0 0
      %3494 = vmatpush1.bf16.msra.mxu0 0
      %3495 = vmatprep.subr.bf16.mxu0 0
      %3496 = vmatpush1.bf16.msra.mxu0 0
      %3497 = vmatprep.subr.bf16.mxu0 0
      %3498 = vmatpush1.bf16.msra.mxu0 0
      %3499 = vmatprep.subr.bf16.mxu0 0
      %3500 = vmatpush1.bf16.msra.mxu0 0
      %3501 = vmatprep.subr.bf16.mxu0 0
      %3502 = vmatpush1.bf16.msra.mxu0 0
      %3503 = vmatprep.mubr.bf16.mxu0 0
      %3504 = vmatmul.mubr.bf16.gmra.mrb[0].mxu0 %v3466
      %v3505 = vpop.f32.mrb[0].mxu0
      %v3506 = vadd.f32 0.0, %v3505
      %v3507 = vpop.f32.mrb[0].mxu0
      %v3508 = vpop.f32.mrb[0].mxu0
      %v3509 = vadd.f32 0.0, %v3508
      %v3510 = vpop.f32.mrb[0].mxu0
      %3511 = vdwg.mxu0
      %v3512 = vadd.f32 %v2529, %v3506
      %v3513 = vadd.f32 %v2530, %v3509
      %3514 = vrot.lane.b32.xlu0 %v560, 104
      %v3515 = vpop.permute.xlu0 %3514
      %3516 = vrot.lane.b32.xlu0 %v560, 72
      %v3517 = vpop.permute.xlu0 %3516
      %v3519 = vsel %vm571, %v3515, 0
      %v3522 = vsel %vm571, %v3517, 0
      %3524 = vmatprep.subr.bf16.mxu0 0
      %3525 = vmatpush1.bf16.xpose.msra.mxu0 %v3522
      %3526 = vmatprep.subr.bf16.mxu0 0
      %3527 = vmatpush1.bf16.xpose.msra.mxu0 0
      %3528 = vmatprep.subr.bf16.mxu0 0
      %3529 = vmatpush1.bf16.xpose.msra.mxu0 0
      %3530 = vmatprep.subr.bf16.mxu0 0
      %3531 = vmatpush1.bf16.xpose.msra.mxu0 0
      %3532 = vmatprep.subr.bf16.mxu0 0
      %3533 = vmatpush1.bf16.xpose.msra.mxu0 0
      %3534 = vmatprep.subr.bf16.mxu0 0
      %3535 = vmatpush1.bf16.xpose.msra.mxu0 0
      %3536 = vmatprep.subr.bf16.mxu0 0
      %3537 = vmatpush1.bf16.xpose.msra.mxu0 0
      %3538 = vmatprep.subr.bf16.mxu0 0
      %3539 = vmatpush1.bf16.xpose.msra.mxu0 0
      %3540 = vmatprep.subr.bf16.mxu0 0
      %3541 = vmatpush1.bf16.xpose.msra.mxu0 0
      %3542 = vmatprep.subr.bf16.mxu0 0
      %3543 = vmatpush1.bf16.xpose.msra.mxu0 0
      %3544 = vmatprep.subr.bf16.mxu0 0
      %3545 = vmatpush1.bf16.xpose.msra.mxu0 0
      %3546 = vmatprep.subr.bf16.mxu0 0
      %3547 = vmatpush1.bf16.xpose.msra.mxu0 0
      %3548 = vmatprep.subr.bf16.mxu0 0
      %3549 = vmatpush1.bf16.xpose.msra.mxu0 0
      %3550 = vmatprep.subr.bf16.mxu0 0
      %3551 = vmatpush1.bf16.xpose.msra.mxu0 0
      %3552 = vmatprep.subr.bf16.mxu0 0
      %3553 = vmatpush1.bf16.xpose.msra.mxu0 0
      %3554 = vmatprep.subr.bf16.mxu0 0
      %3555 = vmatpush1.bf16.xpose.msra.mxu0 0
      %3556 = vmatprep.mubr.bf16.mxu0 0
      %3557 = vmatmul.mubr.bf16.gmra.mrb[0].mxu0 %v3519
      %v3558 = vpop.f32.mrb[0].mxu0
      %v3559 = vadd.f32 0.0, %v3558
      %v3560 = vpop.f32.mrb[0].mxu0
      %v3561 = vpop.f32.mrb[0].mxu0
      %v3562 = vpop.f32.mrb[0].mxu0
      %3563 = vdwg.mxu0
      %3564 = vrot.lane.b32.xlu0 %v561, 104
      %v3565 = vpop.permute.xlu0 %3564
      %3566 = vrot.lane.b32.xlu0 %v561, 72
      %v3567 = vpop.permute.xlu0 %3566
      %v3569 = vsel %vm571, %v3565, 0
      %v3572 = vsel %vm571, %v3567, 0
      %3574 = vmatprep.subr.bf16.mxu0 0
      %3575 = vmatpush1.bf16.xpose.msra.mxu0 %v3572
      %3576 = vmatprep.subr.bf16.mxu0 0
      %3577 = vmatpush1.bf16.xpose.msra.mxu0 0
      %3578 = vmatprep.subr.bf16.mxu0 0
      %3579 = vmatpush1.bf16.xpose.msra.mxu0 0
      %3580 = vmatprep.subr.bf16.mxu0 0
      %3581 = vmatpush1.bf16.xpose.msra.mxu0 0
      %3582 = vmatprep.subr.bf16.mxu0 0
      %3583 = vmatpush1.bf16.xpose.msra.mxu0 0
      %3584 = vmatprep.subr.bf16.mxu0 0
      %3585 = vmatpush1.bf16.xpose.msra.mxu0 0
      %3586 = vmatprep.subr.bf16.mxu0 0
      %3587 = vmatpush1.bf16.xpose.msra.mxu0 0
      %3588 = vmatprep.subr.bf16.mxu0 0
      %3589 = vmatpush1.bf16.xpose.msra.mxu0 0
      %3590 = vmatprep.subr.bf16.mxu0 0
      %3591 = vmatpush1.bf16.xpose.msra.mxu0 0
      %3592 = vmatprep.subr.bf16.mxu0 0
      %3593 = vmatpush1.bf16.xpose.msra.mxu0 0
      %3594 = vmatprep.subr.bf16.mxu0 0
      %3595 = vmatpush1.bf16.xpose.msra.mxu0 0
      %3596 = vmatprep.subr.bf16.mxu0 0
      %3597 = vmatpush1.bf16.xpose.msra.mxu0 0
      %3598 = vmatprep.subr.bf16.mxu0 0
      %3599 = vmatpush1.bf16.xpose.msra.mxu0 0
      %3600 = vmatprep.subr.bf16.mxu0 0
      %3601 = vmatpush1.bf16.xpose.msra.mxu0 0
      %3602 = vmatprep.subr.bf16.mxu0 0
      %3603 = vmatpush1.bf16.xpose.msra.mxu0 0
      %3604 = vmatprep.subr.bf16.mxu0 0
      %3605 = vmatpush1.bf16.xpose.msra.mxu0 0
      %3606 = vmatprep.mubr.bf16.mxu0 0
      %3607 = vmatmul.mubr.bf16.gmra.mrb[0].mxu0 %v3569
      %v3608 = vpop.f32.mrb[0].mxu0
      %v3609 = vadd.f32 0.0, %v3608
      %v3610 = vpop.f32.mrb[0].mxu0
      %v3611 = vpop.f32.mrb[0].mxu0
      %v3612 = vpop.f32.mrb[0].mxu0
      %3613 = vdwg.mxu0
      %3614 = vrot.lane.b32.xlu0 %v562, 104
      %v3615 = vpop.permute.xlu0 %3614
      %3616 = vrot.lane.b32.xlu0 %v562, 72
      %v3617 = vpop.permute.xlu0 %3616
      %v3619 = vsel %vm571, %v3615, 0
      %v3622 = vsel %vm571, %v3617, 0
      %3624 = vmatprep.subr.bf16.mxu0 0
      %3625 = vmatpush1.bf16.xpose.msra.mxu0 %v3622
      %3626 = vmatprep.subr.bf16.mxu0 0
      %3627 = vmatpush1.bf16.xpose.msra.mxu0 0
      %3628 = vmatprep.subr.bf16.mxu0 0
      %3629 = vmatpush1.bf16.xpose.msra.mxu0 0
      %3630 = vmatprep.subr.bf16.mxu0 0
      %3631 = vmatpush1.bf16.xpose.msra.mxu0 0
      %3632 = vmatprep.subr.bf16.mxu0 0
      %3633 = vmatpush1.bf16.xpose.msra.mxu0 0
      %3634 = vmatprep.subr.bf16.mxu0 0
      %3635 = vmatpush1.bf16.xpose.msra.mxu0 0
      %3636 = vmatprep.subr.bf16.mxu0 0
      %3637 = vmatpush1.bf16.xpose.msra.mxu0 0
      %3638 = vmatprep.subr.bf16.mxu0 0
      %3639 = vmatpush1.bf16.xpose.msra.mxu0 0
      %3640 = vmatprep.subr.bf16.mxu0 0
      %3641 = vmatpush1.bf16.xpose.msra.mxu0 0
      %3642 = vmatprep.subr.bf16.mxu0 0
      %3643 = vmatpush1.bf16.xpose.msra.mxu0 0
      %3644 = vmatprep.subr.bf16.mxu0 0
      %3645 = vmatpush1.bf16.xpose.msra.mxu0 0
      %3646 = vmatprep.subr.bf16.mxu0 0
      %3647 = vmatpush1.bf16.xpose.msra.mxu0 0
      %3648 = vmatprep.subr.bf16.mxu0 0
      %3649 = vmatpush1.bf16.xpose.msra.mxu0 0
      %3650 = vmatprep.subr.bf16.mxu0 0
      %3651 = vmatpush1.bf16.xpose.msra.mxu0 0
      %3652 = vmatprep.subr.bf16.mxu0 0
      %3653 = vmatpush1.bf16.xpose.msra.mxu0 0
      %3654 = vmatprep.subr.bf16.mxu0 0
      %3655 = vmatpush1.bf16.xpose.msra.mxu0 0
      %3656 = vmatprep.mubr.bf16.mxu0 0
      %3657 = vmatmul.mubr.bf16.gmra.mrb[0].mxu0 %v3619
      %v3658 = vpop.f32.mrb[0].mxu0
      %v3659 = vadd.f32 0.0, %v3658
      %v3660 = vpop.f32.mrb[0].mxu0
      %v3661 = vpop.f32.mrb[0].mxu0
      %v3662 = vpop.f32.mrb[0].mxu0
      %3663 = vdwg.mxu0
      %3664 = vrot.lane.b32.xlu0 %v563, 104
      %v3665 = vpop.permute.xlu0 %3664
      %3666 = vrot.lane.b32.xlu0 %v563, 72
      %v3667 = vpop.permute.xlu0 %3666
      %v3669 = vsel %vm571, %v3665, 0
      %v3672 = vsel %vm571, %v3667, 0
      %3674 = vmatprep.subr.bf16.mxu0 0
      %3675 = vmatpush1.bf16.xpose.msra.mxu0 %v3672
      %3676 = vmatprep.subr.bf16.mxu0 0
      %3677 = vmatpush1.bf16.xpose.msra.mxu0 0
      %3678 = vmatprep.subr.bf16.mxu0 0
      %3679 = vmatpush1.bf16.xpose.msra.mxu0 0
      %3680 = vmatprep.subr.bf16.mxu0 0
      %3681 = vmatpush1.bf16.xpose.msra.mxu0 0
      %3682 = vmatprep.subr.bf16.mxu0 0
      %3683 = vmatpush1.bf16.xpose.msra.mxu0 0
      %3684 = vmatprep.subr.bf16.mxu0 0
      %3685 = vmatpush1.bf16.xpose.msra.mxu0 0
      %3686 = vmatprep.subr.bf16.mxu0 0
      %3687 = vmatpush1.bf16.xpose.msra.mxu0 0
      %3688 = vmatprep.subr.bf16.mxu0 0
      %3689 = vmatpush1.bf16.xpose.msra.mxu0 0
      %3690 = vmatprep.subr.bf16.mxu0 0
      %3691 = vmatpush1.bf16.xpose.msra.mxu0 0
      %3692 = vmatprep.subr.bf16.mxu0 0
      %3693 = vmatpush1.bf16.xpose.msra.mxu0 0
      %3694 = vmatprep.subr.bf16.mxu0 0
      %3695 = vmatpush1.bf16.xpose.msra.mxu0 0
      %3696 = vmatprep.subr.bf16.mxu0 0
      %3697 = vmatpush1.bf16.xpose.msra.mxu0 0
      %3698 = vmatprep.subr.bf16.mxu0 0
      %3699 = vmatpush1.bf16.xpose.msra.mxu0 0
      %3700 = vmatprep.subr.bf16.mxu0 0
      %3701 = vmatpush1.bf16.xpose.msra.mxu0 0
      %3702 = vmatprep.subr.bf16.mxu0 0
      %3703 = vmatpush1.bf16.xpose.msra.mxu0 0
      %3704 = vmatprep.subr.bf16.mxu0 0
      %3705 = vmatpush1.bf16.xpose.msra.mxu0 0
      %3706 = vmatprep.mubr.bf16.mxu0 0
      %3707 = vmatmul.mubr.bf16.gmra.mrb[0].mxu0 %v3669
      %v3708 = vpop.f32.mrb[0].mxu0
      %v3709 = vadd.f32 0.0, %v3708
      %v3710 = vpop.f32.mrb[0].mxu0
      %v3711 = vpop.f32.mrb[0].mxu0
      %v3712 = vpop.f32.mrb[0].mxu0
      %3713 = vdwg.mxu0
      %3714 = vrot.lane.b32.xlu0 %v564, 104
      %v3715 = vpop.permute.xlu0 %3714
      %3716 = vrot.lane.b32.xlu0 %v564, 72
      %v3717 = vpop.permute.xlu0 %3716
      %v3719 = vsel %vm571, %v3715, 0
      %v3722 = vsel %vm571, %v3717, 0
      %3724 = vmatprep.subr.bf16.mxu0 0
      %3725 = vmatpush1.bf16.xpose.msra.mxu0 %v3722
      %3726 = vmatprep.subr.bf16.mxu0 0
      %3727 = vmatpush1.bf16.xpose.msra.mxu0 0
      %3728 = vmatprep.subr.bf16.mxu0 0
      %3729 = vmatpush1.bf16.xpose.msra.mxu0 0
      %3730 = vmatprep.subr.bf16.mxu0 0
      %3731 = vmatpush1.bf16.xpose.msra.mxu0 0
      %3732 = vmatprep.subr.bf16.mxu0 0
      %3733 = vmatpush1.bf16.xpose.msra.mxu0 0
      %3734 = vmatprep.subr.bf16.mxu0 0
      %3735 = vmatpush1.bf16.xpose.msra.mxu0 0
      %3736 = vmatprep.subr.bf16.mxu0 0
      %3737 = vmatpush1.bf16.xpose.msra.mxu0 0
      %3738 = vmatprep.subr.bf16.mxu0 0
      %3739 = vmatpush1.bf16.xpose.msra.mxu0 0
      %3740 = vmatprep.subr.bf16.mxu0 0
      %3741 = vmatpush1.bf16.xpose.msra.mxu0 0
      %3742 = vmatprep.subr.bf16.mxu0 0
      %3743 = vmatpush1.bf16.xpose.msra.mxu0 0
      %3744 = vmatprep.subr.bf16.mxu0 0
      %3745 = vmatpush1.bf16.xpose.msra.mxu0 0
      %3746 = vmatprep.subr.bf16.mxu0 0
      %3747 = vmatpush1.bf16.xpose.msra.mxu0 0
      %3748 = vmatprep.subr.bf16.mxu0 0
      %3749 = vmatpush1.bf16.xpose.msra.mxu0 0
      %3750 = vmatprep.subr.bf16.mxu0 0
      %3751 = vmatpush1.bf16.xpose.msra.mxu0 0
      %3752 = vmatprep.subr.bf16.mxu0 0
      %3753 = vmatpush1.bf16.xpose.msra.mxu0 0
      %3754 = vmatprep.subr.bf16.mxu0 0
      %3755 = vmatpush1.bf16.xpose.msra.mxu0 0
      %3756 = vmatprep.mubr.bf16.mxu0 0
      %3757 = vmatmul.mubr.bf16.gmra.mrb[0].mxu0 %v3719
      %v3758 = vpop.f32.mrb[0].mxu0
      %v3759 = vadd.f32 0.0, %v3758
      %v3760 = vpop.f32.mrb[0].mxu0
      %v3761 = vpop.f32.mrb[0].mxu0
      %v3762 = vpop.f32.mrb[0].mxu0
      %3763 = vdwg.mxu0
      %3764 = vrot.lane.b32.xlu0 %v565, 104
      %v3765 = vpop.permute.xlu0 %3764
      %3766 = vrot.lane.b32.xlu0 %v565, 72
      %v3767 = vpop.permute.xlu0 %3766
      %v3769 = vsel %vm571, %v3765, 0
      %v3772 = vsel %vm571, %v3767, 0
      %3774 = vmatprep.subr.bf16.mxu0 0
      %3775 = vmatpush1.bf16.xpose.msra.mxu0 %v3772
      %3776 = vmatprep.subr.bf16.mxu0 0
      %3777 = vmatpush1.bf16.xpose.msra.mxu0 0
      %3778 = vmatprep.subr.bf16.mxu0 0
      %3779 = vmatpush1.bf16.xpose.msra.mxu0 0
      %3780 = vmatprep.subr.bf16.mxu0 0
      %3781 = vmatpush1.bf16.xpose.msra.mxu0 0
      %3782 = vmatprep.subr.bf16.mxu0 0
      %3783 = vmatpush1.bf16.xpose.msra.mxu0 0
      %3784 = vmatprep.subr.bf16.mxu0 0
      %3785 = vmatpush1.bf16.xpose.msra.mxu0 0
      %3786 = vmatprep.subr.bf16.mxu0 0
      %3787 = vmatpush1.bf16.xpose.msra.mxu0 0
      %3788 = vmatprep.subr.bf16.mxu0 0
      %3789 = vmatpush1.bf16.xpose.msra.mxu0 0
      %3790 = vmatprep.subr.bf16.mxu0 0
      %3791 = vmatpush1.bf16.xpose.msra.mxu0 0
      %3792 = vmatprep.subr.bf16.mxu0 0
      %3793 = vmatpush1.bf16.xpose.msra.mxu0 0
      %3794 = vmatprep.subr.bf16.mxu0 0
      %3795 = vmatpush1.bf16.xpose.msra.mxu0 0
      %3796 = vmatprep.subr.bf16.mxu0 0
      %3797 = vmatpush1.bf16.xpose.msra.mxu0 0
      %3798 = vmatprep.subr.bf16.mxu0 0
      %3799 = vmatpush1.bf16.xpose.msra.mxu0 0
      %3800 = vmatprep.subr.bf16.mxu0 0
      %3801 = vmatpush1.bf16.xpose.msra.mxu0 0
      %3802 = vmatprep.subr.bf16.mxu0 0
      %3803 = vmatpush1.bf16.xpose.msra.mxu0 0
      %3804 = vmatprep.subr.bf16.mxu0 0
      %3805 = vmatpush1.bf16.xpose.msra.mxu0 0
      %3806 = vmatprep.mubr.bf16.mxu0 0
      %3807 = vmatmul.mubr.bf16.gmra.mrb[0].mxu0 %v3769
      %v3808 = vpop.f32.mrb[0].mxu0
      %v3809 = vadd.f32 0.0, %v3808
      %v3810 = vpop.f32.mrb[0].mxu0
      %v3811 = vpop.f32.mrb[0].mxu0
      %v3812 = vpop.f32.mrb[0].mxu0
      %3813 = vdwg.mxu0
      %3814 = vrot.lane.b32.xlu0 %v566, 104
      %v3815 = vpop.permute.xlu0 %3814
      %3816 = vrot.lane.b32.xlu0 %v566, 72
      %v3817 = vpop.permute.xlu0 %3816
      %v3819 = vsel %vm571, %v3815, 0
      %v3822 = vsel %vm571, %v3817, 0
      %3824 = vmatprep.subr.bf16.mxu0 0
      %3825 = vmatpush1.bf16.xpose.msra.mxu0 %v3822
      %3826 = vmatprep.subr.bf16.mxu0 0
      %3827 = vmatpush1.bf16.xpose.msra.mxu0 0
      %3828 = vmatprep.subr.bf16.mxu0 0
      %3829 = vmatpush1.bf16.xpose.msra.mxu0 0
      %3830 = vmatprep.subr.bf16.mxu0 0
      %3831 = vmatpush1.bf16.xpose.msra.mxu0 0
      %3832 = vmatprep.subr.bf16.mxu0 0
      %3833 = vmatpush1.bf16.xpose.msra.mxu0 0
      %3834 = vmatprep.subr.bf16.mxu0 0
      %3835 = vmatpush1.bf16.xpose.msra.mxu0 0
      %3836 = vmatprep.subr.bf16.mxu0 0
      %3837 = vmatpush1.bf16.xpose.msra.mxu0 0
      %3838 = vmatprep.subr.bf16.mxu0 0
      %3839 = vmatpush1.bf16.xpose.msra.mxu0 0
      %3840 = vmatprep.subr.bf16.mxu0 0
      %3841 = vmatpush1.bf16.xpose.msra.mxu0 0
      %3842 = vmatprep.subr.bf16.mxu0 0
      %3843 = vmatpush1.bf16.xpose.msra.mxu0 0
      %3844 = vmatprep.subr.bf16.mxu0 0
      %3845 = vmatpush1.bf16.xpose.msra.mxu0 0
      %3846 = vmatprep.subr.bf16.mxu0 0
      %3847 = vmatpush1.bf16.xpose.msra.mxu0 0
      %3848 = vmatprep.subr.bf16.mxu0 0
      %3849 = vmatpush1.bf16.xpose.msra.mxu0 0
      %3850 = vmatprep.subr.bf16.mxu0 0
      %3851 = vmatpush1.bf16.xpose.msra.mxu0 0
      %3852 = vmatprep.subr.bf16.mxu0 0
      %3853 = vmatpush1.bf16.xpose.msra.mxu0 0
      %3854 = vmatprep.subr.bf16.mxu0 0
      %3855 = vmatpush1.bf16.xpose.msra.mxu0 0
      %3856 = vmatprep.mubr.bf16.mxu0 0
      %3857 = vmatmul.mubr.bf16.gmra.mrb[0].mxu0 %v3819
      %v3858 = vpop.f32.mrb[0].mxu0
      %v3859 = vadd.f32 0.0, %v3858
      %v3860 = vpop.f32.mrb[0].mxu0
      %v3861 = vpop.f32.mrb[0].mxu0
      %v3862 = vpop.f32.mrb[0].mxu0
      %3863 = vdwg.mxu0
      %3864 = vrot.lane.b32.xlu0 %v567, 104
      %v3865 = vpop.permute.xlu0 %3864
      %3866 = vrot.lane.b32.xlu0 %v567, 72
      %v3867 = vpop.permute.xlu0 %3866
      %v3869 = vsel %vm571, %v3865, 0
      %v3872 = vsel %vm571, %v3867, 0
      %3874 = vmatprep.subr.bf16.mxu0 0
      %3875 = vmatpush1.bf16.xpose.msra.mxu0 %v3872
      %3876 = vmatprep.subr.bf16.mxu0 0
      %3877 = vmatpush1.bf16.xpose.msra.mxu0 0
      %3878 = vmatprep.subr.bf16.mxu0 0
      %3879 = vmatpush1.bf16.xpose.msra.mxu0 0
      %3880 = vmatprep.subr.bf16.mxu0 0
      %3881 = vmatpush1.bf16.xpose.msra.mxu0 0
      %3882 = vmatprep.subr.bf16.mxu0 0
      %3883 = vmatpush1.bf16.xpose.msra.mxu0 0
      %3884 = vmatprep.subr.bf16.mxu0 0
      %3885 = vmatpush1.bf16.xpose.msra.mxu0 0
      %3886 = vmatprep.subr.bf16.mxu0 0
      %3887 = vmatpush1.bf16.xpose.msra.mxu0 0
      %3888 = vmatprep.subr.bf16.mxu0 0
      %3889 = vmatpush1.bf16.xpose.msra.mxu0 0
      %3890 = vmatprep.subr.bf16.mxu0 0
      %3891 = vmatpush1.bf16.xpose.msra.mxu0 0
      %3892 = vmatprep.subr.bf16.mxu0 0
      %3893 = vmatpush1.bf16.xpose.msra.mxu0 0
      %3894 = vmatprep.subr.bf16.mxu0 0
      %3895 = vmatpush1.bf16.xpose.msra.mxu0 0
      %3896 = vmatprep.subr.bf16.mxu0 0
      %3897 = vmatpush1.bf16.xpose.msra.mxu0 0
      %3898 = vmatprep.subr.bf16.mxu0 0
      %3899 = vmatpush1.bf16.xpose.msra.mxu0 0
      %3900 = vmatprep.subr.bf16.mxu0 0
      %3901 = vmatpush1.bf16.xpose.msra.mxu0 0
      %3902 = vmatprep.subr.bf16.mxu0 0
      %3903 = vmatpush1.bf16.xpose.msra.mxu0 0
      %3904 = vmatprep.subr.bf16.mxu0 0
      %3905 = vmatpush1.bf16.xpose.msra.mxu0 0
      %3906 = vmatprep.mubr.bf16.mxu0 0
      %3907 = vmatmul.mubr.bf16.gmra.mrb[0].mxu0 %v3869
      %v3908 = vpop.f32.mrb[0].mxu0
      %v3909 = vadd.f32 0.0, %v3908
      %v3910 = vpop.f32.mrb[0].mxu0
      %v3911 = vpop.f32.mrb[0].mxu0
      %v3912 = vpop.f32.mrb[0].mxu0
      %3913 = vdwg.mxu0
      %v3914 = vmul.f32 %v3559, 0.35355338
      %v3915 = vmul.f32 %v3609, 0.35355338
      %v3916 = vmul.f32 %v3659, 0.35355338
      %v3917 = vmul.f32 %v3709, 0.35355338
      %v3918 = vmul.f32 %v3759, 0.35355338
      %v3919 = vmul.f32 %v3809, 0.35355338
      %v3920 = vmul.f32 %v3859, 0.35355338
      %v3921 = vmul.f32 %v3909, 0.35355338
      %v3922 = vsel %vm969, %v3914, -inf
      %3923 = vmax.xlane.f32.xlu0 %v3922
      %v3924 = vpop.xlane.xlu0 %3923
      %v3925 = vsel %vm969, %v3915, -inf
      %3926 = vmax.xlane.f32.xlu0 %v3925
      %v3927 = vpop.xlane.xlu0 %3926
      %v3928 = vsel %vm969, %v3916, -inf
      %3929 = vmax.xlane.f32.xlu0 %v3928
      %v3930 = vpop.xlane.xlu0 %3929
      %v3931 = vsel %vm969, %v3917, -inf
      %3932 = vmax.xlane.f32.xlu0 %v3931
      %v3933 = vpop.xlane.xlu0 %3932
      %v3934 = vsel %vm969, %v3918, -inf
      %3935 = vmax.xlane.f32.xlu0 %v3934
      %v3936 = vpop.xlane.xlu0 %3935
      %v3937 = vsel %vm969, %v3919, -inf
      %3938 = vmax.xlane.f32.xlu0 %v3937
      %v3939 = vpop.xlane.xlu0 %3938
      %v3940 = vsel %vm969, %v3920, -inf
      %3941 = vmax.xlane.f32.xlu0 %v3940
      %v3942 = vpop.xlane.xlu0 %3941
      %v3943 = vsel %vm969, %v3921, -inf
      %3944 = vmax.xlane.f32.xlu0 %v3943
      %v3945 = vpop.xlane.xlu0 %3944
      %v3946 = vsub.f32 %v3914, %v3924
      %v3947 = vsub.f32 %v3915, %v3927
      %v3948 = vsub.f32 %v3916, %v3930
      %v3949 = vsub.f32 %v3917, %v3933
      %v3950 = vsub.f32 %v3918, %v3936
      %v3951 = vsub.f32 %v3919, %v3939
      %v3952 = vsub.f32 %v3920, %v3942
      %v3953 = vsub.f32 %v3921, %v3945
      %v3954 = vmul.f32 %v3946, 1.442695
      %v3955 = vpow.pop %v3954
      %v3956 = vmul.f32 %v3947, 1.442695
      %v3957 = vpow.pop %v3956
      %v3958 = vmul.f32 %v3948, 1.442695
      %v3959 = vpow.pop %v3958
      %v3960 = vmul.f32 %v3949, 1.442695
      %v3961 = vpow.pop %v3960
      %v3962 = vmul.f32 %v3950, 1.442695
      %v3963 = vpow.pop %v3962
      %v3964 = vmul.f32 %v3951, 1.442695
      %v3965 = vpow.pop %v3964
      %v3966 = vmul.f32 %v3952, 1.442695
      %v3967 = vpow.pop %v3966
      %v3968 = vmul.f32 %v3953, 1.442695
      %v3969 = vpow.pop %v3968
      %v3970 = vsel %vm969, %v3955, 0.0
      %3971 = vadd.xlane.f32.xlu0 %v3970
      %v3972 = vpop.xlane.xlu0 %3971
      %v3973 = vsel %vm969, %v3957, 0.0
      %3974 = vadd.xlane.f32.xlu0 %v3973
      %v3975 = vpop.xlane.xlu0 %3974
      %v3976 = vsel %vm969, %v3959, 0.0
      %3977 = vadd.xlane.f32.xlu0 %v3976
      %v3978 = vpop.xlane.xlu0 %3977
      %v3979 = vsel %vm969, %v3961, 0.0
      %3980 = vadd.xlane.f32.xlu0 %v3979
      %v3981 = vpop.xlane.xlu0 %3980
      %v3982 = vsel %vm969, %v3963, 0.0
      %3983 = vadd.xlane.f32.xlu0 %v3982
      %v3984 = vpop.xlane.xlu0 %3983
      %v3985 = vsel %vm969, %v3965, 0.0
      %3986 = vadd.xlane.f32.xlu0 %v3985
      %v3987 = vpop.xlane.xlu0 %3986
      %v3988 = vsel %vm969, %v3967, 0.0
      %3989 = vadd.xlane.f32.xlu0 %v3988
      %v3990 = vpop.xlane.xlu0 %3989
      %v3991 = vsel %vm969, %v3969, 0.0
      %3992 = vadd.xlane.f32.xlu0 %v3991
      %v3993 = vpop.xlane.xlu0 %3992
      %v3994 = vrcp.pop %v3972
      %v3995 = vrcp.pop %v3975
      %v3996 = vrcp.pop %v3978
      %v3997 = vrcp.pop %v3981
      %v3998 = vrcp.pop %v3984
      %v3999 = vrcp.pop %v3987
      %v4000 = vrcp.pop %v3990
      %v4001 = vrcp.pop %v3993
      %v4002 = vmul.f32 %v3955, %v3994
      %v4003 = vmul.f32 %v3957, %v3995
      %v4004 = vmul.f32 %v3959, %v3996
      %v4005 = vmul.f32 %v3961, %v3997
      %v4006 = vmul.f32 %v3963, %v3998
      %v4007 = vmul.f32 %v3965, %v3999
      %v4008 = vmul.f32 %v3967, %v4000
      %v4009 = vmul.f32 %v3969, %v4001
      %v4010 = vpack.c.bf16 %v4002, %v4002
      %v4011 = vpack.c.bf16 %v4003, %v4003
      %v4012 = vpack.c.bf16 %v4004, %v4004
      %v4013 = vpack.c.bf16 %v4005, %v4005
      %v4014 = vpack.c.bf16 %v4006, %v4006
      %v4015 = vpack.c.bf16 %v4007, %v4007
      %v4016 = vpack.c.bf16 %v4008, %v4008
      %v4017 = vpack.c.bf16 %v4009, %v4009
      %4018 = vrot.lane.b32.xlu0 %v560, 40
      %v4019 = vpop.permute.xlu0 %4018
      %v4021 = vsel %vm1068, %v4010, 0
      %v4024 = vsel %vm1072, %v4019, 0
      %4026 = vmatprep.subr.bf16.mxu0 0
      %4027 = vmatpush1.bf16.msra.mxu0 %v4024
      %4028 = vmatprep.subr.bf16.mxu0 0
      %4029 = vmatpush1.bf16.msra.mxu0 0
      %4030 = vmatprep.subr.bf16.mxu0 0
      %4031 = vmatpush1.bf16.msra.mxu0 0
      %4032 = vmatprep.subr.bf16.mxu0 0
      %4033 = vmatpush1.bf16.msra.mxu0 0
      %4034 = vmatprep.subr.bf16.mxu0 0
      %4035 = vmatpush1.bf16.msra.mxu0 0
      %4036 = vmatprep.subr.bf16.mxu0 0
      %4037 = vmatpush1.bf16.msra.mxu0 0
      %4038 = vmatprep.subr.bf16.mxu0 0
      %4039 = vmatpush1.bf16.msra.mxu0 0
      %4040 = vmatprep.subr.bf16.mxu0 0
      %4041 = vmatpush1.bf16.msra.mxu0 0
      %4042 = vmatprep.subr.bf16.mxu0 0
      %4043 = vmatpush1.bf16.msra.mxu0 0
      %4044 = vmatprep.subr.bf16.mxu0 0
      %4045 = vmatpush1.bf16.msra.mxu0 0
      %4046 = vmatprep.subr.bf16.mxu0 0
      %4047 = vmatpush1.bf16.msra.mxu0 0
      %4048 = vmatprep.subr.bf16.mxu0 0
      %4049 = vmatpush1.bf16.msra.mxu0 0
      %4050 = vmatprep.subr.bf16.mxu0 0
      %4051 = vmatpush1.bf16.msra.mxu0 0
      %4052 = vmatprep.subr.bf16.mxu0 0
      %4053 = vmatpush1.bf16.msra.mxu0 0
      %4054 = vmatprep.subr.bf16.mxu0 0
      %4055 = vmatpush1.bf16.msra.mxu0 0
      %4056 = vmatprep.subr.bf16.mxu0 0
      %4057 = vmatpush1.bf16.msra.mxu0 0
      %4058 = vmatprep.mubr.bf16.mxu0 0
      %4059 = vmatmul.mubr.bf16.gmra.mrb[0].mxu0 %v4021
      %v4060 = vpop.f32.mrb[0].mxu0
      %v4061 = vadd.f32 0.0, %v4060
      %v4062 = vpop.f32.mrb[0].mxu0
      %v4063 = vpop.f32.mrb[0].mxu0
      %v4064 = vpop.f32.mrb[0].mxu0
      %4065 = vdwg.mxu0
      %4066 = vrot.lane.b32.xlu0 %v561, 40
      %v4067 = vpop.permute.xlu0 %4066
      %v4069 = vsel %vm1068, %v4011, 0
      %v4072 = vsel %vm1072, %v4067, 0
      %4074 = vmatprep.subr.bf16.mxu0 0
      %4075 = vmatpush1.bf16.msra.mxu0 %v4072
      %4076 = vmatprep.subr.bf16.mxu0 0
      %4077 = vmatpush1.bf16.msra.mxu0 0
      %4078 = vmatprep.subr.bf16.mxu0 0
      %4079 = vmatpush1.bf16.msra.mxu0 0
      %4080 = vmatprep.subr.bf16.mxu0 0
      %4081 = vmatpush1.bf16.msra.mxu0 0
      %4082 = vmatprep.subr.bf16.mxu0 0
      %4083 = vmatpush1.bf16.msra.mxu0 0
      %4084 = vmatprep.subr.bf16.mxu0 0
      %4085 = vmatpush1.bf16.msra.mxu0 0
      %4086 = vmatprep.subr.bf16.mxu0 0
      %4087 = vmatpush1.bf16.msra.mxu0 0
      %4088 = vmatprep.subr.bf16.mxu0 0
      %4089 = vmatpush1.bf16.msra.mxu0 0
      %4090 = vmatprep.subr.bf16.mxu0 0
      %4091 = vmatpush1.bf16.msra.mxu0 0
      %4092 = vmatprep.subr.bf16.mxu0 0
      %4093 = vmatpush1.bf16.msra.mxu0 0
      %4094 = vmatprep.subr.bf16.mxu0 0
      %4095 = vmatpush1.bf16.msra.mxu0 0
      %4096 = vmatprep.subr.bf16.mxu0 0
      %4097 = vmatpush1.bf16.msra.mxu0 0
      %4098 = vmatprep.subr.bf16.mxu0 0
      %4099 = vmatpush1.bf16.msra.mxu0 0
      %4100 = vmatprep.subr.bf16.mxu0 0
      %4101 = vmatpush1.bf16.msra.mxu0 0
      %4102 = vmatprep.subr.bf16.mxu0 0
      %4103 = vmatpush1.bf16.msra.mxu0 0
      %4104 = vmatprep.subr.bf16.mxu0 0
      %4105 = vmatpush1.bf16.msra.mxu0 0
      %4106 = vmatprep.mubr.bf16.mxu0 0
      %4107 = vmatmul.mubr.bf16.gmra.mrb[0].mxu0 %v4069
      %v4108 = vpop.f32.mrb[0].mxu0
      %v4109 = vadd.f32 0.0, %v4108
      %v4110 = vpop.f32.mrb[0].mxu0
      %v4111 = vpop.f32.mrb[0].mxu0
      %v4112 = vpop.f32.mrb[0].mxu0
      %4113 = vdwg.mxu0
      %4114 = vrot.lane.b32.xlu0 %v562, 40
      %v4115 = vpop.permute.xlu0 %4114
      %v4117 = vsel %vm1068, %v4012, 0
      %v4120 = vsel %vm1072, %v4115, 0
      %4122 = vmatprep.subr.bf16.mxu0 0
      %4123 = vmatpush1.bf16.msra.mxu0 %v4120
      %4124 = vmatprep.subr.bf16.mxu0 0
      %4125 = vmatpush1.bf16.msra.mxu0 0
      %4126 = vmatprep.subr.bf16.mxu0 0
      %4127 = vmatpush1.bf16.msra.mxu0 0
      %4128 = vmatprep.subr.bf16.mxu0 0
      %4129 = vmatpush1.bf16.msra.mxu0 0
      %4130 = vmatprep.subr.bf16.mxu0 0
      %4131 = vmatpush1.bf16.msra.mxu0 0
      %4132 = vmatprep.subr.bf16.mxu0 0
      %4133 = vmatpush1.bf16.msra.mxu0 0
      %4134 = vmatprep.subr.bf16.mxu0 0
      %4135 = vmatpush1.bf16.msra.mxu0 0
      %4136 = vmatprep.subr.bf16.mxu0 0
      %4137 = vmatpush1.bf16.msra.mxu0 0
      %4138 = vmatprep.subr.bf16.mxu0 0
      %4139 = vmatpush1.bf16.msra.mxu0 0
      %4140 = vmatprep.subr.bf16.mxu0 0
      %4141 = vmatpush1.bf16.msra.mxu0 0
      %4142 = vmatprep.subr.bf16.mxu0 0
      %4143 = vmatpush1.bf16.msra.mxu0 0
      %4144 = vmatprep.subr.bf16.mxu0 0
      %4145 = vmatpush1.bf16.msra.mxu0 0
      %4146 = vmatprep.subr.bf16.mxu0 0
      %4147 = vmatpush1.bf16.msra.mxu0 0
      %4148 = vmatprep.subr.bf16.mxu0 0
      %4149 = vmatpush1.bf16.msra.mxu0 0
      %4150 = vmatprep.subr.bf16.mxu0 0
      %4151 = vmatpush1.bf16.msra.mxu0 0
      %4152 = vmatprep.subr.bf16.mxu0 0
      %4153 = vmatpush1.bf16.msra.mxu0 0
      %4154 = vmatprep.mubr.bf16.mxu0 0
      %4155 = vmatmul.mubr.bf16.gmra.mrb[0].mxu0 %v4117
      %v4156 = vpop.f32.mrb[0].mxu0
      %v4157 = vadd.f32 0.0, %v4156
      %v4158 = vpop.f32.mrb[0].mxu0
      %v4159 = vpop.f32.mrb[0].mxu0
      %v4160 = vpop.f32.mrb[0].mxu0
      %4161 = vdwg.mxu0
      %4162 = vrot.lane.b32.xlu0 %v563, 40
      %v4163 = vpop.permute.xlu0 %4162
      %v4165 = vsel %vm1068, %v4013, 0
      %v4168 = vsel %vm1072, %v4163, 0
      %4170 = vmatprep.subr.bf16.mxu0 0
      %4171 = vmatpush1.bf16.msra.mxu0 %v4168
      %4172 = vmatprep.subr.bf16.mxu0 0
      %4173 = vmatpush1.bf16.msra.mxu0 0
      %4174 = vmatprep.subr.bf16.mxu0 0
      %4175 = vmatpush1.bf16.msra.mxu0 0
      %4176 = vmatprep.subr.bf16.mxu0 0
      %4177 = vmatpush1.bf16.msra.mxu0 0
      %4178 = vmatprep.subr.bf16.mxu0 0
      %4179 = vmatpush1.bf16.msra.mxu0 0
      %4180 = vmatprep.subr.bf16.mxu0 0
      %4181 = vmatpush1.bf16.msra.mxu0 0
      %4182 = vmatprep.subr.bf16.mxu0 0
      %4183 = vmatpush1.bf16.msra.mxu0 0
      %4184 = vmatprep.subr.bf16.mxu0 0
      %4185 = vmatpush1.bf16.msra.mxu0 0
      %4186 = vmatprep.subr.bf16.mxu0 0
      %4187 = vmatpush1.bf16.msra.mxu0 0
      %4188 = vmatprep.subr.bf16.mxu0 0
      %4189 = vmatpush1.bf16.msra.mxu0 0
      %4190 = vmatprep.subr.bf16.mxu0 0
      %4191 = vmatpush1.bf16.msra.mxu0 0
      %4192 = vmatprep.subr.bf16.mxu0 0
      %4193 = vmatpush1.bf16.msra.mxu0 0
      %4194 = vmatprep.subr.bf16.mxu0 0
      %4195 = vmatpush1.bf16.msra.mxu0 0
      %4196 = vmatprep.subr.bf16.mxu0 0
      %4197 = vmatpush1.bf16.msra.mxu0 0
      %4198 = vmatprep.subr.bf16.mxu0 0
      %4199 = vmatpush1.bf16.msra.mxu0 0
      %4200 = vmatprep.subr.bf16.mxu0 0
      %4201 = vmatpush1.bf16.msra.mxu0 0
      %4202 = vmatprep.mubr.bf16.mxu0 0
      %4203 = vmatmul.mubr.bf16.gmra.mrb[0].mxu0 %v4165
      %v4204 = vpop.f32.mrb[0].mxu0
      %v4205 = vadd.f32 0.0, %v4204
      %v4206 = vpop.f32.mrb[0].mxu0
      %v4207 = vpop.f32.mrb[0].mxu0
      %v4208 = vpop.f32.mrb[0].mxu0
      %4209 = vdwg.mxu0
      %4210 = vrot.lane.b32.xlu0 %v564, 40
      %v4211 = vpop.permute.xlu0 %4210
      %v4213 = vsel %vm1068, %v4014, 0
      %v4216 = vsel %vm1072, %v4211, 0
      %4218 = vmatprep.subr.bf16.mxu0 0
      %4219 = vmatpush1.bf16.msra.mxu0 %v4216
      %4220 = vmatprep.subr.bf16.mxu0 0
      %4221 = vmatpush1.bf16.msra.mxu0 0
      %4222 = vmatprep.subr.bf16.mxu0 0
      %4223 = vmatpush1.bf16.msra.mxu0 0
      %4224 = vmatprep.subr.bf16.mxu0 0
      %4225 = vmatpush1.bf16.msra.mxu0 0
      %4226 = vmatprep.subr.bf16.mxu0 0
      %4227 = vmatpush1.bf16.msra.mxu0 0
      %4228 = vmatprep.subr.bf16.mxu0 0
      %4229 = vmatpush1.bf16.msra.mxu0 0
      %4230 = vmatprep.subr.bf16.mxu0 0
      %4231 = vmatpush1.bf16.msra.mxu0 0
      %4232 = vmatprep.subr.bf16.mxu0 0
      %4233 = vmatpush1.bf16.msra.mxu0 0
      %4234 = vmatprep.subr.bf16.mxu0 0
      %4235 = vmatpush1.bf16.msra.mxu0 0
      %4236 = vmatprep.subr.bf16.mxu0 0
      %4237 = vmatpush1.bf16.msra.mxu0 0
      %4238 = vmatprep.subr.bf16.mxu0 0
      %4239 = vmatpush1.bf16.msra.mxu0 0
      %4240 = vmatprep.subr.bf16.mxu0 0
      %4241 = vmatpush1.bf16.msra.mxu0 0
      %4242 = vmatprep.subr.bf16.mxu0 0
      %4243 = vmatpush1.bf16.msra.mxu0 0
      %4244 = vmatprep.subr.bf16.mxu0 0
      %4245 = vmatpush1.bf16.msra.mxu0 0
      %4246 = vmatprep.subr.bf16.mxu0 0
      %4247 = vmatpush1.bf16.msra.mxu0 0
      %4248 = vmatprep.subr.bf16.mxu0 0
      %4249 = vmatpush1.bf16.msra.mxu0 0
      %4250 = vmatprep.mubr.bf16.mxu0 0
      %4251 = vmatmul.mubr.bf16.gmra.mrb[0].mxu0 %v4213
      %v4252 = vpop.f32.mrb[0].mxu0
      %v4253 = vadd.f32 0.0, %v4252
      %v4254 = vpop.f32.mrb[0].mxu0
      %v4255 = vpop.f32.mrb[0].mxu0
      %v4256 = vpop.f32.mrb[0].mxu0
      %4257 = vdwg.mxu0
      %4258 = vrot.lane.b32.xlu0 %v565, 40
      %v4259 = vpop.permute.xlu0 %4258
      %v4261 = vsel %vm1068, %v4015, 0
      %v4264 = vsel %vm1072, %v4259, 0
      %4266 = vmatprep.subr.bf16.mxu0 0
      %4267 = vmatpush1.bf16.msra.mxu0 %v4264
      %4268 = vmatprep.subr.bf16.mxu0 0
      %4269 = vmatpush1.bf16.msra.mxu0 0
      %4270 = vmatprep.subr.bf16.mxu0 0
      %4271 = vmatpush1.bf16.msra.mxu0 0
      %4272 = vmatprep.subr.bf16.mxu0 0
      %4273 = vmatpush1.bf16.msra.mxu0 0
      %4274 = vmatprep.subr.bf16.mxu0 0
      %4275 = vmatpush1.bf16.msra.mxu0 0
      %4276 = vmatprep.subr.bf16.mxu0 0
      %4277 = vmatpush1.bf16.msra.mxu0 0
      %4278 = vmatprep.subr.bf16.mxu0 0
      %4279 = vmatpush1.bf16.msra.mxu0 0
      %4280 = vmatprep.subr.bf16.mxu0 0
      %4281 = vmatpush1.bf16.msra.mxu0 0
      %4282 = vmatprep.subr.bf16.mxu0 0
      %4283 = vmatpush1.bf16.msra.mxu0 0
      %4284 = vmatprep.subr.bf16.mxu0 0
      %4285 = vmatpush1.bf16.msra.mxu0 0
      %4286 = vmatprep.subr.bf16.mxu0 0
      %4287 = vmatpush1.bf16.msra.mxu0 0
      %4288 = vmatprep.subr.bf16.mxu0 0
      %4289 = vmatpush1.bf16.msra.mxu0 0
      %4290 = vmatprep.subr.bf16.mxu0 0
      %4291 = vmatpush1.bf16.msra.mxu0 0
      %4292 = vmatprep.subr.bf16.mxu0 0
      %4293 = vmatpush1.bf16.msra.mxu0 0
      %4294 = vmatprep.subr.bf16.mxu0 0
      %4295 = vmatpush1.bf16.msra.mxu0 0
      %4296 = vmatprep.subr.bf16.mxu0 0
      %4297 = vmatpush1.bf16.msra.mxu0 0
      %4298 = vmatprep.mubr.bf16.mxu0 0
      %4299 = vmatmul.mubr.bf16.gmra.mrb[0].mxu0 %v4261
      %v4300 = vpop.f32.mrb[0].mxu0
      %v4301 = vadd.f32 0.0, %v4300
      %v4302 = vpop.f32.mrb[0].mxu0
      %v4303 = vpop.f32.mrb[0].mxu0
      %v4304 = vpop.f32.mrb[0].mxu0
      %4305 = vdwg.mxu0
      %4306 = vrot.lane.b32.xlu0 %v566, 40
      %v4307 = vpop.permute.xlu0 %4306
      %v4309 = vsel %vm1068, %v4016, 0
      %v4312 = vsel %vm1072, %v4307, 0
      %4314 = vmatprep.subr.bf16.mxu0 0
      %4315 = vmatpush1.bf16.msra.mxu0 %v4312
      %4316 = vmatprep.subr.bf16.mxu0 0
      %4317 = vmatpush1.bf16.msra.mxu0 0
      %4318 = vmatprep.subr.bf16.mxu0 0
      %4319 = vmatpush1.bf16.msra.mxu0 0
      %4320 = vmatprep.subr.bf16.mxu0 0
      %4321 = vmatpush1.bf16.msra.mxu0 0
      %4322 = vmatprep.subr.bf16.mxu0 0
      %4323 = vmatpush1.bf16.msra.mxu0 0
      %4324 = vmatprep.subr.bf16.mxu0 0
      %4325 = vmatpush1.bf16.msra.mxu0 0
      %4326 = vmatprep.subr.bf16.mxu0 0
      %4327 = vmatpush1.bf16.msra.mxu0 0
      %4328 = vmatprep.subr.bf16.mxu0 0
      %4329 = vmatpush1.bf16.msra.mxu0 0
      %4330 = vmatprep.subr.bf16.mxu0 0
      %4331 = vmatpush1.bf16.msra.mxu0 0
      %4332 = vmatprep.subr.bf16.mxu0 0
      %4333 = vmatpush1.bf16.msra.mxu0 0
      %4334 = vmatprep.subr.bf16.mxu0 0
      %4335 = vmatpush1.bf16.msra.mxu0 0
      %4336 = vmatprep.subr.bf16.mxu0 0
      %4337 = vmatpush1.bf16.msra.mxu0 0
      %4338 = vmatprep.subr.bf16.mxu0 0
      %4339 = vmatpush1.bf16.msra.mxu0 0
      %4340 = vmatprep.subr.bf16.mxu0 0
      %4341 = vmatpush1.bf16.msra.mxu0 0
      %4342 = vmatprep.subr.bf16.mxu0 0
      %4343 = vmatpush1.bf16.msra.mxu0 0
      %4344 = vmatprep.subr.bf16.mxu0 0
      %4345 = vmatpush1.bf16.msra.mxu0 0
      %4346 = vmatprep.mubr.bf16.mxu0 0
      %4347 = vmatmul.mubr.bf16.gmra.mrb[0].mxu0 %v4309
      %v4348 = vpop.f32.mrb[0].mxu0
      %v4349 = vadd.f32 0.0, %v4348
      %v4350 = vpop.f32.mrb[0].mxu0
      %v4351 = vpop.f32.mrb[0].mxu0
      %v4352 = vpop.f32.mrb[0].mxu0
      %4353 = vdwg.mxu0
      %4354 = vrot.lane.b32.xlu0 %v567, 40
      %v4355 = vpop.permute.xlu0 %4354
      %v4357 = vsel %vm1068, %v4017, 0
      %v4360 = vsel %vm1072, %v4355, 0
      %4362 = vmatprep.subr.bf16.mxu0 0
      %4363 = vmatpush1.bf16.msra.mxu0 %v4360
      %4364 = vmatprep.subr.bf16.mxu0 0
      %4365 = vmatpush1.bf16.msra.mxu0 0
      %4366 = vmatprep.subr.bf16.mxu0 0
      %4367 = vmatpush1.bf16.msra.mxu0 0
      %4368 = vmatprep.subr.bf16.mxu0 0
      %4369 = vmatpush1.bf16.msra.mxu0 0
      %4370 = vmatprep.subr.bf16.mxu0 0
      %4371 = vmatpush1.bf16.msra.mxu0 0
      %4372 = vmatprep.subr.bf16.mxu0 0
      %4373 = vmatpush1.bf16.msra.mxu0 0
      %4374 = vmatprep.subr.bf16.mxu0 0
      %4375 = vmatpush1.bf16.msra.mxu0 0
      %4376 = vmatprep.subr.bf16.mxu0 0
      %4377 = vmatpush1.bf16.msra.mxu0 0
      %4378 = vmatprep.subr.bf16.mxu0 0
      %4379 = vmatpush1.bf16.msra.mxu0 0
      %4380 = vmatprep.subr.bf16.mxu0 0
      %4381 = vmatpush1.bf16.msra.mxu0 0
      %4382 = vmatprep.subr.bf16.mxu0 0
      %4383 = vmatpush1.bf16.msra.mxu0 0
      %4384 = vmatprep.subr.bf16.mxu0 0
      %4385 = vmatpush1.bf16.msra.mxu0 0
      %4386 = vmatprep.subr.bf16.mxu0 0
      %4387 = vmatpush1.bf16.msra.mxu0 0
      %4388 = vmatprep.subr.bf16.mxu0 0
      %4389 = vmatpush1.bf16.msra.mxu0 0
      %4390 = vmatprep.subr.bf16.mxu0 0
      %4391 = vmatpush1.bf16.msra.mxu0 0
      %4392 = vmatprep.subr.bf16.mxu0 0
      %4393 = vmatpush1.bf16.msra.mxu0 0
      %4394 = vmatprep.mubr.bf16.mxu0 0
      %4395 = vmatmul.mubr.bf16.gmra.mrb[0].mxu0 %v4357
      %v4396 = vpop.f32.mrb[0].mxu0
      %v4397 = vadd.f32 0.0, %v4396
      %v4398 = vpop.f32.mrb[0].mxu0
      %v4399 = vpop.f32.mrb[0].mxu0
      %v4400 = vpop.f32.mrb[0].mxu0
      %4401 = vdwg.mxu0
      %v4410 = vcombine.low %v4061, %v4109
      %v4411 = vcombine.low %v4157, %v4205
      %v4413 = vunpack.c.l.s4 1983009808
      %v4414 = vunpack.c.0.s8 %v4413
      %v4415 = vlaneseq
      %v4416 = vshrl.u32 %v4415, 7
      %v4417 = vsub.s32 %v4414, %v4416
      %v4418 = vrot.slane %v4410, %v4417
      %v4420 = vunpack.c.l.s4 1983009808
      %v4421 = vunpack.c.0.s8 %v4420
      %v4422 = vlaneseq
      %v4423 = vshrl.u32 %v4422, 7
      %v4424 = vsub.s32 %v4421, %v4423
      %v4425 = vrot.slane %v4411, %v4424
      %v4426 = vcombine.low %v4418, %v4425
      %v4427 = vcombine.low %v4253, %v4301
      %v4428 = vcombine.low %v4349, %v4397
      %v4430 = vunpack.c.l.s4 1983009808
      %v4431 = vunpack.c.0.s8 %v4430
      %v4432 = vlaneseq
      %v4433 = vshrl.u32 %v4432, 7
      %v4434 = vsub.s32 %v4431, %v4433
      %v4435 = vrot.slane %v4427, %v4434
      %v4437 = vunpack.c.l.s4 1983009808
      %v4438 = vunpack.c.0.s8 %v4437
      %v4439 = vlaneseq
      %v4440 = vshrl.u32 %v4439, 7
      %v4441 = vsub.s32 %v4438, %v4440
      %v4442 = vrot.slane %v4428, %v4441
      %v4443 = vcombine.low %v4435, %v4442
      %v4446 = vpack.c.bf16 %v4443, %v4426
      %v4447 = vld [vmem:[%s5 + $0xc] sm:$0xf]
      %v4449 = vsel %vm571, %v4446, 0
      %v4452 = vsel %vm1501, %v4447, 0
      %4454 = vmatprep.subr.bf16.mxu0 0
      %4455 = vmatpush1.bf16.msra.mxu0 %v4452
      %4456 = vmatprep.subr.bf16.mxu0 0
      %4457 = vmatpush1.bf16.msra.mxu0 0
      %4458 = vmatprep.subr.bf16.mxu0 0
      %4459 = vmatpush1.bf16.msra.mxu0 0
      %4460 = vmatprep.subr.bf16.mxu0 0
      %4461 = vmatpush1.bf16.msra.mxu0 0
      %4462 = vmatprep.subr.bf16.mxu0 0
      %4463 = vmatpush1.bf16.msra.mxu0 0
      %4464 = vmatprep.subr.bf16.mxu0 0
      %4465 = vmatpush1.bf16.msra.mxu0 0
      %4466 = vmatprep.subr.bf16.mxu0 0
      %4467 = vmatpush1.bf16.msra.mxu0 0
      %4468 = vmatprep.subr.bf16.mxu0 0
      %4469 = vmatpush1.bf16.msra.mxu0 0
      %4470 = vmatprep.subr.bf16.mxu0 0
      %4471 = vmatpush1.bf16.msra.mxu0 0
      %4472 = vmatprep.subr.bf16.mxu0 0
      %4473 = vmatpush1.bf16.msra.mxu0 0
      %4474 = vmatprep.subr.bf16.mxu0 0
      %4475 = vmatpush1.bf16.msra.mxu0 0
      %4476 = vmatprep.subr.bf16.mxu0 0
      %4477 = vmatpush1.bf16.msra.mxu0 0
      %4478 = vmatprep.subr.bf16.mxu0 0
      %4479 = vmatpush1.bf16.msra.mxu0 0
      %4480 = vmatprep.subr.bf16.mxu0 0
      %4481 = vmatpush1.bf16.msra.mxu0 0
      %4482 = vmatprep.subr.bf16.mxu0 0
      %4483 = vmatpush1.bf16.msra.mxu0 0
      %4484 = vmatprep.subr.bf16.mxu0 0
      %4485 = vmatpush1.bf16.msra.mxu0 0
      %4486 = vmatprep.mubr.bf16.mxu0 0
      %4487 = vmatmul.mubr.bf16.gmra.mrb[0].mxu0 %v4449
      %v4488 = vpop.f32.mrb[0].mxu0
      %v4489 = vadd.f32 0.0, %v4488
      %v4490 = vpop.f32.mrb[0].mxu0
      %v4491 = vpop.f32.mrb[0].mxu0
      %v4492 = vadd.f32 0.0, %v4491
      %v4493 = vpop.f32.mrb[0].mxu0
      %4494 = vdwg.mxu0
      %v4495 = vadd.f32 %v3512, %v4489
      %v4496 = vadd.f32 %v3513, %v4492
      %v4497 = vsel %vm395, %v4495, 0.0
      %4498 = vadd.xlane.f32.xlu0 %v4497
      %v4499 = vpop.xlane.xlu0 %4498
      %v4500 = vsel %vm395, %v4496, 0.0
      %4501 = vadd.xlane.f32.xlu0 %v4500
      %v4502 = vpop.xlane.xlu0 %4501
      %v4503 = vmul.f32 %v4499, %v402
      %v4504 = vmul.f32 %v4502, %v402
      %v4505 = vsub.f32 %v4495, %v4503
      %v4506 = vsub.f32 %v4496, %v4504
      %v4507 = vmul.f32 %v4505, %v4505
      %v4508 = vmul.f32 %v4506, %v4506
      %v4509 = vsel %vm395, %v4507, 0.0
      %4510 = vadd.xlane.f32.xlu0 %v4509
      %v4511 = vpop.xlane.xlu0 %4510
      %v4512 = vsel %vm395, %v4508, 0.0
      %4513 = vadd.xlane.f32.xlu0 %v4512
      %v4514 = vpop.xlane.xlu0 %4513
      %v4515 = vmul.f32 %v4511, %v402
      %v4516 = vmul.f32 %v4514, %v402
      %v4517 = vadd.f32 %v4515, 1e-05
      %v4518 = vadd.f32 %v4516, 1e-05
      %v4519 = vrsqrt.pop %v4517
      %v4520 = vrsqrt.pop %v4518
      %v4521 = vmul.f32 %v4505, %v4519
      %v4522 = vmul.f32 %v4506, %v4520
      %v4523 = vmul.f32 %v4521, %v427
      %v4524 = vmul.f32 %v4522, %v427
      %v4525 = vadd.f32 %v4523, %v435
      %v4526 = vadd.f32 %v4524, %v435
      %v4527 = vpack.c.bf16 %v4526, %v4525
      %v4528 = vld [vmem:[%s10] sm:$0x1]
      %v4530 = vlaneseq
      %v4531 = vshrl.u32 %v4530, 7
      %v4532 = vsub.s32 0, %v4531
      %v4533 = vrot.slane %v4528, %v4532
      %v4535 = vadd.f32 %v4495, %v4533
      %v4536 = vadd.f32 %v4496, %v4533
      %v4537 = vld [vmem:[%s7] sm:$0xf]
      %v4538 = vld [vmem:[%s7 + $0x4] sm:$0xf]
      %v4539 = vld [vmem:[%s7 + $0x8] sm:$0xf]
      %v4540 = vld [vmem:[%s7 + $0xc] sm:$0xf]
      %v4541 = vld [vmem:[%s8] sm:$0x1]
      %v4543 = vlaneseq
      %v4544 = vshrl.u32 %v4543, 7
      %v4545 = vsub.s32 0, %v4544
      %v4546 = vrot.slane %v4541, %v4545
      %v4552 = vunpack.c.l.b16 %v4537
      %v4553 = vunpack.c.l.b16 %v4538
      %v4554 = vunpack.c.l.b16 %v4539
      %v4555 = vunpack.c.l.b16 %v4540
      %v4556 = vpack.c.b16 %v4553, %v4552
      %v4557 = vpack.c.b16 %v4555, %v4554
      %v4561 = vsel %vm395, %v4527, 0
      %4563 = vmatprep.subr.bf16.mxu0 0
      %4564 = vmatpush1.bf16.msra.mxu0 %v4556
      %4565 = vmatprep.subr.bf16.mxu0 0
      %4566 = vmatpush1.bf16.msra.mxu0 %v4557
      %4567 = vmatprep.subr.bf16.mxu0 0
      %4568 = vmatpush1.bf16.msra.mxu0 0
      %4569 = vmatprep.subr.bf16.mxu0 0
      %4570 = vmatpush1.bf16.msra.mxu0 0
      %4571 = vmatprep.subr.bf16.mxu0 0
      %4572 = vmatpush1.bf16.msra.mxu0 0
      %4573 = vmatprep.subr.bf16.mxu0 0
      %4574 = vmatpush1.bf16.msra.mxu0 0
      %4575 = vmatprep.subr.bf16.mxu0 0
      %4576 = vmatpush1.bf16.msra.mxu0 0
      %4577 = vmatprep.subr.bf16.mxu0 0
      %4578 = vmatpush1.bf16.msra.mxu0 0
      %4579 = vmatprep.subr.bf16.mxu0 0
      %4580 = vmatpush1.bf16.msra.mxu0 0
      %4581 = vmatprep.subr.bf16.mxu0 0
      %4582 = vmatpush1.bf16.msra.mxu0 0
      %4583 = vmatprep.subr.bf16.mxu0 0
      %4584 = vmatpush1.bf16.msra.mxu0 0
      %4585 = vmatprep.subr.bf16.mxu0 0
      %4586 = vmatpush1.bf16.msra.mxu0 0
      %4587 = vmatprep.subr.bf16.mxu0 0
      %4588 = vmatpush1.bf16.msra.mxu0 0
      %4589 = vmatprep.subr.bf16.mxu0 0
      %4590 = vmatpush1.bf16.msra.mxu0 0
      %4591 = vmatprep.subr.bf16.mxu0 0
      %4592 = vmatpush1.bf16.msra.mxu0 0
      %4593 = vmatprep.subr.bf16.mxu0 0
      %4594 = vmatpush1.bf16.msra.mxu0 0
      %4595 = vmatprep.mubr.bf16.mxu0 0
      %4596 = vmatmul.mubr.bf16.gmra.mrb[0].mxu0 %v4561
      %v4597 = vpop.f32.mrb[0].mxu0
      %v4598 = vadd.f32 %v4546, %v4597
      %v4599 = vpop.f32.mrb[0].mxu0
      %v4600 = vpop.f32.mrb[0].mxu0
      %v4601 = vadd.f32 %v4546, %v4600
      %v4602 = vpop.f32.mrb[0].mxu0
      %4603 = vdwg.mxu0
      %v4604 = vmul.f32 %v4598, 0.5
      %v4605 = vmul.f32 %v4601, 0.5
      %v4606 = vmul.f32 %v4598, 0.044715
      %v4607 = vmul.f32 %v4601, 0.044715
      %v4608 = vmul.f32 %v4606, %v4598
      %v4609 = vmul.f32 %v4607, %v4601
      %v4610 = vmul.f32 %v4608, %v4598
      %v4611 = vmul.f32 %v4609, %v4601
      %v4612 = vadd.f32 %v4598, %v4610
      %v4613 = vadd.f32 %v4601, %v4611
      %v4614 = vmul.f32 %v4612, 0.7978846
      %v4615 = vmul.f32 %v4613, 0.7978846
      %v4616 = vtanh.pop %v4614
      %v4617 = vtanh.pop %v4615
      %v4618 = vadd.f32 %v4616, 1.0
      %v4619 = vadd.f32 %v4617, 1.0
      %v4620 = vmul.f32 %v4604, %v4618
      %v4621 = vmul.f32 %v4605, %v4619
      %v4622 = vpack.c.bf16 %v4621, %v4620
      %v4623 = vld [vmem:[%s9] sm:$0xf]
      %v4624 = vld [vmem:[%s9 + $0x4] sm:$0xf]
      %v4625 = vld [vmem:[%s9 + $0x8] sm:$0xf]
      %v4626 = vld [vmem:[%s9 + $0xc] sm:$0xf]
      %v4627 = vld [vmem:[%s9 + $0x10] sm:$0xf]
      %v4628 = vld [vmem:[%s9 + $0x14] sm:$0xf]
      %v4629 = vld [vmem:[%s9 + $0x18] sm:$0xf]
      %v4630 = vld [vmem:[%s9 + $0x1c] sm:$0xf]
      %v4631 = vld [vmem:[%s9 + $0x20] sm:$0xf]
      %v4632 = vld [vmem:[%s9 + $0x24] sm:$0xf]
      %v4633 = vld [vmem:[%s9 + $0x28] sm:$0xf]
      %v4634 = vld [vmem:[%s9 + $0x2c] sm:$0xf]
      %v4635 = vld [vmem:[%s9 + $0x30] sm:$0xf]
      %v4636 = vld [vmem:[%s9 + $0x34] sm:$0xf]
      %v4637 = vld [vmem:[%s9 + $0x38] sm:$0xf]
      %v4638 = vld [vmem:[%s9 + $0x3c] sm:$0xf]
      %v4655 = vunpack.c.l.b16 %v4623
      %v4656 = vunpack.c.l.b16 %v4624
      %v4657 = vunpack.c.l.b16 %v4625
      %v4658 = vunpack.c.l.b16 %v4626
      %v4659 = vunpack.c.l.b16 %v4627
      %v4660 = vunpack.c.l.b16 %v4628
      %v4661 = vunpack.c.l.b16 %v4629
      %v4662 = vunpack.c.l.b16 %v4630
      %v4663 = vunpack.c.l.b16 %v4631
      %v4664 = vunpack.c.l.b16 %v4632
      %v4665 = vunpack.c.l.b16 %v4633
      %v4666 = vunpack.c.l.b16 %v4634
      %v4667 = vunpack.c.l.b16 %v4635
      %v4668 = vunpack.c.l.b16 %v4636
      %v4669 = vunpack.c.l.b16 %v4637
      %v4670 = vunpack.c.l.b16 %v4638
      %v4671 = vpack.c.b16 %v4656, %v4655
      %v4672 = vpack.c.b16 %v4658, %v4657
      %v4673 = vpack.c.b16 %v4660, %v4659
      %v4674 = vpack.c.b16 %v4662, %v4661
      %v4675 = vpack.c.b16 %v4664, %v4663
      %v4676 = vpack.c.b16 %v4666, %v4665
      %v4677 = vpack.c.b16 %v4668, %v4667
      %v4678 = vpack.c.b16 %v4670, %v4669
      %4687 = vmatprep.subr.bf16.mxu0 0
      %4688 = vmatpush1.bf16.msra.mxu0 %v4671
      %4689 = vmatprep.subr.bf16.mxu0 0
      %4690 = vmatpush1.bf16.msra.mxu0 %v4672
      %4691 = vmatprep.subr.bf16.mxu0 0
      %4692 = vmatpush1.bf16.msra.mxu0 %v4673
      %4693 = vmatprep.subr.bf16.mxu0 0
      %4694 = vmatpush1.bf16.msra.mxu0 %v4674
      %4695 = vmatprep.subr.bf16.mxu0 0
      %4696 = vmatpush1.bf16.msra.mxu0 %v4675
      %4697 = vmatprep.subr.bf16.mxu0 0
      %4698 = vmatpush1.bf16.msra.mxu0 %v4676
      %4699 = vmatprep.subr.bf16.mxu0 0
      %4700 = vmatpush1.bf16.msra.mxu0 %v4677
      %4701 = vmatprep.subr.bf16.mxu0 0
      %4702 = vmatpush1.bf16.msra.mxu0 %v4678
      %4703 = vmatprep.subr.bf16.mxu0 0
      %4704 = vmatpush1.bf16.msra.mxu0 0
      %4705 = vmatprep.subr.bf16.mxu0 0
      %4706 = vmatpush1.bf16.msra.mxu0 0
      %4707 = vmatprep.subr.bf16.mxu0 0
      %4708 = vmatpush1.bf16.msra.mxu0 0
      %4709 = vmatprep.subr.bf16.mxu0 0
      %4710 = vmatpush1.bf16.msra.mxu0 0
      %4711 = vmatprep.subr.bf16.mxu0 0
      %4712 = vmatpush1.bf16.msra.mxu0 0
      %4713 = vmatprep.subr.bf16.mxu0 0
      %4714 = vmatpush1.bf16.msra.mxu0 0
      %4715 = vmatprep.subr.bf16.mxu0 0
      %4716 = vmatpush1.bf16.msra.mxu0 0
      %4717 = vmatprep.subr.bf16.mxu0 0
      %4718 = vmatpush1.bf16.msra.mxu0 0
      %4719 = vmatprep.mubr.bf16.mxu0 0
      %4720 = vmatmul.mubr.bf16.gmra.mrb[0].mxu0 %v4622
      %v4721 = vpop.f32.mrb[0].mxu0
      %v4722 = vadd.f32 0.0, %v4721
      %v4723 = vpop.f32.mrb[0].mxu0
      %v4724 = vpop.f32.mrb[0].mxu0
      %v4725 = vadd.f32 0.0, %v4724
      %v4726 = vpop.f32.mrb[0].mxu0
      %4727 = vdwg.mxu0
      %v4728 = vadd.f32 %v4535, %v4722
      %v4729 = vadd.f32 %v4536, %v4725
      %4730 = vst.msk [vmem:[%s388] sm:$0xff] %vm395, %v4728
      %4731 = vst.msk [vmem:[%s388 + $0x8] sm:$0xff] %vm395, %v4729
      %s4732 = smul.u32 2, %s22
      %p4733 = scmp.lt.s32.totalorder %s4732, 3
      %s4734 = scalar_select %p4733, %s4732, 3
      %s4735 = smul.addr %s4734, 8
      %s4736 = scalar_lea.vmem %s11, %s4735
      // Predicated region
      $region65: #{transformer_encoder_block.1} parent=63 // pred_check
        %p4737 = pneg %p276
      $region66: #{transformer_encoder_block.1} parent=63 // pred_check_branch
        %4739 = sbr.rel (%p4737) target = $region68
      $region67: #{transformer_encoder_block.1} parent=63 // pred_region
        %s4740 = smul.u32 2, %s22
      $region68: #{transformer_encoder_block.1} parent=63 // pred_fallthru
        _
    $region64: #{transformer_encoder_block.1} parent=5 // pred_fallthru
      _
    %p4741 = scmp.le.s32.totalorder 2, %s17
    // Predicated region
    $region69: #{transformer_encoder_block.1} parent=5 // pred_check
      %p4742 = pneg %p4741
    $region70: #{transformer_encoder_block.1} parent=5 // pred_check_branch
      %4744 = sbr.rel (%p4742) target = $region72
    $region71: #{transformer_encoder_block.1} parent=5 // pred_region
      %s4745 = ssub.s32 %s17, 2
      // Predicated region
      $region73: #{transformer_encoder_block.1} parent=71 // pred_check
        %p4746 = pneg %p282
      $region74: #{transformer_encoder_block.1} parent=71 // pred_check_branch
        %4748 = sbr.rel (%p4746) target = $region76
      $region75: #{transformer_encoder_block.1} parent=71 // pred_region
        %s4749 = smul.u32 2, %s23
        %p4750 = scmp.lt.s32.totalorder %s4749, 3
        %s4751 = scalar_select %p4750, %s4749, 3
        %s4752 = smul.addr %s4751, 8
        %s4753 = scalar_lea.vmem %s11, %s4752
      $region76: #{transformer_encoder_block.1} parent=71 // pred_fallthru
        _
    $region72: #{transformer_encoder_block.1} parent=5 // pred_fallthru
      _
  $region6: #{transformer_encoder_block.1} parent=0 // loop_footer
    %s21 = sadd.s32 1, %s17
  $region7: #{transformer_encoder_block.1} parent=0 // loop_footer_branch
    %16 = sbr.rel target = $region3
  $region8: #{transformer_encoder_block.1} parent=0 // loop_exit
    _

// kernel: transformer_encoder_block.1
$region0: #{transformer_encoder_block.1}
  #allocation0 [shape = 'u32[]', space=smem, size = 0x4, offset = 0x4, fixed_abs, tag = 'smem constant byte address 0x4 - core index']
  #allocation1 [shape = 'u32[144,128]{1,0:T(1,128)}', space=vmem, size = 0x12000, scoped, tag = 'internal scratch']
  %s0 = inlined_call_operand.vmem [shape: f32[32,32], index: 0, kind: input, shape index: {}]
  %s1 = inlined_call_operand.vmem [shape: f32[1,32], index: 1, kind: input, shape index: {}]
  %s2 = inlined_call_operand.vmem [shape: f32[1,32], index: 2, kind: input, shape index: {}]
  %s3 = inlined_call_operand.vmem [shape: bf16[32,96], index: 3, kind: input, shape index: {}]
  %s4 = inlined_call_operand.vmem [shape: f32[1,96], index: 4, kind: input, shape index: {}]
  %s5 = inlined_call_operand.vmem [shape: bf16[32,32], index: 5, kind: input, shape index: {}]
  %s6 = inlined_call_operand.vmem [shape: f32[1,32], index: 6, kind: input, shape index: {}]
  %s7 = inlined_call_operand.vmem [shape: bf16[32,128], index: 7, kind: input, shape index: {}]
  %s8 = inlined_call_operand.vmem [shape: f32[1,128], index: 8, kind: input, shape index: {}]
  %s9 = inlined_call_operand.vmem [shape: bf16[128,32], index: 9, kind: input, shape index: {}]
  %s10 = inlined_call_operand.vmem [shape: f32[1,32], index: 10, kind: input, shape index: {}]
  %s11 = inlined_call_operand.vmem [shape: f32[32,32], index: 11, kind: output, shape index: {}]
  %s12 = sld [smem:[#allocation0]]
  $region77: #{transformer_encoder_block.1} parent=0
    _
  %s14 = ssub.s32 1, %s12
  %s15 = scalar_select 0, %s14, %s12
  loop: start=0, step=1, limit=4
  $region2: #{transformer_encoder_block.1} parent=0 // loop_pre_header
    _
  $region3: #{transformer_encoder_block.1} parent=0 // loop_header
    %s17 = sphi 0, %s21
    %p18 = scmp.ge.s32.totalorder %s17, 4
    %s27 = sphi 0, %s29
    %s30 = sphi 0, %s27
    %s31 = sphi 0, %s30
    %s47 = sphi 0, %s31
    %s51 = sphi 0, %s51
    %s53 = sphi 0, %s51
    %s54 = sphi 0, %s53
    %s68 = sphi 0, %s54
    %s72 = sphi 0, %s72
    %s74 = sphi 0, %s72
    %s75 = sphi 0, %s74
    %s89 = sphi 0, %s75
    %s93 = sphi 0, %s93
    %s95 = sphi 0, %s93
    %s96 = sphi 0, %s95
    %s110 = sphi 0, %s96
    %s114 = sphi 0, %s114
    %s116 = sphi 0, %s114
    %s117 = sphi 0, %s116
    %s131 = sphi 0, %s117
    %s135 = sphi 0, %s135
    %s137 = sphi 0, %s135
    %s138 = sphi 0, %s137
    %s152 = sphi 0, %s138
    %s156 = sphi 0, %s156
    %s158 = sphi 0, %s156
    %s159 = sphi 0, %s158
    %s173 = sphi 0, %s159
    %s177 = sphi 0, %s177
    %s179 = sphi 0, %s177
    %s180 = sphi 0, %s179
    %s194 = sphi 0, %s180
    %s198 = sphi 0, %s198
    %s200 = sphi 0, %s198
    %s201 = sphi 0, %s200
    %s215 = sphi 0, %s201
    %s219 = sphi 0, %s219
    %s221 = sphi 0, %s219
    %s222 = sphi 0, %s221
    %s236 = sphi 0, %s222
    %s240 = sphi 0, %s240
    %s242 = sphi 0, %s240
    %s243 = sphi 0, %s242
    %s257 = sphi 0, %s243
    %s263 = sphi 0, %s265
    %s266 = sphi 0, %s263
    %s267 = sphi 0, %s266
    %s283 = sphi 0, %s267
  $region4: #{transformer_encoder_block.1} parent=0 // loop_header_branch
    %20 = sbr.rel (%p18) target = $region8
  $region5: #{transformer_encoder_block.1} parent=0 // loop_body
    %s22 = ssub.s32 %s17, 1
    %s23 = ssub.s32 %s17, 2
    %s24 = sadd.s32 %s17, 1
    %s25 = ssub.s32 %s17, %s24
    %p26 = scmp.eq.s32.totalorder %s25, 0
    %s28 = sadd.s32 %s27, 1
    %s29 = scalar_select %p26, %s27, %s28
    %p32 = pneg %p26
    %p33 = scmp.eq.s32.totalorder %s17, 1
    %p34 = por %p32, %p33
    %p35 = scmp.ne.s32.totalorder %s27, %s30
    %p36 = scmp.eq.s32.totalorder %s17, 0
    %p37 = por %p35, %p36
    %p38 = scmp.ne.s32.totalorder %s27, %s30
    %p39 = scmp.eq.s32.totalorder %s22, 1
    %p40 = por %p38, %p39
    %p41 = scmp.ne.s32.totalorder %s30, %s31
    %p42 = scmp.eq.s32.totalorder %s22, 0
    %p43 = por %p41, %p42
    %p44 = scmp.ne.s32.totalorder %s30, %s31
    %p45 = scmp.eq.s32.totalorder %s23, 1
    %p46 = por %p44, %p45
    %p48 = scmp.ne.s32.totalorder %s31, %s47
    %p49 = scmp.eq.s32.totalorder %s23, 0
    %p50 = por %p48, %p49
    %s52 = sadd.s32 %s51, 1
    %p55 = scmp.eq.s32.totalorder %s17, 1
    %p56 = scmp.ne.s32.totalorder %s51, %s53
    %p57 = scmp.eq.s32.totalorder %s17, 0
    %p58 = por %p56, %p57
    %p59 = scmp.ne.s32.totalorder %s51, %s53
    %p60 = scmp.eq.s32.totalorder %s22, 1
    %p61 = por %p59, %p60
    %p62 = scmp.ne.s32.totalorder %s53, %s54
    %p63 = scmp.eq.s32.totalorder %s22, 0
    %p64 = por %p62, %p63
    %p65 = scmp.ne.s32.totalorder %s53, %s54
    %p66 = scmp.eq.s32.totalorder %s23, 1
    %p67 = por %p65, %p66
    %p69 = scmp.ne.s32.totalorder %s54, %s68
    %p70 = scmp.eq.s32.totalorder %s23, 0
    %p71 = por %p69, %p70
    %s73 = sadd.s32 %s72, 1
    %p76 = scmp.eq.s32.totalorder %s17, 1
    %p77 = scmp.ne.s32.totalorder %s72, %s74
    %p78 = scmp.eq.s32.totalorder %s17, 0
    %p79 = por %p77, %p78
    %p80 = scmp.ne.s32.totalorder %s72, %s74
    %p81 = scmp.eq.s32.totalorder %s22, 1
    %p82 = por %p80, %p81
    %p83 = scmp.ne.s32.totalorder %s74, %s75
    %p84 = scmp.eq.s32.totalorder %s22, 0
    %p85 = por %p83, %p84
    %p86 = scmp.ne.s32.totalorder %s74, %s75
    %p87 = scmp.eq.s32.totalorder %s23, 1
    %p88 = por %p86, %p87
    %p90 = scmp.ne.s32.totalorder %s75, %s89
    %p91 = scmp.eq.s32.totalorder %s23, 0
    %p92 = por %p90, %p91
    %s94 = sadd.s32 %s93, 1
    %p97 = scmp.eq.s32.totalorder %s17, 1
    %p98 = scmp.ne.s32.totalorder %s93, %s95
    %p99 = scmp.eq.s32.totalorder %s17, 0
    %p100 = por %p98, %p99
    %p101 = scmp.ne.s32.totalorder %s93, %s95
    %p102 = scmp.eq.s32.totalorder %s22, 1
    %p103 = por %p101, %p102
    %p104 = scmp.ne.s32.totalorder %s95, %s96
    %p105 = scmp.eq.s32.totalorder %s22, 0
    %p106 = por %p104, %p105
    %p107 = scmp.ne.s32.totalorder %s95, %s96
    %p108 = scmp.eq.s32.totalorder %s23, 1
    %p109 = por %p107, %p108
    %p111 = scmp.ne.s32.totalorder %s96, %s110
    %p112 = scmp.eq.s32.totalorder %s23, 0
    %p113 = por %p111, %p112
    %s115 = sadd.s32 %s114, 1
    %p118 = scmp.eq.s32.totalorder %s17, 1
    %p119 = scmp.ne.s32.totalorder %s114, %s116
    %p120 = scmp.eq.s32.totalorder %s17, 0
    %p121 = por %p119, %p120
    %p122 = scmp.ne.s32.totalorder %s114, %s116
    %p123 = scmp.eq.s32.totalorder %s22, 1
    %p124 = por %p122, %p123
    %p125 = scmp.ne.s32.totalorder %s116, %s117
    %p126 = scmp.eq.s32.totalorder %s22, 0
    %p127 = por %p125, %p126
    %p128 = scmp.ne.s32.totalorder %s116, %s117
    %p129 = scmp.eq.s32.totalorder %s23, 1
    %p130 = por %p128, %p129
    %p132 = scmp.ne.s32.totalorder %s117, %s131
    %p133 = scmp.eq.s32.totalorder %s23, 0
    %p134 = por %p132, %p133
    %s136 = sadd.s32 %s135, 1
    %p139 = scmp.eq.s32.totalorder %s17, 1
    %p140 = scmp.ne.s32.totalorder %s135, %s137
    %p141 = scmp.eq.s32.totalorder %s17, 0
    %p142 = por %p140, %p141
    %p143 = scmp.ne.s32.totalorder %s135, %s137
    %p144 = scmp.eq.s32.totalorder %s22, 1
    %p145 = por %p143, %p144
    %p146 = scmp.ne.s32.totalorder %s137, %s138
    %p147 = scmp.eq.s32.totalorder %s22, 0
    %p148 = por %p146, %p147
    %p149 = scmp.ne.s32.totalorder %s137, %s138
    %p150 = scmp.eq.s32.totalorder %s23, 1
    %p151 = por %p149, %p150
    %p153 = scmp.ne.s32.totalorder %s138, %s152
    %p154 = scmp.eq.s32.totalorder %s23, 0
    %p155 = por %p153, %p154
    %s157 = sadd.s32 %s156, 1
    %p160 = scmp.eq.s32.totalorder %s17, 1
    %p161 = scmp.ne.s32.totalorder %s156, %s158
    %p162 = scmp.eq.s32.totalorder %s17, 0
    %p163 = por %p161, %p162
    %p164 = scmp.ne.s32.totalorder %s156, %s158
    %p165 = scmp.eq.s32.totalorder %s22, 1
    %p166 = por %p164, %p165
    %p167 = scmp.ne.s32.totalorder %s158, %s159
    %p168 = scmp.eq.s32.totalorder %s22, 0
    %p169 = por %p167, %p168
    %p170 = scmp.ne.s32.totalorder %s158, %s159
    %p171 = scmp.eq.s32.totalorder %s23, 1
    %p172 = por %p170, %p171
    %p174 = scmp.ne.s32.totalorder %s159, %s173
    %p175 = scmp.eq.s32.totalorder %s23, 0
    %p176 = por %p174, %p175
    %s178 = sadd.s32 %s177, 1
    %p181 = scmp.eq.s32.totalorder %s17, 1
    %p182 = scmp.ne.s32.totalorder %s177, %s179
    %p183 = scmp.eq.s32.totalorder %s17, 0
    %p184 = por %p182, %p183
    %p185 = scmp.ne.s32.totalorder %s177, %s179
    %p186 = scmp.eq.s32.totalorder %s22, 1
    %p187 = por %p185, %p186
    %p188 = scmp.ne.s32.totalorder %s179, %s180
    %p189 = scmp.eq.s32.totalorder %s22, 0
    %p190 = por %p188, %p189
    %p191 = scmp.ne.s32.totalorder %s179, %s180
    %p192 = scmp.eq.s32.totalorder %s23, 1
    %p193 = por %p191, %p192
    %p195 = scmp.ne.s32.totalorder %s180, %s194
    %p196 = scmp.eq.s32.totalorder %s23, 0
    %p197 = por %p195, %p196
    %s199 = sadd.s32 %s198, 1
    %p202 = scmp.eq.s32.totalorder %s17, 1
    %p203 = scmp.ne.s32.totalorder %s198, %s200
    %p204 = scmp.eq.s32.totalorder %s17, 0
    %p205 = por %p203, %p204
    %p206 = scmp.ne.s32.totalorder %s198, %s200
    %p207 = scmp.eq.s32.totalorder %s22, 1
    %p208 = por %p206, %p207
    %p209 = scmp.ne.s32.totalorder %s200, %s201
    %p210 = scmp.eq.s32.totalorder %s22, 0
    %p211 = por %p209, %p210
    %p212 = scmp.ne.s32.totalorder %s200, %s201
    %p213 = scmp.eq.s32.totalorder %s23, 1
    %p214 = por %p212, %p213
    %p216 = scmp.ne.s32.totalorder %s201, %s215
    %p217 = scmp.eq.s32.totalorder %s23, 0
    %p218 = por %p216, %p217
    %s220 = sadd.s32 %s219, 1
    %p223 = scmp.eq.s32.totalorder %s17, 1
    %p224 = scmp.ne.s32.totalorder %s219, %s221
    %p225 = scmp.eq.s32.totalorder %s17, 0
    %p226 = por %p224, %p225
    %p227 = scmp.ne.s32.totalorder %s219, %s221
    %p228 = scmp.eq.s32.totalorder %s22, 1
    %p229 = por %p227, %p228
    %p230 = scmp.ne.s32.totalorder %s221, %s222
    %p231 = scmp.eq.s32.totalorder %s22, 0
    %p232 = por %p230, %p231
    %p233 = scmp.ne.s32.totalorder %s221, %s222
    %p234 = scmp.eq.s32.totalorder %s23, 1
    %p235 = por %p233, %p234
    %p237 = scmp.ne.s32.totalorder %s222, %s236
    %p238 = scmp.eq.s32.totalorder %s23, 0
    %p239 = por %p237, %p238
    %s241 = sadd.s32 %s240, 1
    %p244 = scmp.eq.s32.totalorder %s17, 1
    %p245 = scmp.ne.s32.totalorder %s240, %s242
    %p246 = scmp.eq.s32.totalorder %s17, 0
    %p247 = por %p245, %p246
    %p248 = scmp.ne.s32.totalorder %s240, %s242
    %p249 = scmp.eq.s32.totalorder %s22, 1
    %p250 = por %p248, %p249
    %p251 = scmp.ne.s32.totalorder %s242, %s243
    %p252 = scmp.eq.s32.totalorder %s22, 0
    %p253 = por %p251, %p252
    %p254 = scmp.ne.s32.totalorder %s242, %s243
    %p255 = scmp.eq.s32.totalorder %s23, 1
    %p256 = por %p254, %p255
    %p258 = scmp.ne.s32.totalorder %s243, %s257
    %p259 = scmp.eq.s32.totalorder %s23, 0
    %p260 = por %p258, %p259
    %s261 = ssub.s32 %s17, %s24
    %p262 = scmp.eq.s32.totalorder %s261, 0
    %s264 = sadd.s32 %s263, 1
    %s265 = scalar_select %p262, %s263, %s264
    %p268 = pneg %p262
    %p269 = scmp.eq.s32.totalorder %s17, 1
    %p270 = por %p268, %p269
    %p271 = scmp.ne.s32.totalorder %s263, %s266
    %p272 = scmp.eq.s32.totalorder %s17, 0
    %p273 = por %p271, %p272
    %p274 = scmp.ne.s32.totalorder %s263, %s266
    %p275 = scmp.eq.s32.totalorder %s22, 1
    %p276 = por %p274, %p275
    %p277 = scmp.ne.s32.totalorder %s266, %s267
    %p278 = scmp.eq.s32.totalorder %s22, 0
    %p279 = por %p277, %p278
    %p280 = scmp.ne.s32.totalorder %s266, %s267
    %p281 = scmp.eq.s32.totalorder %s23, 1
    %p282 = por %p280, %p281
    %p284 = scmp.ne.s32.totalorder %s267, %s283
    %p285 = scmp.eq.s32.totalorder %s23, 0
    %p286 = por %p284, %p285
    %p287 = scmp.le.s32.totalorder 1, %s17
    %p288 = scmp.lt.s32.totalorder %s17, 3
    %p289 = pnand %p287, %p288
    %p290 = pneg %p289
    // Predicated region
    $region9: #{transformer_encoder_block.1} parent=5 // pred_check
      _
    $region10: #{transformer_encoder_block.1} parent=5 // pred_check_branch
      %292 = sbr.rel (%p289) target = $region12
    $region11: #{transformer_encoder_block.1} parent=5 // pred_region
      %s293 = ssub.s32 %s17, 1
      // Predicated region
      $region13: #{transformer_encoder_block.1} parent=11 // pred_check
        %p294 = pneg %p64
      $region14: #{transformer_encoder_block.1} parent=11 // pred_check_branch
        %296 = sbr.rel (%p294) target = $region16
      $region15: #{transformer_encoder_block.1} parent=11 // pred_region
        _
      $region16: #{transformer_encoder_block.1} parent=11 // pred_fallthru
        _
      // Predicated region
      $region17: #{transformer_encoder_block.1} parent=11 // pred_check
        %p297 = pneg %p85
      $region18: #{transformer_encoder_block.1} parent=11 // pred_check_branch
        %299 = sbr.rel (%p297) target = $region20
      $region19: #{transformer_encoder_block.1} parent=11 // pred_region
        _
      $region20: #{transformer_encoder_block.1} parent=11 // pred_fallthru
        _
      // Predicated region
      $region21: #{transformer_encoder_block.1} parent=11 // pred_check
        %p300 = pneg %p106
      $region22: #{transformer_encoder_block.1} parent=11 // pred_check_branch
        %302 = sbr.rel (%p300) target = $region24
      $region23: #{transformer_encoder_block.1} parent=11 // pred_region
        _
      $region24: #{transformer_encoder_block.1} parent=11 // pred_fallthru
        _
      // Predicated region
      $region25: #{transformer_encoder_block.1} parent=11 // pred_check
        %p303 = pneg %p127
      $region26: #{transformer_encoder_block.1} parent=11 // pred_check_branch
        %305 = sbr.rel (%p303) target = $region28
      $region27: #{transformer_encoder_block.1} parent=11 // pred_region
        _
      $region28: #{transformer_encoder_block.1} parent=11 // pred_fallthru
        _
      // Predicated region
      $region29: #{transformer_encoder_block.1} parent=11 // pred_check
        %p306 = pneg %p148
      $region30: #{transformer_encoder_block.1} parent=11 // pred_check_branch
        %308 = sbr.rel (%p306) target = $region32
      $region31: #{transformer_encoder_block.1} parent=11 // pred_region
        _
      $region32: #{transformer_encoder_block.1} parent=11 // pred_fallthru
        _
      // Predicated region
      $region33: #{transformer_encoder_block.1} parent=11 // pred_check
        %p309 = pneg %p169
      $region34: #{transformer_encoder_block.1} parent=11 // pred_check_branch
        %311 = sbr.rel (%p309) target = $region36
      $region35: #{transformer_encoder_block.1} parent=11 // pred_region
        _
      $region36: #{transformer_encoder_block.1} parent=11 // pred_fallthru
        _
      // Predicated region
      $region37: #{transformer_encoder_block.1} parent=11 // pred_check
        %p312 = pneg %p190
      $region38: #{transformer_encoder_block.1} parent=11 // pred_check_branch
        %314 = sbr.rel (%p312) target = $region40
      $region39: #{transformer_encoder_block.1} parent=11 // pred_region
        _
      $region40: #{transformer_encoder_block.1} parent=11 // pred_fallthru
        _
      // Predicated region
      $region41: #{transformer_encoder_block.1} parent=11 // pred_check
        %p315 = pneg %p211
      $region42: #{transformer_encoder_block.1} parent=11 // pred_check_branch
        %317 = sbr.rel (%p315) target = $region44
      $region43: #{transformer_encoder_block.1} parent=11 // pred_region
        _
      $region44: #{transformer_encoder_block.1} parent=11 // pred_fallthru
        _
      // Predicated region
      $region45: #{transformer_encoder_block.1} parent=11 // pred_check
        %p318 = pneg %p232
      $region46: #{transformer_encoder_block.1} parent=11 // pred_check_branch
        %320 = sbr.rel (%p318) target = $region48
      $region47: #{transformer_encoder_block.1} parent=11 // pred_region
        _
      $region48: #{transformer_encoder_block.1} parent=11 // pred_fallthru
        _
      // Predicated region
      $region49: #{transformer_encoder_block.1} parent=11 // pred_check
        %p321 = pneg %p253
      $region50: #{transformer_encoder_block.1} parent=11 // pred_check_branch
        %323 = sbr.rel (%p321) target = $region52
      $region51: #{transformer_encoder_block.1} parent=11 // pred_region
        _
      $region52: #{transformer_encoder_block.1} parent=11 // pred_fallthru
        _
    $region12: #{transformer_encoder_block.1} parent=5 // pred_fallthru
      _
    %p324 = scmp.lt.s32.totalorder %s17, 2
    // Predicated region
    $region53: #{transformer_encoder_block.1} parent=5 // pred_check
      %p325 = pneg %p324
    $region54: #{transformer_encoder_block.1} parent=5 // pred_check_branch
      %327 = sbr.rel (%p325) target = $region56
    $region55: #{transformer_encoder_block.1} parent=5 // pred_region
      // Predicated region
      $region57: #{transformer_encoder_block.1} parent=55 // pred_check
        %p328 = pneg %p37
      $region58: #{transformer_encoder_block.1} parent=55 // pred_check_branch
        %330 = sbr.rel (%p328) target = $region60
      $region59: #{transformer_encoder_block.1} parent=55 // pred_region
        %s331 = smul.u32 2, %s17
        %p332 = scmp.lt.s32.totalorder %s331, 3
        %s333 = scalar_select %p332, %s331, 3
        %s334 = smul.addr %s333, 8
        %s335 = scalar_lea.vmem %s0, %s334
        %s336 = smul.u32 2, %s17
      $region60: #{transformer_encoder_block.1} parent=55 // pred_fallthru
        _
    $region56: #{transformer_encoder_block.1} parent=5 // pred_fallthru
      _
    %p337 = scmp.le.s32.totalorder 1, %s17
    %p338 = scmp.lt.s32.totalorder %s17, 3
    %p339 = pnand %p337, %p338
    %p340 = pneg %p339
    // Predicated region
    $region61: #{transformer_encoder_block.1} parent=5 // pred_check
      _
    $region62: #{transformer_encoder_block.1} parent=5 // pred_check_branch
      %342 = sbr.rel (%p339) target = $region64
    $region63: #{transformer_encoder_block.1} parent=5 // pred_region
      %s343 = ssub.s32 %s17, 1
      %s344 = smul.u32 2, %s22
      %p345 = scmp.lt.s32.totalorder %s344, 3
      %s346 = scalar_select %p345, %s344, 3
      %s347 = smul.addr %s346, 8
      %s348 = scalar_lea.vmem %s0, %s347
      %p349 = pneg %p43
      %p350 = pneg %p40
      %p351 = pneg %p64
      %p352 = pneg %p61
      %p353 = pneg %p85
      %p354 = pneg %p82
      %p355 = pneg %p106
      %p356 = pneg %p103
      %p357 = pneg %p127
      %p358 = pneg %p124
      %p359 = pneg %p148
      %p360 = pneg %p145
      %p361 = pneg %p169
      %p362 = pneg %p166
      %p363 = pneg %p190
      %p364 = pneg %p187
      %p365 = pneg %p211
      %p366 = pneg %p208
      %p367 = pneg %p232
      %p368 = pneg %p229
      %p369 = pneg %p253
      %p370 = pneg %p250
      %p371 = pneg %p279
      %p372 = pneg %p276
      %s373 = smul.u32 2, %s22
      %p374 = scmp.lt.s32.totalorder %s373, 3
      %s375 = scalar_select %p374, %s373, 3
      %s376 = smul.addr %s375, 8
      %s377 = scalar_lea.vmem %s11, %s376
      %s378 = smul.u32 2, %s22
      %p379 = scmp.lt.s32.totalorder %s378, 3
      %s380 = scalar_select %p379, %s378, 3
      %s381 = smul.addr %s380, 8
      %s382 = scalar_lea.vmem %s0, %s381
      %s383 = smul.u32 2, %s22
      %s384 = smul.u32 2, %s22
      %p385 = scmp.lt.s32.totalorder %s384, 3
      %s386 = scalar_select %p385, %s384, 3
      %s387 = smul.addr %s386, 8
      %s388 = scalar_lea.vmem %s11, %s387
      %s389 = smul.u32 2, %s22
      %v391 = vld [vmem:[%s382] sm:$0xff]
      %v392 = vld [vmem:[%s382 + $0x8] sm:$0xff]
      %v393 = vld [vmem:[%s1] sm:$0x1]
      %v394 = vld [vmem:[%s2] sm:$0x1]
      %vm395 = vcmask 261120
      %v396 = vsel %vm395, %v391, 0.0
      %397 = vadd.xlane.f32.xlu0 %v396
      %v398 = vpop.xlane.xlu0 %397
      %v399 = vsel %vm395, %v392, 0.0
      %400 = vadd.xlane.f32.xlu0 %v399
      %v401 = vpop.xlane.xlu0 %400
      %v402 = vrcp.pop 32.0
      %v403 = vmul.f32 %v398, %v402
      %v404 = vmul.f32 %v401, %v402
      %v405 = vsub.f32 %v391, %v403
      %v406 = vsub.f32 %v392, %v404
      %v407 = vmul.f32 %v405, %v405
      %v408 = vmul.f32 %v406, %v406
      %v409 = vsel %vm395, %v407, 0.0
      %410 = vadd.xlane.f32.xlu0 %v409
      %v411 = vpop.xlane.xlu0 %410
      %v412 = vsel %vm395, %v408, 0.0
      %413 = vadd.xlane.f32.xlu0 %v412
      %v414 = vpop.xlane.xlu0 %413
      %v415 = vmul.f32 %v411, %v402
      %v416 = vmul.f32 %v414, %v402
      %v417 = vadd.f32 %v415, 1e-05
      %v418 = vadd.f32 %v416, 1e-05
      %v419 = vrsqrt.pop %v417
      %v420 = vrsqrt.pop %v418
      %v421 = vmul.f32 %v405, %v419
      %v422 = vmul.f32 %v406, %v420
      %v424 = vlaneseq
      %v425 = vshrl.u32 %v424, 7
      %v426 = vsub.s32 0, %v425
      %v427 = vrot.slane %v393, %v426
      %v429 = vmul.f32 %v421, %v427
      %v430 = vmul.f32 %v422, %v427
      %v432 = vlaneseq
      %v433 = vshrl.u32 %v432, 7
      %v434 = vsub.s32 0, %v433
      %v435 = vrot.slane %v394, %v434
      %v437 = vadd.f32 %v429, %v435
      %v438 = vadd.f32 %v430, %v435
      %v439 = vpack.c.bf16 %v438, %v437
      %v440 = vld [vmem:[%s3] sm:$0xf]
      %v441 = vld [vmem:[%s3 + $0x4] sm:$0xf]
      %v442 = vld [vmem:[%s3 + $0x8] sm:$0xf]
      %v443 = vld [vmem:[%s3 + $0xc] sm:$0xf]
      %v444 = vld [vmem:[%s4] sm:$0x1]
      %v446 = vlaneseq
      %v447 = vshrl.u32 %v446, 7
      %v448 = vsub.s32 0, %v447
      %v449 = vrot.slane %v444, %v448
      %v455 = vunpack.c.l.b16 %v440
      %v456 = vunpack.c.l.b16 %v441
      %v457 = vunpack.c.l.b16 %v442
      %v458 = vunpack.c.l.b16 %v443
      %v459 = vpack.c.b16 %v456, %v455
      %v460 = vpack.c.b16 %v458, %v457
      %v464 = vsel %vm395, %v439, 0
      %466 = vmatprep.subr.bf16.mxu0 0
      %467 = vmatpush1.bf16.msra.mxu0 %v459
      %468 = vmatprep.subr.bf16.mxu0 0
      %469 = vmatpush1.bf16.msra.mxu0 %v460
      %470 = vmatprep.subr.bf16.mxu0 0
      %471 = vmatpush1.bf16.msra.mxu0 0
      %472 = vmatprep.subr.bf16.mxu0 0
      %473 = vmatpush1.bf16.msra.mxu0 0
      %474 = vmatprep.subr.bf16.mxu0 0
      %475 = vmatpush1.bf16.msra.mxu0 0
      %476 = vmatprep.subr.bf16.mxu0 0
      %477 = vmatpush1.bf16.msra.mxu0 0
      %478 = vmatprep.subr.bf16.mxu0 0
      %479 = vmatpush1.bf16.msra.mxu0 0
      %480 = vmatprep.subr.bf16.mxu0 0
      %481 = vmatpush1.bf16.msra.mxu0 0
      %482 = vmatprep.subr.bf16.mxu0 0
      %483 = vmatpush1.bf16.msra.mxu0 0
      %484 = vmatprep.subr.bf16.mxu0 0
      %485 = vmatpush1.bf16.msra.mxu0 0
      %486 = vmatprep.subr.bf16.mxu0 0
      %487 = vmatpush1.bf16.msra.mxu0 0
      %488 = vmatprep.subr.bf16.mxu0 0
      %489 = vmatpush1.bf16.msra.mxu0 0
      %490 = vmatprep.subr.bf16.mxu0 0
      %491 = vmatpush1.bf16.msra.mxu0 0
      %492 = vmatprep.subr.bf16.mxu0 0
      %493 = vmatpush1.bf16.msra.mxu0 0
      %494 = vmatprep.subr.bf16.mxu0 0
      %495 = vmatpush1.bf16.msra.mxu0 0
      %496 = vmatprep.subr.bf16.mxu0 0
      %497 = vmatpush1.bf16.msra.mxu0 0
      %498 = vmatprep.mubr.bf16.mxu0 0
      %499 = vmatmul.mubr.bf16.gmra.mrb[0].mxu0 %v464
      %v500 = vpop.f32.mrb[0].mxu0
      %v501 = vadd.f32 %v449, %v500
      %v502 = vpop.f32.mrb[0].mxu0
      %v503 = vpop.f32.mrb[0].mxu0
      %v504 = vadd.f32 %v449, %v503
      %v505 = vpop.f32.mrb[0].mxu0
      %506 = vdwg.mxu0
      %v507 = vld [vmem:[%s6] sm:$0x1]
      %v509 = vlaneseq
      %v510 = vshrl.u32 %v509, 7
      %v511 = vsub.s32 0, %v510
      %v512 = vrot.slane %v507, %v511
      %v514 = vadd.f32 %v391, %v512
      %v515 = vadd.f32 %v392, %v512
      %v518 = vcombine.high %v501, %v501
      %v520 = vunpack.c.l.s4 1983009808
      %v521 = vunpack.c.0.s8 %v520
      %v522 = vlaneseq
      %v523 = vshrl.u32 %v522, 7
      %v524 = vsub.s32 %v521, %v523
      %v525 = vrot.slane %v501, %v524
      %v527 = vunpack.c.l.s4 1983009808
      %v528 = vunpack.c.0.s8 %v527
      %v529 = vlaneseq
      %v530 = vshrl.u32 %v529, 7
      %v531 = vsub.s32 %v528, %v530
      %v532 = vrot.slane %v518, %v531
      %v533 = vcombine.high %v525, %v525
      %v534 = vcombine.high %v532, %v532
      %v535 = vcombine.high %v504, %v504
      %v537 = vunpack.c.l.s4 1983009808
      %v538 = vunpack.c.0.s8 %v537
      %v539 = vlaneseq
      %v540 = vshrl.u32 %v539, 7
      %v541 = vsub.s32 %v538, %v540
      %v542 = vrot.slane %v504, %v541
      %v544 = vunpack.c.l.s4 1983009808
      %v545 = vunpack.c.0.s8 %v544
      %v546 = vlaneseq
      %v547 = vshrl.u32 %v546, 7
      %v548 = vsub.s32 %v545, %v547
      %v549 = vrot.slane %v535, %v548
      %v550 = vcombine.high %v542, %v542
      %v551 = vcombine.high %v549, %v549
      %v560 = vpack.c.bf16 %v525, %v525
      %v561 = vpack.c.bf16 %v533, %v533
      %v562 = vpack.c.bf16 %v532, %v532
      %v563 = vpack.c.bf16 %v534, %v534
      %v564 = vpack.c.bf16 %v542, %v542
      %v565 = vpack.c.bf16 %v550, %v550
      %v566 = vpack.c.bf16 %v549, %v549
      %v567 = vpack.c.bf16 %v551, %v551
      %569 = vrot.lane.b32.xlu0 %v560, 96
      %v570 = vpop.permute.xlu0 %569
      %vm571 = vcmask 64512
      %v573 = vsel %vm571, %v560, 0
      %v576 = vsel %vm571, %v570, 0
      %578 = vmatprep.subr.bf16.mxu0 0
      %579 = vmatpush1.bf16.xpose.msra.mxu0 %v576
      %580 = vmatprep.subr.bf16.mxu0 0
      %581 = vmatpush1.bf16.xpose.msra.mxu0 0
      %582 = vmatprep.subr.bf16.mxu0 0
      %583 = vmatpush1.bf16.xpose.msra.mxu0 0
      %584 = vmatprep.subr.bf16.mxu0 0
      %585 = vmatpush1.bf16.xpose.msra.mxu0 0
      %586 = vmatprep.subr.bf16.mxu0 0
      %587 = vmatpush1.bf16.xpose.msra.mxu0 0
      %588 = vmatprep.subr.bf16.mxu0 0
      %589 = vmatpush1.bf16.xpose.msra.mxu0 0
      %590 = vmatprep.subr.bf16.mxu0 0
      %591 = vmatpush1.bf16.xpose.msra.mxu0 0
      %592 = vmatprep.subr.bf16.mxu0 0
      %593 = vmatpush1.bf16.xpose.msra.mxu0 0
      %594 = vmatprep.subr.bf16.mxu0 0
      %595 = vmatpush1.bf16.xpose.msra.mxu0 0
      %596 = vmatprep.subr.bf16.mxu0 0
      %597 = vmatpush1.bf16.xpose.msra.mxu0 0
      %598 = vmatprep.subr.bf16.mxu0 0
      %599 = vmatpush1.bf16.xpose.msra.mxu0 0
      %600 = vmatprep.subr.bf16.mxu0 0
      %601 = vmatpush1.bf16.xpose.msra.mxu0 0
      %602 = vmatprep.subr.bf16.mxu0 0
      %603 = vmatpush1.bf16.xpose.msra.mxu0 0
      %604 = vmatprep.subr.bf16.mxu0 0
      %605 = vmatpush1.bf16.xpose.msra.mxu0 0
      %606 = vmatprep.subr.bf16.mxu0 0
      %607 = vmatpush1.bf16.xpose.msra.mxu0 0
      %608 = vmatprep.subr.bf16.mxu0 0
      %609 = vmatpush1.bf16.xpose.msra.mxu0 0
      %610 = vmatprep.mubr.bf16.mxu0 0
      %611 = vmatmul.mubr.bf16.gmra.mrb[0].mxu0 %v573
      %v612 = vpop.f32.mrb[0].mxu0
      %v613 = vadd.f32 0.0, %v612
      %v614 = vpop.f32.mrb[0].mxu0
      %v615 = vpop.f32.mrb[0].mxu0
      %v616 = vpop.f32.mrb[0].mxu0
      %617 = vdwg.mxu0
      %619 = vrot.lane.b32.xlu0 %v561, 96
      %v620 = vpop.permute.xlu0 %619
      %v622 = vsel %vm571, %v561, 0
      %v625 = vsel %vm571, %v620, 0
      %627 = vmatprep.subr.bf16.mxu0 0
      %628 = vmatpush1.bf16.xpose.msra.mxu0 %v625
      %629 = vmatprep.subr.bf16.mxu0 0
      %630 = vmatpush1.bf16.xpose.msra.mxu0 0
      %631 = vmatprep.subr.bf16.mxu0 0
      %632 = vmatpush1.bf16.xpose.msra.mxu0 0
      %633 = vmatprep.subr.bf16.mxu0 0
      %634 = vmatpush1.bf16.xpose.msra.mxu0 0
      %635 = vmatprep.subr.bf16.mxu0 0
      %636 = vmatpush1.bf16.xpose.msra.mxu0 0
      %637 = vmatprep.subr.bf16.mxu0 0
      %638 = vmatpush1.bf16.xpose.msra.mxu0 0
      %639 = vmatprep.subr.bf16.mxu0 0
      %640 = vmatpush1.bf16.xpose.msra.mxu0 0
      %641 = vmatprep.subr.bf16.mxu0 0
      %642 = vmatpush1.bf16.xpose.msra.mxu0 0
      %643 = vmatprep.subr.bf16.mxu0 0
      %644 = vmatpush1.bf16.xpose.msra.mxu0 0
      %645 = vmatprep.subr.bf16.mxu0 0
      %646 = vmatpush1.bf16.xpose.msra.mxu0 0
      %647 = vmatprep.subr.bf16.mxu0 0
      %648 = vmatpush1.bf16.xpose.msra.mxu0 0
      %649 = vmatprep.subr.bf16.mxu0 0
      %650 = vmatpush1.bf16.xpose.msra.mxu0 0
      %651 = vmatprep.subr.bf16.mxu0 0
      %652 = vmatpush1.bf16.xpose.msra.mxu0 0
      %653 = vmatprep.subr.bf16.mxu0 0
      %654 = vmatpush1.bf16.xpose.msra.mxu0 0
      %655 = vmatprep.subr.bf16.mxu0 0
      %656 = vmatpush1.bf16.xpose.msra.mxu0 0
      %657 = vmatprep.subr.bf16.mxu0 0
      %658 = vmatpush1.bf16.xpose.msra.mxu0 0
      %659 = vmatprep.mubr.bf16.mxu0 0
      %660 = vmatmul.mubr.bf16.gmra.mrb[0].mxu0 %v622
      %v661 = vpop.f32.mrb[0].mxu0
      %v662 = vadd.f32 0.0, %v661
      %v663 = vpop.f32.mrb[0].mxu0
      %v664 = vpop.f32.mrb[0].mxu0
      %v665 = vpop.f32.mrb[0].mxu0
      %666 = vdwg.mxu0
      %668 = vrot.lane.b32.xlu0 %v562, 96
      %v669 = vpop.permute.xlu0 %668
      %v671 = vsel %vm571, %v562, 0
      %v674 = vsel %vm571, %v669, 0
      %676 = vmatprep.subr.bf16.mxu0 0
      %677 = vmatpush1.bf16.xpose.msra.mxu0 %v674
      %678 = vmatprep.subr.bf16.mxu0 0
      %679 = vmatpush1.bf16.xpose.msra.mxu0 0
      %680 = vmatprep.subr.bf16.mxu0 0
      %681 = vmatpush1.bf16.xpose.msra.mxu0 0
      %682 = vmatprep.subr.bf16.mxu0 0
      %683 = vmatpush1.bf16.xpose.msra.mxu0 0
      %684 = vmatprep.subr.bf16.mxu0 0
      %685 = vmatpush1.bf16.xpose.msra.mxu0 0
      %686 = vmatprep.subr.bf16.mxu0 0
      %687 = vmatpush1.bf16.xpose.msra.mxu0 0
      %688 = vmatprep.subr.bf16.mxu0 0
      %689 = vmatpush1.bf16.xpose.msra.mxu0 0
      %690 = vmatprep.subr.bf16.mxu0 0
      %691 = vmatpush1.bf16.xpose.msra.mxu0 0
      %692 = vmatprep.subr.bf16.mxu0 0
      %693 = vmatpush1.bf16.xpose.msra.mxu0 0
      %694 = vmatprep.subr.bf16.mxu0 0
      %695 = vmatpush1.bf16.xpose.msra.mxu0 0
      %696 = vmatprep.subr.bf16.mxu0 0
      %697 = vmatpush1.bf16.xpose.msra.mxu0 0
      %698 = vmatprep.subr.bf16.mxu0 0
      %699 = vmatpush1.bf16.xpose.msra.mxu0 0
      %700 = vmatprep.subr.bf16.mxu0 0
      %701 = vmatpush1.bf16.xpose.msra.mxu0 0
      %702 = vmatprep.subr.bf16.mxu0 0
      %703 = vmatpush1.bf16.xpose.msra.mxu0 0
      %704 = vmatprep.subr.bf16.mxu0 0
      %705 = vmatpush1.bf16.xpose.msra.mxu0 0
      %706 = vmatprep.subr.bf16.mxu0 0
      %707 = vmatpush1.bf16.xpose.msra.mxu0 0
      %708 = vmatprep.mubr.bf16.mxu0 0
      %709 = vmatmul.mubr.bf16.gmra.mrb[0].mxu0 %v671
      %v710 = vpop.f32.mrb[0].mxu0
      %v711 = vadd.f32 0.0, %v710
      %v712 = vpop.f32.mrb[0].mxu0
      %v713 = vpop.f32.mrb[0].mxu0
      %v714 = vpop.f32.mrb[0].mxu0
      %715 = vdwg.mxu0
      %717 = vrot.lane.b32.xlu0 %v563, 96
      %v718 = vpop.permute.xlu0 %717
      %v720 = vsel %vm571, %v563, 0
      %v723 = vsel %vm571, %v718, 0
      %725 = vmatprep.subr.bf16.mxu0 0
      %726 = vmatpush1.bf16.xpose.msra.mxu0 %v723
      %727 = vmatprep.subr.bf16.mxu0 0
      %728 = vmatpush1.bf16.xpose.msra.mxu0 0
      %729 = vmatprep.subr.bf16.mxu0 0
      %730 = vmatpush1.bf16.xpose.msra.mxu0 0
      %731 = vmatprep.subr.bf16.mxu0 0
      %732 = vmatpush1.bf16.xpose.msra.mxu0 0
      %733 = vmatprep.subr.bf16.mxu0 0
      %734 = vmatpush1.bf16.xpose.msra.mxu0 0
      %735 = vmatprep.subr.bf16.mxu0 0
      %736 = vmatpush1.bf16.xpose.msra.mxu0 0
      %737 = vmatprep.subr.bf16.mxu0 0
      %738 = vmatpush1.bf16.xpose.msra.mxu0 0
      %739 = vmatprep.subr.bf16.mxu0 0
      %740 = vmatpush1.bf16.xpose.msra.mxu0 0
      %741 = vmatprep.subr.bf16.mxu0 0
      %742 = vmatpush1.bf16.xpose.msra.mxu0 0
      %743 = vmatprep.subr.bf16.mxu0 0
      %744 = vmatpush1.bf16.xpose.msra.mxu0 0
      %745 = vmatprep.subr.bf16.mxu0 0
      %746 = vmatpush1.bf16.xpose.msra.mxu0 0
      %747 = vmatprep.subr.bf16.mxu0 0
      %748 = vmatpush1.bf16.xpose.msra.mxu0 0
      %749 = vmatprep.subr.bf16.mxu0 0
      %750 = vmatpush1.bf16.xpose.msra.mxu0 0
      %751 = vmatprep.subr.bf16.mxu0 0
      %752 = vmatpush1.bf16.xpose.msra.mxu0 0
      %753 = vmatprep.subr.bf16.mxu0 0
      %754 = vmatpush1.bf16.xpose.msra.mxu0 0
      %755 = vmatprep.subr.bf16.mxu0 0
      %756 = vmatpush1.bf16.xpose.msra.mxu0 0
      %757 = vmatprep.mubr.bf16.mxu0 0
      %758 = vmatmul.mubr.bf16.gmra.mrb[0].mxu0 %v720
      %v759 = vpop.f32.mrb[0].mxu0
      %v760 = vadd.f32 0.0, %v759
      %v761 = vpop.f32.mrb[0].mxu0
      %v762 = vpop.f32.mrb[0].mxu0
      %v763 = vpop.f32.mrb[0].mxu0
      %764 = vdwg.mxu0
      %766 = vrot.lane.b32.xlu0 %v564, 96
      %v767 = vpop.permute.xlu0 %766
      %v769 = vsel %vm571, %v564, 0
      %v772 = vsel %vm571, %v767, 0
      %774 = vmatprep.subr.bf16.mxu0 0
      %775 = vmatpush1.bf16.xpose.msra.mxu0 %v772
      %776 = vmatprep.subr.bf16.mxu0 0
      %777 = vmatpush1.bf16.xpose.msra.mxu0 0
      %778 = vmatprep.subr.bf16.mxu0 0
      %779 = vmatpush1.bf16.xpose.msra.mxu0 0
      %780 = vmatprep.subr.bf16.mxu0 0
      %781 = vmatpush1.bf16.xpose.msra.mxu0 0
      %782 = vmatprep.subr.bf16.mxu0 0
      %783 = vmatpush1.bf16.xpose.msra.mxu0 0
      %784 = vmatprep.subr.bf16.mxu0 0
      %785 = vmatpush1.bf16.xpose.msra.mxu0 0
      %786 = vmatprep.subr.bf16.mxu0 0
      %787 = vmatpush1.bf16.xpose.msra.mxu0 0
      %788 = vmatprep.subr.bf16.mxu0 0
      %789 = vmatpush1.bf16.xpose.msra.mxu0 0
      %790 = vmatprep.subr.bf16.mxu0 0
      %791 = vmatpush1.bf16.xpose.msra.mxu0 0
      %792 = vmatprep.subr.bf16.mxu0 0
      %793 = vmatpush1.bf16.xpose.msra.mxu0 0
      %794 = vmatprep.subr.bf16.mxu0 0
      %795 = vmatpush1.bf16.xpose.msra.mxu0 0
      %796 = vmatprep.subr.bf16.mxu0 0
      %797 = vmatpush1.bf16.xpose.msra.mxu0 0
      %798 = vmatprep.subr.bf16.mxu0 0
      %799 = vmatpush1.bf16.xpose.msra.mxu0 0
      %800 = vmatprep.subr.bf16.mxu0 0
      %801 = vmatpush1.bf16.xpose.msra.mxu0 0
      %802 = vmatprep.subr.bf16.mxu0 0
      %803 = vmatpush1.bf16.xpose.msra.mxu0 0
      %804 = vmatprep.subr.bf16.mxu0 0
      %805 = vmatpush1.bf16.xpose.msra.mxu0 0
      %806 = vmatprep.mubr.bf16.mxu0 0
      %807 = vmatmul.mubr.bf16.gmra.mrb[0].mxu0 %v769
      %v808 = vpop.f32.mrb[0].mxu0
      %v809 = vadd.f32 0.0, %v808
      %v810 = vpop.f32.mrb[0].mxu0
      %v811 = vpop.f32.mrb[0].mxu0
      %v812 = vpop.f32.mrb[0].mxu0
      %813 = vdwg.mxu0
      %815 = vrot.lane.b32.xlu0 %v565, 96
      %v816 = vpop.permute.xlu0 %815
      %v818 = vsel %vm571, %v565, 0
      %v821 = vsel %vm571, %v816, 0
      %823 = vmatprep.subr.bf16.mxu0 0
      %824 = vmatpush1.bf16.xpose.msra.mxu0 %v821
      %825 = vmatprep.subr.bf16.mxu0 0
      %826 = vmatpush1.bf16.xpose.msra.mxu0 0
      %827 = vmatprep.subr.bf16.mxu0 0
      %828 = vmatpush1.bf16.xpose.msra.mxu0 0
      %829 = vmatprep.subr.bf16.mxu0 0
      %830 = vmatpush1.bf16.xpose.msra.mxu0 0
      %831 = vmatprep.subr.bf16.mxu0 0
      %832 = vmatpush1.bf16.xpose.msra.mxu0 0
      %833 = vmatprep.subr.bf16.mxu0 0
      %834 = vmatpush1.bf16.xpose.msra.mxu0 0
      %835 = vmatprep.subr.bf16.mxu0 0
      %836 = vmatpush1.bf16.xpose.msra.mxu0 0
      %837 = vmatprep.subr.bf16.mxu0 0
      %838 = vmatpush1.bf16.xpose.msra.mxu0 0
      %839 = vmatprep.subr.bf16.mxu0 0
      %840 = vmatpush1.bf16.xpose.msra.mxu0 0
      %841 = vmatprep.subr.bf16.mxu0 0
      %842 = vmatpush1.bf16.xpose.msra.mxu0 0
      %843 = vmatprep.subr.bf16.mxu0 0
      %844 = vmatpush1.bf16.xpose.msra.mxu0 0
      %845 = vmatprep.subr.bf16.mxu0 0
      %846 = vmatpush1.bf16.xpose.msra.mxu0 0
      %847 = vmatprep.subr.bf16.mxu0 0
      %848 = vmatpush1.bf16.xpose.msra.mxu0 0
      %849 = vmatprep.subr.bf16.mxu0 0
      %850 = vmatpush1.bf16.xpose.msra.mxu0 0
      %851 = vmatprep.subr.bf16.mxu0 0
      %852 = vmatpush1.bf16.xpose.msra.mxu0 0
      %853 = vmatprep.subr.bf16.mxu0 0
      %854 = vmatpush1.bf16.xpose.msra.mxu0 0
      %855 = vmatprep.mubr.bf16.mxu0 0
      %856 = vmatmul.mubr.bf16.gmra.mrb[0].mxu0 %v818
      %v857 = vpop.f32.mrb[0].mxu0
      %v858 = vadd.f32 0.0, %v857
      %v859 = vpop.f32.mrb[0].mxu0
      %v860 = vpop.f32.mrb[0].mxu0
      %v861 = vpop.f32.mrb[0].mxu0
      %862 = vdwg.mxu0
      %864 = vrot.lane.b32.xlu0 %v566, 96
      %v865 = vpop.permute.xlu0 %864
      %v867 = vsel %vm571, %v566, 0
      %v870 = vsel %vm571, %v865, 0
      %872 = vmatprep.subr.bf16.mxu0 0
      %873 = vmatpush1.bf16.xpose.msra.mxu0 %v870
      %874 = vmatprep.subr.bf16.mxu0 0
      %875 = vmatpush1.bf16.xpose.msra.mxu0 0
      %876 = vmatprep.subr.bf16.mxu0 0
      %877 = vmatpush1.bf16.xpose.msra.mxu0 0
      %878 = vmatprep.subr.bf16.mxu0 0
      %879 = vmatpush1.bf16.xpose.msra.mxu0 0
      %880 = vmatprep.subr.bf16.mxu0 0
      %881 = vmatpush1.bf16.xpose.msra.mxu0 0
      %882 = vmatprep.subr.bf16.mxu0 0
      %883 = vmatpush1.bf16.xpose.msra.mxu0 0
      %884 = vmatprep.subr.bf16.mxu0 0
      %885 = vmatpush1.bf16.xpose.msra.mxu0 0
      %886 = vmatprep.subr.bf16.mxu0 0
      %887 = vmatpush1.bf16.xpose.msra.mxu0 0
      %888 = vmatprep.subr.bf16.mxu0 0
      %889 = vmatpush1.bf16.xpose.msra.mxu0 0
      %890 = vmatprep.subr.bf16.mxu0 0
      %891 = vmatpush1.bf16.xpose.msra.mxu0 0
      %892 = vmatprep.subr.bf16.mxu0 0
      %893 = vmatpush1.bf16.xpose.msra.mxu0 0
      %894 = vmatprep.subr.bf16.mxu0 0
      %895 = vmatpush1.bf16.xpose.msra.mxu0 0
      %896 = vmatprep.subr.bf16.mxu0 0
      %897 = vmatpush1.bf16.xpose.msra.mxu0 0
      %898 = vmatprep.subr.bf16.mxu0 0
      %899 = vmatpush1.bf16.xpose.msra.mxu0 0
      %900 = vmatprep.subr.bf16.mxu0 0
      %901 = vmatpush1.bf16.xpose.msra.mxu0 0
      %902 = vmatprep.subr.bf16.mxu0 0
      %903 = vmatpush1.bf16.xpose.msra.mxu0 0
      %904 = vmatprep.mubr.bf16.mxu0 0
      %905 = vmatmul.mubr.bf16.gmra.mrb[0].mxu0 %v867
      %v906 = vpop.f32.mrb[0].mxu0
      %v907 = vadd.f32 0.0, %v906
      %v908 = vpop.f32.mrb[0].mxu0
      %v909 = vpop.f32.mrb[0].mxu0
      %v910 = vpop.f32.mrb[0].mxu0
      %911 = vdwg.mxu0
      %913 = vrot.lane.b32.xlu0 %v567, 96
      %v914 = vpop.permute.xlu0 %913
      %v916 = vsel %vm571, %v567, 0
      %v919 = vsel %vm571, %v914, 0
      %921 = vmatprep.subr.bf16.mxu0 0
      %922 = vmatpush1.bf16.xpose.msra.mxu0 %v919
      %923 = vmatprep.subr.bf16.mxu0 0
      %924 = vmatpush1.bf16.xpose.msra.mxu0 0
      %925 = vmatprep.subr.bf16.mxu0 0
      %926 = vmatpush1.bf16.xpose.msra.mxu0 0
      %927 = vmatprep.subr.bf16.mxu0 0
      %928 = vmatpush1.bf16.xpose.msra.mxu0 0
      %929 = vmatprep.subr.bf16.mxu0 0
      %930 = vmatpush1.bf16.xpose.msra.mxu0 0
      %931 = vmatprep.subr.bf16.mxu0 0
      %932 = vmatpush1.bf16.xpose.msra.mxu0 0
      %933 = vmatprep.subr.bf16.mxu0 0
      %934 = vmatpush1.bf16.xpose.msra.mxu0 0
      %935 = vmatprep.subr.bf16.mxu0 0
      %936 = vmatpush1.bf16.xpose.msra.mxu0 0
      %937 = vmatprep.subr.bf16.mxu0 0
      %938 = vmatpush1.bf16.xpose.msra.mxu0 0
      %939 = vmatprep.subr.bf16.mxu0 0
      %940 = vmatpush1.bf16.xpose.msra.mxu0 0
      %941 = vmatprep.subr.bf16.mxu0 0
      %942 = vmatpush1.bf16.xpose.msra.mxu0 0
      %943 = vmatprep.subr.bf16.mxu0 0
      %944 = vmatpush1.bf16.xpose.msra.mxu0 0
      %945 = vmatprep.subr.bf16.mxu0 0
      %946 = vmatpush1.bf16.xpose.msra.mxu0 0
      %947 = vmatprep.subr.bf16.mxu0 0
      %948 = vmatpush1.bf16.xpose.msra.mxu0 0
      %949 = vmatprep.subr.bf16.mxu0 0
      %950 = vmatpush1.bf16.xpose.msra.mxu0 0
      %951 = vmatprep.subr.bf16.mxu0 0
      %952 = vmatpush1.bf16.xpose.msra.mxu0 0
      %953 = vmatprep.mubr.bf16.mxu0 0
      %954 = vmatmul.mubr.bf16.gmra.mrb[0].mxu0 %v916
      %v955 = vpop.f32.mrb[0].mxu0
      %v956 = vadd.f32 0.0, %v955
      %v957 = vpop.f32.mrb[0].mxu0
      %v958 = vpop.f32.mrb[0].mxu0
      %v959 = vpop.f32.mrb[0].mxu0
      %960 = vdwg.mxu0
      %v961 = vmul.f32 %v613, 0.35355338
      %v962 = vmul.f32 %v662, 0.35355338
      %v963 = vmul.f32 %v711, 0.35355338
      %v964 = vmul.f32 %v760, 0.35355338
      %v965 = vmul.f32 %v809, 0.35355338
      %v966 = vmul.f32 %v858, 0.35355338
      %v967 = vmul.f32 %v907, 0.35355338
      %v968 = vmul.f32 %v956, 0.35355338
      %vm969 = vcmask 9216
      %v970 = vsel %vm969, %v961, -inf
      %971 = vmax.xlane.f32.xlu0 %v970
      %v972 = vpop.xlane.xlu0 %971
      %v973 = vsel %vm969, %v962, -inf
      %974 = vmax.xlane.f32.xlu0 %v973
      %v975 = vpop.xlane.xlu0 %974
      %v976 = vsel %vm969, %v963, -inf
      %977 = vmax.xlane.f32.xlu0 %v976
      %v978 = vpop.xlane.xlu0 %977
      %v979 = vsel %vm969, %v964, -inf
      %980 = vmax.xlane.f32.xlu0 %v979
      %v981 = vpop.xlane.xlu0 %980
      %v982 = vsel %vm969, %v965, -inf
      %983 = vmax.xlane.f32.xlu0 %v982
      %v984 = vpop.xlane.xlu0 %983
      %v985 = vsel %vm969, %v966, -inf
      %986 = vmax.xlane.f32.xlu0 %v985
      %v987 = vpop.xlane.xlu0 %986
      %v988 = vsel %vm969, %v967, -inf
      %989 = vmax.xlane.f32.xlu0 %v988
      %v990 = vpop.xlane.xlu0 %989
      %v991 = vsel %vm969, %v968, -inf
      %992 = vmax.xlane.f32.xlu0 %v991
      %v993 = vpop.xlane.xlu0 %992
      %v994 = vsub.f32 %v961, %v972
      %v995 = vsub.f32 %v962, %v975
      %v996 = vsub.f32 %v963, %v978
      %v997 = vsub.f32 %v964, %v981
      %v998 = vsub.f32 %v965, %v984
      %v999 = vsub.f32 %v966, %v987
      %v1000 = vsub.f32 %v967, %v990
      %v1001 = vsub.f32 %v968, %v993
      %v1002 = vmul.f32 %v994, 1.442695
      %v1003 = vpow.pop %v1002
      %v1004 = vmul.f32 %v995, 1.442695
      %v1005 = vpow.pop %v1004
      %v1006 = vmul.f32 %v996, 1.442695
      %v1007 = vpow.pop %v1006
      %v1008 = vmul.f32 %v997, 1.442695
      %v1009 = vpow.pop %v1008
      %v1010 = vmul.f32 %v998, 1.442695
      %v1011 = vpow.pop %v1010
      %v1012 = vmul.f32 %v999, 1.442695
      %v1013 = vpow.pop %v1012
      %v1014 = vmul.f32 %v1000, 1.442695
      %v1015 = vpow.pop %v1014
      %v1016 = vmul.f32 %v1001, 1.442695
      %v1017 = vpow.pop %v1016
      %v1018 = vsel %vm969, %v1003, 0.0
      %1019 = vadd.xlane.f32.xlu0 %v1018
      %v1020 = vpop.xlane.xlu0 %1019
      %v1021 = vsel %vm969, %v1005, 0.0
      %1022 = vadd.xlane.f32.xlu0 %v1021
      %v1023 = vpop.xlane.xlu0 %1022
      %v1024 = vsel %vm969, %v1007, 0.0
      %1025 = vadd.xlane.f32.xlu0 %v1024
      %v1026 = vpop.xlane.xlu0 %1025
      %v1027 = vsel %vm969, %v1009, 0.0
      %1028 = vadd.xlane.f32.xlu0 %v1027
      %v1029 = vpop.xlane.xlu0 %1028
      %v1030 = vsel %vm969, %v1011, 0.0
      %1031 = vadd.xlane.f32.xlu0 %v1030
      %v1032 = vpop.xlane.xlu0 %1031
      %v1033 = vsel %vm969, %v1013, 0.0
      %1034 = vadd.xlane.f32.xlu0 %v1033
      %v1035 = vpop.xlane.xlu0 %1034
      %v1036 = vsel %vm969, %v1015, 0.0
      %1037 = vadd.xlane.f32.xlu0 %v1036
      %v1038 = vpop.xlane.xlu0 %1037
      %v1039 = vsel %vm969, %v1017, 0.0
      %1040 = vadd.xlane.f32.xlu0 %v1039
      %v1041 = vpop.xlane.xlu0 %1040
      %v1042 = vrcp.pop %v1020
      %v1043 = vrcp.pop %v1023
      %v1044 = vrcp.pop %v1026
      %v1045 = vrcp.pop %v1029
      %v1046 = vrcp.pop %v1032
      %v1047 = vrcp.pop %v1035
      %v1048 = vrcp.pop %v1038
      %v1049 = vrcp.pop %v1041
      %v1050 = vmul.f32 %v1003, %v1042
      %v1051 = vmul.f32 %v1005, %v1043
      %v1052 = vmul.f32 %v1007, %v1044
      %v1053 = vmul.f32 %v1009, %v1045
      %v1054 = vmul.f32 %v1011, %v1046
      %v1055 = vmul.f32 %v1013, %v1047
      %v1056 = vmul.f32 %v1015, %v1048
      %v1057 = vmul.f32 %v1017, %v1049
      %v1058 = vpack.c.bf16 %v1050, %v1050
      %v1059 = vpack.c.bf16 %v1051, %v1051
      %v1060 = vpack.c.bf16 %v1052, %v1052
      %v1061 = vpack.c.bf16 %v1053, %v1053
      %v1062 = vpack.c.bf16 %v1054, %v1054
      %v1063 = vpack.c.bf16 %v1055, %v1055
      %v1064 = vpack.c.bf16 %v1056, %v1056
      %v1065 = vpack.c.bf16 %v1057, %v1057
      %1066 = vrot.lane.b32.xlu0 %v560, 64
      %v1067 = vpop.permute.xlu0 %1066
      %vm1068 = vcmask 15360
      %v1070 = vsel %vm1068, %v1058, 0
      %vm1072 = vcmask 1040384
      %v1074 = vsel %vm1072, %v1067, 0
      %1076 = vmatprep.subr.bf16.mxu0 0
      %1077 = vmatpush1.bf16.msra.mxu0 %v1074
      %1078 = vmatprep.subr.bf16.mxu0 0
      %1079 = vmatpush1.bf16.msra.mxu0 0
      %1080 = vmatprep.subr.bf16.mxu0 0
      %1081 = vmatpush1.bf16.msra.mxu0 0
      %1082 = vmatprep.subr.bf16.mxu0 0
      %1083 = vmatpush1.bf16.msra.mxu0 0
      %1084 = vmatprep.subr.bf16.mxu0 0
      %1085 = vmatpush1.bf16.msra.mxu0 0
      %1086 = vmatprep.subr.bf16.mxu0 0
      %1087 = vmatpush1.bf16.msra.mxu0 0
      %1088 = vmatprep.subr.bf16.mxu0 0
      %1089 = vmatpush1.bf16.msra.mxu0 0
      %1090 = vmatprep.subr.bf16.mxu0 0
      %1091 = vmatpush1.bf16.msra.mxu0 0
      %1092 = vmatprep.subr.bf16.mxu0 0
      %1093 = vmatpush1.bf16.msra.mxu0 0
      %1094 = vmatprep.subr.bf16.mxu0 0
      %1095 = vmatpush1.bf16.msra.mxu0 0
      %1096 = vmatprep.subr.bf16.mxu0 0
      %1097 = vmatpush1.bf16.msra.mxu0 0
      %1098 = vmatprep.subr.bf16.mxu0 0
      %1099 = vmatpush1.bf16.msra.mxu0 0
      %1100 = vmatprep.subr.bf16.mxu0 0
      %1101 = vmatpush1.bf16.msra.mxu0 0
      %1102 = vmatprep.subr.bf16.mxu0 0
      %1103 = vmatpush1.bf16.msra.mxu0 0
      %1104 = vmatprep.subr.bf16.mxu0 0
      %1105 = vmatpush1.bf16.msra.mxu0 0
      %1106 = vmatprep.subr.bf16.mxu0 0
      %1107 = vmatpush1.bf16.msra.mxu0 0
      %1108 = vmatprep.mubr.bf16.mxu0 0
      %1109 = vmatmul.mubr.bf16.gmra.mrb[0].mxu0 %v1070
      %v1110 = vpop.f32.mrb[0].mxu0
      %v1111 = vadd.f32 0.0, %v1110
      %v1112 = vpop.f32.mrb[0].mxu0
      %v1113 = vpop.f32.mrb[0].mxu0
      %v1114 = vpop.f32.mrb[0].mxu0
      %1115 = vdwg.mxu0
      %1116 = vrot.lane.b32.xlu0 %v561, 64
      %v1117 = vpop.permute.xlu0 %1116
      %v1119 = vsel %vm1068, %v1059, 0
      %v1122 = vsel %vm1072, %v1117, 0
      %1124 = vmatprep.subr.bf16.mxu0 0
      %1125 = vmatpush1.bf16.msra.mxu0 %v1122
      %1126 = vmatprep.subr.bf16.mxu0 0
      %1127 = vmatpush1.bf16.msra.mxu0 0
      %1128 = vmatprep.subr.bf16.mxu0 0
      %1129 = vmatpush1.bf16.msra.mxu0 0
      %1130 = vmatprep.subr.bf16.mxu0 0
      %1131 = vmatpush1.bf16.msra.mxu0 0
      %1132 = vmatprep.subr.bf16.mxu0 0
      %1133 = vmatpush1.bf16.msra.mxu0 0
      %1134 = vmatprep.subr.bf16.mxu0 0
      %1135 = vmatpush1.bf16.msra.mxu0 0
      %1136 = vmatprep.subr.bf16.mxu0 0
      %1137 = vmatpush1.bf16.msra.mxu0 0
      %1138 = vmatprep.subr.bf16.mxu0 0
      %1139 = vmatpush1.bf16.msra.mxu0 0
      %1140 = vmatprep.subr.bf16.mxu0 0
      %1141 = vmatpush1.bf16.msra.mxu0 0
      %1142 = vmatprep.subr.bf16.mxu0 0
      %1143 = vmatpush1.bf16.msra.mxu0 0
      %1144 = vmatprep.subr.bf16.mxu0 0
      %1145 = vmatpush1.bf16.msra.mxu0 0
      %1146 = vmatprep.subr.bf16.mxu0 0
      %1147 = vmatpush1.bf16.msra.mxu0 0
      %1148 = vmatprep.subr.bf16.mxu0 0
      %1149 = vmatpush1.bf16.msra.mxu0 0
      %1150 = vmatprep.subr.bf16.mxu0 0
      %1151 = vmatpush1.bf16.msra.mxu0 0
      %1152 = vmatprep.subr.bf16.mxu0 0
      %1153 = vmatpush1.bf16.msra.mxu0 0
      %1154 = vmatprep.subr.bf16.mxu0 0
      %1155 = vmatpush1.bf16.msra.mxu0 0
      %1156 = vmatprep.mubr.bf16.mxu0 0
      %1157 = vmatmul.mubr.bf16.gmra.mrb[0].mxu0 %v1119
      %v1158 = vpop.f32.mrb[0].mxu0
      %v1159 = vadd.f32 0.0, %v1158
      %v1160 = vpop.f32.mrb[0].mxu0
      %v1161 = vpop.f32.mrb[0].mxu0
      %v1162 = vpop.f32.mrb[0].mxu0
      %1163 = vdwg.mxu0
      %1164 = vrot.lane.b32.xlu0 %v562, 64
      %v1165 = vpop.permute.xlu0 %1164
      %v1167 = vsel %vm1068, %v1060, 0
      %v1170 = vsel %vm1072, %v1165, 0
      %1172 = vmatprep.subr.bf16.mxu0 0
      %1173 = vmatpush1.bf16.msra.mxu0 %v1170
      %1174 = vmatprep.subr.bf16.mxu0 0
      %1175 = vmatpush1.bf16.msra.mxu0 0
      %1176 = vmatprep.subr.bf16.mxu0 0
      %1177 = vmatpush1.bf16.msra.mxu0 0
      %1178 = vmatprep.subr.bf16.mxu0 0
      %1179 = vmatpush1.bf16.msra.mxu0 0
      %1180 = vmatprep.subr.bf16.mxu0 0
      %1181 = vmatpush1.bf16.msra.mxu0 0
      %1182 = vmatprep.subr.bf16.mxu0 0
      %1183 = vmatpush1.bf16.msra.mxu0 0
      %1184 = vmatprep.subr.bf16.mxu0 0
      %1185 = vmatpush1.bf16.msra.mxu0 0
      %1186 = vmatprep.subr.bf16.mxu0 0
      %1187 = vmatpush1.bf16.msra.mxu0 0
      %1188 = vmatprep.subr.bf16.mxu0 0
      %1189 = vmatpush1.bf16.msra.mxu0 0
      %1190 = vmatprep.subr.bf16.mxu0 0
      %1191 = vmatpush1.bf16.msra.mxu0 0
      %1192 = vmatprep.subr.bf16.mxu0 0
      %1193 = vmatpush1.bf16.msra.mxu0 0
      %1194 = vmatprep.subr.bf16.mxu0 0
      %1195 = vmatpush1.bf16.msra.mxu0 0
      %1196 = vmatprep.subr.bf16.mxu0 0
      %1197 = vmatpush1.bf16.msra.mxu0 0
      %1198 = vmatprep.subr.bf16.mxu0 0
      %1199 = vmatpush1.bf16.msra.mxu0 0
      %1200 = vmatprep.subr.bf16.mxu0 0
      %1201 = vmatpush1.bf16.msra.mxu0 0
      %1202 = vmatprep.subr.bf16.mxu0 0
      %1203 = vmatpush1.bf16.msra.mxu0 0
      %1204 = vmatprep.mubr.bf16.mxu0 0
      %1205 = vmatmul.mubr.bf16.gmra.mrb[0].mxu0 %v1167
      %v1206 = vpop.f32.mrb[0].mxu0
      %v1207 = vadd.f32 0.0, %v1206
      %v1208 = vpop.f32.mrb[0].mxu0
      %v1209 = vpop.f32.mrb[0].mxu0
      %v1210 = vpop.f32.mrb[0].mxu0
      %1211 = vdwg.mxu0
      %1212 = vrot.lane.b32.xlu0 %v563, 64
      %v1213 = vpop.permute.xlu0 %1212
      %v1215 = vsel %vm1068, %v1061, 0
      %v1218 = vsel %vm1072, %v1213, 0
      %1220 = vmatprep.subr.bf16.mxu0 0
      %1221 = vmatpush1.bf16.msra.mxu0 %v1218
      %1222 = vmatprep.subr.bf16.mxu0 0
      %1223 = vmatpush1.bf16.msra.mxu0 0
      %1224 = vmatprep.subr.bf16.mxu0 0
      %1225 = vmatpush1.bf16.msra.mxu0 0
      %1226 = vmatprep.subr.bf16.mxu0 0
      %1227 = vmatpush1.bf16.msra.mxu0 0
      %1228 = vmatprep.subr.bf16.mxu0 0
      %1229 = vmatpush1.bf16.msra.mxu0 0
      %1230 = vmatprep.subr.bf16.mxu0 0
      %1231 = vmatpush1.bf16.msra.mxu0 0
      %1232 = vmatprep.subr.bf16.mxu0 0
      %1233 = vmatpush1.bf16.msra.mxu0 0
      %1234 = vmatprep.subr.bf16.mxu0 0
      %1235 = vmatpush1.bf16.msra.mxu0 0
      %1236 = vmatprep.subr.bf16.mxu0 0
      %1237 = vmatpush1.bf16.msra.mxu0 0
      %1238 = vmatprep.subr.bf16.mxu0 0
      %1239 = vmatpush1.bf16.msra.mxu0 0
      %1240 = vmatprep.subr.bf16.mxu0 0
      %1241 = vmatpush1.bf16.msra.mxu0 0
      %1242 = vmatprep.subr.bf16.mxu0 0
      %1243 = vmatpush1.bf16.msra.mxu0 0
      %1244 = vmatprep.subr.bf16.mxu0 0
      %1245 = vmatpush1.bf16.msra.mxu0 0
      %1246 = vmatprep.subr.bf16.mxu0 0
      %1247 = vmatpush1.bf16.msra.mxu0 0
      %1248 = vmatprep.subr.bf16.mxu0 0
      %1249 = vmatpush1.bf16.msra.mxu0 0
      %1250 = vmatprep.subr.bf16.mxu0 0
      %1251 = vmatpush1.bf16.msra.mxu0 0
      %1252 = vmatprep.mubr.bf16.mxu0 0
      %1253 = vmatmul.mubr.bf16.gmra.mrb[0].mxu0 %v1215
      %v1254 = vpop.f32.mrb[0].mxu0
      %v1255 = vadd.f32 0.0, %v1254
      %v1256 = vpop.f32.mrb[0].mxu0
      %v1257 = vpop.f32.mrb[0].mxu0
      %v1258 = vpop.f32.mrb[0].mxu0
      %1259 = vdwg.mxu0
      %1260 = vrot.lane.b32.xlu0 %v564, 64
      %v1261 = vpop.permute.xlu0 %1260
      %v1263 = vsel %vm1068, %v1062, 0
      %v1266 = vsel %vm1072, %v1261, 0
      %1268 = vmatprep.subr.bf16.mxu0 0
      %1269 = vmatpush1.bf16.msra.mxu0 %v1266
      %1270 = vmatprep.subr.bf16.mxu0 0
      %1271 = vmatpush1.bf16.msra.mxu0 0
      %1272 = vmatprep.subr.bf16.mxu0 0
      %1273 = vmatpush1.bf16.msra.mxu0 0
      %1274 = vmatprep.subr.bf16.mxu0 0
      %1275 = vmatpush1.bf16.msra.mxu0 0
      %1276 = vmatprep.subr.bf16.mxu0 0
      %1277 = vmatpush1.bf16.msra.mxu0 0
      %1278 = vmatprep.subr.bf16.mxu0 0
      %1279 = vmatpush1.bf16.msra.mxu0 0
      %1280 = vmatprep.subr.bf16.mxu0 0
      %1281 = vmatpush1.bf16.msra.mxu0 0
      %1282 = vmatprep.subr.bf16.mxu0 0
      %1283 = vmatpush1.bf16.msra.mxu0 0
      %1284 = vmatprep.subr.bf16.mxu0 0
      %1285 = vmatpush1.bf16.msra.mxu0 0
      %1286 = vmatprep.subr.bf16.mxu0 0
      %1287 = vmatpush1.bf16.msra.mxu0 0
      %1288 = vmatprep.subr.bf16.mxu0 0
      %1289 = vmatpush1.bf16.msra.mxu0 0
      %1290 = vmatprep.subr.bf16.mxu0 0
      %1291 = vmatpush1.bf16.msra.mxu0 0
      %1292 = vmatprep.subr.bf16.mxu0 0
      %1293 = vmatpush1.bf16.msra.mxu0 0
      %1294 = vmatprep.subr.bf16.mxu0 0
      %1295 = vmatpush1.bf16.msra.mxu0 0
      %1296 = vmatprep.subr.bf16.mxu0 0
      %1297 = vmatpush1.bf16.msra.mxu0 0
      %1298 = vmatprep.subr.bf16.mxu0 0
      %1299 = vmatpush1.bf16.msra.mxu0 0
      %1300 = vmatprep.mubr.bf16.mxu0 0
      %1301 = vmatmul.mubr.bf16.gmra.mrb[0].mxu0 %v1263
      %v1302 = vpop.f32.mrb[0].mxu0
      %v1303 = vadd.f32 0.0, %v1302
      %v1304 = vpop.f32.mrb[0].mxu0
      %v1305 = vpop.f32.mrb[0].mxu0
      %v1306 = vpop.f32.mrb[0].mxu0
      %1307 = vdwg.mxu0
      %1308 = vrot.lane.b32.xlu0 %v565, 64
      %v1309 = vpop.permute.xlu0 %1308
      %v1311 = vsel %vm1068, %v1063, 0
      %v1314 = vsel %vm1072, %v1309, 0
      %1316 = vmatprep.subr.bf16.mxu0 0
      %1317 = vmatpush1.bf16.msra.mxu0 %v1314
      %1318 = vmatprep.subr.bf16.mxu0 0
      %1319 = vmatpush1.bf16.msra.mxu0 0
      %1320 = vmatprep.subr.bf16.mxu0 0
      %1321 = vmatpush1.bf16.msra.mxu0 0
      %1322 = vmatprep.subr.bf16.mxu0 0
      %1323 = vmatpush1.bf16.msra.mxu0 0
      %1324 = vmatprep.subr.bf16.mxu0 0
      %1325 = vmatpush1.bf16.msra.mxu0 0
      %1326 = vmatprep.subr.bf16.mxu0 0
      %1327 = vmatpush1.bf16.msra.mxu0 0
      %1328 = vmatprep.subr.bf16.mxu0 0
      %1329 = vmatpush1.bf16.msra.mxu0 0
      %1330 = vmatprep.subr.bf16.mxu0 0
      %1331 = vmatpush1.bf16.msra.mxu0 0
      %1332 = vmatprep.subr.bf16.mxu0 0
      %1333 = vmatpush1.bf16.msra.mxu0 0
      %1334 = vmatprep.subr.bf16.mxu0 0
      %1335 = vmatpush1.bf16.msra.mxu0 0
      %1336 = vmatprep.subr.bf16.mxu0 0
      %1337 = vmatpush1.bf16.msra.mxu0 0
      %1338 = vmatprep.subr.bf16.mxu0 0
      %1339 = vmatpush1.bf16.msra.mxu0 0
      %1340 = vmatprep.subr.bf16.mxu0 0
      %1341 = vmatpush1.bf16.msra.mxu0 0
      %1342 = vmatprep.subr.bf16.mxu0 0
      %1343 = vmatpush1.bf16.msra.mxu0 0
      %1344 = vmatprep.subr.bf16.mxu0 0
      %1345 = vmatpush1.bf16.msra.mxu0 0
      %1346 = vmatprep.subr.bf16.mxu0 0
      %1347 = vmatpush1.bf16.msra.mxu0 0
      %1348 = vmatprep.mubr.bf16.mxu0 0
      %1349 = vmatmul.mubr.bf16.gmra.mrb[0].mxu0 %v1311
      %v1350 = vpop.f32.mrb[0].mxu0
      %v1351 = vadd.f32 0.0, %v1350
      %v1352 = vpop.f32.mrb[0].mxu0
      %v1353 = vpop.f32.mrb[0].mxu0
      %v1354 = vpop.f32.mrb[0].mxu0
      %1355 = vdwg.mxu0
      %1356 = vrot.lane.b32.xlu0 %v566, 64
      %v1357 = vpop.permute.xlu0 %1356
      %v1359 = vsel %vm1068, %v1064, 0
      %v1362 = vsel %vm1072, %v1357, 0
      %1364 = vmatprep.subr.bf16.mxu0 0
      %1365 = vmatpush1.bf16.msra.mxu0 %v1362
      %1366 = vmatprep.subr.bf16.mxu0 0
      %1367 = vmatpush1.bf16.msra.mxu0 0
      %1368 = vmatprep.subr.bf16.mxu0 0
      %1369 = vmatpush1.bf16.msra.mxu0 0
      %1370 = vmatprep.subr.bf16.mxu0 0
      %1371 = vmatpush1.bf16.msra.mxu0 0
      %1372 = vmatprep.subr.bf16.mxu0 0
      %1373 = vmatpush1.bf16.msra.mxu0 0
      %1374 = vmatprep.subr.bf16.mxu0 0
      %1375 = vmatpush1.bf16.msra.mxu0 0
      %1376 = vmatprep.subr.bf16.mxu0 0
      %1377 = vmatpush1.bf16.msra.mxu0 0
      %1378 = vmatprep.subr.bf16.mxu0 0
      %1379 = vmatpush1.bf16.msra.mxu0 0
      %1380 = vmatprep.subr.bf16.mxu0 0
      %1381 = vmatpush1.bf16.msra.mxu0 0
      %1382 = vmatprep.subr.bf16.mxu0 0
      %1383 = vmatpush1.bf16.msra.mxu0 0
      %1384 = vmatprep.subr.bf16.mxu0 0
      %1385 = vmatpush1.bf16.msra.mxu0 0
      %1386 = vmatprep.subr.bf16.mxu0 0
      %1387 = vmatpush1.bf16.msra.mxu0 0
      %1388 = vmatprep.subr.bf16.mxu0 0
      %1389 = vmatpush1.bf16.msra.mxu0 0
      %1390 = vmatprep.subr.bf16.mxu0 0
      %1391 = vmatpush1.bf16.msra.mxu0 0
      %1392 = vmatprep.subr.bf16.mxu0 0
      %1393 = vmatpush1.bf16.msra.mxu0 0
      %1394 = vmatprep.subr.bf16.mxu0 0
      %1395 = vmatpush1.bf16.msra.mxu0 0
      %1396 = vmatprep.mubr.bf16.mxu0 0
      %1397 = vmatmul.mubr.bf16.gmra.mrb[0].mxu0 %v1359
      %v1398 = vpop.f32.mrb[0].mxu0
      %v1399 = vadd.f32 0.0, %v1398
      %v1400 = vpop.f32.mrb[0].mxu0
      %v1401 = vpop.f32.mrb[0].mxu0
      %v1402 = vpop.f32.mrb[0].mxu0
      %1403 = vdwg.mxu0
      %1404 = vrot.lane.b32.xlu0 %v567, 64
      %v1405 = vpop.permute.xlu0 %1404
      %v1407 = vsel %vm1068, %v1065, 0
      %v1410 = vsel %vm1072, %v1405, 0
      %1412 = vmatprep.subr.bf16.mxu0 0
      %1413 = vmatpush1.bf16.msra.mxu0 %v1410
      %1414 = vmatprep.subr.bf16.mxu0 0
      %1415 = vmatpush1.bf16.msra.mxu0 0
      %1416 = vmatprep.subr.bf16.mxu0 0
      %1417 = vmatpush1.bf16.msra.mxu0 0
      %1418 = vmatprep.subr.bf16.mxu0 0
      %1419 = vmatpush1.bf16.msra.mxu0 0
      %1420 = vmatprep.subr.bf16.mxu0 0
      %1421 = vmatpush1.bf16.msra.mxu0 0
      %1422 = vmatprep.subr.bf16.mxu0 0
      %1423 = vmatpush1.bf16.msra.mxu0 0
      %1424 = vmatprep.subr.bf16.mxu0 0
      %1425 = vmatpush1.bf16.msra.mxu0 0
      %1426 = vmatprep.subr.bf16.mxu0 0
      %1427 = vmatpush1.bf16.msra.mxu0 0
      %1428 = vmatprep.subr.bf16.mxu0 0
      %1429 = vmatpush1.bf16.msra.mxu0 0
      %1430 = vmatprep.subr.bf16.mxu0 0
      %1431 = vmatpush1.bf16.msra.mxu0 0
      %1432 = vmatprep.subr.bf16.mxu0 0
      %1433 = vmatpush1.bf16.msra.mxu0 0
      %1434 = vmatprep.subr.bf16.mxu0 0
      %1435 = vmatpush1.bf16.msra.mxu0 0
      %1436 = vmatprep.subr.bf16.mxu0 0
      %1437 = vmatpush1.bf16.msra.mxu0 0
      %1438 = vmatprep.subr.bf16.mxu0 0
      %1439 = vmatpush1.bf16.msra.mxu0 0
      %1440 = vmatprep.subr.bf16.mxu0 0
      %1441 = vmatpush1.bf16.msra.mxu0 0
      %1442 = vmatprep.subr.bf16.mxu0 0
      %1443 = vmatpush1.bf16.msra.mxu0 0
      %1444 = vmatprep.mubr.bf16.mxu0 0
      %1445 = vmatmul.mubr.bf16.gmra.mrb[0].mxu0 %v1407
      %v1446 = vpop.f32.mrb[0].mxu0
      %v1447 = vadd.f32 0.0, %v1446
      %v1448 = vpop.f32.mrb[0].mxu0
      %v1449 = vpop.f32.mrb[0].mxu0
      %v1450 = vpop.f32.mrb[0].mxu0
      %1451 = vdwg.mxu0
      %v1460 = vcombine.low %v1111, %v1159
      %v1461 = vcombine.low %v1207, %v1255
      %v1463 = vunpack.c.l.s4 1983009808
      %v1464 = vunpack.c.0.s8 %v1463
      %v1465 = vlaneseq
      %v1466 = vshrl.u32 %v1465, 7
      %v1467 = vsub.s32 %v1464, %v1466
      %v1468 = vrot.slane %v1460, %v1467
      %v1470 = vunpack.c.l.s4 1983009808
      %v1471 = vunpack.c.0.s8 %v1470
      %v1472 = vlaneseq
      %v1473 = vshrl.u32 %v1472, 7
      %v1474 = vsub.s32 %v1471, %v1473
      %v1475 = vrot.slane %v1461, %v1474
      %v1476 = vcombine.low %v1468, %v1475
      %v1477 = vcombine.low %v1303, %v1351
      %v1478 = vcombine.low %v1399, %v1447
      %v1480 = vunpack.c.l.s4 1983009808
      %v1481 = vunpack.c.0.s8 %v1480
      %v1482 = vlaneseq
      %v1483 = vshrl.u32 %v1482, 7
      %v1484 = vsub.s32 %v1481, %v1483
      %v1485 = vrot.slane %v1477, %v1484
      %v1487 = vunpack.c.l.s4 1983009808
      %v1488 = vunpack.c.0.s8 %v1487
      %v1489 = vlaneseq
      %v1490 = vshrl.u32 %v1489, 7
      %v1491 = vsub.s32 %v1488, %v1490
      %v1492 = vrot.slane %v1478, %v1491
      %v1493 = vcombine.low %v1485, %v1492
      %v1496 = vpack.c.bf16 %v1493, %v1476
      %v1497 = vld [vmem:[%s5] sm:$0xf]
      %v1499 = vsel %vm571, %v1496, 0
      %vm1501 = vcmask 1043456
      %v1503 = vsel %vm1501, %v1497, 0
      %1505 = vmatprep.subr.bf16.mxu0 0
      %1506 = vmatpush1.bf16.msra.mxu0 %v1503
      %1507 = vmatprep.subr.bf16.mxu0 0
      %1508 = vmatpush1.bf16.msra.mxu0 0
      %1509 = vmatprep.subr.bf16.mxu0 0
      %1510 = vmatpush1.bf16.msra.mxu0 0
      %1511 = vmatprep.subr.bf16.mxu0 0
      %1512 = vmatpush1.bf16.msra.mxu0 0
      %1513 = vmatprep.subr.bf16.mxu0 0
      %1514 = vmatpush1.bf16.msra.mxu0 0
      %1515 = vmatprep.subr.bf16.mxu0 0
      %1516 = vmatpush1.bf16.msra.mxu0 0
      %1517 = vmatprep.subr.bf16.mxu0 0
      %1518 = vmatpush1.bf16.msra.mxu0 0
      %1519 = vmatprep.subr.bf16.mxu0 0
      %1520 = vmatpush1.bf16.msra.mxu0 0
      %1521 = vmatprep.subr.bf16.mxu0 0
      %1522 = vmatpush1.bf16.msra.mxu0 0
      %1523 = vmatprep.subr.bf16.mxu0 0
      %1524 = vmatpush1.bf16.msra.mxu0 0
      %1525 = vmatprep.subr.bf16.mxu0 0
      %1526 = vmatpush1.bf16.msra.mxu0 0
      %1527 = vmatprep.subr.bf16.mxu0 0
      %1528 = vmatpush1.bf16.msra.mxu0 0
      %1529 = vmatprep.subr.bf16.mxu0 0
      %1530 = vmatpush1.bf16.msra.mxu0 0
      %1531 = vmatprep.subr.bf16.mxu0 0
      %1532 = vmatpush1.bf16.msra.mxu0 0
      %1533 = vmatprep.subr.bf16.mxu0 0
      %1534 = vmatpush1.bf16.msra.mxu0 0
      %1535 = vmatprep.subr.bf16.mxu0 0
      %1536 = vmatpush1.bf16.msra.mxu0 0
      %1537 = vmatprep.mubr.bf16.mxu0 0
      %1538 = vmatmul.mubr.bf16.gmra.mrb[0].mxu0 %v1499
      %v1539 = vpop.f32.mrb[0].mxu0
      %v1540 = vadd.f32 0.0, %v1539
      %v1541 = vpop.f32.mrb[0].mxu0
      %v1542 = vpop.f32.mrb[0].mxu0
      %v1543 = vadd.f32 0.0, %v1542
      %v1544 = vpop.f32.mrb[0].mxu0
      %1545 = vdwg.mxu0
      %v1546 = vadd.f32 %v514, %v1540
      %v1547 = vadd.f32 %v515, %v1543
      %1548 = vrot.lane.b32.xlu0 %v560, 120
      %v1549 = vpop.permute.xlu0 %1548
      %1550 = vrot.lane.b32.xlu0 %v560, 88
      %v1551 = vpop.permute.xlu0 %1550
      %v1553 = vsel %vm571, %v1549, 0
      %v1556 = vsel %vm571, %v1551, 0
      %1558 = vmatprep.subr.bf16.mxu0 0
      %1559 = vmatpush1.bf16.xpose.msra.mxu0 %v1556
      %1560 = vmatprep.subr.bf16.mxu0 0
      %1561 = vmatpush1.bf16.xpose.msra.mxu0 0
      %1562 = vmatprep.subr.bf16.mxu0 0
      %1563 = vmatpush1.bf16.xpose.msra.mxu0 0
      %1564 = vmatprep.subr.bf16.mxu0 0
      %1565 = vmatpush1.bf16.xpose.msra.mxu0 0
      %1566 = vmatprep.subr.bf16.mxu0 0
      %1567 = vmatpush1.bf16.xpose.msra.mxu0 0
      %1568 = vmatprep.subr.bf16.mxu0 0
      %1569 = vmatpush1.bf16.xpose.msra.mxu0 0
      %1570 = vmatprep.subr.bf16.mxu0 0
      %1571 = vmatpush1.bf16.xpose.msra.mxu0 0
      %1572 = vmatprep.subr.bf16.mxu0 0
      %1573 = vmatpush1.bf16.xpose.msra.mxu0 0
      %1574 = vmatprep.subr.bf16.mxu0 0
      %1575 = vmatpush1.bf16.xpose.msra.mxu0 0
      %1576 = vmatprep.subr.bf16.mxu0 0
      %1577 = vmatpush1.bf16.xpose.msra.mxu0 0
      %1578 = vmatprep.subr.bf16.mxu0 0
      %1579 = vmatpush1.bf16.xpose.msra.mxu0 0
      %1580 = vmatprep.subr.bf16.mxu0 0
      %1581 = vmatpush1.bf16.xpose.msra.mxu0 0
      %1582 = vmatprep.subr.bf16.mxu0 0
      %1583 = vmatpush1.bf16.xpose.msra.mxu0 0
      %1584 = vmatprep.subr.bf16.mxu0 0
      %1585 = vmatpush1.bf16.xpose.msra.mxu0 0
      %1586 = vmatprep.subr.bf16.mxu0 0
      %1587 = vmatpush1.bf16.xpose.msra.mxu0 0
      %1588 = vmatprep.subr.bf16.mxu0 0
      %1589 = vmatpush1.bf16.xpose.msra.mxu0 0
      %1590 = vmatprep.mubr.bf16.mxu0 0
      %1591 = vmatmul.mubr.bf16.gmra.mrb[0].mxu0 %v1553
      %v1592 = vpop.f32.mrb[0].mxu0
      %v1593 = vadd.f32 0.0, %v1592
      %v1594 = vpop.f32.mrb[0].mxu0
      %v1595 = vpop.f32.mrb[0].mxu0
      %v1596 = vpop.f32.mrb[0].mxu0
      %1597 = vdwg.mxu0
      %1598 = vrot.lane.b32.xlu0 %v561, 120
      %v1599 = vpop.permute.xlu0 %1598
      %1600 = vrot.lane.b32.xlu0 %v561, 88
      %v1601 = vpop.permute.xlu0 %1600
      %v1603 = vsel %vm571, %v1599, 0
      %v1606 = vsel %vm571, %v1601, 0
      %1608 = vmatprep.subr.bf16.mxu0 0
      %1609 = vmatpush1.bf16.xpose.msra.mxu0 %v1606
      %1610 = vmatprep.subr.bf16.mxu0 0
      %1611 = vmatpush1.bf16.xpose.msra.mxu0 0
      %1612 = vmatprep.subr.bf16.mxu0 0
      %1613 = vmatpush1.bf16.xpose.msra.mxu0 0
      %1614 = vmatprep.subr.bf16.mxu0 0
      %1615 = vmatpush1.bf16.xpose.msra.mxu0 0
      %1616 = vmatprep.subr.bf16.mxu0 0
      %1617 = vmatpush1.bf16.xpose.msra.mxu0 0
      %1618 = vmatprep.subr.bf16.mxu0 0
      %1619 = vmatpush1.bf16.xpose.msra.mxu0 0
      %1620 = vmatprep.subr.bf16.mxu0 0
      %1621 = vmatpush1.bf16.xpose.msra.mxu0 0
      %1622 = vmatprep.subr.bf16.mxu0 0
      %1623 = vmatpush1.bf16.xpose.msra.mxu0 0
      %1624 = vmatprep.subr.bf16.mxu0 0
      %1625 = vmatpush1.bf16.xpose.msra.mxu0 0
      %1626 = vmatprep.subr.bf16.mxu0 0
      %1627 = vmatpush1.bf16.xpose.msra.mxu0 0
      %1628 = vmatprep.subr.bf16.mxu0 0
      %1629 = vmatpush1.bf16.xpose.msra.mxu0 0
      %1630 = vmatprep.subr.bf16.mxu0 0
      %1631 = vmatpush1.bf16.xpose.msra.mxu0 0
      %1632 = vmatprep.subr.bf16.mxu0 0
      %1633 = vmatpush1.bf16.xpose.msra.mxu0 0
      %1634 = vmatprep.subr.bf16.mxu0 0
      %1635 = vmatpush1.bf16.xpose.msra.mxu0 0
      %1636 = vmatprep.subr.bf16.mxu0 0
      %1637 = vmatpush1.bf16.xpose.msra.mxu0 0
      %1638 = vmatprep.subr.bf16.mxu0 0
      %1639 = vmatpush1.bf16.xpose.msra.mxu0 0
      %1640 = vmatprep.mubr.bf16.mxu0 0
      %1641 = vmatmul.mubr.bf16.gmra.mrb[0].mxu0 %v1603
      %v1642 = vpop.f32.mrb[0].mxu0
      %v1643 = vadd.f32 0.0, %v1642
      %v1644 = vpop.f32.mrb[0].mxu0
      %v1645 = vpop.f32.mrb[0].mxu0
      %v1646 = vpop.f32.mrb[0].mxu0
      %1647 = vdwg.mxu0
      %1648 = vrot.lane.b32.xlu0 %v562, 120
      %v1649 = vpop.permute.xlu0 %1648
      %1650 = vrot.lane.b32.xlu0 %v562, 88
      %v1651 = vpop.permute.xlu0 %1650
      %v1653 = vsel %vm571, %v1649, 0
      %v1656 = vsel %vm571, %v1651, 0
      %1658 = vmatprep.subr.bf16.mxu0 0
      %1659 = vmatpush1.bf16.xpose.msra.mxu0 %v1656
      %1660 = vmatprep.subr.bf16.mxu0 0
      %1661 = vmatpush1.bf16.xpose.msra.mxu0 0
      %1662 = vmatprep.subr.bf16.mxu0 0
      %1663 = vmatpush1.bf16.xpose.msra.mxu0 0
      %1664 = vmatprep.subr.bf16.mxu0 0
      %1665 = vmatpush1.bf16.xpose.msra.mxu0 0
      %1666 = vmatprep.subr.bf16.mxu0 0
      %1667 = vmatpush1.bf16.xpose.msra.mxu0 0
      %1668 = vmatprep.subr.bf16.mxu0 0
      %1669 = vmatpush1.bf16.xpose.msra.mxu0 0
      %1670 = vmatprep.subr.bf16.mxu0 0
      %1671 = vmatpush1.bf16.xpose.msra.mxu0 0
      %1672 = vmatprep.subr.bf16.mxu0 0
      %1673 = vmatpush1.bf16.xpose.msra.mxu0 0
      %1674 = vmatprep.subr.bf16.mxu0 0
      %1675 = vmatpush1.bf16.xpose.msra.mxu0 0
      %1676 = vmatprep.subr.bf16.mxu0 0
      %1677 = vmatpush1.bf16.xpose.msra.mxu0 0
      %1678 = vmatprep.subr.bf16.mxu0 0
      %1679 = vmatpush1.bf16.xpose.msra.mxu0 0
      %1680 = vmatprep.subr.bf16.mxu0 0
      %1681 = vmatpush1.bf16.xpose.msra.mxu0 0
      %1682 = vmatprep.subr.bf16.mxu0 0
      %1683 = vmatpush1.bf16.xpose.msra.mxu0 0
      %1684 = vmatprep.subr.bf16.mxu0 0
      %1685 = vmatpush1.bf16.xpose.msra.mxu0 0
      %1686 = vmatprep.subr.bf16.mxu0 0
      %1687 = vmatpush1.bf16.xpose.msra.mxu0 0
      %1688 = vmatprep.subr.bf16.mxu0 0
      %1689 = vmatpush1.bf16.xpose.msra.mxu0 0
      %1690 = vmatprep.mubr.bf16.mxu0 0
      %1691 = vmatmul.mubr.bf16.gmra.mrb[0].mxu0 %v1653
      %v1692 = vpop.f32.mrb[0].mxu0
      %v1693 = vadd.f32 0.0, %v1692
      %v1694 = vpop.f32.mrb[0].mxu0
      %v1695 = vpop.f32.mrb[0].mxu0
      %v1696 = vpop.f32.mrb[0].mxu0
      %1697 = vdwg.mxu0
      %1698 = vrot.lane.b32.xlu0 %v563, 120
      %v1699 = vpop.permute.xlu0 %1698
      %1700 = vrot.lane.b32.xlu0 %v563, 88
      %v1701 = vpop.permute.xlu0 %1700
      %v1703 = vsel %vm571, %v1699, 0
      %v1706 = vsel %vm571, %v1701, 0
      %1708 = vmatprep.subr.bf16.mxu0 0
      %1709 = vmatpush1.bf16.xpose.msra.mxu0 %v1706
      %1710 = vmatprep.subr.bf16.mxu0 0
      %1711 = vmatpush1.bf16.xpose.msra.mxu0 0
      %1712 = vmatprep.subr.bf16.mxu0 0
      %1713 = vmatpush1.bf16.xpose.msra.mxu0 0
      %1714 = vmatprep.subr.bf16.mxu0 0
      %1715 = vmatpush1.bf16.xpose.msra.mxu0 0
      %1716 = vmatprep.subr.bf16.mxu0 0
      %1717 = vmatpush1.bf16.xpose.msra.mxu0 0
      %1718 = vmatprep.subr.bf16.mxu0 0
      %1719 = vmatpush1.bf16.xpose.msra.mxu0 0
      %1720 = vmatprep.subr.bf16.mxu0 0
      %1721 = vmatpush1.bf16.xpose.msra.mxu0 0
      %1722 = vmatprep.subr.bf16.mxu0 0
      %1723 = vmatpush1.bf16.xpose.msra.mxu0 0
      %1724 = vmatprep.subr.bf16.mxu0 0
      %1725 = vmatpush1.bf16.xpose.msra.mxu0 0
      %1726 = vmatprep.subr.bf16.mxu0 0
      %1727 = vmatpush1.bf16.xpose.msra.mxu0 0
      %1728 = vmatprep.subr.bf16.mxu0 0
      %1729 = vmatpush1.bf16.xpose.msra.mxu0 0
      %1730 = vmatprep.subr.bf16.mxu0 0
      %1731 = vmatpush1.bf16.xpose.msra.mxu0 0
      %1732 = vmatprep.subr.bf16.mxu0 0
      %1733 = vmatpush1.bf16.xpose.msra.mxu0 0
      %1734 = vmatprep.subr.bf16.mxu0 0
      %1735 = vmatpush1.bf16.xpose.msra.mxu0 0
      %1736 = vmatprep.subr.bf16.mxu0 0
      %1737 = vmatpush1.bf16.xpose.msra.mxu0 0
      %1738 = vmatprep.subr.bf16.mxu0 0
      %1739 = vmatpush1.bf16.xpose.msra.mxu0 0
      %1740 = vmatprep.mubr.bf16.mxu0 0
      %1741 = vmatmul.mubr.bf16.gmra.mrb[0].mxu0 %v1703
      %v1742 = vpop.f32.mrb[0].mxu0
      %v1743 = vadd.f32 0.0, %v1742
      %v1744 = vpop.f32.mrb[0].mxu0
      %v1745 = vpop.f32.mrb[0].mxu0
      %v1746 = vpop.f32.mrb[0].mxu0
      %1747 = vdwg.mxu0
      %1748 = vrot.lane.b32.xlu0 %v564, 120
      %v1749 = vpop.permute.xlu0 %1748
      %1750 = vrot.lane.b32.xlu0 %v564, 88
      %v1751 = vpop.permute.xlu0 %1750
      %v1753 = vsel %vm571, %v1749, 0
      %v1756 = vsel %vm571, %v1751, 0
      %1758 = vmatprep.subr.bf16.mxu0 0
      %1759 = vmatpush1.bf16.xpose.msra.mxu0 %v1756
      %1760 = vmatprep.subr.bf16.mxu0 0
      %1761 = vmatpush1.bf16.xpose.msra.mxu0 0
      %1762 = vmatprep.subr.bf16.mxu0 0
      %1763 = vmatpush1.bf16.xpose.msra.mxu0 0
      %1764 = vmatprep.subr.bf16.mxu0 0
      %1765 = vmatpush1.bf16.xpose.msra.mxu0 0
      %1766 = vmatprep.subr.bf16.mxu0 0
      %1767 = vmatpush1.bf16.xpose.msra.mxu0 0
      %1768 = vmatprep.subr.bf16.mxu0 0
      %1769 = vmatpush1.bf16.xpose.msra.mxu0 0
      %1770 = vmatprep.subr.bf16.mxu0 0
      %1771 = vmatpush1.bf16.xpose.msra.mxu0 0
      %1772 = vmatprep.subr.bf16.mxu0 0
      %1773 = vmatpush1.bf16.xpose.msra.mxu0 0
      %1774 = vmatprep.subr.bf16.mxu0 0
      %1775 = vmatpush1.bf16.xpose.msra.mxu0 0
      %1776 = vmatprep.subr.bf16.mxu0 0
      %1777 = vmatpush1.bf16.xpose.msra.mxu0 0
      %1778 = vmatprep.subr.bf16.mxu0 0
      %1779 = vmatpush1.bf16.xpose.msra.mxu0 0
      %1780 = vmatprep.subr.bf16.mxu0 0
      %1781 = vmatpush1.bf16.xpose.msra.mxu0 0
      %1782 = vmatprep.subr.bf16.mxu0 0
      %1783 = vmatpush1.bf16.xpose.msra.mxu0 0
      %1784 = vmatprep.subr.bf16.mxu0 0
      %1785 = vmatpush1.bf16.xpose.msra.mxu0 0
      %1786 = vmatprep.subr.bf16.mxu0 0
      %1787 = vmatpush1.bf16.xpose.msra.mxu0 0
      %1788 = vmatprep.subr.bf16.mxu0 0
      %1789 = vmatpush1.bf16.xpose.msra.mxu0 0
      %1790 = vmatprep.mubr.bf16.mxu0 0
      %1791 = vmatmul.mubr.bf16.gmra.mrb[0].mxu0 %v1753
      %v1792 = vpop.f32.mrb[0].mxu0
      %v1793 = vadd.f32 0.0, %v1792
      %v1794 = vpop.f32.mrb[0].mxu0
      %v1795 = vpop.f32.mrb[0].mxu0
      %v1796 = vpop.f32.mrb[0].mxu0
      %1797 = vdwg.mxu0
      %1798 = vrot.lane.b32.xlu0 %v565, 120
      %v1799 = vpop.permute.xlu0 %1798
      %1800 = vrot.lane.b32.xlu0 %v565, 88
      %v1801 = vpop.permute.xlu0 %1800
      %v1803 = vsel %vm571, %v1799, 0
      %v1806 = vsel %vm571, %v1801, 0
      %1808 = vmatprep.subr.bf16.mxu0 0
      %1809 = vmatpush1.bf16.xpose.msra.mxu0 %v1806
      %1810 = vmatprep.subr.bf16.mxu0 0
      %1811 = vmatpush1.bf16.xpose.msra.mxu0 0
      %1812 = vmatprep.subr.bf16.mxu0 0
      %1813 = vmatpush1.bf16.xpose.msra.mxu0 0
      %1814 = vmatprep.subr.bf16.mxu0 0
      %1815 = vmatpush1.bf16.xpose.msra.mxu0 0
      %1816 = vmatprep.subr.bf16.mxu0 0
      %1817 = vmatpush1.bf16.xpose.msra.mxu0 0
      %1818 = vmatprep.subr.bf16.mxu0 0
      %1819 = vmatpush1.bf16.xpose.msra.mxu0 0
      %1820 = vmatprep.subr.bf16.mxu0 0
      %1821 = vmatpush1.bf16.xpose.msra.mxu0 0
      %1822 = vmatprep.subr.bf16.mxu0 0
      %1823 = vmatpush1.bf16.xpose.msra.mxu0 0
      %1824 = vmatprep.subr.bf16.mxu0 0
      %1825 = vmatpush1.bf16.xpose.msra.mxu0 0
      %1826 = vmatprep.subr.bf16.mxu0 0
      %1827 = vmatpush1.bf16.xpose.msra.mxu0 0
      %1828 = vmatprep.subr.bf16.mxu0 0
      %1829 = vmatpush1.bf16.xpose.msra.mxu0 0
      %1830 = vmatprep.subr.bf16.mxu0 0
      %1831 = vmatpush1.bf16.xpose.msra.mxu0 0
      %1832 = vmatprep.subr.bf16.mxu0 0
      %1833 = vmatpush1.bf16.xpose.msra.mxu0 0
      %1834 = vmatprep.subr.bf16.mxu0 0
      %1835 = vmatpush1.bf16.xpose.msra.mxu0 0
      %1836 = vmatprep.subr.bf16.mxu0 0
      %1837 = vmatpush1.bf16.xpose.msra.mxu0 0
      %1838 = vmatprep.subr.bf16.mxu0 0
      %1839 = vmatpush1.bf16.xpose.msra.mxu0 0
      %1840 = vmatprep.mubr.bf16.mxu0 0
      %1841 = vmatmul.mubr.bf16.gmra.mrb[0].mxu0 %v1803
      %v1842 = vpop.f32.mrb[0].mxu0
      %v1843 = vadd.f32 0.0, %v1842
      %v1844 = vpop.f32.mrb[0].mxu0
      %v1845 = vpop.f32.mrb[0].mxu0
      %v1846 = vpop.f32.mrb[0].mxu0
      %1847 = vdwg.mxu0
      %1848 = vrot.lane.b32.xlu0 %v566, 120
      %v1849 = vpop.permute.xlu0 %1848
      %1850 = vrot.lane.b32.xlu0 %v566, 88
      %v1851 = vpop.permute.xlu0 %1850
      %v1853 = vsel %vm571, %v1849, 0
      %v1856 = vsel %vm571, %v1851, 0
      %1858 = vmatprep.subr.bf16.mxu0 0
      %1859 = vmatpush1.bf16.xpose.msra.mxu0 %v1856
      %1860 = vmatprep.subr.bf16.mxu0 0
      %1861 = vmatpush1.bf16.xpose.msra.mxu0 0
      %1862 = vmatprep.subr.bf16.mxu0 0
      %1863 = vmatpush1.bf16.xpose.msra.mxu0 0
      %1864 = vmatprep.subr.bf16.mxu0 0
      %1865 = vmatpush1.bf16.xpose.msra.mxu0 0
      %1866 = vmatprep.subr.bf16.mxu0 0
      %1867 = vmatpush1.bf16.xpose.msra.mxu0 0
      %1868 = vmatprep.subr.bf16.mxu0 0
      %1869 = vmatpush1.bf16.xpose.msra.mxu0 0
      %1870 = vmatprep.subr.bf16.mxu0 0
      %1871 = vmatpush1.bf16.xpose.msra.mxu0 0
      %1872 = vmatprep.subr.bf16.mxu0 0
      %1873 = vmatpush1.bf16.xpose.msra.mxu0 0
      %1874 = vmatprep.subr.bf16.mxu0 0
      %1875 = vmatpush1.bf16.xpose.msra.mxu0 0
      %1876 = vmatprep.subr.bf16.mxu0 0
      %1877 = vmatpush1.bf16.xpose.msra.mxu0 0
      %1878 = vmatprep.subr.bf16.mxu0 0
      %1879 = vmatpush1.bf16.xpose.msra.mxu0 0
      %1880 = vmatprep.subr.bf16.mxu0 0
      %1881 = vmatpush1.bf16.xpose.msra.mxu0 0
      %1882 = vmatprep.subr.bf16.mxu0 0
      %1883 = vmatpush1.bf16.xpose.msra.mxu0 0
      %1884 = vmatprep.subr.bf16.mxu0 0
      %1885 = vmatpush1.bf16.xpose.msra.mxu0 0
      %1886 = vmatprep.subr.bf16.mxu0 0
      %1887 = vmatpush1.bf16.xpose.msra.mxu0 0
      %1888 = vmatprep.subr.bf16.mxu0 0
      %1889 = vmatpush1.bf16.xpose.msra.mxu0 0
      %1890 = vmatprep.mubr.bf16.mxu0 0
      %1891 = vmatmul.mubr.bf16.gmra.mrb[0].mxu0 %v1853
      %v1892 = vpop.f32.mrb[0].mxu0
      %v1893 = vadd.f32 0.0, %v1892
      %v1894 = vpop.f32.mrb[0].mxu0
      %v1895 = vpop.f32.mrb[0].mxu0
      %v1896 = vpop.f32.mrb[0].mxu0
      %1897 = vdwg.mxu0
      %1898 = vrot.lane.b32.xlu0 %v567, 120
      %v1899 = vpop.permute.xlu0 %1898
      %1900 = vrot.lane.b32.xlu0 %v567, 88
      %v1901 = vpop.permute.xlu0 %1900
      %v1903 = vsel %vm571, %v1899, 0
      %v1906 = vsel %vm571, %v1901, 0
      %1908 = vmatprep.subr.bf16.mxu0 0
      %1909 = vmatpush1.bf16.xpose.msra.mxu0 %v1906
      %1910 = vmatprep.subr.bf16.mxu0 0
      %1911 = vmatpush1.bf16.xpose.msra.mxu0 0
      %1912 = vmatprep.subr.bf16.mxu0 0
      %1913 = vmatpush1.bf16.xpose.msra.mxu0 0
      %1914 = vmatprep.subr.bf16.mxu0 0
      %1915 = vmatpush1.bf16.xpose.msra.mxu0 0
      %1916 = vmatprep.subr.bf16.mxu0 0
      %1917 = vmatpush1.bf16.xpose.msra.mxu0 0
      %1918 = vmatprep.subr.bf16.mxu0 0
      %1919 = vmatpush1.bf16.xpose.msra.mxu0 0
      %1920 = vmatprep.subr.bf16.mxu0 0
      %1921 = vmatpush1.bf16.xpose.msra.mxu0 0
      %1922 = vmatprep.subr.bf16.mxu0 0
      %1923 = vmatpush1.bf16.xpose.msra.mxu0 0
      %1924 = vmatprep.subr.bf16.mxu0 0
      %1925 = vmatpush1.bf16.xpose.msra.mxu0 0
      %1926 = vmatprep.subr.bf16.mxu0 0
      %1927 = vmatpush1.bf16.xpose.msra.mxu0 0
      %1928 = vmatprep.subr.bf16.mxu0 0
      %1929 = vmatpush1.bf16.xpose.msra.mxu0 0
      %1930 = vmatprep.subr.bf16.mxu0 0
      %1931 = vmatpush1.bf16.xpose.msra.mxu0 0
      %1932 = vmatprep.subr.bf16.mxu0 0
      %1933 = vmatpush1.bf16.xpose.msra.mxu0 0
      %1934 = vmatprep.subr.bf16.mxu0 0
      %1935 = vmatpush1.bf16.xpose.msra.mxu0 0
      %1936 = vmatprep.subr.bf16.mxu0 0
      %1937 = vmatpush1.bf16.xpose.msra.mxu0 0
      %1938 = vmatprep.subr.bf16.mxu0 0
      %1939 = vmatpush1.bf16.xpose.msra.mxu0 0
      %1940 = vmatprep.mubr.bf16.mxu0 0
      %1941 = vmatmul.mubr.bf16.gmra.mrb[0].mxu0 %v1903
      %v1942 = vpop.f32.mrb[0].mxu0
      %v1943 = vadd.f32 0.0, %v1942
      %v1944 = vpop.f32.mrb[0].mxu0
      %v1945 = vpop.f32.mrb[0].mxu0
      %v1946 = vpop.f32.mrb[0].mxu0
      %1947 = vdwg.mxu0
      %v1948 = vmul.f32 %v1593, 0.35355338
      %v1949 = vmul.f32 %v1643, 0.35355338
      %v1950 = vmul.f32 %v1693, 0.35355338
      %v1951 = vmul.f32 %v1743, 0.35355338
      %v1952 = vmul.f32 %v1793, 0.35355338
      %v1953 = vmul.f32 %v1843, 0.35355338
      %v1954 = vmul.f32 %v1893, 0.35355338
      %v1955 = vmul.f32 %v1943, 0.35355338
      %v1956 = vsel %vm969, %v1948, -inf
      %1957 = vmax.xlane.f32.xlu0 %v1956
      %v1958 = vpop.xlane.xlu0 %1957
      %v1959 = vsel %vm969, %v1949, -inf
      %1960 = vmax.xlane.f32.xlu0 %v1959
      %v1961 = vpop.xlane.xlu0 %1960
      %v1962 = vsel %vm969, %v1950, -inf
      %1963 = vmax.xlane.f32.xlu0 %v1962
      %v1964 = vpop.xlane.xlu0 %1963
      %v1965 = vsel %vm969, %v1951, -inf
      %1966 = vmax.xlane.f32.xlu0 %v1965
      %v1967 = vpop.xlane.xlu0 %1966
      %v1968 = vsel %vm969, %v1952, -inf
      %1969 = vmax.xlane.f32.xlu0 %v1968
      %v1970 = vpop.xlane.xlu0 %1969
      %v1971 = vsel %vm969, %v1953, -inf
      %1972 = vmax.xlane.f32.xlu0 %v1971
      %v1973 = vpop.xlane.xlu0 %1972
      %v1974 = vsel %vm969, %v1954, -inf
      %1975 = vmax.xlane.f32.xlu0 %v1974
      %v1976 = vpop.xlane.xlu0 %1975
      %v1977 = vsel %vm969, %v1955, -inf
      %1978 = vmax.xlane.f32.xlu0 %v1977
      %v1979 = vpop.xlane.xlu0 %1978
      %v1980 = vsub.f32 %v1948, %v1958
      %v1981 = vsub.f32 %v1949, %v1961
      %v1982 = vsub.f32 %v1950, %v1964
      %v1983 = vsub.f32 %v1951, %v1967
      %v1984 = vsub.f32 %v1952, %v1970
      %v1985 = vsub.f32 %v1953, %v1973
      %v1986 = vsub.f32 %v1954, %v1976
      %v1987 = vsub.f32 %v1955, %v1979
      %v1988 = vmul.f32 %v1980, 1.442695
      %v1989 = vpow.pop %v1988
      %v1990 = vmul.f32 %v1981, 1.442695
      %v1991 = vpow.pop %v1990
      %v1992 = vmul.f32 %v1982, 1.442695
      %v1993 = vpow.pop %v1992
      %v1994 = vmul.f32 %v1983, 1.442695
      %v1995 = vpow.pop %v1994
      %v1996 = vmul.f32 %v1984, 1.442695
      %v1997 = vpow.pop %v1996
      %v1998 = vmul.f32 %v1985, 1.442695
      %v1999 = vpow.pop %v1998
      %v2000 = vmul.f32 %v1986, 1.442695
      %v2001 = vpow.pop %v2000
      %v2002 = vmul.f32 %v1987, 1.442695
      %v2003 = vpow.pop %v2002
      %v2004 = vsel %vm969, %v1989, 0.0
      %2005 = vadd.xlane.f32.xlu0 %v2004
      %v2006 = vpop.xlane.xlu0 %2005
      %v2007 = vsel %vm969, %v1991, 0.0
      %2008 = vadd.xlane.f32.xlu0 %v2007
      %v2009 = vpop.xlane.xlu0 %2008
      %v2010 = vsel %vm969, %v1993, 0.0
      %2011 = vadd.xlane.f32.xlu0 %v2010
      %v2012 = vpop.xlane.xlu0 %2011
      %v2013 = vsel %vm969, %v1995, 0.0
      %2014 = vadd.xlane.f32.xlu0 %v2013
      %v2015 = vpop.xlane.xlu0 %2014
      %v2016 = vsel %vm969, %v1997, 0.0
      %2017 = vadd.xlane.f32.xlu0 %v2016
      %v2018 = vpop.xlane.xlu0 %2017
      %v2019 = vsel %vm969, %v1999, 0.0
      %2020 = vadd.xlane.f32.xlu0 %v2019
      %v2021 = vpop.xlane.xlu0 %2020
      %v2022 = vsel %vm969, %v2001, 0.0
      %2023 = vadd.xlane.f32.xlu0 %v2022
      %v2024 = vpop.xlane.xlu0 %2023
      %v2025 = vsel %vm969, %v2003, 0.0
      %2026 = vadd.xlane.f32.xlu0 %v2025
      %v2027 = vpop.xlane.xlu0 %2026
      %v2028 = vrcp.pop %v2006
      %v2029 = vrcp.pop %v2009
      %v2030 = vrcp.pop %v2012
      %v2031 = vrcp.pop %v2015
      %v2032 = vrcp.pop %v2018
      %v2033 = vrcp.pop %v2021
      %v2034 = vrcp.pop %v2024
      %v2035 = vrcp.pop %v2027
      %v2036 = vmul.f32 %v1989, %v2028
      %v2037 = vmul.f32 %v1991, %v2029
      %v2038 = vmul.f32 %v1993, %v2030
      %v2039 = vmul.f32 %v1995, %v2031
      %v2040 = vmul.f32 %v1997, %v2032
      %v2041 = vmul.f32 %v1999, %v2033
      %v2042 = vmul.f32 %v2001, %v2034
      %v2043 = vmul.f32 %v2003, %v2035
      %v2044 = vpack.c.bf16 %v2036, %v2036
      %v2045 = vpack.c.bf16 %v2037, %v2037
      %v2046 = vpack.c.bf16 %v2038, %v2038
      %v2047 = vpack.c.bf16 %v2039, %v2039
      %v2048 = vpack.c.bf16 %v2040, %v2040
      %v2049 = vpack.c.bf16 %v2041, %v2041
      %v2050 = vpack.c.bf16 %v2042, %v2042
      %v2051 = vpack.c.bf16 %v2043, %v2043
      %2052 = vrot.lane.b32.xlu0 %v560, 56
      %v2053 = vpop.permute.xlu0 %2052
      %v2055 = vsel %vm1068, %v2044, 0
      %v2058 = vsel %vm1072, %v2053, 0
      %2060 = vmatprep.subr.bf16.mxu0 0
      %2061 = vmatpush1.bf16.msra.mxu0 %v2058
      %2062 = vmatprep.subr.bf16.mxu0 0
      %2063 = vmatpush1.bf16.msra.mxu0 0
      %2064 = vmatprep.subr.bf16.mxu0 0
      %2065 = vmatpush1.bf16.msra.mxu0 0
      %2066 = vmatprep.subr.bf16.mxu0 0
      %2067 = vmatpush1.bf16.msra.mxu0 0
      %2068 = vmatprep.subr.bf16.mxu0 0
      %2069 = vmatpush1.bf16.msra.mxu0 0
      %2070 = vmatprep.subr.bf16.mxu0 0
      %2071 = vmatpush1.bf16.msra.mxu0 0
      %2072 = vmatprep.subr.bf16.mxu0 0
      %2073 = vmatpush1.bf16.msra.mxu0 0
      %2074 = vmatprep.subr.bf16.mxu0 0
      %2075 = vmatpush1.bf16.msra.mxu0 0
      %2076 = vmatprep.subr.bf16.mxu0 0
      %2077 = vmatpush1.bf16.msra.mxu0 0
      %2078 = vmatprep.subr.bf16.mxu0 0
      %2079 = vmatpush1.bf16.msra.mxu0 0
      %2080 = vmatprep.subr.bf16.mxu0 0
      %2081 = vmatpush1.bf16.msra.mxu0 0
      %2082 = vmatprep.subr.bf16.mxu0 0
      %2083 = vmatpush1.bf16.msra.mxu0 0
      %2084 = vmatprep.subr.bf16.mxu0 0
      %2085 = vmatpush1.bf16.msra.mxu0 0
      %2086 = vmatprep.subr.bf16.mxu0 0
      %2087 = vmatpush1.bf16.msra.mxu0 0
      %2088 = vmatprep.subr.bf16.mxu0 0
      %2089 = vmatpush1.bf16.msra.mxu0 0
      %2090 = vmatprep.subr.bf16.mxu0 0
      %2091 = vmatpush1.bf16.msra.mxu0 0
      %2092 = vmatprep.mubr.bf16.mxu0 0
      %2093 = vmatmul.mubr.bf16.gmra.mrb[0].mxu0 %v2055
      %v2094 = vpop.f32.mrb[0].mxu0
      %v2095 = vadd.f32 0.0, %v2094
      %v2096 = vpop.f32.mrb[0].mxu0
      %v2097 = vpop.f32.mrb[0].mxu0
      %v2098 = vpop.f32.mrb[0].mxu0
      %2099 = vdwg.mxu0
      %2100 = vrot.lane.b32.xlu0 %v561, 56
      %v2101 = vpop.permute.xlu0 %2100
      %v2103 = vsel %vm1068, %v2045, 0
      %v2106 = vsel %vm1072, %v2101, 0
      %2108 = vmatprep.subr.bf16.mxu0 0
      %2109 = vmatpush1.bf16.msra.mxu0 %v2106
      %2110 = vmatprep.subr.bf16.mxu0 0
      %2111 = vmatpush1.bf16.msra.mxu0 0
      %2112 = vmatprep.subr.bf16.mxu0 0
      %2113 = vmatpush1.bf16.msra.mxu0 0
      %2114 = vmatprep.subr.bf16.mxu0 0
      %2115 = vmatpush1.bf16.msra.mxu0 0
      %2116 = vmatprep.subr.bf16.mxu0 0
      %2117 = vmatpush1.bf16.msra.mxu0 0
      %2118 = vmatprep.subr.bf16.mxu0 0
      %2119 = vmatpush1.bf16.msra.mxu0 0
      %2120 = vmatprep.subr.bf16.mxu0 0
      %2121 = vmatpush1.bf16.msra.mxu0 0
      %2122 = vmatprep.subr.bf16.mxu0 0
      %2123 = vmatpush1.bf16.msra.mxu0 0
      %2124 = vmatprep.subr.bf16.mxu0 0
      %2125 = vmatpush1.bf16.msra.mxu0 0
      %2126 = vmatprep.subr.bf16.mxu0 0
      %2127 = vmatpush1.bf16.msra.mxu0 0
      %2128 = vmatprep.subr.bf16.mxu0 0
      %2129 = vmatpush1.bf16.msra.mxu0 0
      %2130 = vmatprep.subr.bf16.mxu0 0
      %2131 = vmatpush1.bf16.msra.mxu0 0
      %2132 = vmatprep.subr.bf16.mxu0 0
      %2133 = vmatpush1.bf16.msra.mxu0 0
      %2134 = vmatprep.subr.bf16.mxu0 0
      %2135 = vmatpush1.bf16.msra.mxu0 0
      %2136 = vmatprep.subr.bf16.mxu0 0
      %2137 = vmatpush1.bf16.msra.mxu0 0
      %2138 = vmatprep.subr.bf16.mxu0 0
      %2139 = vmatpush1.bf16.msra.mxu0 0
      %2140 = vmatprep.mubr.bf16.mxu0 0
      %2141 = vmatmul.mubr.bf16.gmra.mrb[0].mxu0 %v2103
      %v2142 = vpop.f32.mrb[0].mxu0
      %v2143 = vadd.f32 0.0, %v2142
      %v2144 = vpop.f32.mrb[0].mxu0
      %v2145 = vpop.f32.mrb[0].mxu0
      %v2146 = vpop.f32.mrb[0].mxu0
      %2147 = vdwg.mxu0
      %2148 = vrot.lane.b32.xlu0 %v562, 56
      %v2149 = vpop.permute.xlu0 %2148
      %v2151 = vsel %vm1068, %v2046, 0
      %v2154 = vsel %vm1072, %v2149, 0
      %2156 = vmatprep.subr.bf16.mxu0 0
      %2157 = vmatpush1.bf16.msra.mxu0 %v2154
      %2158 = vmatprep.subr.bf16.mxu0 0
      %2159 = vmatpush1.bf16.msra.mxu0 0
      %2160 = vmatprep.subr.bf16.mxu0 0
      %2161 = vmatpush1.bf16.msra.mxu0 0
      %2162 = vmatprep.subr.bf16.mxu0 0
      %2163 = vmatpush1.bf16.msra.mxu0 0
      %2164 = vmatprep.subr.bf16.mxu0 0
      %2165 = vmatpush1.bf16.msra.mxu0 0
      %2166 = vmatprep.subr.bf16.mxu0 0
      %2167 = vmatpush1.bf16.msra.mxu0 0
      %2168 = vmatprep.subr.bf16.mxu0 0
      %2169 = vmatpush1.bf16.msra.mxu0 0
      %2170 = vmatprep.subr.bf16.mxu0 0
      %2171 = vmatpush1.bf16.msra.mxu0 0
      %2172 = vmatprep.subr.bf16.mxu0 0
      %2173 = vmatpush1.bf16.msra.mxu0 0
      %2174 = vmatprep.subr.bf16.mxu0 0
      %2175 = vmatpush1.bf16.msra.mxu0 0
      %2176 = vmatprep.subr.bf16.mxu0 0
      %2177 = vmatpush1.bf16.msra.mxu0 0
      %2178 = vmatprep.subr.bf16.mxu0 0
      %2179 = vmatpush1.bf16.msra.mxu0 0
      %2180 = vmatprep.subr.bf16.mxu0 0
      %2181 = vmatpush1.bf16.msra.mxu0 0
      %2182 = vmatprep.subr.bf16.mxu0 0
      %2183 = vmatpush1.bf16.msra.mxu0 0
      %2184 = vmatprep.subr.bf16.mxu0 0
      %2185 = vmatpush1.bf16.msra.mxu0 0
      %2186 = vmatprep.subr.bf16.mxu0 0
      %2187 = vmatpush1.bf16.msra.mxu0 0
      %2188 = vmatprep.mubr.bf16.mxu0 0
      %2189 = vmatmul.mubr.bf16.gmra.mrb[0].mxu0 %v2151
      %v2190 = vpop.f32.mrb[0].mxu0
      %v2191 = vadd.f32 0.0, %v2190
      %v2192 = vpop.f32.mrb[0].mxu0
      %v2193 = vpop.f32.mrb[0].mxu0
      %v2194 = vpop.f32.mrb[0].mxu0
      %2195 = vdwg.mxu0
      %2196 = vrot.lane.b32.xlu0 %v563, 56
      %v2197 = vpop.permute.xlu0 %2196
      %v2199 = vsel %vm1068, %v2047, 0
      %v2202 = vsel %vm1072, %v2197, 0
      %2204 = vmatprep.subr.bf16.mxu0 0
      %2205 = vmatpush1.bf16.msra.mxu0 %v2202
      %2206 = vmatprep.subr.bf16.mxu0 0
      %2207 = vmatpush1.bf16.msra.mxu0 0
      %2208 = vmatprep.subr.bf16.mxu0 0
      %2209 = vmatpush1.bf16.msra.mxu0 0
      %2210 = vmatprep.subr.bf16.mxu0 0
      %2211 = vmatpush1.bf16.msra.mxu0 0
      %2212 = vmatprep.subr.bf16.mxu0 0
      %2213 = vmatpush1.bf16.msra.mxu0 0
      %2214 = vmatprep.subr.bf16.mxu0 0
      %2215 = vmatpush1.bf16.msra.mxu0 0
      %2216 = vmatprep.subr.bf16.mxu0 0
      %2217 = vmatpush1.bf16.msra.mxu0 0
      %2218 = vmatprep.subr.bf16.mxu0 0
      %2219 = vmatpush1.bf16.msra.mxu0 0
      %2220 = vmatprep.subr.bf16.mxu0 0
      %2221 = vmatpush1.bf16.msra.mxu0 0
      %2222 = vmatprep.subr.bf16.mxu0 0
      %2223 = vmatpush1.bf16.msra.mxu0 0
      %2224 = vmatprep.subr.bf16.mxu0 0
      %2225 = vmatpush1.bf16.msra.mxu0 0
      %2226 = vmatprep.subr.bf16.mxu0 0
      %2227 = vmatpush1.bf16.msra.mxu0 0
      %2228 = vmatprep.subr.bf16.mxu0 0
      %2229 = vmatpush1.bf16.msra.mxu0 0
      %2230 = vmatprep.subr.bf16.mxu0 0
      %2231 = vmatpush1.bf16.msra.mxu0 0
      %2232 = vmatprep.subr.bf16.mxu0 0
      %2233 = vmatpush1.bf16.msra.mxu0 0
      %2234 = vmatprep.subr.bf16.mxu0 0
      %2235 = vmatpush1.bf16.msra.mxu0 0
      %2236 = vmatprep.mubr.bf16.mxu0 0
      %2237 = vmatmul.mubr.bf16.gmra.mrb[0].mxu0 %v2199
      %v2238 = vpop.f32.mrb[0].mxu0
      %v2239 = vadd.f32 0.0, %v2238
      %v2240 = vpop.f32.mrb[0].mxu0
      %v2241 = vpop.f32.mrb[0].mxu0
      %v2242 = vpop.f32.mrb[0].mxu0
      %2243 = vdwg.mxu0
      %2244 = vrot.lane.b32.xlu0 %v564, 56
      %v2245 = vpop.permute.xlu0 %2244
      %v2247 = vsel %vm1068, %v2048, 0
      %v2250 = vsel %vm1072, %v2245, 0
      %2252 = vmatprep.subr.bf16.mxu0 0
      %2253 = vmatpush1.bf16.msra.mxu0 %v2250
      %2254 = vmatprep.subr.bf16.mxu0 0
      %2255 = vmatpush1.bf16.msra.mxu0 0
      %2256 = vmatprep.subr.bf16.mxu0 0
      %2257 = vmatpush1.bf16.msra.mxu0 0
      %2258 = vmatprep.subr.bf16.mxu0 0
      %2259 = vmatpush1.bf16.msra.mxu0 0
      %2260 = vmatprep.subr.bf16.mxu0 0
      %2261 = vmatpush1.bf16.msra.mxu0 0
      %2262 = vmatprep.subr.bf16.mxu0 0
      %2263 = vmatpush1.bf16.msra.mxu0 0
      %2264 = vmatprep.subr.bf16.mxu0 0
      %2265 = vmatpush1.bf16.msra.mxu0 0
      %2266 = vmatprep.subr.bf16.mxu0 0
      %2267 = vmatpush1.bf16.msra.mxu0 0
      %2268 = vmatprep.subr.bf16.mxu0 0
      %2269 = vmatpush1.bf16.msra.mxu0 0
      %2270 = vmatprep.subr.bf16.mxu0 0
      %2271 = vmatpush1.bf16.msra.mxu0 0
      %2272 = vmatprep.subr.bf16.mxu0 0
      %2273 = vmatpush1.bf16.msra.mxu0 0
      %2274 = vmatprep.subr.bf16.mxu0 0
      %2275 = vmatpush1.bf16.msra.mxu0 0
      %2276 = vmatprep.subr.bf16.mxu0 0
      %2277 = vmatpush1.bf16.msra.mxu0 0
      %2278 = vmatprep.subr.bf16.mxu0 0
      %2279 = vmatpush1.bf16.msra.mxu0 0
      %2280 = vmatprep.subr.bf16.mxu0 0
      %2281 = vmatpush1.bf16.msra.mxu0 0
      %2282 = vmatprep.subr.bf16.mxu0 0
      %2283 = vmatpush1.bf16.msra.mxu0 0
      %2284 = vmatprep.mubr.bf16.mxu0 0
      %2285 = vmatmul.mubr.bf16.gmra.mrb[0].mxu0 %v2247
      %v2286 = vpop.f32.mrb[0].mxu0
      %v2287 = vadd.f32 0.0, %v2286
      %v2288 = vpop.f32.mrb[0].mxu0
      %v2289 = vpop.f32.mrb[0].mxu0
      %v2290 = vpop.f32.mrb[0].mxu0
      %2291 = vdwg.mxu0
      %2292 = vrot.lane.b32.xlu0 %v565, 56
      %v2293 = vpop.permute.xlu0 %2292
      %v2295 = vsel %vm1068, %v2049, 0
      %v2298 = vsel %vm1072, %v2293, 0
      %2300 = vmatprep.subr.bf16.mxu0 0
      %2301 = vmatpush1.bf16.msra.mxu0 %v2298
      %2302 = vmatprep.subr.bf16.mxu0 0
      %2303 = vmatpush1.bf16.msra.mxu0 0
      %2304 = vmatprep.subr.bf16.mxu0 0
      %2305 = vmatpush1.bf16.msra.mxu0 0
      %2306 = vmatprep.subr.bf16.mxu0 0
      %2307 = vmatpush1.bf16.msra.mxu0 0
      %2308 = vmatprep.subr.bf16.mxu0 0
      %2309 = vmatpush1.bf16.msra.mxu0 0
      %2310 = vmatprep.subr.bf16.mxu0 0
      %2311 = vmatpush1.bf16.msra.mxu0 0
      %2312 = vmatprep.subr.bf16.mxu0 0
      %2313 = vmatpush1.bf16.msra.mxu0 0
      %2314 = vmatprep.subr.bf16.mxu0 0
      %2315 = vmatpush1.bf16.msra.mxu0 0
      %2316 = vmatprep.subr.bf16.mxu0 0
      %2317 = vmatpush1.bf16.msra.mxu0 0
      %2318 = vmatprep.subr.bf16.mxu0 0
      %2319 = vmatpush1.bf16.msra.mxu0 0
      %2320 = vmatprep.subr.bf16.mxu0 0
      %2321 = vmatpush1.bf16.msra.mxu0 0
      %2322 = vmatprep.subr.bf16.mxu0 0
      %2323 = vmatpush1.bf16.msra.mxu0 0
      %2324 = vmatprep.subr.bf16.mxu0 0
      %2325 = vmatpush1.bf16.msra.mxu0 0
      %2326 = vmatprep.subr.bf16.mxu0 0
      %2327 = vmatpush1.bf16.msra.mxu0 0
      %2328 = vmatprep.subr.bf16.mxu0 0
      %2329 = vmatpush1.bf16.msra.mxu0 0
      %2330 = vmatprep.subr.bf16.mxu0 0
      %2331 = vmatpush1.bf16.msra.mxu0 0
      %2332 = vmatprep.mubr.bf16.mxu0 0
      %2333 = vmatmul.mubr.bf16.gmra.mrb[0].mxu0 %v2295
      %v2334 = vpop.f32.mrb[0].mxu0
      %v2335 = vadd.f32 0.0, %v2334
      %v2336 = vpop.f32.mrb[0].mxu0
      %v2337 = vpop.f32.mrb[0].mxu0
      %v2338 = vpop.f32.mrb[0].mxu0
      %2339 = vdwg.mxu0
      %2340 = vrot.lane.b32.xlu0 %v566, 56
      %v2341 = vpop.permute.xlu0 %2340
      %v2343 = vsel %vm1068, %v2050, 0
      %v2346 = vsel %vm1072, %v2341, 0
      %2348 = vmatprep.subr.bf16.mxu0 0
      %2349 = vmatpush1.bf16.msra.mxu0 %v2346
      %2350 = vmatprep.subr.bf16.mxu0 0
      %2351 = vmatpush1.bf16.msra.mxu0 0
      %2352 = vmatprep.subr.bf16.mxu0 0
      %2353 = vmatpush1.bf16.msra.mxu0 0
      %2354 = vmatprep.subr.bf16.mxu0 0
      %2355 = vmatpush1.bf16.msra.mxu0 0
      %2356 = vmatprep.subr.bf16.mxu0 0
      %2357 = vmatpush1.bf16.msra.mxu0 0
      %2358 = vmatprep.subr.bf16.mxu0 0
      %2359 = vmatpush1.bf16.msra.mxu0 0
      %2360 = vmatprep.subr.bf16.mxu0 0
      %2361 = vmatpush1.bf16.msra.mxu0 0
      %2362 = vmatprep.subr.bf16.mxu0 0
      %2363 = vmatpush1.bf16.msra.mxu0 0
      %2364 = vmatprep.subr.bf16.mxu0 0
      %2365 = vmatpush1.bf16.msra.mxu0 0
      %2366 = vmatprep.subr.bf16.mxu0 0
      %2367 = vmatpush1.bf16.msra.mxu0 0
      %2368 = vmatprep.subr.bf16.mxu0 0
      %2369 = vmatpush1.bf16.msra.mxu0 0
      %2370 = vmatprep.subr.bf16.mxu0 0
      %2371 = vmatpush1.bf16.msra.mxu0 0
      %2372 = vmatprep.subr.bf16.mxu0 0
      %2373 = vmatpush1.bf16.msra.mxu0 0
      %2374 = vmatprep.subr.bf16.mxu0 0
      %2375 = vmatpush1.bf16.msra.mxu0 0
      %2376 = vmatprep.subr.bf16.mxu0 0
      %2377 = vmatpush1.bf16.msra.mxu0 0
      %2378 = vmatprep.subr.bf16.mxu0 0
      %2379 = vmatpush1.bf16.msra.mxu0 0
      %2380 = vmatprep.mubr.bf16.mxu0 0
      %2381 = vmatmul.mubr.bf16.gmra.mrb[0].mxu0 %v2343
      %v2382 = vpop.f32.mrb[0].mxu0
      %v2383 = vadd.f32 0.0, %v2382
      %v2384 = vpop.f32.mrb[0].mxu0
      %v2385 = vpop.f32.mrb[0].mxu0
      %v2386 = vpop.f32.mrb[0].mxu0
      %2387 = vdwg.mxu0
      %2388 = vrot.lane.b32.xlu0 %v567, 56
      %v2389 = vpop.permute.xlu0 %2388
      %v2391 = vsel %vm1068, %v2051, 0
      %v2394 = vsel %vm1072, %v2389, 0
      %2396 = vmatprep.subr.bf16.mxu0 0
      %2397 = vmatpush1.bf16.msra.mxu0 %v2394
      %2398 = vmatprep.subr.bf16.mxu0 0
      %2399 = vmatpush1.bf16.msra.mxu0 0
      %2400 = vmatprep.subr.bf16.mxu0 0
      %2401 = vmatpush1.bf16.msra.mxu0 0
      %2402 = vmatprep.subr.bf16.mxu0 0
      %2403 = vmatpush1.bf16.msra.mxu0 0
      %2404 = vmatprep.subr.bf16.mxu0 0
      %2405 = vmatpush1.bf16.msra.mxu0 0
      %2406 = vmatprep.subr.bf16.mxu0 0
      %2407 = vmatpush1.bf16.msra.mxu0 0
      %2408 = vmatprep.subr.bf16.mxu0 0
      %2409 = vmatpush1.bf16.msra.mxu0 0
      %2410 = vmatprep.subr.bf16.mxu0 0
      %2411 = vmatpush1.bf16.msra.mxu0 0
      %2412 = vmatprep.subr.bf16.mxu0 0
      %2413 = vmatpush1.bf16.msra.mxu0 0
      %2414 = vmatprep.subr.bf16.mxu0 0
      %2415 = vmatpush1.bf16.msra.mxu0 0
      %2416 = vmatprep.subr.bf16.mxu0 0
      %2417 = vmatpush1.bf16.msra.mxu0 0
      %2418 = vmatprep.subr.bf16.mxu0 0
      %2419 = vmatpush1.bf16.msra.mxu0 0
      %2420 = vmatprep.subr.bf16.mxu0 0
      %2421 = vmatpush1.bf16.msra.mxu0 0
      %2422 = vmatprep.subr.bf16.mxu0 0
      %2423 = vmatpush1.bf16.msra.mxu0 0
      %2424 = vmatprep.subr.bf16.mxu0 0
      %2425 = vmatpush1.bf16.msra.mxu0 0
      %2426 = vmatprep.subr.bf16.mxu0 0
      %2427 = vmatpush1.bf16.msra.mxu0 0
      %2428 = vmatprep.mubr.bf16.mxu0 0
      %2429 = vmatmul.mubr.bf16.gmra.mrb[0].mxu0 %v2391
      %v2430 = vpop.f32.mrb[0].mxu0
      %v2431 = vadd.f32 0.0, %v2430
      %v2432 = vpop.f32.mrb[0].mxu0
      %v2433 = vpop.f32.mrb[0].mxu0
      %v2434 = vpop.f32.mrb[0].mxu0
      %2435 = vdwg.mxu0
      %v2444 = vcombine.low %v2095, %v2143
      %v2445 = vcombine.low %v2191, %v2239
      %v2447 = vunpack.c.l.s4 1983009808
      %v2448 = vunpack.c.0.s8 %v2447
      %v2449 = vlaneseq
      %v2450 = vshrl.u32 %v2449, 7
      %v2451 = vsub.s32 %v2448, %v2450
      %v2452 = vrot.slane %v2444, %v2451
      %v2454 = vunpack.c.l.s4 1983009808
      %v2455 = vunpack.c.0.s8 %v2454
      %v2456 = vlaneseq
      %v2457 = vshrl.u32 %v2456, 7
      %v2458 = vsub.s32 %v2455, %v2457
      %v2459 = vrot.slane %v2445, %v2458
      %v2460 = vcombine.low %v2452, %v2459
      %v2461 = vcombine.low %v2287, %v2335
      %v2462 = vcombine.low %v2383, %v2431
      %v2464 = vunpack.c.l.s4 1983009808
      %v2465 = vunpack.c.0.s8 %v2464
      %v2466 = vlaneseq
      %v2467 = vshrl.u32 %v2466, 7
      %v2468 = vsub.s32 %v2465, %v2467
      %v2469 = vrot.slane %v2461, %v2468
      %v2471 = vunpack.c.l.s4 1983009808
      %v2472 = vunpack.c.0.s8 %v2471
      %v2473 = vlaneseq
      %v2474 = vshrl.u32 %v2473, 7
      %v2475 = vsub.s32 %v2472, %v2474
      %v2476 = vrot.slane %v2462, %v2475
      %v2477 = vcombine.low %v2469, %v2476
      %v2480 = vpack.c.bf16 %v2477, %v2460
      %v2481 = vld [vmem:[%s5 + $0x4] sm:$0xf]
      %v2483 = vsel %vm571, %v2480, 0
      %v2486 = vsel %vm1501, %v2481, 0
      %2488 = vmatprep.subr.bf16.mxu0 0
      %2489 = vmatpush1.bf16.msra.mxu0 %v2486
      %2490 = vmatprep.subr.bf16.mxu0 0
      %2491 = vmatpush1.bf16.msra.mxu0 0
      %2492 = vmatprep.subr.bf16.mxu0 0
      %2493 = vmatpush1.bf16.msra.mxu0 0
      %2494 = vmatprep.subr.bf16.mxu0 0
      %2495 = vmatpush1.bf16.msra.mxu0 0
      %2496 = vmatprep.subr.bf16.mxu0 0
      %2497 = vmatpush1.bf16.msra.mxu0 0
      %2498 = vmatprep.subr.bf16.mxu0 0
      %2499 = vmatpush1.bf16.msra.mxu0 0
      %2500 = vmatprep.subr.bf16.mxu0 0
      %2501 = vmatpush1.bf16.msra.mxu0 0
      %2502 = vmatprep.subr.bf16.mxu0 0
      %2503 = vmatpush1.bf16.msra.mxu0 0
      %2504 = vmatprep.subr.bf16.mxu0 0
      %2505 = vmatpush1.bf16.msra.mxu0 0
      %2506 = vmatprep.subr.bf16.mxu0 0
      %2507 = vmatpush1.bf16.msra.mxu0 0
      %2508 = vmatprep.subr.bf16.mxu0 0
      %2509 = vmatpush1.bf16.msra.mxu0 0
      %2510 = vmatprep.subr.bf16.mxu0 0
      %2511 = vmatpush1.bf16.msra.mxu0 0
      %2512 = vmatprep.subr.bf16.mxu0 0
      %2513 = vmatpush1.bf16.msra.mxu0 0
      %2514 = vmatprep.subr.bf16.mxu0 0
      %2515 = vmatpush1.bf16.msra.mxu0 0
      %2516 = vmatprep.subr.bf16.mxu0 0
      %2517 = vmatpush1.bf16.msra.mxu0 0
      %2518 = vmatprep.subr.bf16.mxu0 0
      %2519 = vmatpush1.bf16.msra.mxu0 0
      %2520 = vmatprep.mubr.bf16.mxu0 0
      %2521 = vmatmul.mubr.bf16.gmra.mrb[0].mxu0 %v2483
      %v2522 = vpop.f32.mrb[0].mxu0
      %v2523 = vadd.f32 0.0, %v2522
      %v2524 = vpop.f32.mrb[0].mxu0
      %v2525 = vpop.f32.mrb[0].mxu0
      %v2526 = vadd.f32 0.0, %v2525
      %v2527 = vpop.f32.mrb[0].mxu0
      %2528 = vdwg.mxu0
      %v2529 = vadd.f32 %v1546, %v2523
      %v2530 = vadd.f32 %v1547, %v2526
      %2531 = vrot.lane.b32.xlu0 %v560, 112
      %v2532 = vpop.permute.xlu0 %2531
      %2533 = vrot.lane.b32.xlu0 %v560, 80
      %v2534 = vpop.permute.xlu0 %2533
      %v2536 = vsel %vm571, %v2532, 0
      %v2539 = vsel %vm571, %v2534, 0
      %2541 = vmatprep.subr.bf16.mxu0 0
      %2542 = vmatpush1.bf16.xpose.msra.mxu0 %v2539
      %2543 = vmatprep.subr.bf16.mxu0 0
      %2544 = vmatpush1.bf16.xpose.msra.mxu0 0
      %2545 = vmatprep.subr.bf16.mxu0 0
      %2546 = vmatpush1.bf16.xpose.msra.mxu0 0
      %2547 = vmatprep.subr.bf16.mxu0 0
      %2548 = vmatpush1.bf16.xpose.msra.mxu0 0
      %2549 = vmatprep.subr.bf16.mxu0 0
      %2550 = vmatpush1.bf16.xpose.msra.mxu0 0
      %2551 = vmatprep.subr.bf16.mxu0 0
      %2552 = vmatpush1.bf16.xpose.msra.mxu0 0
      %2553 = vmatprep.subr.bf16.mxu0 0
      %2554 = vmatpush1.bf16.xpose.msra.mxu0 0
      %2555 = vmatprep.subr.bf16.mxu0 0
      %2556 = vmatpush1.bf16.xpose.msra.mxu0 0
      %2557 = vmatprep.subr.bf16.mxu0 0
      %2558 = vmatpush1.bf16.xpose.msra.mxu0 0
      %2559 = vmatprep.subr.bf16.mxu0 0
      %2560 = vmatpush1.bf16.xpose.msra.mxu0 0
      %2561 = vmatprep.subr.bf16.mxu0 0
      %2562 = vmatpush1.bf16.xpose.msra.mxu0 0
      %2563 = vmatprep.subr.bf16.mxu0 0
      %2564 = vmatpush1.bf16.xpose.msra.mxu0 0
      %2565 = vmatprep.subr.bf16.mxu0 0
      %2566 = vmatpush1.bf16.xpose.msra.mxu0 0
      %2567 = vmatprep.subr.bf16.mxu0 0
      %2568 = vmatpush1.bf16.xpose.msra.mxu0 0
      %2569 = vmatprep.subr.bf16.mxu0 0
      %2570 = vmatpush1.bf16.xpose.msra.mxu0 0
      %2571 = vmatprep.subr.bf16.mxu0 0
      %2572 = vmatpush1.bf16.xpose.msra.mxu0 0
      %2573 = vmatprep.mubr.bf16.mxu0 0
      %2574 = vmatmul.mubr.bf16.gmra.mrb[0].mxu0 %v2536
      %v2575 = vpop.f32.mrb[0].mxu0
      %v2576 = vadd.f32 0.0, %v2575
      %v2577 = vpop.f32.mrb[0].mxu0
      %v2578 = vpop.f32.mrb[0].mxu0
      %v2579 = vpop.f32.mrb[0].mxu0
      %2580 = vdwg.mxu0
      %2581 = vrot.lane.b32.xlu0 %v561, 112
      %v2582 = vpop.permute.xlu0 %2581
      %2583 = vrot.lane.b32.xlu0 %v561, 80
      %v2584 = vpop.permute.xlu0 %2583
      %v2586 = vsel %vm571, %v2582, 0
      %v2589 = vsel %vm571, %v2584, 0
      %2591 = vmatprep.subr.bf16.mxu0 0
      %2592 = vmatpush1.bf16.xpose.msra.mxu0 %v2589
      %2593 = vmatprep.subr.bf16.mxu0 0
      %2594 = vmatpush1.bf16.xpose.msra.mxu0 0
      %2595 = vmatprep.subr.bf16.mxu0 0
      %2596 = vmatpush1.bf16.xpose.msra.mxu0 0
      %2597 = vmatprep.subr.bf16.mxu0 0
      %2598 = vmatpush1.bf16.xpose.msra.mxu0 0
      %2599 = vmatprep.subr.bf16.mxu0 0
      %2600 = vmatpush1.bf16.xpose.msra.mxu0 0
      %2601 = vmatprep.subr.bf16.mxu0 0
      %2602 = vmatpush1.bf16.xpose.msra.mxu0 0
      %2603 = vmatprep.subr.bf16.mxu0 0
      %2604 = vmatpush1.bf16.xpose.msra.mxu0 0
      %2605 = vmatprep.subr.bf16.mxu0 0
      %2606 = vmatpush1.bf16.xpose.msra.mxu0 0
      %2607 = vmatprep.subr.bf16.mxu0 0
      %2608 = vmatpush1.bf16.xpose.msra.mxu0 0
      %2609 = vmatprep.subr.bf16.mxu0 0
      %2610 = vmatpush1.bf16.xpose.msra.mxu0 0
      %2611 = vmatprep.subr.bf16.mxu0 0
      %2612 = vmatpush1.bf16.xpose.msra.mxu0 0
      %2613 = vmatprep.subr.bf16.mxu0 0
      %2614 = vmatpush1.bf16.xpose.msra.mxu0 0
      %2615 = vmatprep.subr.bf16.mxu0 0
      %2616 = vmatpush1.bf16.xpose.msra.mxu0 0
      %2617 = vmatprep.subr.bf16.mxu0 0
      %2618 = vmatpush1.bf16.xpose.msra.mxu0 0
      %2619 = vmatprep.subr.bf16.mxu0 0
      %2620 = vmatpush1.bf16.xpose.msra.mxu0 0
      %2621 = vmatprep.subr.bf16.mxu0 0
      %2622 = vmatpush1.bf16.xpose.msra.mxu0 0
      %2623 = vmatprep.mubr.bf16.mxu0 0
      %2624 = vmatmul.mubr.bf16.gmra.mrb[0].mxu0 %v2586
      %v2625 = vpop.f32.mrb[0].mxu0
      %v2626 = vadd.f32 0.0, %v2625
      %v2627 = vpop.f32.mrb[0].mxu0
      %v2628 = vpop.f32.mrb[0].mxu0
      %v2629 = vpop.f32.mrb[0].mxu0
      %2630 = vdwg.mxu0
      %2631 = vrot.lane.b32.xlu0 %v562, 112
      %v2632 = vpop.permute.xlu0 %2631
      %2633 = vrot.lane.b32.xlu0 %v562, 80
      %v2634 = vpop.permute.xlu0 %2633
      %v2636 = vsel %vm571, %v2632, 0
      %v2639 = vsel %vm571, %v2634, 0
      %2641 = vmatprep.subr.bf16.mxu0 0
      %2642 = vmatpush1.bf16.xpose.msra.mxu0 %v2639
      %2643 = vmatprep.subr.bf16.mxu0 0
      %2644 = vmatpush1.bf16.xpose.msra.mxu0 0
      %2645 = vmatprep.subr.bf16.mxu0 0
      %2646 = vmatpush1.bf16.xpose.msra.mxu0 0
      %2647 = vmatprep.subr.bf16.mxu0 0
      %2648 = vmatpush1.bf16.xpose.msra.mxu0 0
      %2649 = vmatprep.subr.bf16.mxu0 0
      %2650 = vmatpush1.bf16.xpose.msra.mxu0 0
      %2651 = vmatprep.subr.bf16.mxu0 0
      %2652 = vmatpush1.bf16.xpose.msra.mxu0 0
      %2653 = vmatprep.subr.bf16.mxu0 0
      %2654 = vmatpush1.bf16.xpose.msra.mxu0 0
      %2655 = vmatprep.subr.bf16.mxu0 0
      %2656 = vmatpush1.bf16.xpose.msra.mxu0 0
      %2657 = vmatprep.subr.bf16.mxu0 0
      %2658 = vmatpush1.bf16.xpose.msra.mxu0 0
      %2659 = vmatprep.subr.bf16.mxu0 0
      %2660 = vmatpush1.bf16.xpose.msra.mxu0 0
      %2661 = vmatprep.subr.bf16.mxu0 0
      %2662 = vmatpush1.bf16.xpose.msra.mxu0 0
      %2663 = vmatprep.subr.bf16.mxu0 0
      %2664 = vmatpush1.bf16.xpose.msra.mxu0 0
      %2665 = vmatprep.subr.bf16.mxu0 0
      %2666 = vmatpush1.bf16.xpose.msra.mxu0 0
      %2667 = vmatprep.subr.bf16.mxu0 0
      %2668 = vmatpush1.bf16.xpose.msra.mxu0 0
      %2669 = vmatprep.subr.bf16.mxu0 0
      %2670 = vmatpush1.bf16.xpose.msra.mxu0 0
      %2671 = vmatprep.subr.bf16.mxu0 0
      %2672 = vmatpush1.bf16.xpose.msra.mxu0 0
      %2673 = vmatprep.mubr.bf16.mxu0 0
      %2674 = vmatmul.mubr.bf16.gmra.mrb[0].mxu0 %v2636
      %v2675 = vpop.f32.mrb[0].mxu0
      %v2676 = vadd.f32 0.0, %v2675
      %v2677 = vpop.f32.mrb[0].mxu0
      %v2678 = vpop.f32.mrb[0].mxu0
      %v2679 = vpop.f32.mrb[0].mxu0
      %2680 = vdwg.mxu0
      %2681 = vrot.lane.b32.xlu0 %v563, 112
      %v2682 = vpop.permute.xlu0 %2681
      %2683 = vrot.lane.b32.xlu0 %v563, 80
      %v2684 = vpop.permute.xlu0 %2683
      %v2686 = vsel %vm571, %v2682, 0
      %v2689 = vsel %vm571, %v2684, 0
      %2691 = vmatprep.subr.bf16.mxu0 0
      %2692 = vmatpush1.bf16.xpose.msra.mxu0 %v2689
      %2693 = vmatprep.subr.bf16.mxu0 0
      %2694 = vmatpush1.bf16.xpose.msra.mxu0 0
      %2695 = vmatprep.subr.bf16.mxu0 0
      %2696 = vmatpush1.bf16.xpose.msra.mxu0 0
      %2697 = vmatprep.subr.bf16.mxu0 0
      %2698 = vmatpush1.bf16.xpose.msra.mxu0 0
      %2699 = vmatprep.subr.bf16.mxu0 0
      %2700 = vmatpush1.bf16.xpose.msra.mxu0 0
      %2701 = vmatprep.subr.bf16.mxu0 0
      %2702 = vmatpush1.bf16.xpose.msra.mxu0 0
      %2703 = vmatprep.subr.bf16.mxu0 0
      %2704 = vmatpush1.bf16.xpose.msra.mxu0 0
      %2705 = vmatprep.subr.bf16.mxu0 0
      %2706 = vmatpush1.bf16.xpose.msra.mxu0 0
      %2707 = vmatprep.subr.bf16.mxu0 0
      %2708 = vmatpush1.bf16.xpose.msra.mxu0 0
      %2709 = vmatprep.subr.bf16.mxu0 0
      %2710 = vmatpush1.bf16.xpose.msra.mxu0 0
      %2711 = vmatprep.subr.bf16.mxu0 0
      %2712 = vmatpush1.bf16.xpose.msra.mxu0 0
      %2713 = vmatprep.subr.bf16.mxu0 0
      %2714 = vmatpush1.bf16.xpose.msra.mxu0 0
      %2715 = vmatprep.subr.bf16.mxu0 0
      %2716 = vmatpush1.bf16.xpose.msra.mxu0 0
      %2717 = vmatprep.subr.bf16.mxu0 0
      %2718 = vmatpush1.bf16.xpose.msra.mxu0 0
      %2719 = vmatprep.subr.bf16.mxu0 0
      %2720 = vmatpush1.bf16.xpose.msra.mxu0 0
      %2721 = vmatprep.subr.bf16.mxu0 0
      %2722 = vmatpush1.bf16.xpose.msra.mxu0 0
      %2723 = vmatprep.mubr.bf16.mxu0 0
      %2724 = vmatmul.mubr.bf16.gmra.mrb[0].mxu0 %v2686
      %v2725 = vpop.f32.mrb[0].mxu0
      %v2726 = vadd.f32 0.0, %v2725
      %v2727 = vpop.f32.mrb[0].mxu0
      %v2728 = vpop.f32.mrb[0].mxu0
      %v2729 = vpop.f32.mrb[0].mxu0
      %2730 = vdwg.mxu0
      %2731 = vrot.lane.b32.xlu0 %v564, 112
      %v2732 = vpop.permute.xlu0 %2731
      %2733 = vrot.lane.b32.xlu0 %v564, 80
      %v2734 = vpop.permute.xlu0 %2733
      %v2736 = vsel %vm571, %v2732, 0
      %v2739 = vsel %vm571, %v2734, 0
      %2741 = vmatprep.subr.bf16.mxu0 0
      %2742 = vmatpush1.bf16.xpose.msra.mxu0 %v2739
      %2743 = vmatprep.subr.bf16.mxu0 0
      %2744 = vmatpush1.bf16.xpose.msra.mxu0 0
      %2745 = vmatprep.subr.bf16.mxu0 0
      %2746 = vmatpush1.bf16.xpose.msra.mxu0 0
      %2747 = vmatprep.subr.bf16.mxu0 0
      %2748 = vmatpush1.bf16.xpose.msra.mxu0 0
      %2749 = vmatprep.subr.bf16.mxu0 0
      %2750 = vmatpush1.bf16.xpose.msra.mxu0 0
      %2751 = vmatprep.subr.bf16.mxu0 0
      %2752 = vmatpush1.bf16.xpose.msra.mxu0 0
      %2753 = vmatprep.subr.bf16.mxu0 0
      %2754 = vmatpush1.bf16.xpose.msra.mxu0 0
      %2755 = vmatprep.subr.bf16.mxu0 0
      %2756 = vmatpush1.bf16.xpose.msra.mxu0 0
      %2757 = vmatprep.subr.bf16.mxu0 0
      %2758 = vmatpush1.bf16.xpose.msra.mxu0 0
      %2759 = vmatprep.subr.bf16.mxu0 0
      %2760 = vmatpush1.bf16.xpose.msra.mxu0 0
      %2761 = vmatprep.subr.bf16.mxu0 0
      %2762 = vmatpush1.bf16.xpose.msra.mxu0 0
      %2763 = vmatprep.subr.bf16.mxu0 0
      %2764 = vmatpush1.bf16.xpose.msra.mxu0 0
      %2765 = vmatprep.subr.bf16.mxu0 0
      %2766 = vmatpush1.bf16.xpose.msra.mxu0 0
      %2767 = vmatprep.subr.bf16.mxu0 0
      %2768 = vmatpush1.bf16.xpose.msra.mxu0 0
      %2769 = vmatprep.subr.bf16.mxu0 0
      %2770 = vmatpush1.bf16.xpose.msra.mxu0 0
      %2771 = vmatprep.subr.bf16.mxu0 0
      %2772 = vmatpush1.bf16.xpose.msra.mxu0 0
      %2773 = vmatprep.mubr.bf16.mxu0 0
      %2774 = vmatmul.mubr.bf16.gmra.mrb[0].mxu0 %v2736
      %v2775 = vpop.f32.mrb[0].mxu0
      %v2776 = vadd.f32 0.0, %v2775
      %v2777 = vpop.f32.mrb[0].mxu0
      %v2778 = vpop.f32.mrb[0].mxu0
      %v2779 = vpop.f32.mrb[0].mxu0
      %2780 = vdwg.mxu0
      %2781 = vrot.lane.b32.xlu0 %v565, 112
      %v2782 = vpop.permute.xlu0 %2781
      %2783 = vrot.lane.b32.xlu0 %v565, 80
      %v2784 = vpop.permute.xlu0 %2783
      %v2786 = vsel %vm571, %v2782, 0
      %v2789 = vsel %vm571, %v2784, 0
      %2791 = vmatprep.subr.bf16.mxu0 0
      %2792 = vmatpush1.bf16.xpose.msra.mxu0 %v2789
      %2793 = vmatprep.subr.bf16.mxu0 0
      %2794 = vmatpush1.bf16.xpose.msra.mxu0 0
      %2795 = vmatprep.subr.bf16.mxu0 0
      %2796 = vmatpush1.bf16.xpose.msra.mxu0 0
      %2797 = vmatprep.subr.bf16.mxu0 0
      %2798 = vmatpush1.bf16.xpose.msra.mxu0 0
      %2799 = vmatprep.subr.bf16.mxu0 0
      %2800 = vmatpush1.bf16.xpose.msra.mxu0 0
      %2801 = vmatprep.subr.bf16.mxu0 0
      %2802 = vmatpush1.bf16.xpose.msra.mxu0 0
      %2803 = vmatprep.subr.bf16.mxu0 0
      %2804 = vmatpush1.bf16.xpose.msra.mxu0 0
      %2805 = vmatprep.subr.bf16.mxu0 0
      %2806 = vmatpush1.bf16.xpose.msra.mxu0 0
      %2807 = vmatprep.subr.bf16.mxu0 0
      %2808 = vmatpush1.bf16.xpose.msra.mxu0 0
      %2809 = vmatprep.subr.bf16.mxu0 0
      %2810 = vmatpush1.bf16.xpose.msra.mxu0 0
      %2811 = vmatprep.subr.bf16.mxu0 0
      %2812 = vmatpush1.bf16.xpose.msra.mxu0 0
      %2813 = vmatprep.subr.bf16.mxu0 0
      %2814 = vmatpush1.bf16.xpose.msra.mxu0 0
      %2815 = vmatprep.subr.bf16.mxu0 0
      %2816 = vmatpush1.bf16.xpose.msra.mxu0 0
      %2817 = vmatprep.subr.bf16.mxu0 0
      %2818 = vmatpush1.bf16.xpose.msra.mxu0 0
      %2819 = vmatprep.subr.bf16.mxu0 0
      %2820 = vmatpush1.bf16.xpose.msra.mxu0 0
      %2821 = vmatprep.subr.bf16.mxu0 0
      %2822 = vmatpush1.bf16.xpose.msra.mxu0 0
      %2823 = vmatprep.mubr.bf16.mxu0 0
      %2824 = vmatmul.mubr.bf16.gmra.mrb[0].mxu0 %v2786
      %v2825 = vpop.f32.mrb[0].mxu0
      %v2826 = vadd.f32 0.0, %v2825
      %v2827 = vpop.f32.mrb[0].mxu0
      %v2828 = vpop.f32.mrb[0].mxu0
      %v2829 = vpop.f32.mrb[0].mxu0
      %2830 = vdwg.mxu0
      %2831 = vrot.lane.b32.xlu0 %v566, 112
      %v2832 = vpop.permute.xlu0 %2831
      %2833 = vrot.lane.b32.xlu0 %v566, 80
      %v2834 = vpop.permute.xlu0 %2833
      %v2836 = vsel %vm571, %v2832, 0
      %v2839 = vsel %vm571, %v2834, 0
      %2841 = vmatprep.subr.bf16.mxu0 0
      %2842 = vmatpush1.bf16.xpose.msra.mxu0 %v2839
      %2843 = vmatprep.subr.bf16.mxu0 0
      %2844 = vmatpush1.bf16.xpose.msra.mxu0 0
      %2845 = vmatprep.subr.bf16.mxu0 0
      %2846 = vmatpush1.bf16.xpose.msra.mxu0 0
      %2847 = vmatprep.subr.bf16.mxu0 0
      %2848 = vmatpush1.bf16.xpose.msra.mxu0 0
      %2849 = vmatprep.subr.bf16.mxu0 0
      %2850 = vmatpush1.bf16.xpose.msra.mxu0 0
      %2851 = vmatprep.subr.bf16.mxu0 0
      %2852 = vmatpush1.bf16.xpose.msra.mxu0 0
      %2853 = vmatprep.subr.bf16.mxu0 0
      %2854 = vmatpush1.bf16.xpose.msra.mxu0 0
      %2855 = vmatprep.subr.bf16.mxu0 0
      %2856 = vmatpush1.bf16.xpose.msra.mxu0 0
      %2857 = vmatprep.subr.bf16.mxu0 0
      %2858 = vmatpush1.bf16.xpose.msra.mxu0 0
      %2859 = vmatprep.subr.bf16.mxu0 0
      %2860 = vmatpush1.bf16.xpose.msra.mxu0 0
      %2861 = vmatprep.subr.bf16.mxu0 0
      %2862 = vmatpush1.bf16.xpose.msra.mxu0 0
      %2863 = vmatprep.subr.bf16.mxu0 0
      %2864 = vmatpush1.bf16.xpose.msra.mxu0 0
      %2865 = vmatprep.subr.bf16.mxu0 0
      %2866 = vmatpush1.bf16.xpose.msra.mxu0 0
      %2867 = vmatprep.subr.bf16.mxu0 0
      %2868 = vmatpush1.bf16.xpose.msra.mxu0 0
      %2869 = vmatprep.subr.bf16.mxu0 0
      %2870 = vmatpush1.bf16.xpose.msra.mxu0 0
      %2871 = vmatprep.subr.bf16.mxu0 0
      %2872 = vmatpush1.bf16.xpose.msra.mxu0 0
      %2873 = vmatprep.mubr.bf16.mxu0 0
      %2874 = vmatmul.mubr.bf16.gmra.mrb[0].mxu0 %v2836
      %v2875 = vpop.f32.mrb[0].mxu0
      %v2876 = vadd.f32 0.0, %v2875
      %v2877 = vpop.f32.mrb[0].mxu0
      %v2878 = vpop.f32.mrb[0].mxu0
      %v2879 = vpop.f32.mrb[0].mxu0
      %2880 = vdwg.mxu0
      %2881 = vrot.lane.b32.xlu0 %v567, 112
      %v2882 = vpop.permute.xlu0 %2881
      %2883 = vrot.lane.b32.xlu0 %v567, 80
      %v2884 = vpop.permute.xlu0 %2883
      %v2886 = vsel %vm571, %v2882, 0
      %v2889 = vsel %vm571, %v2884, 0
      %2891 = vmatprep.subr.bf16.mxu0 0
      %2892 = vmatpush1.bf16.xpose.msra.mxu0 %v2889
      %2893 = vmatprep.subr.bf16.mxu0 0
      %2894 = vmatpush1.bf16.xpose.msra.mxu0 0
      %2895 = vmatprep.subr.bf16.mxu0 0
      %2896 = vmatpush1.bf16.xpose.msra.mxu0 0
      %2897 = vmatprep.subr.bf16.mxu0 0
      %2898 = vmatpush1.bf16.xpose.msra.mxu0 0
      %2899 = vmatprep.subr.bf16.mxu0 0
      %2900 = vmatpush1.bf16.xpose.msra.mxu0 0
      %2901 = vmatprep.subr.bf16.mxu0 0
      %2902 = vmatpush1.bf16.xpose.msra.mxu0 0
      %2903 = vmatprep.subr.bf16.mxu0 0
      %2904 = vmatpush1.bf16.xpose.msra.mxu0 0
      %2905 = vmatprep.subr.bf16.mxu0 0
      %2906 = vmatpush1.bf16.xpose.msra.mxu0 0
      %2907 = vmatprep.subr.bf16.mxu0 0
      %2908 = vmatpush1.bf16.xpose.msra.mxu0 0
      %2909 = vmatprep.subr.bf16.mxu0 0
      %2910 = vmatpush1.bf16.xpose.msra.mxu0 0
      %2911 = vmatprep.subr.bf16.mxu0 0
      %2912 = vmatpush1.bf16.xpose.msra.mxu0 0
      %2913 = vmatprep.subr.bf16.mxu0 0
      %2914 = vmatpush1.bf16.xpose.msra.mxu0 0
      %2915 = vmatprep.subr.bf16.mxu0 0
      %2916 = vmatpush1.bf16.xpose.msra.mxu0 0
      %2917 = vmatprep.subr.bf16.mxu0 0
      %2918 = vmatpush1.bf16.xpose.msra.mxu0 0
      %2919 = vmatprep.subr.bf16.mxu0 0
      %2920 = vmatpush1.bf16.xpose.msra.mxu0 0
      %2921 = vmatprep.subr.bf16.mxu0 0
      %2922 = vmatpush1.bf16.xpose.msra.mxu0 0
      %2923 = vmatprep.mubr.bf16.mxu0 0
      %2924 = vmatmul.mubr.bf16.gmra.mrb[0].mxu0 %v2886
      %v2925 = vpop.f32.mrb[0].mxu0
      %v2926 = vadd.f32 0.0, %v2925
      %v2927 = vpop.f32.mrb[0].mxu0
      %v2928 = vpop.f32.mrb[0].mxu0
      %v2929 = vpop.f32.mrb[0].mxu0
      %2930 = vdwg.mxu0
      %v2931 = vmul.f32 %v2576, 0.35355338
      %v2932 = vmul.f32 %v2626, 0.35355338
      %v2933 = vmul.f32 %v2676, 0.35355338
      %v2934 = vmul.f32 %v2726, 0.35355338
      %v2935 = vmul.f32 %v2776, 0.35355338
      %v2936 = vmul.f32 %v2826, 0.35355338
      %v2937 = vmul.f32 %v2876, 0.35355338
      %v2938 = vmul.f32 %v2926, 0.35355338
      %v2939 = vsel %vm969, %v2931, -inf
      %2940 = vmax.xlane.f32.xlu0 %v2939
      %v2941 = vpop.xlane.xlu0 %2940
      %v2942 = vsel %vm969, %v2932, -inf
      %2943 = vmax.xlane.f32.xlu0 %v2942
      %v2944 = vpop.xlane.xlu0 %2943
      %v2945 = vsel %vm969, %v2933, -inf
      %2946 = vmax.xlane.f32.xlu0 %v2945
      %v2947 = vpop.xlane.xlu0 %2946
      %v2948 = vsel %vm969, %v2934, -inf
      %2949 = vmax.xlane.f32.xlu0 %v2948
      %v2950 = vpop.xlane.xlu0 %2949
      %v2951 = vsel %vm969, %v2935, -inf
      %2952 = vmax.xlane.f32.xlu0 %v2951
      %v2953 = vpop.xlane.xlu0 %2952
      %v2954 = vsel %vm969, %v2936, -inf
      %2955 = vmax.xlane.f32.xlu0 %v2954
      %v2956 = vpop.xlane.xlu0 %2955
      %v2957 = vsel %vm969, %v2937, -inf
      %2958 = vmax.xlane.f32.xlu0 %v2957
      %v2959 = vpop.xlane.xlu0 %2958
      %v2960 = vsel %vm969, %v2938, -inf
      %2961 = vmax.xlane.f32.xlu0 %v2960
      %v2962 = vpop.xlane.xlu0 %2961
      %v2963 = vsub.f32 %v2931, %v2941
      %v2964 = vsub.f32 %v2932, %v2944
      %v2965 = vsub.f32 %v2933, %v2947
      %v2966 = vsub.f32 %v2934, %v2950
      %v2967 = vsub.f32 %v2935, %v2953
      %v2968 = vsub.f32 %v2936, %v2956
      %v2969 = vsub.f32 %v2937, %v2959
      %v2970 = vsub.f32 %v2938, %v2962
      %v2971 = vmul.f32 %v2963, 1.442695
      %v2972 = vpow.pop %v2971
      %v2973 = vmul.f32 %v2964, 1.442695
      %v2974 = vpow.pop %v2973
      %v2975 = vmul.f32 %v2965, 1.442695
      %v2976 = vpow.pop %v2975
      %v2977 = vmul.f32 %v2966, 1.442695
      %v2978 = vpow.pop %v2977
      %v2979 = vmul.f32 %v2967, 1.442695
      %v2980 = vpow.pop %v2979
      %v2981 = vmul.f32 %v2968, 1.442695
      %v2982 = vpow.pop %v2981
      %v2983 = vmul.f32 %v2969, 1.442695
      %v2984 = vpow.pop %v2983
      %v2985 = vmul.f32 %v2970, 1.442695
      %v2986 = vpow.pop %v2985
      %v2987 = vsel %vm969, %v2972, 0.0
      %2988 = vadd.xlane.f32.xlu0 %v2987
      %v2989 = vpop.xlane.xlu0 %2988
      %v2990 = vsel %vm969, %v2974, 0.0
      %2991 = vadd.xlane.f32.xlu0 %v2990
      %v2992 = vpop.xlane.xlu0 %2991
      %v2993 = vsel %vm969, %v2976, 0.0
      %2994 = vadd.xlane.f32.xlu0 %v2993
      %v2995 = vpop.xlane.xlu0 %2994
      %v2996 = vsel %vm969, %v2978, 0.0
      %2997 = vadd.xlane.f32.xlu0 %v2996
      %v2998 = vpop.xlane.xlu0 %2997
      %v2999 = vsel %vm969, %v2980, 0.0
      %3000 = vadd.xlane.f32.xlu0 %v2999
      %v3001 = vpop.xlane.xlu0 %3000
      %v3002 = vsel %vm969, %v2982, 0.0
      %3003 = vadd.xlane.f32.xlu0 %v3002
      %v3004 = vpop.xlane.xlu0 %3003
      %v3005 = vsel %vm969, %v2984, 0.0
      %3006 = vadd.xlane.f32.xlu0 %v3005
      %v3007 = vpop.xlane.xlu0 %3006
      %v3008 = vsel %vm969, %v2986, 0.0
      %3009 = vadd.xlane.f32.xlu0 %v3008
      %v3010 = vpop.xlane.xlu0 %3009
      %v3011 = vrcp.pop %v2989
      %v3012 = vrcp.pop %v2992
      %v3013 = vrcp.pop %v2995
      %v3014 = vrcp.pop %v2998
      %v3015 = vrcp.pop %v3001
      %v3016 = vrcp.pop %v3004
      %v3017 = vrcp.pop %v3007
      %v3018 = vrcp.pop %v3010
      %v3019 = vmul.f32 %v2972, %v3011
      %v3020 = vmul.f32 %v2974, %v3012
      %v3021 = vmul.f32 %v2976, %v3013
      %v3022 = vmul.f32 %v2978, %v3014
      %v3023 = vmul.f32 %v2980, %v3015
      %v3024 = vmul.f32 %v2982, %v3016
      %v3025 = vmul.f32 %v2984, %v3017
      %v3026 = vmul.f32 %v2986, %v3018
      %v3027 = vpack.c.bf16 %v3019, %v3019
      %v3028 = vpack.c.bf16 %v3020, %v3020
      %v3029 = vpack.c.bf16 %v3021, %v3021
      %v3030 = vpack.c.bf16 %v3022, %v3022
      %v3031 = vpack.c.bf16 %v3023, %v3023
      %v3032 = vpack.c.bf16 %v3024, %v3024
      %v3033 = vpack.c.bf16 %v3025, %v3025
      %v3034 = vpack.c.bf16 %v3026, %v3026
      %3035 = vrot.lane.b32.xlu0 %v560, 48
      %v3036 = vpop.permute.xlu0 %3035
      %v3038 = vsel %vm1068, %v3027, 0
      %v3041 = vsel %vm1072, %v3036, 0
      %3043 = vmatprep.subr.bf16.mxu0 0
      %3044 = vmatpush1.bf16.msra.mxu0 %v3041
      %3045 = vmatprep.subr.bf16.mxu0 0
      %3046 = vmatpush1.bf16.msra.mxu0 0
      %3047 = vmatprep.subr.bf16.mxu0 0
      %3048 = vmatpush1.bf16.msra.mxu0 0
      %3049 = vmatprep.subr.bf16.mxu0 0
      %3050 = vmatpush1.bf16.msra.mxu0 0
      %3051 = vmatprep.subr.bf16.mxu0 0
      %3052 = vmatpush1.bf16.msra.mxu0 0
      %3053 = vmatprep.subr.bf16.mxu0 0
      %3054 = vmatpush1.bf16.msra.mxu0 0
      %3055 = vmatprep.subr.bf16.mxu0 0
      %3056 = vmatpush1.bf16.msra.mxu0 0
      %3057 = vmatprep.subr.bf16.mxu0 0
      %3058 = vmatpush1.bf16.msra.mxu0 0
      %3059 = vmatprep.subr.bf16.mxu0 0
      %3060 = vmatpush1.bf16.msra.mxu0 0
      %3061 = vmatprep.subr.bf16.mxu0 0
      %3062 = vmatpush1.bf16.msra.mxu0 0
      %3063 = vmatprep.subr.bf16.mxu0 0
      %3064 = vmatpush1.bf16.msra.mxu0 0
      %3065 = vmatprep.subr.bf16.mxu0 0
      %3066 = vmatpush1.bf16.msra.mxu0 0
      %3067 = vmatprep.subr.bf16.mxu0 0
      %3068 = vmatpush1.bf16.msra.mxu0 0
      %3069 = vmatprep.subr.bf16.mxu0 0
      %3070 = vmatpush1.bf16.msra.mxu0 0
      %3071 = vmatprep.subr.bf16.mxu0 0
      %3072 = vmatpush1.bf16.msra.mxu0 0
      %3073 = vmatprep.subr.bf16.mxu0 0
      %3074 = vmatpush1.bf16.msra.mxu0 0
      %3075 = vmatprep.mubr.bf16.mxu0 0
      %3076 = vmatmul.mubr.bf16.gmra.mrb[0].mxu0 %v3038
      %v3077 = vpop.f32.mrb[0].mxu0
      %v3078 = vadd.f32 0.0, %v3077
      %v3079 = vpop.f32.mrb[0].mxu0
      %v3080 = vpop.f32.mrb[0].mxu0
      %v3081 = vpop.f32.mrb[0].mxu0
      %3082 = vdwg.mxu0
      %3083 = vrot.lane.b32.xlu0 %v561, 48
      %v3084 = vpop.permute.xlu0 %3083
      %v3086 = vsel %vm1068, %v3028, 0
      %v3089 = vsel %vm1072, %v3084, 0
      %3091 = vmatprep.subr.bf16.mxu0 0
      %3092 = vmatpush1.bf16.msra.mxu0 %v3089
      %3093 = vmatprep.subr.bf16.mxu0 0
      %3094 = vmatpush1.bf16.msra.mxu0 0
      %3095 = vmatprep.subr.bf16.mxu0 0
      %3096 = vmatpush1.bf16.msra.mxu0 0
      %3097 = vmatprep.subr.bf16.mxu0 0
      %3098 = vmatpush1.bf16.msra.mxu0 0
      %3099 = vmatprep.subr.bf16.mxu0 0
      %3100 = vmatpush1.bf16.msra.mxu0 0
      %3101 = vmatprep.subr.bf16.mxu0 0
      %3102 = vmatpush1.bf16.msra.mxu0 0
      %3103 = vmatprep.subr.bf16.mxu0 0
      %3104 = vmatpush1.bf16.msra.mxu0 0
      %3105 = vmatprep.subr.bf16.mxu0 0
      %3106 = vmatpush1.bf16.msra.mxu0 0
      %3107 = vmatprep.subr.bf16.mxu0 0
      %3108 = vmatpush1.bf16.msra.mxu0 0
      %3109 = vmatprep.subr.bf16.mxu0 0
      %3110 = vmatpush1.bf16.msra.mxu0 0
      %3111 = vmatprep.subr.bf16.mxu0 0
      %3112 = vmatpush1.bf16.msra.mxu0 0
      %3113 = vmatprep.subr.bf16.mxu0 0
      %3114 = vmatpush1.bf16.msra.mxu0 0
      %3115 = vmatprep.subr.bf16.mxu0 0
      %3116 = vmatpush1.bf16.msra.mxu0 0
      %3117 = vmatprep.subr.bf16.mxu0 0
      %3118 = vmatpush1.bf16.msra.mxu0 0
      %3119 = vmatprep.subr.bf16.mxu0 0
      %3120 = vmatpush1.bf16.msra.mxu0 0
      %3121 = vmatprep.subr.bf16.mxu0 0
      %3122 = vmatpush1.bf16.msra.mxu0 0
      %3123 = vmatprep.mubr.bf16.mxu0 0
      %3124 = vmatmul.mubr.bf16.gmra.mrb[0].mxu0 %v3086
      %v3125 = vpop.f32.mrb[0].mxu0
      %v3126 = vadd.f32 0.0, %v3125
      %v3127 = vpop.f32.mrb[0].mxu0
      %v3128 = vpop.f32.mrb[0].mxu0
      %v3129 = vpop.f32.mrb[0].mxu0
      %3130 = vdwg.mxu0
      %3131 = vrot.lane.b32.xlu0 %v562, 48
      %v3132 = vpop.permute.xlu0 %3131
      %v3134 = vsel %vm1068, %v3029, 0
      %v3137 = vsel %vm1072, %v3132, 0
      %3139 = vmatprep.subr.bf16.mxu0 0
      %3140 = vmatpush1.bf16.msra.mxu0 %v3137
      %3141 = vmatprep.subr.bf16.mxu0 0
      %3142 = vmatpush1.bf16.msra.mxu0 0
      %3143 = vmatprep.subr.bf16.mxu0 0
      %3144 = vmatpush1.bf16.msra.mxu0 0
      %3145 = vmatprep.subr.bf16.mxu0 0
      %3146 = vmatpush1.bf16.msra.mxu0 0
      %3147 = vmatprep.subr.bf16.mxu0 0
      %3148 = vmatpush1.bf16.msra.mxu0 0
      %3149 = vmatprep.subr.bf16.mxu0 0
      %3150 = vmatpush1.bf16.msra.mxu0 0
      %3151 = vmatprep.subr.bf16.mxu0 0
      %3152 = vmatpush1.bf16.msra.mxu0 0
      %3153 = vmatprep.subr.bf16.mxu0 0
      %3154 = vmatpush1.bf16.msra.mxu0 0
      %3155 = vmatprep.subr.bf16.mxu0 0
      %3156 = vmatpush1.bf16.msra.mxu0 0
      %3157 = vmatprep.subr.bf16.mxu0 0
      %3158 = vmatpush1.bf16.msra.mxu0 0
      %3159 = vmatprep.subr.bf16.mxu0 0
      %3160 = vmatpush1.bf16.msra.mxu0 0
      %3161 = vmatprep.subr.bf16.mxu0 0
      %3162 = vmatpush1.bf16.msra.mxu0 0
      %3163 = vmatprep.subr.bf16.mxu0 0
      %3164 = vmatpush1.bf16.msra.mxu0 0
      %3165 = vmatprep.subr.bf16.mxu0 0
      %3166 = vmatpush1.bf16.msra.mxu0 0
      %3167 = vmatprep.subr.bf16.mxu0 0
      %3168 = vmatpush1.bf16.msra.mxu0 0
      %3169 = vmatprep.subr.bf16.mxu0 0
      %3170 = vmatpush1.bf16.msra.mxu0 0
      %3171 = vmatprep.mubr.bf16.mxu0 0
      %3172 = vmatmul.mubr.bf16.gmra.mrb[0].mxu0 %v3134
      %v3173 = vpop.f32.mrb[0].mxu0
      %v3174 = vadd.f32 0.0, %v3173
      %v3175 = vpop.f32.mrb[0].mxu0
      %v3176 = vpop.f32.mrb[0].mxu0
      %v3177 = vpop.f32.mrb[0].mxu0
      %3178 = vdwg.mxu0
      %3179 = vrot.lane.b32.xlu0 %v563, 48
      %v3180 = vpop.permute.xlu0 %3179
      %v3182 = vsel %vm1068, %v3030, 0
      %v3185 = vsel %vm1072, %v3180, 0
      %3187 = vmatprep.subr.bf16.mxu0 0
      %3188 = vmatpush1.bf16.msra.mxu0 %v3185
      %3189 = vmatprep.subr.bf16.mxu0 0
      %3190 = vmatpush1.bf16.msra.mxu0 0
      %3191 = vmatprep.subr.bf16.mxu0 0
      %3192 = vmatpush1.bf16.msra.mxu0 0
      %3193 = vmatprep.subr.bf16.mxu0 0
      %3194 = vmatpush1.bf16.msra.mxu0 0
      %3195 = vmatprep.subr.bf16.mxu0 0
      %3196 = vmatpush1.bf16.msra.mxu0 0
      %3197 = vmatprep.subr.bf16.mxu0 0
      %3198 = vmatpush1.bf16.msra.mxu0 0
      %3199 = vmatprep.subr.bf16.mxu0 0
      %3200 = vmatpush1.bf16.msra.mxu0 0
      %3201 = vmatprep.subr.bf16.mxu0 0
      %3202 = vmatpush1.bf16.msra.mxu0 0
      %3203 = vmatprep.subr.bf16.mxu0 0
      %3204 = vmatpush1.bf16.msra.mxu0 0
      %3205 = vmatprep.subr.bf16.mxu0 0
      %3206 = vmatpush1.bf16.msra.mxu0 0
      %3207 = vmatprep.subr.bf16.mxu0 0
      %3208 = vmatpush1.bf16.msra.mxu0 0
      %3209 = vmatprep.subr.bf16.mxu0 0
      %3210 = vmatpush1.bf16.msra.mxu0 0
      %3211 = vmatprep.subr.bf16.mxu0 0
      %3212 = vmatpush1.bf16.msra.mxu0 0
      %3213 = vmatprep.subr.bf16.mxu0 0
      %3214 = vmatpush1.bf16.msra.mxu0 0
      %3215 = vmatprep.subr.bf16.mxu0 0
      %3216 = vmatpush1.bf16.msra.mxu0 0
      %3217 = vmatprep.subr.bf16.mxu0 0
      %3218 = vmatpush1.bf16.msra.mxu0 0
      %3219 = vmatprep.mubr.bf16.mxu0 0
      %3220 = vmatmul.mubr.bf16.gmra.mrb[0].mxu0 %v3182
      %v3221 = vpop.f32.mrb[0].mxu0
      %v3222 = vadd.f32 0.0, %v3221
      %v3223 = vpop.f32.mrb[0].mxu0
      %v3224 = vpop.f32.mrb[0].mxu0
      %v3225 = vpop.f32.mrb[0].mxu0
      %3226 = vdwg.mxu0
      %3227 = vrot.lane.b32.xlu0 %v564, 48
      %v3228 = vpop.permute.xlu0 %3227
      %v3230 = vsel %vm1068, %v3031, 0
      %v3233 = vsel %vm1072, %v3228, 0
      %3235 = vmatprep.subr.bf16.mxu0 0
      %3236 = vmatpush1.bf16.msra.mxu0 %v3233
      %3237 = vmatprep.subr.bf16.mxu0 0
      %3238 = vmatpush1.bf16.msra.mxu0 0
      %3239 = vmatprep.subr.bf16.mxu0 0
      %3240 = vmatpush1.bf16.msra.mxu0 0
      %3241 = vmatprep.subr.bf16.mxu0 0
      %3242 = vmatpush1.bf16.msra.mxu0 0
      %3243 = vmatprep.subr.bf16.mxu0 0
      %3244 = vmatpush1.bf16.msra.mxu0 0
      %3245 = vmatprep.subr.bf16.mxu0 0
      %3246 = vmatpush1.bf16.msra.mxu0 0
      %3247 = vmatprep.subr.bf16.mxu0 0
      %3248 = vmatpush1.bf16.msra.mxu0 0
      %3249 = vmatprep.subr.bf16.mxu0 0
      %3250 = vmatpush1.bf16.msra.mxu0 0
      %3251 = vmatprep.subr.bf16.mxu0 0
      %3252 = vmatpush1.bf16.msra.mxu0 0
      %3253 = vmatprep.subr.bf16.mxu0 0
      %3254 = vmatpush1.bf16.msra.mxu0 0
      %3255 = vmatprep.subr.bf16.mxu0 0
      %3256 = vmatpush1.bf16.msra.mxu0 0
      %3257 = vmatprep.subr.bf16.mxu0 0
      %3258 = vmatpush1.bf16.msra.mxu0 0
      %3259 = vmatprep.subr.bf16.mxu0 0
      %3260 = vmatpush1.bf16.msra.mxu0 0
      %3261 = vmatprep.subr.bf16.mxu0 0
      %3262 = vmatpush1.bf16.msra.mxu0 0
      %3263 = vmatprep.subr.bf16.mxu0 0
      %3264 = vmatpush1.bf16.msra.mxu0 0
      %3265 = vmatprep.subr.bf16.mxu0 0
      %3266 = vmatpush1.bf16.msra.mxu0 0
      %3267 = vmatprep.mubr.bf16.mxu0 0
      %3268 = vmatmul.mubr.bf16.gmra.mrb[0].mxu0 %v3230
      %v3269 = vpop.f32.mrb[0].mxu0
      %v3270 = vadd.f32 0.0, %v3269
      %v3271 = vpop.f32.mrb[0].mxu0
      %v3272 = vpop.f32.mrb[0].mxu0
      %v3273 = vpop.f32.mrb[0].mxu0
      %3274 = vdwg.mxu0
      %3275 = vrot.lane.b32.xlu0 %v565, 48
      %v3276 = vpop.permute.xlu0 %3275
      %v3278 = vsel %vm1068, %v3032, 0
      %v3281 = vsel %vm1072, %v3276, 0
      %3283 = vmatprep.subr.bf16.mxu0 0
      %3284 = vmatpush1.bf16.msra.mxu0 %v3281
      %3285 = vmatprep.subr.bf16.mxu0 0
      %3286 = vmatpush1.bf16.msra.mxu0 0
      %3287 = vmatprep.subr.bf16.mxu0 0
      %3288 = vmatpush1.bf16.msra.mxu0 0
      %3289 = vmatprep.subr.bf16.mxu0 0
      %3290 = vmatpush1.bf16.msra.mxu0 0
      %3291 = vmatprep.subr.bf16.mxu0 0
      %3292 = vmatpush1.bf16.msra.mxu0 0
      %3293 = vmatprep.subr.bf16.mxu0 0
      %3294 = vmatpush1.bf16.msra.mxu0 0
      %3295 = vmatprep.subr.bf16.mxu0 0
      %3296 = vmatpush1.bf16.msra.mxu0 0
      %3297 = vmatprep.subr.bf16.mxu0 0
      %3298 = vmatpush1.bf16.msra.mxu0 0
      %3299 = vmatprep.subr.bf16.mxu0 0
      %3300 = vmatpush1.bf16.msra.mxu0 0
      %3301 = vmatprep.subr.bf16.mxu0 0
      %3302 = vmatpush1.bf16.msra.mxu0 0
      %3303 = vmatprep.subr.bf16.mxu0 0
      %3304 = vmatpush1.bf16.msra.mxu0 0
      %3305 = vmatprep.subr.bf16.mxu0 0
      %3306 = vmatpush1.bf16.msra.mxu0 0
      %3307 = vmatprep.subr.bf16.mxu0 0
      %3308 = vmatpush1.bf16.msra.mxu0 0
      %3309 = vmatprep.subr.bf16.mxu0 0
      %3310 = vmatpush1.bf16.msra.mxu0 0
      %3311 = vmatprep.subr.bf16.mxu0 0
      %3312 = vmatpush1.bf16.msra.mxu0 0
      %3313 = vmatprep.subr.bf16.mxu0 0
      %3314 = vmatpush1.bf16.msra.mxu0 0
      %3315 = vmatprep.mubr.bf16.mxu0 0
      %3316 = vmatmul.mubr.bf16.gmra.mrb[0].mxu0 %v3278
      %v3317 = vpop.f32.mrb[0].mxu0
      %v3318 = vadd.f32 0.0, %v3317
      %v3319 = vpop.f32.mrb[0].mxu0
      %v3320 = vpop.f32.mrb[0].mxu0
      %v3321 = vpop.f32.mrb[0].mxu0
      %3322 = vdwg.mxu0
      %3323 = vrot.lane.b32.xlu0 %v566, 48
      %v3324 = vpop.permute.xlu0 %3323
      %v3326 = vsel %vm1068, %v3033, 0
      %v3329 = vsel %vm1072, %v3324, 0
      %3331 = vmatprep.subr.bf16.mxu0 0
      %3332 = vmatpush1.bf16.msra.mxu0 %v3329
      %3333 = vmatprep.subr.bf16.mxu0 0
      %3334 = vmatpush1.bf16.msra.mxu0 0
      %3335 = vmatprep.subr.bf16.mxu0 0
      %3336 = vmatpush1.bf16.msra.mxu0 0
      %3337 = vmatprep.subr.bf16.mxu0 0
      %3338 = vmatpush1.bf16.msra.mxu0 0
      %3339 = vmatprep.subr.bf16.mxu0 0
      %3340 = vmatpush1.bf16.msra.mxu0 0
      %3341 = vmatprep.subr.bf16.mxu0 0
      %3342 = vmatpush1.bf16.msra.mxu0 0
      %3343 = vmatprep.subr.bf16.mxu0 0
      %3344 = vmatpush1.bf16.msra.mxu0 0
      %3345 = vmatprep.subr.bf16.mxu0 0
      %3346 = vmatpush1.bf16.msra.mxu0 0
      %3347 = vmatprep.subr.bf16.mxu0 0
      %3348 = vmatpush1.bf16.msra.mxu0 0
      %3349 = vmatprep.subr.bf16.mxu0 0
      %3350 = vmatpush1.bf16.msra.mxu0 0
      %3351 = vmatprep.subr.bf16.mxu0 0
      %3352 = vmatpush1.bf16.msra.mxu0 0
      %3353 = vmatprep.subr.bf16.mxu0 0
      %3354 = vmatpush1.bf16.msra.mxu0 0
      %3355 = vmatprep.subr.bf16.mxu0 0
      %3356 = vmatpush1.bf16.msra.mxu0 0
      %3357 = vmatprep.subr.bf16.mxu0 0
      %3358 = vmatpush1.bf16.msra.mxu0 0
      %3359 = vmatprep.subr.bf16.mxu0 0
      %3360 = vmatpush1.bf16.msra.mxu0 0
      %3361 = vmatprep.subr.bf16.mxu0 0
      %3362 = vmatpush1.bf16.msra.mxu0 0
      %3363 = vmatprep.mubr.bf16.mxu0 0
      %3364 = vmatmul.mubr.bf16.gmra.mrb[0].mxu0 %v3326
      %v3365 = vpop.f32.mrb[0].mxu0
      %v3366 = vadd.f32 0.0, %v3365
      %v3367 = vpop.f32.mrb[0].mxu0
      %v3368 = vpop.f32.mrb[0].mxu0
      %v3369 = vpop.f32.mrb[0].mxu0
      %3370 = vdwg.mxu0
      %3371 = vrot.lane.b32.xlu0 %v567, 48
      %v3372 = vpop.permute.xlu0 %3371
      %v3374 = vsel %vm1068, %v3034, 0
      %v3377 = vsel %vm1072, %v3372, 0
      %3379 = vmatprep.subr.bf16.mxu0 0
      %3380 = vmatpush1.bf16.msra.mxu0 %v3377
      %3381 = vmatprep.subr.bf16.mxu0 0
      %3382 = vmatpush1.bf16.msra.mxu0 0
      %3383 = vmatprep.subr.bf16.mxu0 0
      %3384 = vmatpush1.bf16.msra.mxu0 0
      %3385 = vmatprep.subr.bf16.mxu0 0
      %3386 = vmatpush1.bf16.msra.mxu0 0
      %3387 = vmatprep.subr.bf16.mxu0 0
      %3388 = vmatpush1.bf16.msra.mxu0 0
      %3389 = vmatprep.subr.bf16.mxu0 0
      %3390 = vmatpush1.bf16.msra.mxu0 0
      %3391 = vmatprep.subr.bf16.mxu0 0
      %3392 = vmatpush1.bf16.msra.mxu0 0
      %3393 = vmatprep.subr.bf16.mxu0 0
      %3394 = vmatpush1.bf16.msra.mxu0 0
      %3395 = vmatprep.subr.bf16.mxu0 0
      %3396 = vmatpush1.bf16.msra.mxu0 0
      %3397 = vmatprep.subr.bf16.mxu0 0
      %3398 = vmatpush1.bf16.msra.mxu0 0
      %3399 = vmatprep.subr.bf16.mxu0 0
      %3400 = vmatpush1.bf16.msra.mxu0 0
      %3401 = vmatprep.subr.bf16.mxu0 0
      %3402 = vmatpush1.bf16.msra.mxu0 0
      %3403 = vmatprep.subr.bf16.mxu0 0
      %3404 = vmatpush1.bf16.msra.mxu0 0
      %3405 = vmatprep.subr.bf16.mxu0 0
      %3406 = vmatpush1.bf16.msra.mxu0 0
      %3407 = vmatprep.subr.bf16.mxu0 0
      %3408 = vmatpush1.bf16.msra.mxu0 0
      %3409 = vmatprep.subr.bf16.mxu0 0
      %3410 = vmatpush1.bf16.msra.mxu0 0
      %3411 = vmatprep.mubr.bf16.mxu0 0
      %3412 = vmatmul.mubr.bf16.gmra.mrb[0].mxu0 %v3374
      %v3413 = vpop.f32.mrb[0].mxu0
      %v3414 = vadd.f32 0.0, %v3413
      %v3415 = vpop.f32.mrb[0].mxu0
      %v3416 = vpop.f32.mrb[0].mxu0
      %v3417 = vpop.f32.mrb[0].mxu0
      %3418 = vdwg.mxu0
      %v3427 = vcombine.low %v3078, %v3126
      %v3428 = vcombine.low %v3174, %v3222
      %v3430 = vunpack.c.l.s4 1983009808
      %v3431 = vunpack.c.0.s8 %v3430
      %v3432 = vlaneseq
      %v3433 = vshrl.u32 %v3432, 7
      %v3434 = vsub.s32 %v3431, %v3433
      %v3435 = vrot.slane %v3427, %v3434
      %v3437 = vunpack.c.l.s4 1983009808
      %v3438 = vunpack.c.0.s8 %v3437
      %v3439 = vlaneseq
      %v3440 = vshrl.u32 %v3439, 7
      %v3441 = vsub.s32 %v3438, %v3440
      %v3442 = vrot.slane %v3428, %v3441
      %v3443 = vcombine.low %v3435, %v3442
      %v3444 = vcombine.low %v3270, %v3318
      %v3445 = vcombine.low %v3366, %v3414
      %v3447 = vunpack.c.l.s4 1983009808
      %v3448 = vunpack.c.0.s8 %v3447
      %v3449 = vlaneseq
      %v3450 = vshrl.u32 %v3449, 7
      %v3451 = vsub.s32 %v3448, %v3450
      %v3452 = vrot.slane %v3444, %v3451
      %v3454 = vunpack.c.l.s4 1983009808
      %v3455 = vunpack.c.0.s8 %v3454
      %v3456 = vlaneseq
      %v3457 = vshrl.u32 %v3456, 7
      %v3458 = vsub.s32 %v3455, %v3457
      %v3459 = vrot.slane %v3445, %v3458
      %v3460 = vcombine.low %v3452, %v3459
      %v3463 = vpack.c.bf16 %v3460, %v3443
      %v3464 = vld [vmem:[%s5 + $0x8] sm:$0xf]
      %v3466 = vsel %vm571, %v3463, 0
      %v3469 = vsel %vm1501, %v3464, 0
      %3471 = vmatprep.subr.bf16.mxu0 0
      %3472 = vmatpush1.bf16.msra.mxu0 %v3469
      %3473 = vmatprep.subr.bf16.mxu0 0
      %3474 = vmatpush1.bf16.msra.mxu0 0
      %3475 = vmatprep.subr.bf16.mxu0 0
      %3476 = vmatpush1.bf16.msra.mxu0 0
      %3477 = vmatprep.subr.bf16.mxu0 0
      %3478 = vmatpush1.bf16.msra.mxu0 0
      %3479 = vmatprep.subr.bf16.mxu0 0
      %3480 = vmatpush1.bf16.msra.mxu0 0
      %3481 = vmatprep.subr.bf16.mxu0 0
      %3482 = vmatpush1.bf16.msra.mxu0 0
      %3483 = vmatprep.subr.bf16.mxu0 0
      %3484 = vmatpush1.bf16.msra.mxu0 0
      %3485 = vmatprep.subr.bf16.mxu0 0
      %3486 = vmatpush1.bf16.msra.mxu0 0
      %3487 = vmatprep.subr.bf16.mxu0 0
      %3488 = vmatpush1.bf16.msra.mxu0 0
      %3489 = vmatprep.subr.bf16.mxu0 0
      %3490 = vmatpush1.bf16.msra.mxu0 0
      %3491 = vmatprep.subr.bf16.mxu0 0
      %3492 = vmatpush1.bf16.msra.mxu0 0
      %3493 = vmatprep.subr.bf16.mxu0 0
      %3494 = vmatpush1.bf16.msra.mxu0 0
      %3495 = vmatprep.subr.bf16.mxu0 0
      %3496 = vmatpush1.bf16.msra.mxu0 0
      %3497 = vmatprep.subr.bf16.mxu0 0
      %3498 = vmatpush1.bf16.msra.mxu0 0
      %3499 = vmatprep.subr.bf16.mxu0 0
      %3500 = vmatpush1.bf16.msra.mxu0 0
      %3501 = vmatprep.subr.bf16.mxu0 0
      %3502 = vmatpush1.bf16.msra.mxu0 0
      %3503 = vmatprep.mubr.bf16.mxu0 0
      %3504 = vmatmul.mubr.bf16.gmra.mrb[0].mxu0 %v3466
      %v3505 = vpop.f32.mrb[0].mxu0
      %v3506 = vadd.f32 0.0, %v3505
      %v3507 = vpop.f32.mrb[0].mxu0
      %v3508 = vpop.f32.mrb[0].mxu0
      %v3509 = vadd.f32 0.0, %v3508
      %v3510 = vpop.f32.mrb[0].mxu0
      %3511 = vdwg.mxu0
      %v3512 = vadd.f32 %v2529, %v3506
      %v3513 = vadd.f32 %v2530, %v3509
      %3514 = vrot.lane.b32.xlu0 %v560, 104
      %v3515 = vpop.permute.xlu0 %3514
      %3516 = vrot.lane.b32.xlu0 %v560, 72
      %v3517 = vpop.permute.xlu0 %3516
      %v3519 = vsel %vm571, %v3515, 0
      %v3522 = vsel %vm571, %v3517, 0
      %3524 = vmatprep.subr.bf16.mxu0 0
      %3525 = vmatpush1.bf16.xpose.msra.mxu0 %v3522
      %3526 = vmatprep.subr.bf16.mxu0 0
      %3527 = vmatpush1.bf16.xpose.msra.mxu0 0
      %3528 = vmatprep.subr.bf16.mxu0 0
      %3529 = vmatpush1.bf16.xpose.msra.mxu0 0
      %3530 = vmatprep.subr.bf16.mxu0 0
      %3531 = vmatpush1.bf16.xpose.msra.mxu0 0
      %3532 = vmatprep.subr.bf16.mxu0 0
      %3533 = vmatpush1.bf16.xpose.msra.mxu0 0
      %3534 = vmatprep.subr.bf16.mxu0 0
      %3535 = vmatpush1.bf16.xpose.msra.mxu0 0
      %3536 = vmatprep.subr.bf16.mxu0 0
      %3537 = vmatpush1.bf16.xpose.msra.mxu0 0
      %3538 = vmatprep.subr.bf16.mxu0 0
      %3539 = vmatpush1.bf16.xpose.msra.mxu0 0
      %3540 = vmatprep.subr.bf16.mxu0 0
      %3541 = vmatpush1.bf16.xpose.msra.mxu0 0
      %3542 = vmatprep.subr.bf16.mxu0 0
      %3543 = vmatpush1.bf16.xpose.msra.mxu0 0
      %3544 = vmatprep.subr.bf16.mxu0 0
      %3545 = vmatpush1.bf16.xpose.msra.mxu0 0
      %3546 = vmatprep.subr.bf16.mxu0 0
      %3547 = vmatpush1.bf16.xpose.msra.mxu0 0
      %3548 = vmatprep.subr.bf16.mxu0 0
      %3549 = vmatpush1.bf16.xpose.msra.mxu0 0
      %3550 = vmatprep.subr.bf16.mxu0 0
      %3551 = vmatpush1.bf16.xpose.msra.mxu0 0
      %3552 = vmatprep.subr.bf16.mxu0 0
      %3553 = vmatpush1.bf16.xpose.msra.mxu0 0
      %3554 = vmatprep.subr.bf16.mxu0 0
      %3555 = vmatpush1.bf16.xpose.msra.mxu0 0
      %3556 = vmatprep.mubr.bf16.mxu0 0
      %3557 = vmatmul.mubr.bf16.gmra.mrb[0].mxu0 %v3519
      %v3558 = vpop.f32.mrb[0].mxu0
      %v3559 = vadd.f32 0.0, %v3558
      %v3560 = vpop.f32.mrb[0].mxu0
      %v3561 = vpop.f32.mrb[0].mxu0
      %v3562 = vpop.f32.mrb[0].mxu0
      %3563 = vdwg.mxu0
      %3564 = vrot.lane.b32.xlu0 %v561, 104
      %v3565 = vpop.permute.xlu0 %3564
      %3566 = vrot.lane.b32.xlu0 %v561, 72
      %v3567 = vpop.permute.xlu0 %3566
      %v3569 = vsel %vm571, %v3565, 0
      %v3572 = vsel %vm571, %v3567, 0
      %3574 = vmatprep.subr.bf16.mxu0 0
      %3575 = vmatpush1.bf16.xpose.msra.mxu0 %v3572
      %3576 = vmatprep.subr.bf16.mxu0 0
      %3577 = vmatpush1.bf16.xpose.msra.mxu0 0
      %3578 = vmatprep.subr.bf16.mxu0 0
      %3579 = vmatpush1.bf16.xpose.msra.mxu0 0
      %3580 = vmatprep.subr.bf16.mxu0 0
      %3581 = vmatpush1.bf16.xpose.msra.mxu0 0
      %3582 = vmatprep.subr.bf16.mxu0 0
      %3583 = vmatpush1.bf16.xpose.msra.mxu0 0
      %3584 = vmatprep.subr.bf16.mxu0 0
      %3585 = vmatpush1.bf16.xpose.msra.mxu0 0
      %3586 = vmatprep.subr.bf16.mxu0 0
      %3587 = vmatpush1.bf16.xpose.msra.mxu0 0
      %3588 = vmatprep.subr.bf16.mxu0 0
      %3589 = vmatpush1.bf16.xpose.msra.mxu0 0
      %3590 = vmatprep.subr.bf16.mxu0 0
      %3591 = vmatpush1.bf16.xpose.msra.mxu0 0
      %3592 = vmatprep.subr.bf16.mxu0 0
      %3593 = vmatpush1.bf16.xpose.msra.mxu0 0
      %3594 = vmatprep.subr.bf16.mxu0 0
      %3595 = vmatpush1.bf16.xpose.msra.mxu0 0
      %3596 = vmatprep.subr.bf16.mxu0 0
      %3597 = vmatpush1.bf16.xpose.msra.mxu0 0
      %3598 = vmatprep.subr.bf16.mxu0 0
      %3599 = vmatpush1.bf16.xpose.msra.mxu0 0
      %3600 = vmatprep.subr.bf16.mxu0 0
      %3601 = vmatpush1.bf16.xpose.msra.mxu0 0
      %3602 = vmatprep.subr.bf16.mxu0 0
      %3603 = vmatpush1.bf16.xpose.msra.mxu0 0
      %3604 = vmatprep.subr.bf16.mxu0 0
      %3605 = vmatpush1.bf16.xpose.msra.mxu0 0
      %3606 = vmatprep.mubr.bf16.mxu0 0
      %3607 = vmatmul.mubr.bf16.gmra.mrb[0].mxu0 %v3569
      %v3608 = vpop.f32.mrb[0].mxu0
      %v3609 = vadd.f32 0.0, %v3608
      %v3610 = vpop.f32.mrb[0].mxu0
      %v3611 = vpop.f32.mrb[0].mxu0
      %v3612 = vpop.f32.mrb[0].mxu0
      %3613 = vdwg.mxu0
      %3614 = vrot.lane.b32.xlu0 %v562, 104
      %v3615 = vpop.permute.xlu0 %3614
      %3616 = vrot.lane.b32.xlu0 %v562, 72
      %v3617 = vpop.permute.xlu0 %3616
      %v3619 = vsel %vm571, %v3615, 0
      %v3622 = vsel %vm571, %v3617, 0
      %3624 = vmatprep.subr.bf16.mxu0 0
      %3625 = vmatpush1.bf16.xpose.msra.mxu0 %v3622
      %3626 = vmatprep.subr.bf16.mxu0 0
      %3627 = vmatpush1.bf16.xpose.msra.mxu0 0
      %3628 = vmatprep.subr.bf16.mxu0 0
      %3629 = vmatpush1.bf16.xpose.msra.mxu0 0
      %3630 = vmatprep.subr.bf16.mxu0 0
      %3631 = vmatpush1.bf16.xpose.msra.mxu0 0
      %3632 = vmatprep.subr.bf16.mxu0 0
      %3633 = vmatpush1.bf16.xpose.msra.mxu0 0
      %3634 = vmatprep.subr.bf16.mxu0 0
      %3635 = vmatpush1.bf16.xpose.msra.mxu0 0
      %3636 = vmatprep.subr.bf16.mxu0 0
      %3637 = vmatpush1.bf16.xpose.msra.mxu0 0
      %3638 = vmatprep.subr.bf16.mxu0 0
      %3639 = vmatpush1.bf16.xpose.msra.mxu0 0
      %3640 = vmatprep.subr.bf16.mxu0 0
      %3641 = vmatpush1.bf16.xpose.msra.mxu0 0
      %3642 = vmatprep.subr.bf16.mxu0 0
      %3643 = vmatpush1.bf16.xpose.msra.mxu0 0
      %3644 = vmatprep.subr.bf16.mxu0 0
      %3645 = vmatpush1.bf16.xpose.msra.mxu0 0
      %3646 = vmatprep.subr.bf16.mxu0 0
      %3647 = vmatpush1.bf16.xpose.msra.mxu0 0
      %3648 = vmatprep.subr.bf16.mxu0 0
      %3649 = vmatpush1.bf16.xpose.msra.mxu0 0
      %3650 = vmatprep.subr.bf16.mxu0 0
      %3651 = vmatpush1.bf16.xpose.msra.mxu0 0
      %3652 = vmatprep.subr.bf16.mxu0 0
      %3653 = vmatpush1.bf16.xpose.msra.mxu0 0
      %3654 = vmatprep.subr.bf16.mxu0 0
      %3655 = vmatpush1.bf16.xpose.msra.mxu0 0
      %3656 = vmatprep.mubr.bf16.mxu0 0
      %3657 = vmatmul.mubr.bf16.gmra.mrb[0].mxu0 %v3619
      %v3658 = vpop.f32.mrb[0].mxu0
      %v3659 = vadd.f32 0.0, %v3658
      %v3660 = vpop.f32.mrb[0].mxu0
      %v3661 = vpop.f32.mrb[0].mxu0
      %v3662 = vpop.f32.mrb[0].mxu0
      %3663 = vdwg.mxu0
      %3664 = vrot.lane.b32.xlu0 %v563, 104
      %v3665 = vpop.permute.xlu0 %3664
      %3666 = vrot.lane.b32.xlu0 %v563, 72
      %v3667 = vpop.permute.xlu0 %3666
      %v3669 = vsel %vm571, %v3665, 0
      %v3672 = vsel %vm571, %v3667, 0
      %3674 = vmatprep.subr.bf16.mxu0 0
      %3675 = vmatpush1.bf16.xpose.msra.mxu0 %v3672
      %3676 = vmatprep.subr.bf16.mxu0 0
      %3677 = vmatpush1.bf16.xpose.msra.mxu0 0
      %3678 = vmatprep.subr.bf16.mxu0 0
      %3679 = vmatpush1.bf16.xpose.msra.mxu0 0
      %3680 = vmatprep.subr.bf16.mxu0 0
      %3681 = vmatpush1.bf16.xpose.msra.mxu0 0
      %3682 = vmatprep.subr.bf16.mxu0 0
      %3683 = vmatpush1.bf16.xpose.msra.mxu0 0
      %3684 = vmatprep.subr.bf16.mxu0 0
      %3685 = vmatpush1.bf16.xpose.msra.mxu0 0
      %3686 = vmatprep.subr.bf16.mxu0 0
      %3687 = vmatpush1.bf16.xpose.msra.mxu0 0
      %3688 = vmatprep.subr.bf16.mxu0 0
      %3689 = vmatpush1.bf16.xpose.msra.mxu0 0
      %3690 = vmatprep.subr.bf16.mxu0 0
      %3691 = vmatpush1.bf16.xpose.msra.mxu0 0
      %3692 = vmatprep.subr.bf16.mxu0 0
      %3693 = vmatpush1.bf16.xpose.msra.mxu0 0
      %3694 = vmatprep.subr.bf16.mxu0 0
      %3695 = vmatpush1.bf16.xpose.msra.mxu0 0
      %3696 = vmatprep.subr.bf16.mxu0 0
      %3697 = vmatpush1.bf16.xpose.msra.mxu0 0
      %3698 = vmatprep.subr.bf16.mxu0 0
      %3699 = vmatpush1.bf16.xpose.msra.mxu0 0
      %3700 = vmatprep.subr.bf16.mxu0 0
      %3701 = vmatpush1.bf16.xpose.msra.mxu0 0
      %3702 = vmatprep.subr.bf16.mxu0 0
      %3703 = vmatpush1.bf16.xpose.msra.mxu0 0
      %3704 = vmatprep.subr.bf16.mxu0 0
      %3705 = vmatpush1.bf16.xpose.msra.mxu0 0
      %3706 = vmatprep.mubr.bf16.mxu0 0
      %3707 = vmatmul.mubr.bf16.gmra.mrb[0].mxu0 %v3669
      %v3708 = vpop.f32.mrb[0].mxu0
      %v3709 = vadd.f32 0.0, %v3708
      %v3710 = vpop.f32.mrb[0].mxu0
      %v3711 = vpop.f32.mrb[0].mxu0
      %v3712 = vpop.f32.mrb[0].mxu0
      %3713 = vdwg.mxu0
      %3714 = vrot.lane.b32.xlu0 %v564, 104
      %v3715 = vpop.permute.xlu0 %3714
      %3716 = vrot.lane.b32.xlu0 %v564, 72
      %v3717 = vpop.permute.xlu0 %3716
      %v3719 = vsel %vm571, %v3715, 0
      %v3722 = vsel %vm571, %v3717, 0
      %3724 = vmatprep.subr.bf16.mxu0 0
      %3725 = vmatpush1.bf16.xpose.msra.mxu0 %v3722
      %3726 = vmatprep.subr.bf16.mxu0 0
      %3727 = vmatpush1.bf16.xpose.msra.mxu0 0
      %3728 = vmatprep.subr.bf16.mxu0 0
      %3729 = vmatpush1.bf16.xpose.msra.mxu0 0
      %3730 = vmatprep.subr.bf16.mxu0 0
      %3731 = vmatpush1.bf16.xpose.msra.mxu0 0
      %3732 = vmatprep.subr.bf16.mxu0 0
      %3733 = vmatpush1.bf16.xpose.msra.mxu0 0
      %3734 = vmatprep.subr.bf16.mxu0 0
      %3735 = vmatpush1.bf16.xpose.msra.mxu0 0
      %3736 = vmatprep.subr.bf16.mxu0 0
      %3737 = vmatpush1.bf16.xpose.msra.mxu0 0
      %3738 = vmatprep.subr.bf16.mxu0 0
      %3739 = vmatpush1.bf16.xpose.msra.mxu0 0
      %3740 = vmatprep.subr.bf16.mxu0 0
      %3741 = vmatpush1.bf16.xpose.msra.mxu0 0
      %3742 = vmatprep.subr.bf16.mxu0 0
      %3743 = vmatpush1.bf16.xpose.msra.mxu0 0
      %3744 = vmatprep.subr.bf16.mxu0 0
      %3745 = vmatpush1.bf16.xpose.msra.mxu0 0
      %3746 = vmatprep.subr.bf16.mxu0 0
      %3747 = vmatpush1.bf16.xpose.msra.mxu0 0
      %3748 = vmatprep.subr.bf16.mxu0 0
      %3749 = vmatpush1.bf16.xpose.msra.mxu0 0
      %3750 = vmatprep.subr.bf16.mxu0 0
      %3751 = vmatpush1.bf16.xpose.msra.mxu0 0
      %3752 = vmatprep.subr.bf16.mxu0 0
      %3753 = vmatpush1.bf16.xpose.msra.mxu0 0
      %3754 = vmatprep.subr.bf16.mxu0 0
      %3755 = vmatpush1.bf16.xpose.msra.mxu0 0
      %3756 = vmatprep.mubr.bf16.mxu0 0
      %3757 = vmatmul.mubr.bf16.gmra.mrb[0].mxu0 %v3719
      %v3758 = vpop.f32.mrb[0].mxu0
      %v3759 = vadd.f32 0.0, %v3758
      %v3760 = vpop.f32.mrb[0].mxu0
      %v3761 = vpop.f32.mrb[0].mxu0
      %v3762 = vpop.f32.mrb[0].mxu0
      %3763 = vdwg.mxu0
      %3764 = vrot.lane.b32.xlu0 %v565, 104
      %v3765 = vpop.permute.xlu0 %3764
      %3766 = vrot.lane.b32.xlu0 %v565, 72
      %v3767 = vpop.permute.xlu0 %3766
      %v3769 = vsel %vm571, %v3765, 0
      %v3772 = vsel %vm571, %v3767, 0
      %3774 = vmatprep.subr.bf16.mxu0 0
      %3775 = vmatpush1.bf16.xpose.msra.mxu0 %v3772
      %3776 = vmatprep.subr.bf16.mxu0 0
      %3777 = vmatpush1.bf16.xpose.msra.mxu0 0
      %3778 = vmatprep.subr.bf16.mxu0 0
      %3779 = vmatpush1.bf16.xpose.msra.mxu0 0
      %3780 = vmatprep.subr.bf16.mxu0 0
      %3781 = vmatpush1.bf16.xpose.msra.mxu0 0
      %3782 = vmatprep.subr.bf16.mxu0 0
      %3783 = vmatpush1.bf16.xpose.msra.mxu0 0
      %3784 = vmatprep.subr.bf16.mxu0 0
      %3785 = vmatpush1.bf16.xpose.msra.mxu0 0
      %3786 = vmatprep.subr.bf16.mxu0 0
      %3787 = vmatpush1.bf16.xpose.msra.mxu0 0
      %3788 = vmatprep.subr.bf16.mxu0 0
      %3789 = vmatpush1.bf16.xpose.msra.mxu0 0
      %3790 = vmatprep.subr.bf16.mxu0 0
      %3791 = vmatpush1.bf16.xpose.msra.mxu0 0
      %3792 = vmatprep.subr.bf16.mxu0 0
      %3793 = vmatpush1.bf16.xpose.msra.mxu0 0
      %3794 = vmatprep.subr.bf16.mxu0 0
      %3795 = vmatpush1.bf16.xpose.msra.mxu0 0
      %3796 = vmatprep.subr.bf16.mxu0 0
      %3797 = vmatpush1.bf16.xpose.msra.mxu0 0
      %3798 = vmatprep.subr.bf16.mxu0 0
      %3799 = vmatpush1.bf16.xpose.msra.mxu0 0
      %3800 = vmatprep.subr.bf16.mxu0 0
      %3801 = vmatpush1.bf16.xpose.msra.mxu0 0
      %3802 = vmatprep.subr.bf16.mxu0 0
      %3803 = vmatpush1.bf16.xpose.msra.mxu0 0
      %3804 = vmatprep.subr.bf16.mxu0 0
      %3805 = vmatpush1.bf16.xpose.msra.mxu0 0
      %3806 = vmatprep.mubr.bf16.mxu0 0
      %3807 = vmatmul.mubr.bf16.gmra.mrb[0].mxu0 %v3769
      %v3808 = vpop.f32.mrb[0].mxu0
      %v3809 = vadd.f32 0.0, %v3808
      %v3810 = vpop.f32.mrb[0].mxu0
      %v3811 = vpop.f32.mrb[0].mxu0
      %v3812 = vpop.f32.mrb[0].mxu0
      %3813 = vdwg.mxu0
      %3814 = vrot.lane.b32.xlu0 %v566, 104
      %v3815 = vpop.permute.xlu0 %3814
      %3816 = vrot.lane.b32.xlu0 %v566, 72
      %v3817 = vpop.permute.xlu0 %3816
      %v3819 = vsel %vm571, %v3815, 0
      %v3822 = vsel %vm571, %v3817, 0
      %3824 = vmatprep.subr.bf16.mxu0 0
      %3825 = vmatpush1.bf16.xpose.msra.mxu0 %v3822
      %3826 = vmatprep.subr.bf16.mxu0 0
      %3827 = vmatpush1.bf16.xpose.msra.mxu0 0
      %3828 = vmatprep.subr.bf16.mxu0 0
      %3829 = vmatpush1.bf16.xpose.msra.mxu0 0
      %3830 = vmatprep.subr.bf16.mxu0 0
      %3831 = vmatpush1.bf16.xpose.msra.mxu0 0
      %3832 = vmatprep.subr.bf16.mxu0 0
      %3833 = vmatpush1.bf16.xpose.msra.mxu0 0
      %3834 = vmatprep.subr.bf16.mxu0 0
      %3835 = vmatpush1.bf16.xpose.msra.mxu0 0
      %3836 = vmatprep.subr.bf16.mxu0 0
      %3837 = vmatpush1.bf16.xpose.msra.mxu0 0
      %3838 = vmatprep.subr.bf16.mxu0 0
      %3839 = vmatpush1.bf16.xpose.msra.mxu0 0
      %3840 = vmatprep.subr.bf16.mxu0 0
      %3841 = vmatpush1.bf16.xpose.msra.mxu0 0
      %3842 = vmatprep.subr.bf16.mxu0 0
      %3843 = vmatpush1.bf16.xpose.msra.mxu0 0
      %3844 = vmatprep.subr.bf16.mxu0 0
      %3845 = vmatpush1.bf16.xpose.msra.mxu0 0
      %3846 = vmatprep.subr.bf16.mxu0 0
      %3847 = vmatpush1.bf16.xpose.msra.mxu0 0
      %3848 = vmatprep.subr.bf16.mxu0 0
      %3849 = vmatpush1.bf16.xpose.msra.mxu0 0
      %3850 = vmatprep.subr.bf16.mxu0 0
      %3851 = vmatpush1.bf16.xpose.msra.mxu0 0
      %3852 = vmatprep.subr.bf16.mxu0 0
      %3853 = vmatpush1.bf16.xpose.msra.mxu0 0
      %3854 = vmatprep.subr.bf16.mxu0 0
      %3855 = vmatpush1.bf16.xpose.msra.mxu0 0
      %3856 = vmatprep.mubr.bf16.mxu0 0
      %3857 = vmatmul.mubr.bf16.gmra.mrb[0].mxu0 %v3819
      %v3858 = vpop.f32.mrb[0].mxu0
      %v3859 = vadd.f32 0.0, %v3858
      %v3860 = vpop.f32.mrb[0].mxu0
      %v3861 = vpop.f32.mrb[0].mxu0
      %v3862 = vpop.f32.mrb[0].mxu0
      %3863 = vdwg.mxu0
      %3864 = vrot.lane.b32.xlu0 %v567, 104
      %v3865 = vpop.permute.xlu0 %3864
      %3866 = vrot.lane.b32.xlu0 %v567, 72
      %v3867 = vpop.permute.xlu0 %3866
      %v3869 = vsel %vm571, %v3865, 0
      %v3872 = vsel %vm571, %v3867, 0
      %3874 = vmatprep.subr.bf16.mxu0 0
      %3875 = vmatpush1.bf16.xpose.msra.mxu0 %v3872
      %3876 = vmatprep.subr.bf16.mxu0 0
      %3877 = vmatpush1.bf16.xpose.msra.mxu0 0
      %3878 = vmatprep.subr.bf16.mxu0 0
      %3879 = vmatpush1.bf16.xpose.msra.mxu0 0
      %3880 = vmatprep.subr.bf16.mxu0 0
      %3881 = vmatpush1.bf16.xpose.msra.mxu0 0
      %3882 = vmatprep.subr.bf16.mxu0 0
      %3883 = vmatpush1.bf16.xpose.msra.mxu0 0
      %3884 = vmatprep.subr.bf16.mxu0 0
      %3885 = vmatpush1.bf16.xpose.msra.mxu0 0
      %3886 = vmatprep.subr.bf16.mxu0 0
      %3887 = vmatpush1.bf16.xpose.msra.mxu0 0
      %3888 = vmatprep.subr.bf16.mxu0 0
      %3889 = vmatpush1.bf16.xpose.msra.mxu0 0
      %3890 = vmatprep.subr.bf16.mxu0 0
      %3891 = vmatpush1.bf16.xpose.msra.mxu0 0
      %3892 = vmatprep.subr.bf16.mxu0 0
      %3893 = vmatpush1.bf16.xpose.msra.mxu0 0
      %3894 = vmatprep.subr.bf16.mxu0 0
      %3895 = vmatpush1.bf16.xpose.msra.mxu0 0
      %3896 = vmatprep.subr.bf16.mxu0 0
      %3897 = vmatpush1.bf16.xpose.msra.mxu0 0
      %3898 = vmatprep.subr.bf16.mxu0 0
      %3899 = vmatpush1.bf16.xpose.msra.mxu0 0
      %3900 = vmatprep.subr.bf16.mxu0 0
      %3901 = vmatpush1.bf16.xpose.msra.mxu0 0
      %3902 = vmatprep.subr.bf16.mxu0 0
      %3903 = vmatpush1.bf16.xpose.msra.mxu0 0
      %3904 = vmatprep.subr.bf16.mxu0 0
      %3905 = vmatpush1.bf16.xpose.msra.mxu0 0
      %3906 = vmatprep.mubr.bf16.mxu0 0
      %3907 = vmatmul.mubr.bf16.gmra.mrb[0].mxu0 %v3869
      %v3908 = vpop.f32.mrb[0].mxu0
      %v3909 = vadd.f32 0.0, %v3908
      %v3910 = vpop.f32.mrb[0].mxu0
      %v3911 = vpop.f32.mrb[0].mxu0
      %v3912 = vpop.f32.mrb[0].mxu0
      %3913 = vdwg.mxu0
      %v3914 = vmul.f32 %v3559, 0.35355338
      %v3915 = vmul.f32 %v3609, 0.35355338
      %v3916 = vmul.f32 %v3659, 0.35355338
      %v3917 = vmul.f32 %v3709, 0.35355338
      %v3918 = vmul.f32 %v3759, 0.35355338
      %v3919 = vmul.f32 %v3809, 0.35355338
      %v3920 = vmul.f32 %v3859, 0.35355338
      %v3921 = vmul.f32 %v3909, 0.35355338
      %v3922 = vsel %vm969, %v3914, -inf
      %3923 = vmax.xlane.f32.xlu0 %v3922
      %v3924 = vpop.xlane.xlu0 %3923
      %v3925 = vsel %vm969, %v3915, -inf
      %3926 = vmax.xlane.f32.xlu0 %v3925
      %v3927 = vpop.xlane.xlu0 %3926
      %v3928 = vsel %vm969, %v3916, -inf
      %3929 = vmax.xlane.f32.xlu0 %v3928
      %v3930 = vpop.xlane.xlu0 %3929
      %v3931 = vsel %vm969, %v3917, -inf
      %3932 = vmax.xlane.f32.xlu0 %v3931
      %v3933 = vpop.xlane.xlu0 %3932
      %v3934 = vsel %vm969, %v3918, -inf
      %3935 = vmax.xlane.f32.xlu0 %v3934
      %v3936 = vpop.xlane.xlu0 %3935
      %v3937 = vsel %vm969, %v3919, -inf
      %3938 = vmax.xlane.f32.xlu0 %v3937
      %v3939 = vpop.xlane.xlu0 %3938
      %v3940 = vsel %vm969, %v3920, -inf
      %3941 = vmax.xlane.f32.xlu0 %v3940
      %v3942 = vpop.xlane.xlu0 %3941
      %v3943 = vsel %vm969, %v3921, -inf
      %3944 = vmax.xlane.f32.xlu0 %v3943
      %v3945 = vpop.xlane.xlu0 %3944
      %v3946 = vsub.f32 %v3914, %v3924
      %v3947 = vsub.f32 %v3915, %v3927
      %v3948 = vsub.f32 %v3916, %v3930
      %v3949 = vsub.f32 %v3917, %v3933
      %v3950 = vsub.f32 %v3918, %v3936
      %v3951 = vsub.f32 %v3919, %v3939
      %v3952 = vsub.f32 %v3920, %v3942
      %v3953 = vsub.f32 %v3921, %v3945
      %v3954 = vmul.f32 %v3946, 1.442695
      %v3955 = vpow.pop %v3954
      %v3956 = vmul.f32 %v3947, 1.442695
      %v3957 = vpow.pop %v3956
      %v3958 = vmul.f32 %v3948, 1.442695
      %v3959 = vpow.pop %v3958
      %v3960 = vmul.f32 %v3949, 1.442695
      %v3961 = vpow.pop %v3960
      %v3962 = vmul.f32 %v3950, 1.442695
      %v3963 = vpow.pop %v3962
      %v3964 = vmul.f32 %v3951, 1.442695
      %v3965 = vpow.pop %v3964
      %v3966 = vmul.f32 %v3952, 1.442695
      %v3967 = vpow.pop %v3966
      %v3968 = vmul.f32 %v3953, 1.442695
      %v3969 = vpow.pop %v3968
      %v3970 = vsel %vm969, %v3955, 0.0
      %3971 = vadd.xlane.f32.xlu0 %v3970
      %v3972 = vpop.xlane.xlu0 %3971
      %v3973 = vsel %vm969, %v3957, 0.0
      %3974 = vadd.xlane.f32.xlu0 %v3973
      %v3975 = vpop.xlane.xlu0 %3974
      %v3976 = vsel %vm969, %v3959, 0.0
      %3977 = vadd.xlane.f32.xlu0 %v3976
      %v3978 = vpop.xlane.xlu0 %3977
      %v3979 = vsel %vm969, %v3961, 0.0
      %3980 = vadd.xlane.f32.xlu0 %v3979
      %v3981 = vpop.xlane.xlu0 %3980
      %v3982 = vsel %vm969, %v3963, 0.0
      %3983 = vadd.xlane.f32.xlu0 %v3982
      %v3984 = vpop.xlane.xlu0 %3983
      %v3985 = vsel %vm969, %v3965, 0.0
      %3986 = vadd.xlane.f32.xlu0 %v3985
      %v3987 = vpop.xlane.xlu0 %3986
      %v3988 = vsel %vm969, %v3967, 0.0
      %3989 = vadd.xlane.f32.xlu0 %v3988
      %v3990 = vpop.xlane.xlu0 %3989
      %v3991 = vsel %vm969, %v3969, 0.0
      %3992 = vadd.xlane.f32.xlu0 %v3991
      %v3993 = vpop.xlane.xlu0 %3992
      %v3994 = vrcp.pop %v3972
      %v3995 = vrcp.pop %v3975
      %v3996 = vrcp.pop %v3978
      %v3997 = vrcp.pop %v3981
      %v3998 = vrcp.pop %v3984
      %v3999 = vrcp.pop %v3987
      %v4000 = vrcp.pop %v3990
      %v4001 = vrcp.pop %v3993
      %v4002 = vmul.f32 %v3955, %v3994
      %v4003 = vmul.f32 %v3957, %v3995
      %v4004 = vmul.f32 %v3959, %v3996
      %v4005 = vmul.f32 %v3961, %v3997
      %v4006 = vmul.f32 %v3963, %v3998
      %v4007 = vmul.f32 %v3965, %v3999
      %v4008 = vmul.f32 %v3967, %v4000
      %v4009 = vmul.f32 %v3969, %v4001
      %v4010 = vpack.c.bf16 %v4002, %v4002
      %v4011 = vpack.c.bf16 %v4003, %v4003
      %v4012 = vpack.c.bf16 %v4004, %v4004
      %v4013 = vpack.c.bf16 %v4005, %v4005
      %v4014 = vpack.c.bf16 %v4006, %v4006
      %v4015 = vpack.c.bf16 %v4007, %v4007
      %v4016 = vpack.c.bf16 %v4008, %v4008
      %v4017 = vpack.c.bf16 %v4009, %v4009
      %4018 = vrot.lane.b32.xlu0 %v560, 40
      %v4019 = vpop.permute.xlu0 %4018
      %v4021 = vsel %vm1068, %v4010, 0
      %v4024 = vsel %vm1072, %v4019, 0
      %4026 = vmatprep.subr.bf16.mxu0 0
      %4027 = vmatpush1.bf16.msra.mxu0 %v4024
      %4028 = vmatprep.subr.bf16.mxu0 0
      %4029 = vmatpush1.bf16.msra.mxu0 0
      %4030 = vmatprep.subr.bf16.mxu0 0
      %4031 = vmatpush1.bf16.msra.mxu0 0
      %4032 = vmatprep.subr.bf16.mxu0 0
      %4033 = vmatpush1.bf16.msra.mxu0 0
      %4034 = vmatprep.subr.bf16.mxu0 0
      %4035 = vmatpush1.bf16.msra.mxu0 0
      %4036 = vmatprep.subr.bf16.mxu0 0
      %4037 = vmatpush1.bf16.msra.mxu0 0
      %4038 = vmatprep.subr.bf16.mxu0 0
      %4039 = vmatpush1.bf16.msra.mxu0 0
      %4040 = vmatprep.subr.bf16.mxu0 0
      %4041 = vmatpush1.bf16.msra.mxu0 0
      %4042 = vmatprep.subr.bf16.mxu0 0
      %4043 = vmatpush1.bf16.msra.mxu0 0
      %4044 = vmatprep.subr.bf16.mxu0 0
      %4045 = vmatpush1.bf16.msra.mxu0 0
      %4046 = vmatprep.subr.bf16.mxu0 0
      %4047 = vmatpush1.bf16.msra.mxu0 0
      %4048 = vmatprep.subr.bf16.mxu0 0
      %4049 = vmatpush1.bf16.msra.mxu0 0
      %4050 = vmatprep.subr.bf16.mxu0 0
      %4051 = vmatpush1.bf16.msra.mxu0 0
      %4052 = vmatprep.subr.bf16.mxu0 0
      %4053 = vmatpush1.bf16.msra.mxu0 0
      %4054 = vmatprep.subr.bf16.mxu0 0
      %4055 = vmatpush1.bf16.msra.mxu0 0
      %4056 = vmatprep.subr.bf16.mxu0 0
      %4057 = vmatpush1.bf16.msra.mxu0 0
      %4058 = vmatprep.mubr.bf16.mxu0 0
      %4059 = vmatmul.mubr.bf16.gmra.mrb[0].mxu0 %v4021
      %v4060 = vpop.f32.mrb[0].mxu0
      %v4061 = vadd.f32 0.0, %v4060
      %v4062 = vpop.f32.mrb[0].mxu0
      %v4063 = vpop.f32.mrb[0].mxu0
      %v4064 = vpop.f32.mrb[0].mxu0
      %4065 = vdwg.mxu0
      %4066 = vrot.lane.b32.xlu0 %v561, 40
      %v4067 = vpop.permute.xlu0 %4066
      %v4069 = vsel %vm1068, %v4011, 0
      %v4072 = vsel %vm1072, %v4067, 0
      %4074 = vmatprep.subr.bf16.mxu0 0
      %4075 = vmatpush1.bf16.msra.mxu0 %v4072
      %4076 = vmatprep.subr.bf16.mxu0 0
      %4077 = vmatpush1.bf16.msra.mxu0 0
      %4078 = vmatprep.subr.bf16.mxu0 0
      %4079 = vmatpush1.bf16.msra.mxu0 0
      %4080 = vmatprep.subr.bf16.mxu0 0
      %4081 = vmatpush1.bf16.msra.mxu0 0
      %4082 = vmatprep.subr.bf16.mxu0 0
      %4083 = vmatpush1.bf16.msra.mxu0 0
      %4084 = vmatprep.subr.bf16.mxu0 0
      %4085 = vmatpush1.bf16.msra.mxu0 0
      %4086 = vmatprep.subr.bf16.mxu0 0
      %4087 = vmatpush1.bf16.msra.mxu0 0
      %4088 = vmatprep.subr.bf16.mxu0 0
      %4089 = vmatpush1.bf16.msra.mxu0 0
      %4090 = vmatprep.subr.bf16.mxu0 0
      %4091 = vmatpush1.bf16.msra.mxu0 0
      %4092 = vmatprep.subr.bf16.mxu0 0
      %4093 = vmatpush1.bf16.msra.mxu0 0
      %4094 = vmatprep.subr.bf16.mxu0 0
      %4095 = vmatpush1.bf16.msra.mxu0 0
      %4096 = vmatprep.subr.bf16.mxu0 0
      %4097 = vmatpush1.bf16.msra.mxu0 0
      %4098 = vmatprep.subr.bf16.mxu0 0
      %4099 = vmatpush1.bf16.msra.mxu0 0
      %4100 = vmatprep.subr.bf16.mxu0 0
      %4101 = vmatpush1.bf16.msra.mxu0 0
      %4102 = vmatprep.subr.bf16.mxu0 0
      %4103 = vmatpush1.bf16.msra.mxu0 0
      %4104 = vmatprep.subr.bf16.mxu0 0
      %4105 = vmatpush1.bf16.msra.mxu0 0
      %4106 = vmatprep.mubr.bf16.mxu0 0
      %4107 = vmatmul.mubr.bf16.gmra.mrb[0].mxu0 %v4069
      %v4108 = vpop.f32.mrb[0].mxu0
      %v4109 = vadd.f32 0.0, %v4108
      %v4110 = vpop.f32.mrb[0].mxu0
      %v4111 = vpop.f32.mrb[0].mxu0
      %v4112 = vpop.f32.mrb[0].mxu0
      %4113 = vdwg.mxu0
      %4114 = vrot.lane.b32.xlu0 %v562, 40
      %v4115 = vpop.permute.xlu0 %4114
      %v4117 = vsel %vm1068, %v4012, 0
      %v4120 = vsel %vm1072, %v4115, 0
      %4122 = vmatprep.subr.bf16.mxu0 0
      %4123 = vmatpush1.bf16.msra.mxu0 %v4120
      %4124 = vmatprep.subr.bf16.mxu0 0
      %4125 = vmatpush1.bf16.msra.mxu0 0
      %4126 = vmatprep.subr.bf16.mxu0 0
      %4127 = vmatpush1.bf16.msra.mxu0 0
      %4128 = vmatprep.subr.bf16.mxu0 0
      %4129 = vmatpush1.bf16.msra.mxu0 0
      %4130 = vmatprep.subr.bf16.mxu0 0
      %4131 = vmatpush1.bf16.msra.mxu0 0
      %4132 = vmatprep.subr.bf16.mxu0 0
      %4133 = vmatpush1.bf16.msra.mxu0 0
      %4134 = vmatprep.subr.bf16.mxu0 0
      %4135 = vmatpush1.bf16.msra.mxu0 0
      %4136 = vmatprep.subr.bf16.mxu0 0
      %4137 = vmatpush1.bf16.msra.mxu0 0
      %4138 = vmatprep.subr.bf16.mxu0 0
      %4139 = vmatpush1.bf16.msra.mxu0 0
      %4140 = vmatprep.subr.bf16.mxu0 0
      %4141 = vmatpush1.bf16.msra.mxu0 0
      %4142 = vmatprep.subr.bf16.mxu0 0
      %4143 = vmatpush1.bf16.msra.mxu0 0
      %4144 = vmatprep.subr.bf16.mxu0 0
      %4145 = vmatpush1.bf16.msra.mxu0 0
      %4146 = vmatprep.subr.bf16.mxu0 0
      %4147 = vmatpush1.bf16.msra.mxu0 0
      %4148 = vmatprep.subr.bf16.mxu0 0
      %4149 = vmatpush1.bf16.msra.mxu0 0
      %4150 = vmatprep.subr.bf16.mxu0 0
      %4151 = vmatpush1.bf16.msra.mxu0 0
      %4152 = vmatprep.subr.bf16.mxu0 0
      %4153 = vmatpush1.bf16.msra.mxu0 0
      %4154 = vmatprep.mubr.bf16.mxu0 0
      %4155 = vmatmul.mubr.bf16.gmra.mrb[0].mxu0 %v4117
      %v4156 = vpop.f32.mrb[0].mxu0
      %v4157 = vadd.f32 0.0, %v4156
      %v4158 = vpop.f32.mrb[0].mxu0
      %v4159 = vpop.f32.mrb[0].mxu0
      %v4160 = vpop.f32.mrb[0].mxu0
      %4161 = vdwg.mxu0
      %4162 = vrot.lane.b32.xlu0 %v563, 40
      %v4163 = vpop.permute.xlu0 %4162
      %v4165 = vsel %vm1068, %v4013, 0
      %v4168 = vsel %vm1072, %v4163, 0
      %4170 = vmatprep.subr.bf16.mxu0 0
      %4171 = vmatpush1.bf16.msra.mxu0 %v4168
      %4172 = vmatprep.subr.bf16.mxu0 0
      %4173 = vmatpush1.bf16.msra.mxu0 0
      %4174 = vmatprep.subr.bf16.mxu0 0
      %4175 = vmatpush1.bf16.msra.mxu0 0
      %4176 = vmatprep.subr.bf16.mxu0 0
      %4177 = vmatpush1.bf16.msra.mxu0 0
      %4178 = vmatprep.subr.bf16.mxu0 0
      %4179 = vmatpush1.bf16.msra.mxu0 0
      %4180 = vmatprep.subr.bf16.mxu0 0
      %4181 = vmatpush1.bf16.msra.mxu0 0
      %4182 = vmatprep.subr.bf16.mxu0 0
      %4183 = vmatpush1.bf16.msra.mxu0 0
      %4184 = vmatprep.subr.bf16.mxu0 0
      %4185 = vmatpush1.bf16.msra.mxu0 0
      %4186 = vmatprep.subr.bf16.mxu0 0
      %4187 = vmatpush1.bf16.msra.mxu0 0
      %4188 = vmatprep.subr.bf16.mxu0 0
      %4189 = vmatpush1.bf16.msra.mxu0 0
      %4190 = vmatprep.subr.bf16.mxu0 0
      %4191 = vmatpush1.bf16.msra.mxu0 0
      %4192 = vmatprep.subr.bf16.mxu0 0
      %4193 = vmatpush1.bf16.msra.mxu0 0
      %4194 = vmatprep.subr.bf16.mxu0 0
      %4195 = vmatpush1.bf16.msra.mxu0 0
      %4196 = vmatprep.subr.bf16.mxu0 0
      %4197 = vmatpush1.bf16.msra.mxu0 0
      %4198 = vmatprep.subr.bf16.mxu0 0
      %4199 = vmatpush1.bf16.msra.mxu0 0
      %4200 = vmatprep.subr.bf16.mxu0 0
      %4201 = vmatpush1.bf16.msra.mxu0 0
      %4202 = vmatprep.mubr.bf16.mxu0 0
      %4203 = vmatmul.mubr.bf16.gmra.mrb[0].mxu0 %v4165
      %v4204 = vpop.f32.mrb[0].mxu0
      %v4205 = vadd.f32 0.0, %v4204
      %v4206 = vpop.f32.mrb[0].mxu0
      %v4207 = vpop.f32.mrb[0].mxu0
      %v4208 = vpop.f32.mrb[0].mxu0
      %4209 = vdwg.mxu0
      %4210 = vrot.lane.b32.xlu0 %v564, 40
      %v4211 = vpop.permute.xlu0 %4210
      %v4213 = vsel %vm1068, %v4014, 0
      %v4216 = vsel %vm1072, %v4211, 0
      %4218 = vmatprep.subr.bf16.mxu0 0
      %4219 = vmatpush1.bf16.msra.mxu0 %v4216
      %4220 = vmatprep.subr.bf16.mxu0 0
      %4221 = vmatpush1.bf16.msra.mxu0 0
      %4222 = vmatprep.subr.bf16.mxu0 0
      %4223 = vmatpush1.bf16.msra.mxu0 0
      %4224 = vmatprep.subr.bf16.mxu0 0
      %4225 = vmatpush1.bf16.msra.mxu0 0
      %4226 = vmatprep.subr.bf16.mxu0 0
      %4227 = vmatpush1.bf16.msra.mxu0 0
      %4228 = vmatprep.subr.bf16.mxu0 0
      %4229 = vmatpush1.bf16.msra.mxu0 0
      %4230 = vmatprep.subr.bf16.mxu0 0
      %4231 = vmatpush1.bf16.msra.mxu0 0
      %4232 = vmatprep.subr.bf16.mxu0 0
      %4233 = vmatpush1.bf16.msra.mxu0 0
      %4234 = vmatprep.subr.bf16.mxu0 0
      %4235 = vmatpush1.bf16.msra.mxu0 0
      %4236 = vmatprep.subr.bf16.mxu0 0
      %4237 = vmatpush1.bf16.msra.mxu0 0
      %4238 = vmatprep.subr.bf16.mxu0 0
      %4239 = vmatpush1.bf16.msra.mxu0 0
      %4240 = vmatprep.subr.bf16.mxu0 0
      %4241 = vmatpush1.bf16.msra.mxu0 0
      %4242 = vmatprep.subr.bf16.mxu0 0
      %4243 = vmatpush1.bf16.msra.mxu0 0
      %4244 = vmatprep.subr.bf16.mxu0 0
      %4245 = vmatpush1.bf16.msra.mxu0 0
      %4246 = vmatprep.subr.bf16.mxu0 0
      %4247 = vmatpush1.bf16.msra.mxu0 0
      %4248 = vmatprep.subr.bf16.mxu0 0
      %4249 = vmatpush1.bf16.msra.mxu0 0
      %4250 = vmatprep.mubr.bf16.mxu0 0
      %4251 = vmatmul.mubr.bf16.gmra.mrb[0].mxu0 %v4213
      %v4252 = vpop.f32.mrb[0].mxu0
      %v4253 = vadd.f32 0.0, %v4252
      %v4254 = vpop.f32.mrb[0].mxu0
      %v4255 = vpop.f32.mrb[0].mxu0
      %v4256 = vpop.f32.mrb[0].mxu0
      %4257 = vdwg.mxu0
      %4258 = vrot.lane.b32.xlu0 %v565, 40
      %v4259 = vpop.permute.xlu0 %4258
      %v4261 = vsel %vm1068, %v4015, 0
      %v4264 = vsel %vm1072, %v4259, 0
      %4266 = vmatprep.subr.bf16.mxu0 0
      %4267 = vmatpush1.bf16.msra.mxu0 %v4264
      %4268 = vmatprep.subr.bf16.mxu0 0
      %4269 = vmatpush1.bf16.msra.mxu0 0
      %4270 = vmatprep.subr.bf16.mxu0 0
      %4271 = vmatpush1.bf16.msra.mxu0 0
      %4272 = vmatprep.subr.bf16.mxu0 0
      %4273 = vmatpush1.bf16.msra.mxu0 0
      %4274 = vmatprep.subr.bf16.mxu0 0
      %4275 = vmatpush1.bf16.msra.mxu0 0
      %4276 = vmatprep.subr.bf16.mxu0 0
      %4277 = vmatpush1.bf16.msra.mxu0 0
      %4278 = vmatprep.subr.bf16.mxu0 0
      %4279 = vmatpush1.bf16.msra.mxu0 0
      %4280 = vmatprep.subr.bf16.mxu0 0
      %4281 = vmatpush1.bf16.msra.mxu0 0
      %4282 = vmatprep.subr.bf16.mxu0 0
      %4283 = vmatpush1.bf16.msra.mxu0 0
      %4284 = vmatprep.subr.bf16.mxu0 0
      %4285 = vmatpush1.bf16.msra.mxu0 0
      %4286 = vmatprep.subr.bf16.mxu0 0
      %4287 = vmatpush1.bf16.msra.mxu0 0
      %4288 = vmatprep.subr.bf16.mxu0 0
      %4289 = vmatpush1.bf16.msra.mxu0 0
      %4290 = vmatprep.subr.bf16.mxu0 0
      %4291 = vmatpush1.bf16.msra.mxu0 0
      %4292 = vmatprep.subr.bf16.mxu0 0
      %4293 = vmatpush1.bf16.msra.mxu0 0
      %4294 = vmatprep.subr.bf16.mxu0 0
      %4295 = vmatpush1.bf16.msra.mxu0 0
      %4296 = vmatprep.subr.bf16.mxu0 0
      %4297 = vmatpush1.bf16.msra.mxu0 0
      %4298 = vmatprep.mubr.bf16.mxu0 0
      %4299 = vmatmul.mubr.bf16.gmra.mrb[0].mxu0 %v4261
      %v4300 = vpop.f32.mrb[0].mxu0
      %v4301 = vadd.f32 0.0, %v4300
      %v4302 = vpop.f32.mrb[0].mxu0
      %v4303 = vpop.f32.mrb[0].mxu0
      %v4304 = vpop.f32.mrb[0].mxu0
      %4305 = vdwg.mxu0
      %4306 = vrot.lane.b32.xlu0 %v566, 40
      %v4307 = vpop.permute.xlu0 %4306
      %v4309 = vsel %vm1068, %v4016, 0
      %v4312 = vsel %vm1072, %v4307, 0
      %4314 = vmatprep.subr.bf16.mxu0 0
      %4315 = vmatpush1.bf16.msra.mxu0 %v4312
      %4316 = vmatprep.subr.bf16.mxu0 0
      %4317 = vmatpush1.bf16.msra.mxu0 0
      %4318 = vmatprep.subr.bf16.mxu0 0
      %4319 = vmatpush1.bf16.msra.mxu0 0
      %4320 = vmatprep.subr.bf16.mxu0 0
      %4321 = vmatpush1.bf16.msra.mxu0 0
      %4322 = vmatprep.subr.bf16.mxu0 0
      %4323 = vmatpush1.bf16.msra.mxu0 0
      %4324 = vmatprep.subr.bf16.mxu0 0
      %4325 = vmatpush1.bf16.msra.mxu0 0
      %4326 = vmatprep.subr.bf16.mxu0 0
      %4327 = vmatpush1.bf16.msra.mxu0 0
      %4328 = vmatprep.subr.bf16.mxu0 0
      %4329 = vmatpush1.bf16.msra.mxu0 0
      %4330 = vmatprep.subr.bf16.mxu0 0
      %4331 = vmatpush1.bf16.msra.mxu0 0
      %4332 = vmatprep.subr.bf16.mxu0 0
      %4333 = vmatpush1.bf16.msra.mxu0 0
      %4334 = vmatprep.subr.bf16.mxu0 0
      %4335 = vmatpush1.bf16.msra.mxu0 0
      %4336 = vmatprep.subr.bf16.mxu0 0
      %4337 = vmatpush1.bf16.msra.mxu0 0
      %4338 = vmatprep.subr.bf16.mxu0 0
      %4339 = vmatpush1.bf16.msra.mxu0 0
      %4340 = vmatprep.subr.bf16.mxu0 0
      %4341 = vmatpush1.bf16.msra.mxu0 0
      %4342 = vmatprep.subr.bf16.mxu0 0
      %4343 = vmatpush1.bf16.msra.mxu0 0
      %4344 = vmatprep.subr.bf16.mxu0 0
      %4345 = vmatpush1.bf16.msra.mxu0 0
      %4346 = vmatprep.mubr.bf16.mxu0 0
      %4347 = vmatmul.mubr.bf16.gmra.mrb[0].mxu0 %v4309
      %v4348 = vpop.f32.mrb[0].mxu0
      %v4349 = vadd.f32 0.0, %v4348
      %v4350 = vpop.f32.mrb[0].mxu0
      %v4351 = vpop.f32.mrb[0].mxu0
      %v4352 = vpop.f32.mrb[0].mxu0
      %4353 = vdwg.mxu0
      %4354 = vrot.lane.b32.xlu0 %v567, 40
      %v4355 = vpop.permute.xlu0 %4354
      %v4357 = vsel %vm1068, %v4017, 0
      %v4360 = vsel %vm1072, %v4355, 0
      %4362 = vmatprep.subr.bf16.mxu0 0
      %4363 = vmatpush1.bf16.msra.mxu0 %v4360
      %4364 = vmatprep.subr.bf16.mxu0 0
      %4365 = vmatpush1.bf16.msra.mxu0 0
      %4366 = vmatprep.subr.bf16.mxu0 0
      %4367 = vmatpush1.bf16.msra.mxu0 0
      %4368 = vmatprep.subr.bf16.mxu0 0
      %4369 = vmatpush1.bf16.msra.mxu0 0
      %4370 = vmatprep.subr.bf16.mxu0 0
      %4371 = vmatpush1.bf16.msra.mxu0 0
      %4372 = vmatprep.subr.bf16.mxu0 0
      %4373 = vmatpush1.bf16.msra.mxu0 0
      %4374 = vmatprep.subr.bf16.mxu0 0
      %4375 = vmatpush1.bf16.msra.mxu0 0
      %4376 = vmatprep.subr.bf16.mxu0 0
      %4377 = vmatpush1.bf16.msra.mxu0 0
      %4378 = vmatprep.subr.bf16.mxu0 0
      %4379 = vmatpush1.bf16.msra.mxu0 0
      %4380 = vmatprep.subr.bf16.mxu0 0
      %4381 = vmatpush1.bf16.msra.mxu0 0
      %4382 = vmatprep.subr.bf16.mxu0 0
      %4383 = vmatpush1.bf16.msra.mxu0 0
      %4384 = vmatprep.subr.bf16.mxu0 0
      %4385 = vmatpush1.bf16.msra.mxu0 0
      %4386 = vmatprep.subr.bf16.mxu0 0
      %4387 = vmatpush1.bf16.msra.mxu0 0
      %4388 = vmatprep.subr.bf16.mxu0 0
      %4389 = vmatpush1.bf16.msra.mxu0 0
      %4390 = vmatprep.subr.bf16.mxu0 0
      %4391 = vmatpush1.bf16.msra.mxu0 0
      %4392 = vmatprep.subr.bf16.mxu0 0
      %4393 = vmatpush1.bf16.msra.mxu0 0
      %4394 = vmatprep.mubr.bf16.mxu0 0
      %4395 = vmatmul.mubr.bf16.gmra.mrb[0].mxu0 %v4357
      %v4396 = vpop.f32.mrb[0].mxu0
      %v4397 = vadd.f32 0.0, %v4396
      %v4398 = vpop.f32.mrb[0].mxu0
      %v4399 = vpop.f32.mrb[0].mxu0
      %v4400 = vpop.f32.mrb[0].mxu0
      %4401 = vdwg.mxu0
      %v4410 = vcombine.low %v4061, %v4109
      %v4411 = vcombine.low %v4157, %v4205
      %v4413 = vunpack.c.l.s4 1983009808
      %v4414 = vunpack.c.0.s8 %v4413
      %v4415 = vlaneseq
      %v4416 = vshrl.u32 %v4415, 7
      %v4417 = vsub.s32 %v4414, %v4416
      %v4418 = vrot.slane %v4410, %v4417
      %v4420 = vunpack.c.l.s4 1983009808
      %v4421 = vunpack.c.0.s8 %v4420
      %v4422 = vlaneseq
      %v4423 = vshrl.u32 %v4422, 7
      %v4424 = vsub.s32 %v4421, %v4423
      %v4425 = vrot.slane %v4411, %v4424
      %v4426 = vcombine.low %v4418, %v4425
      %v4427 = vcombine.low %v4253, %v4301
      %v4428 = vcombine.low %v4349, %v4397
      %v4430 = vunpack.c.l.s4 1983009808
      %v4431 = vunpack.c.0.s8 %v4430
      %v4432 = vlaneseq
      %v4433 = vshrl.u32 %v4432, 7
      %v4434 = vsub.s32 %v4431, %v4433
      %v4435 = vrot.slane %v4427, %v4434
      %v4437 = vunpack.c.l.s4 1983009808
      %v4438 = vunpack.c.0.s8 %v4437
      %v4439 = vlaneseq
      %v4440 = vshrl.u32 %v4439, 7
      %v4441 = vsub.s32 %v4438, %v4440
      %v4442 = vrot.slane %v4428, %v4441
      %v4443 = vcombine.low %v4435, %v4442
      %v4446 = vpack.c.bf16 %v4443, %v4426
      %v4447 = vld [vmem:[%s5 + $0xc] sm:$0xf]
      %v4449 = vsel %vm571, %v4446, 0
      %v4452 = vsel %vm1501, %v4447, 0
      %4454 = vmatprep.subr.bf16.mxu0 0
      %4455 = vmatpush1.bf16.msra.mxu0 %v4452
      %4456 = vmatprep.subr.bf16.mxu0 0
      %4457 = vmatpush1.bf16.msra.mxu0 0
      %4458 = vmatprep.subr.bf16.mxu0 0
      %4459 = vmatpush1.bf16.msra.mxu0 0
      %4460 = vmatprep.subr.bf16.mxu0 0
      %4461 = vmatpush1.bf16.msra.mxu0 0
      %4462 = vmatprep.subr.bf16.mxu0 0
      %4463 = vmatpush1.bf16.msra.mxu0 0
      %4464 = vmatprep.subr.bf16.mxu0 0
      %4465 = vmatpush1.bf16.msra.mxu0 0
      %4466 = vmatprep.subr.bf16.mxu0 0
      %4467 = vmatpush1.bf16.msra.mxu0 0
      %4468 = vmatprep.subr.bf16.mxu0 0
      %4469 = vmatpush1.bf16.msra.mxu0 0
      %4470 = vmatprep.subr.bf16.mxu0 0
      %4471 = vmatpush1.bf16.msra.mxu0 0
      %4472 = vmatprep.subr.bf16.mxu0 0
      %4473 = vmatpush1.bf16.msra.mxu0 0
      %4474 = vmatprep.subr.bf16.mxu0 0
      %4475 = vmatpush1.bf16.msra.mxu0 0
      %4476 = vmatprep.subr.bf16.mxu0 0
      %4477 = vmatpush1.bf16.msra.mxu0 0
      %4478 = vmatprep.subr.bf16.mxu0 0
      %4479 = vmatpush1.bf16.msra.mxu0 0
      %4480 = vmatprep.subr.bf16.mxu0 0
      %4481 = vmatpush1.bf16.msra.mxu0 0
      %4482 = vmatprep.subr.bf16.mxu0 0
      %4483 = vmatpush1.bf16.msra.mxu0 0
      %4484 = vmatprep.subr.bf16.mxu0 0
      %4485 = vmatpush1.bf16.msra.mxu0 0
      %4486 = vmatprep.mubr.bf16.mxu0 0
      %4487 = vmatmul.mubr.bf16.gmra.mrb[0].mxu0 %v4449
      %v4488 = vpop.f32.mrb[0].mxu0
      %v4489 = vadd.f32 0.0, %v4488
      %v4490 = vpop.f32.mrb[0].mxu0
      %v4491 = vpop.f32.mrb[0].mxu0
      %v4492 = vadd.f32 0.0, %v4491
      %v4493 = vpop.f32.mrb[0].mxu0
      %4494 = vdwg.mxu0
      %v4495 = vadd.f32 %v3512, %v4489
      %v4496 = vadd.f32 %v3513, %v4492
      %v4497 = vsel %vm395, %v4495, 0.0
      %4498 = vadd.xlane.f32.xlu0 %v4497
      %v4499 = vpop.xlane.xlu0 %4498
      %v4500 = vsel %vm395, %v4496, 0.0
      %4501 = vadd.xlane.f32.xlu0 %v4500
      %v4502 = vpop.xlane.xlu0 %4501
      %v4503 = vmul.f32 %v4499, %v402
      %v4504 = vmul.f32 %v4502, %v402
      %v4505 = vsub.f32 %v4495, %v4503
      %v4506 = vsub.f32 %v4496, %v4504
      %v4507 = vmul.f32 %v4505, %v4505
      %v4508 = vmul.f32 %v4506, %v4506
      %v4509 = vsel %vm395, %v4507, 0.0
      %4510 = vadd.xlane.f32.xlu0 %v4509
      %v4511 = vpop.xlane.xlu0 %4510
      %v4512 = vsel %vm395, %v4508, 0.0
      %4513 = vadd.xlane.f32.xlu0 %v4512
      %v4514 = vpop.xlane.xlu0 %4513
      %v4515 = vmul.f32 %v4511, %v402
      %v4516 = vmul.f32 %v4514, %v402
      %v4517 = vadd.f32 %v4515, 1e-05
      %v4518 = vadd.f32 %v4516, 1e-05
      %v4519 = vrsqrt.pop %v4517
      %v4520 = vrsqrt.pop %v4518
      %v4521 = vmul.f32 %v4505, %v4519
      %v4522 = vmul.f32 %v4506, %v4520
      %v4523 = vmul.f32 %v4521, %v427
      %v4524 = vmul.f32 %v4522, %v427
      %v4525 = vadd.f32 %v4523, %v435
      %v4526 = vadd.f32 %v4524, %v435
      %v4527 = vpack.c.bf16 %v4526, %v4525
      %v4528 = vld [vmem:[%s10] sm:$0x1]
      %v4530 = vlaneseq
      %v4531 = vshrl.u32 %v4530, 7
      %v4532 = vsub.s32 0, %v4531
      %v4533 = vrot.slane %v4528, %v4532
      %v4535 = vadd.f32 %v4495, %v4533
      %v4536 = vadd.f32 %v4496, %v4533
      %v4537 = vld [vmem:[%s7] sm:$0xf]
      %v4538 = vld [vmem:[%s7 + $0x4] sm:$0xf]
      %v4539 = vld [vmem:[%s7 + $0x8] sm:$0xf]
      %v4540 = vld [vmem:[%s7 + $0xc] sm:$0xf]
      %v4541 = vld [vmem:[%s8] sm:$0x1]
      %v4543 = vlaneseq
      %v4544 = vshrl.u32 %v4543, 7
      %v4545 = vsub.s32 0, %v4544
      %v4546 = vrot.slane %v4541, %v4545
      %v4552 = vunpack.c.l.b16 %v4537
      %v4553 = vunpack.c.l.b16 %v4538
      %v4554 = vunpack.c.l.b16 %v4539
      %v4555 = vunpack.c.l.b16 %v4540
      %v4556 = vpack.c.b16 %v4553, %v4552
      %v4557 = vpack.c.b16 %v4555, %v4554
      %v4561 = vsel %vm395, %v4527, 0
      %4563 = vmatprep.subr.bf16.mxu0 0
      %4564 = vmatpush1.bf16.msra.mxu0 %v4556
      %4565 = vmatprep.subr.bf16.mxu0 0
      %4566 = vmatpush1.bf16.msra.mxu0 %v4557
      %4567 = vmatprep.subr.bf16.mxu0 0
      %4568 = vmatpush1.bf16.msra.mxu0 0
      %4569 = vmatprep.subr.bf16.mxu0 0
      %4570 = vmatpush1.bf16.msra.mxu0 0
      %4571 = vmatprep.subr.bf16.mxu0 0
      %4572 = vmatpush1.bf16.msra.mxu0 0
      %4573 = vmatprep.subr.bf16.mxu0 0
      %4574 = vmatpush1.bf16.msra.mxu0 0
      %4575 = vmatprep.subr.bf16.mxu0 0
      %4576 = vmatpush1.bf16.msra.mxu0 0
      %4577 = vmatprep.subr.bf16.mxu0 0
      %4578 = vmatpush1.bf16.msra.mxu0 0
      %4579 = vmatprep.subr.bf16.mxu0 0
      %4580 = vmatpush1.bf16.msra.mxu0 0
      %4581 = vmatprep.subr.bf16.mxu0 0
      %4582 = vmatpush1.bf16.msra.mxu0 0
      %4583 = vmatprep.subr.bf16.mxu0 0
      %4584 = vmatpush1.bf16.msra.mxu0 0
      %4585 = vmatprep.subr.bf16.mxu0 0
      %4586 = vmatpush1.bf16.msra.mxu0 0
      %4587 = vmatprep.subr.bf16.mxu0 0
      %4588 = vmatpush1.bf16.msra.mxu0 0
      %4589 = vmatprep.subr.bf16.mxu0 0
      %4590 = vmatpush1.bf16.msra.mxu0 0
      %4591 = vmatprep.subr.bf16.mxu0 0
      %4592 = vmatpush1.bf16.msra.mxu0 0
      %4593 = vmatprep.subr.bf16.mxu0 0
      %4594 = vmatpush1.bf16.msra.mxu0 0
      %4595 = vmatprep.mubr.bf16.mxu0 0
      %4596 = vmatmul.mubr.bf16.gmra.mrb[0].mxu0 %v4561
      %v4597 = vpop.f32.mrb[0].mxu0
      %v4598 = vadd.f32 %v4546, %v4597
      %v4599 = vpop.f32.mrb[0].mxu0
      %v4600 = vpop.f32.mrb[0].mxu0
      %v4601 = vadd.f32 %v4546, %v4600
      %v4602 = vpop.f32.mrb[0].mxu0
      %4603 = vdwg.mxu0
      %v4604 = vmul.f32 %v4598, 0.5
      %v4605 = vmul.f32 %v4601, 0.5
      %v4606 = vmul.f32 %v4598, 0.044715
      %v4607 = vmul.f32 %v4601, 0.044715
      %v4608 = vmul.f32 %v4606, %v4598
      %v4609 = vmul.f32 %v4607, %v4601
      %v4610 = vmul.f32 %v4608, %v4598
      %v4611 = vmul.f32 %v4609, %v4601
      %v4612 = vadd.f32 %v4598, %v4610
      %v4613 = vadd.f32 %v4601, %v4611
      %v4614 = vmul.f32 %v4612, 0.7978846
      %v4615 = vmul.f32 %v4613, 0.7978846
      %v4616 = vtanh.pop %v4614
      %v4617 = vtanh.pop %v4615
      %v4618 = vadd.f32 %v4616, 1.0
      %v4619 = vadd.f32 %v4617, 1.0
      %v4620 = vmul.f32 %v4604, %v4618
      %v4621 = vmul.f32 %v4605, %v4619
      %v4622 = vpack.c.bf16 %v4621, %v4620
      %v4623 = vld [vmem:[%s9] sm:$0xf]
      %v4624 = vld [vmem:[%s9 + $0x4] sm:$0xf]
      %v4625 = vld [vmem:[%s9 + $0x8] sm:$0xf]
      %v4626 = vld [vmem:[%s9 + $0xc] sm:$0xf]
      %v4627 = vld [vmem:[%s9 + $0x10] sm:$0xf]
      %v4628 = vld [vmem:[%s9 + $0x14] sm:$0xf]
      %v4629 = vld [vmem:[%s9 + $0x18] sm:$0xf]
      %v4630 = vld [vmem:[%s9 + $0x1c] sm:$0xf]
      %v4631 = vld [vmem:[%s9 + $0x20] sm:$0xf]
      %v4632 = vld [vmem:[%s9 + $0x24] sm:$0xf]
      %v4633 = vld [vmem:[%s9 + $0x28] sm:$0xf]
      %v4634 = vld [vmem:[%s9 + $0x2c] sm:$0xf]
      %v4635 = vld [vmem:[%s9 + $0x30] sm:$0xf]
      %v4636 = vld [vmem:[%s9 + $0x34] sm:$0xf]
      %v4637 = vld [vmem:[%s9 + $0x38] sm:$0xf]
      %v4638 = vld [vmem:[%s9 + $0x3c] sm:$0xf]
      %v4655 = vunpack.c.l.b16 %v4623
      %v4656 = vunpack.c.l.b16 %v4624
      %v4657 = vunpack.c.l.b16 %v4625
      %v4658 = vunpack.c.l.b16 %v4626
      %v4659 = vunpack.c.l.b16 %v4627
      %v4660 = vunpack.c.l.b16 %v4628
      %v4661 = vunpack.c.l.b16 %v4629
      %v4662 = vunpack.c.l.b16 %v4630
      %v4663 = vunpack.c.l.b16 %v4631
      %v4664 = vunpack.c.l.b16 %v4632
      %v4665 = vunpack.c.l.b16 %v4633
      %v4666 = vunpack.c.l.b16 %v4634
      %v4667 = vunpack.c.l.b16 %v4635
      %v4668 = vunpack.c.l.b16 %v4636
      %v4669 = vunpack.c.l.b16 %v4637
      %v4670 = vunpack.c.l.b16 %v4638
      %v4671 = vpack.c.b16 %v4656, %v4655
      %v4672 = vpack.c.b16 %v4658, %v4657
      %v4673 = vpack.c.b16 %v4660, %v4659
      %v4674 = vpack.c.b16 %v4662, %v4661
      %v4675 = vpack.c.b16 %v4664, %v4663
      %v4676 = vpack.c.b16 %v4666, %v4665
      %v4677 = vpack.c.b16 %v4668, %v4667
      %v4678 = vpack.c.b16 %v4670, %v4669
      %4687 = vmatprep.subr.bf16.mxu0 0
      %4688 = vmatpush1.bf16.msra.mxu0 %v4671
      %4689 = vmatprep.subr.bf16.mxu0 0
      %4690 = vmatpush1.bf16.msra.mxu0 %v4672
      %4691 = vmatprep.subr.bf16.mxu0 0
      %4692 = vmatpush1.bf16.msra.mxu0 %v4673
      %4693 = vmatprep.subr.bf16.mxu0 0
      %4694 = vmatpush1.bf16.msra.mxu0 %v4674
      %4695 = vmatprep.subr.bf16.mxu0 0
      %4696 = vmatpush1.bf16.msra.mxu0 %v4675
      %4697 = vmatprep.subr.bf16.mxu0 0
      %4698 = vmatpush1.bf16.msra.mxu0 %v4676
      %4699 = vmatprep.subr.bf16.mxu0 0
      %4700 = vmatpush1.bf16.msra.mxu0 %v4677
      %4701 = vmatprep.subr.bf16.mxu0 0
      %4702 = vmatpush1.bf16.msra.mxu0 %v4678
      %4703 = vmatprep.subr.bf16.mxu0 0
      %4704 = vmatpush1.bf16.msra.mxu0 0
      %4705 = vmatprep.subr.bf16.mxu0 0
      %4706 = vmatpush1.bf16.msra.mxu0 0
      %4707 = vmatprep.subr.bf16.mxu0 0
      %4708 = vmatpush1.bf16.msra.mxu0 0
      %4709 = vmatprep.subr.bf16.mxu0 0
      %4710 = vmatpush1.bf16.msra.mxu0 0
      %4711 = vmatprep.subr.bf16.mxu0 0
      %4712 = vmatpush1.bf16.msra.mxu0 0
      %4713 = vmatprep.subr.bf16.mxu0 0
      %4714 = vmatpush1.bf16.msra.mxu0 0
      %4715 = vmatprep.subr.bf16.mxu0 0
      %4716 = vmatpush1.bf16.msra.mxu0 0
      %4717 = vmatprep.subr.bf16.mxu0 0
      %4718 = vmatpush1.bf16.msra.mxu0 0
      %4719 = vmatprep.mubr.bf16.mxu0 0
      %4720 = vmatmul.mubr.bf16.gmra.mrb[0].mxu0 %v4622
      %v4721 = vpop.f32.mrb[0].mxu0
      %v4722 = vadd.f32 0.0, %v4721
      %v4723 = vpop.f32.mrb[0].mxu0
      %v4724 = vpop.f32.mrb[0].mxu0
      %v4725 = vadd.f32 0.0, %v4724
      %v4726 = vpop.f32.mrb[0].mxu0
      %4727 = vdwg.mxu0
      %v4728 = vadd.f32 %v4535, %v4722
      %v4729 = vadd.f32 %v4536, %v4725
      %4730 = vst.msk [vmem:[%s388] sm:$0xff] %vm395, %v4728
      %4731 = vst.msk [vmem:[%s388 + $0x8] sm:$0xff] %vm395, %v4729
      %s4732 = smul.u32 2, %s22
      %p4733 = scmp.lt.s32.totalorder %s4732, 3
      %s4734 = scalar_select %p4733, %s4732, 3
      %s4735 = smul.addr %s4734, 8
      %s4736 = scalar_lea.vmem %s11, %s4735
      // Predicated region
      $region65: #{transformer_encoder_block.1} parent=63 // pred_check
        %p4737 = pneg %p276
      $region66: #{transformer_encoder_block.1} parent=63 // pred_check_branch
        %4739 = sbr.rel (%p4737) target = $region68
      $region67: #{transformer_encoder_block.1} parent=63 // pred_region
        %s4740 = smul.u32 2, %s22
      $region68: #{transformer_encoder_block.1} parent=63 // pred_fallthru
        _
    $region64: #{transformer_encoder_block.1} parent=5 // pred_fallthru
      _
    %p4741 = scmp.le.s32.totalorder 2, %s17
    // Predicated region
    $region69: #{transformer_encoder_block.1} parent=5 // pred_check
      %p4742 = pneg %p4741
    $region70: #{transformer_encoder_block.1} parent=5 // pred_check_branch
      %4744 = sbr.rel (%p4742) target = $region72
    $region71: #{transformer_encoder_block.1} parent=5 // pred_region
      %s4745 = ssub.s32 %s17, 2
      // Predicated region
      $region73: #{transformer_encoder_block.1} parent=71 // pred_check
        %p4746 = pneg %p282
      $region74: #{transformer_encoder_block.1} parent=71 // pred_check_branch
        %4748 = sbr.rel (%p4746) target = $region76
      $region75: #{transformer_encoder_block.1} parent=71 // pred_region
        %s4749 = smul.u32 2, %s23
        %p4750 = scmp.lt.s32.totalorder %s4749, 3
        %s4751 = scalar_select %p4750, %s4749, 3
        %s4752 = smul.addr %s4751, 8
        %s4753 = scalar_lea.vmem %s11, %s4752
      $region76: #{transformer_encoder_block.1} parent=71 // pred_fallthru
        _
    $region72: #{transformer_encoder_block.1} parent=5 // pred_fallthru
      _
  $region6: #{transformer_encoder_block.1} parent=0 // loop_footer
    %s21 = sadd.s32 1, %s17
  $region7: #{transformer_encoder_block.1} parent=0 // loop_footer_branch
    %16 = sbr.rel target = $region3
  $region8: #{transformer_encoder_block.1} parent=0 // loop_exit
    _

</llo_original>
